<compile_context>
chip_gen: v6e
topology: v6e:2x2x1
jax: 0.10.0
libtpu: 0.0.40
codegen_flags: <defaults>
</compile_context>

<pallas_src>
import jax
import jax.numpy as jnp
from jax.experimental import pallas as pl
from jax.experimental.pallas import tpu as pltpu

NEG_SLOPE = 0.2
CONV_KERNELS = ((9, 9), (5, 5), (5, 5))   # fixed by the module definition


def _lrelu(y):
    return jnp.where(y > 0, y, y * NEG_SLOPE)


# ---------------------------------------------------------------------------
# Fused conv + bias + leaky_relu + 2x2 avg-pool kernel.
# Patches arrive grouped by output-pixel parity: p_ref block is
# (1, 4, Hp*Wp, K); each group is matmul'd, activated, and the four groups
# are averaged (== avg_pool2d of the activated conv output).
# ---------------------------------------------------------------------------
def _conv_pool_kernel(p_ref, w_ref, b_ref, o_ref):
    w = w_ref[...]
    b = b_ref[...]
    acc = _lrelu(jnp.dot(p_ref[0, 0], w, preferred_element_type=jnp.float32) + b)
    for g in range(1, 4):
        acc = acc + _lrelu(
            jnp.dot(p_ref[0, g], w, preferred_element_type=jnp.float32) + b)
    o_ref[0] = (acc * 0.25).astype(o_ref.dtype)


def _im2col_pool_groups(x, kh, kw):
    """x: (N, H, W, C) -> patches (N, 4, Hp*Wp, kh*kw*C), grouped by the
    parity (a, b) of the conv-output pixel, so pooling partners live in
    separate groups.  Column order is (i, j, c) to match the weight matrix."""
    N, H, W, C = x.shape
    Ho, Wo = H - kh + 1, W - kw + 1
    Hp, Wp = Ho // 2, Wo // 2          # avg_pool2d floor semantics
    K = kh * kw * C
    groups = []
    for a in (0, 1):
        for b in (0, 1):
            cols = [
                x[:, a + i: a + i + 2 * Hp: 2, b + j: b + j + 2 * Wp: 2, :]
                for i in range(kh) for j in range(kw)
            ]
            groups.append(
                jnp.concatenate(cols, axis=-1).reshape(N, Hp * Wp, K))
    return jnp.stack(groups, axis=1), (Hp, Wp)


def conv_lrelu_pool(x, wmat, b_row, kh, kw):
    """avg_pool2d(leaky_relu(conv2d(x))) in one pallas_call.
    x NHWC, wmat (kh*kw*Cin, Cout), b_row (1, Cout)."""
    N, H, W, C = x.shape
    K, Cout = wmat.shape
    assert K == kh * kw * C
    p, (Hp, Wp) = _im2col_pool_groups(x, kh, kw)
    HW = Hp * Wp
    out = pl.pallas_call(
        _conv_pool_kernel,
        out_shape=jax.ShapeDtypeStruct((N, HW, Cout), jnp.float32),
        grid_spec=pltpu.PrefetchScalarGridSpec(
            num_scalar_prefetch=0,
            grid=(N,),                                  # >=2: both TCs on v7x
            in_specs=[
                pl.BlockSpec((1, 4, HW, K), lambda n: (n, 0, 0, 0)),
                pl.BlockSpec((K, Cout), lambda n: (0, 0)),   # full weight
                pl.BlockSpec((1, Cout), lambda n: (0, 0)),   # bias row
            ],
            out_specs=pl.BlockSpec((1, HW, Cout), lambda n: (n, 0, 0)),
        ),
        compiler_params=pltpu.CompilerParams(
            dimension_semantics=("parallel",)),
    )(p, wmat, b_row)
    return out.reshape(N, Hp, Wp, Cout)


# ---------------------------------------------------------------------------
# Fused FC stack: fc1 -> lrelu -> fc2 -> lrelu -> fc3 in a single kernel.
# ---------------------------------------------------------------------------
def _fc_fused_kernel(x_ref, w1_ref, b1_ref, w2_ref, b2_ref, w3_ref, b3_ref,
                     o_ref):
    h = jnp.dot(x_ref[...], w1_ref[...], preferred_element_type=jnp.float32)
    h = _lrelu(h + b1_ref[...])
    h = jnp.dot(h, w2_ref[...], preferred_element_type=jnp.float32)
    h = _lrelu(h + b2_ref[...])
    y = jnp.dot(h, w3_ref[...], preferred_element_type=jnp.float32)
    o_ref[...] = (y + b3_ref[...]).astype(o_ref.dtype)


def fc_fused(x, w1, b1, w2, b2, w3, b3):
    M, K1 = x.shape
    N1, N2, N3 = w1.shape[1], w2.shape[1], w3.shape[1]
    return pl.pallas_call(
        _fc_fused_kernel,
        out_shape=jax.ShapeDtypeStruct((M, N3), jnp.float32),
        grid_spec=pltpu.PrefetchScalarGridSpec(
            num_scalar_prefetch=0,
            grid=(1,),
            in_specs=[
                pl.BlockSpec((M, K1), lambda i: (0, 0)),
                pl.BlockSpec((K1, N1), lambda i: (0, 0)),
                pl.BlockSpec((1, N1), lambda i: (0, 0)),
                pl.BlockSpec((N1, N2), lambda i: (0, 0)),
                pl.BlockSpec((1, N2), lambda i: (0, 0)),
                pl.BlockSpec((N2, N3), lambda i: (0, 0)),
                pl.BlockSpec((1, N3), lambda i: (0, 0)),
            ],
            out_specs=pl.BlockSpec((M, N3), lambda i: (0, 0)),
        ),
    )(x, w1, b1, w2, b2, w3, b3)


# ---------------------------------------------------------------------------
# One-time parameter preparation (hoisted out of the per-call forward).
# ---------------------------------------------------------------------------
def prepare_params(params, final_hw):
    Hf, Wf = final_hw
    Cf = params['w3'].shape[0]

    def conv_wmat(w):            # OIHW -> (kh*kw*Cin, Cout), (i, j, c) rows
        Cout, Cin, kh, kw = w.shape
        return jnp.transpose(w, (2, 3, 1, 0)).reshape(kh * kw * Cin, Cout)

    # fc1 columns: PyTorch flattens (C, H, W); activations here are (H, W, C).
    wf1 = params['wf1'].reshape(-1, Cf, Hf, Wf)
    wf1 = jnp.transpose(wf1, (0, 2, 3, 1)).reshape(-1, Hf * Wf * Cf)

    return dict(
        w1=conv_wmat(params['w1']), b1=params['b1'].reshape(1, -1),
        w2=conv_wmat(params['w2']), b2=params['b2'].reshape(1, -1),
        w3=conv_wmat(params['w3']), b3=params['b3'].reshape(1, -1),
        wf1=wf1.T,                 bf1=params['bf1'].reshape(1, -1),
        wf2=params['wf2'].T,       bf2=params['bf2'].reshape(1, -1),
        wf3=params['wf3'].T,       bf3=params['bf3'].reshape(1, -1),
    )


# ---------------------------------------------------------------------------
# Full forward pass (takes prepared params).
# ---------------------------------------------------------------------------
def discriminator_forward(prep, x_nchw):
    x = jnp.transpose(x_nchw, (0, 2, 3, 1))              # NCHW -> NHWC, once
    (kh1, kw1), (kh2, kw2), (kh3, kw3) = CONV_KERNELS
    x = conv_lrelu_pool(x, prep['w1'], prep['b1'], kh1, kw1)
    x = conv_lrelu_pool(x, prep['w2'], prep['b2'], kh2, kw2)
    x = conv_lrelu_pool(x, prep['w3'], prep['b3'], kh3, kw3)
    n = x.shape[0]
    xf = x.reshape(n, -1)                                # (H, W, C) flatten
    return fc_fused(xf, prep['wf1'], prep['bf1'],
                    prep['wf2'], prep['bf2'],
                    prep['wf3'], prep['bf3'])


# ---------------------------------------------------------------------------
# Pure-JAX reference (NCHW, like PyTorch) for a numerical sanity check.
# ---------------------------------------------------------------------------
def _ref_forward(params, x):
    def conv(v, w, b):
        y = jax.lax.conv_general_dilated(
            v, w, (1, 1), 'VALID', dimension_numbers=('NCHW', 'OIHW', 'NCHW'))
        return y + b.reshape(1, -1, 1, 1)

    def pool(v):
        N, C, H, W = v.shape
        return v[:, :, :2 * (H // 2), :2 * (W // 2)].reshape(
            N, C, H // 2, 2, W // 2, 2).mean(axis=(3, 5))

    x = pool(_lrelu(conv(x, params['w1'], params['b1'])))
    x = pool(_lrelu(conv(x, params['w2'], params['b2'])))
    x = pool(_lrelu(conv(x, params['w3'], params['b3'])))
    x = x.reshape(x.shape[0], -1)
    x = _lrelu(x @ params['wf1'].T + params['bf1'])
    x = _lrelu(x @ params['wf2'].T + params['bf2'])
    return x @ params['wf3'].T + params['bf3']


if __name__ == "__main__":
    key = jax.random.PRNGKey(0)
    ks = jax.random.split(key, 13)

    # Small input consistent with the forward math: 48x48 single-channel image.
    # 48 -conv9-> 40 -pool-> 20 -conv5-> 16 -pool-> 8 -conv5-> 4 -pool-> 2
    # => flat features = 64 * 2 * 2 = 256 (stands in for the dataset-specific
    # 12544 / 50176 fc1 input sizes of the original module).
    N, H, W = 2, 48, 48
    flat = 64 * 2 * 2

    def init(k, shape, scale=0.05):
        return scale * jax.random.normal(k, shape, jnp.float32)

    params = dict(
        w1=init(ks[0], (32, 1, 9, 9)),  b1=init(ks[1], (32,)),
        w2=init(ks[2], (64, 32, 5, 5)), b2=init(ks[3], (64,)),
        w3=init(ks[4], (64, 64, 5, 5)), b3=init(ks[5], (64,)),
        wf1=init(ks[6], (512, flat)),   bf1=init(ks[7], (512,)),
        wf2=init(ks[8], (64, 512)),     bf2=init(ks[9], (64,)),
        wf3=init(ks[10], (1, 64)),      bf3=init(ks[11], (1,)),
    )
    x = jax.random.normal(ks[12], (N, 1, H, W), jnp.float32)

    # One-time weight preparation, outside the jitted forward.
    prepared = prepare_params(params, final_hw=(2, 2))

    fwd = jax.jit(discriminator_forward)
    out = jax.block_until_ready(fwd(prepared, x))

    ref = _ref_forward(params, x)
    assert out.shape == (N, 1), out.shape
    assert jnp.allclose(out, ref, rtol=1e-3, atol=1e-3), \
        float(jnp.max(jnp.abs(out - ref)))
    print("KERNEL_OK")
</pallas_src>

<mosaic_0001>
module attributes {stable_mosaic.version = 11 : i64} {
  func.func @_conv_pool_kernel(%arg0: i32, %arg1: memref<1x4x400x81xf32, #tpu.memory_space<vmem>>, %arg2: memref<81x32xf32, #tpu.memory_space<vmem>>, %arg3: memref<1x32xf32, #tpu.memory_space<vmem>>, %arg4: memref<1x400x32xf32, #tpu.memory_space<vmem>>) attributes {dimension_semantics = [#tpu.dimension_semantics<parallel>], iteration_bounds = array<i64: 2>, scalar_prefetch = 0 : i64, scratch_operands = 0 : i64, tpu.core_type = #tpu.core_type<tc>, window_params = [{transform_indices = @transform_0, window_bounds = array<i64: 1, 4, 400, 81>}, {pipeline_mode = #tpu.pipeline_mode<synchronous>, transform_indices = @transform_1, window_bounds = array<i64: 81, 32>}, {pipeline_mode = #tpu.pipeline_mode<synchronous>, transform_indices = @transform_2, window_bounds = array<i64: 1, 32>}, {transform_indices = @transform_3, window_bounds = array<i64: 1, 400, 32>}]} {
    %c0 = arith.constant 0 : index
    %c0_0 = arith.constant 0 : index
    %0 = vector.load %arg2[%c0, %c0_0] : memref<81x32xf32, #tpu.memory_space<vmem>>, vector<81x32xf32>
    %c0_1 = arith.constant 0 : index
    %c0_2 = arith.constant 0 : index
    %1 = vector.load %arg3[%c0_1, %c0_2] : memref<1x32xf32, #tpu.memory_space<vmem>>, vector<1x32xf32>
    %c0_3 = arith.constant 0 : index
    %c0_4 = arith.constant 0 : index
    %c0_5 = arith.constant 0 : index
    %c0_6 = arith.constant 0 : index
    %2 = vector.load %arg1[%c0_3, %c0_4, %c0_5, %c0_6] : memref<1x4x400x81xf32, #tpu.memory_space<vmem>>, vector<1x1x400x81xf32>
    %3 = vector.shape_cast %2 : vector<1x1x400x81xf32> to vector<400x81xf32>
    %cst = arith.constant dense<0.000000e+00> : vector<400x32xf32>
    %4 = tpu.matmul %3, %0, %cst {dimension_numbers = #tpu.dot_dimension_numbers<[1], [0], [0], [1], [0, 0, 1, 1], [], []>} : vector<400x81xf32>, vector<81x32xf32>, vector<400x32xf32> -> vector<400x32xf32>
    %5 = vector.broadcast %1 : vector<1x32xf32> to vector<400x32xf32>
    %6 = arith.addf %4, %5 : vector<400x32xf32>
    %cst_7 = arith.constant 0.000000e+00 : f32
    %7 = vector.broadcast %cst_7 : f32 to vector<400x32xf32>
    %8 = arith.cmpf ogt, %6, %7 : vector<400x32xf32>
    %cst_8 = arith.constant 2.000000e-01 : f32
    %9 = vector.broadcast %cst_8 : f32 to vector<400x32xf32>
    %10 = arith.mulf %6, %9 : vector<400x32xf32>
    %11 = arith.select %8, %6, %10 : vector<400x32xi1>, vector<400x32xf32>
    %c0_9 = arith.constant 0 : index
    %c1 = arith.constant 1 : index
    %c0_10 = arith.constant 0 : index
    %c0_11 = arith.constant 0 : index
    %12 = vector.load %arg1[%c0_9, %c1, %c0_10, %c0_11] : memref<1x4x400x81xf32, #tpu.memory_space<vmem>>, vector<1x1x400x81xf32>
    %13 = vector.shape_cast %12 : vector<1x1x400x81xf32> to vector<400x81xf32>
    %cst_12 = arith.constant dense<0.000000e+00> : vector<400x32xf32>
    %14 = tpu.matmul %13, %0, %cst_12 {dimension_numbers = #tpu.dot_dimension_numbers<[1], [0], [0], [1], [0, 0, 1, 1], [], []>} : vector<400x81xf32>, vector<81x32xf32>, vector<400x32xf32> -> vector<400x32xf32>
    %15 = vector.broadcast %1 : vector<1x32xf32> to vector<400x32xf32>
    %16 = arith.addf %14, %15 : vector<400x32xf32>
    %cst_13 = arith.constant 0.000000e+00 : f32
    %17 = vector.broadcast %cst_13 : f32 to vector<400x32xf32>
    %18 = arith.cmpf ogt, %16, %17 : vector<400x32xf32>
    %cst_14 = arith.constant 2.000000e-01 : f32
    %19 = vector.broadcast %cst_14 : f32 to vector<400x32xf32>
    %20 = arith.mulf %16, %19 : vector<400x32xf32>
    %21 = arith.select %18, %16, %20 : vector<400x32xi1>, vector<400x32xf32>
    %22 = arith.addf %11, %21 : vector<400x32xf32>
    %c0_15 = arith.constant 0 : index
    %c2 = arith.constant 2 : index
    %c0_16 = arith.constant 0 : index
    %c0_17 = arith.constant 0 : index
    %23 = vector.load %arg1[%c0_15, %c2, %c0_16, %c0_17] : memref<1x4x400x81xf32, #tpu.memory_space<vmem>>, vector<1x1x400x81xf32>
    %24 = vector.shape_cast %23 : vector<1x1x400x81xf32> to vector<400x81xf32>
    %cst_18 = arith.constant dense<0.000000e+00> : vector<400x32xf32>
    %25 = tpu.matmul %24, %0, %cst_18 {dimension_numbers = #tpu.dot_dimension_numbers<[1], [0], [0], [1], [0, 0, 1, 1], [], []>} : vector<400x81xf32>, vector<81x32xf32>, vector<400x32xf32> -> vector<400x32xf32>
    %26 = vector.broadcast %1 : vector<1x32xf32> to vector<400x32xf32>
    %27 = arith.addf %25, %26 : vector<400x32xf32>
    %cst_19 = arith.constant 0.000000e+00 : f32
    %28 = vector.broadcast %cst_19 : f32 to vector<400x32xf32>
    %29 = arith.cmpf ogt, %27, %28 : vector<400x32xf32>
    %cst_20 = arith.constant 2.000000e-01 : f32
    %30 = vector.broadcast %cst_20 : f32 to vector<400x32xf32>
    %31 = arith.mulf %27, %30 : vector<400x32xf32>
    %32 = arith.select %29, %27, %31 : vector<400x32xi1>, vector<400x32xf32>
    %33 = arith.addf %22, %32 : vector<400x32xf32>
    %c0_21 = arith.constant 0 : index
    %c3 = arith.constant 3 : index
    %c0_22 = arith.constant 0 : index
    %c0_23 = arith.constant 0 : index
    %34 = vector.load %arg1[%c0_21, %c3, %c0_22, %c0_23] : memref<1x4x400x81xf32, #tpu.memory_space<vmem>>, vector<1x1x400x81xf32>
    %35 = vector.shape_cast %34 : vector<1x1x400x81xf32> to vector<400x81xf32>
    %cst_24 = arith.constant dense<0.000000e+00> : vector<400x32xf32>
    %36 = tpu.matmul %35, %0, %cst_24 {dimension_numbers = #tpu.dot_dimension_numbers<[1], [0], [0], [1], [0, 0, 1, 1], [], []>} : vector<400x81xf32>, vector<81x32xf32>, vector<400x32xf32> -> vector<400x32xf32>
    %37 = vector.broadcast %1 : vector<1x32xf32> to vector<400x32xf32>
    %38 = arith.addf %36, %37 : vector<400x32xf32>
    %cst_25 = arith.constant 0.000000e+00 : f32
    %39 = vector.broadcast %cst_25 : f32 to vector<400x32xf32>
    %40 = arith.cmpf ogt, %38, %39 : vector<400x32xf32>
    %cst_26 = arith.constant 2.000000e-01 : f32
    %41 = vector.broadcast %cst_26 : f32 to vector<400x32xf32>
    %42 = arith.mulf %38, %41 : vector<400x32xf32>
    %43 = arith.select %40, %38, %42 : vector<400x32xi1>, vector<400x32xf32>
    %44 = arith.addf %33, %43 : vector<400x32xf32>
    %cst_27 = arith.constant 2.500000e-01 : f32
    %45 = vector.broadcast %cst_27 : f32 to vector<400x32xf32>
    %46 = arith.mulf %44, %45 : vector<400x32xf32>
    %c0_28 = arith.constant 0 : index
    %c0_29 = arith.constant 0 : index
    %c0_30 = arith.constant 0 : index
    %47 = vector.load %arg4[%c0_28, %c0_29, %c0_30] : memref<1x400x32xf32, #tpu.memory_space<vmem>>, vector<1x400x32xf32>
    %48 = vector.shape_cast %47 : vector<1x400x32xf32> to vector<400x32xf32>
    %49 = vector.shape_cast %46 : vector<400x32xf32> to vector<1x400x32xf32>
    tpu.vector_store %arg4[%c0_28, %c0_29, %c0_30], %49 {strides = array<i32>} : memref<1x400x32xf32, #tpu.memory_space<vmem>>, vector<1x400x32xf32>,
    return
  }
  func.func @transform_0(%arg0: i32) -> (i32, i32, i32, i32) {
    %c0_i32 = arith.constant 0 : i32
    %c0_i32_0 = arith.constant 0 : i32
    %c0_i32_1 = arith.constant 0 : i32
    %c0_i32_2 = arith.constant 0 : i32
    return %arg0, %c0_i32, %c0_i32_0, %c0_i32_1 : i32, i32, i32, i32
  }
  func.func @transform_1(%arg0: i32) -> (i32, i32) {
    %c0_i32 = arith.constant 0 : i32
    %c0_i32_0 = arith.constant 0 : i32
    %c0_i32_1 = arith.constant 0 : i32
    return %c0_i32, %c0_i32_0 : i32, i32
  }
  func.func @transform_2(%arg0: i32) -> (i32, i32) {
    %c0_i32 = arith.constant 0 : i32
    %c0_i32_0 = arith.constant 0 : i32
    %c0_i32_1 = arith.constant 0 : i32
    return %c0_i32, %c0_i32_0 : i32, i32
  }
  func.func @transform_3(%arg0: i32) -> (i32, i32, i32) {
    %c0_i32 = arith.constant 0 : i32
    %c0_i32_0 = arith.constant 0 : i32
    %c0_i32_1 = arith.constant 0 : i32
    return %arg0, %c0_i32, %c0_i32_0 : i32, i32, i32
  }
}

module attributes {stable_mosaic.version = 11 : i64} {
  func.func @_conv_pool_kernel(%arg0: i32, %arg1: memref<1x4x64x800xf32, #tpu.memory_space<vmem>>, %arg2: memref<800x64xf32, #tpu.memory_space<vmem>>, %arg3: memref<1x64xf32, #tpu.memory_space<vmem>>, %arg4: memref<1x64x64xf32, #tpu.memory_space<vmem>>) attributes {dimension_semantics = [#tpu.dimension_semantics<parallel>], iteration_bounds = array<i64: 2>, scalar_prefetch = 0 : i64, scratch_operands = 0 : i64, tpu.core_type = #tpu.core_type<tc>, window_params = [{transform_indices = @transform_0, window_bounds = array<i64: 1, 4, 64, 800>}, {pipeline_mode = #tpu.pipeline_mode<synchronous>, transform_indices = @transform_1, window_bounds = array<i64: 800, 64>}, {pipeline_mode = #tpu.pipeline_mode<synchronous>, transform_indices = @transform_2, window_bounds = array<i64: 1, 64>}, {transform_indices = @transform_3, window_bounds = array<i64: 1, 64, 64>}]} {
    %c0 = arith.constant 0 : index
    %c0_0 = arith.constant 0 : index
    %0 = vector.load %arg2[%c0, %c0_0] : memref<800x64xf32, #tpu.memory_space<vmem>>, vector<800x64xf32>
    %c0_1 = arith.constant 0 : index
    %c0_2 = arith.constant 0 : index
    %1 = vector.load %arg3[%c0_1, %c0_2] : memref<1x64xf32, #tpu.memory_space<vmem>>, vector<1x64xf32>
    %c0_3 = arith.constant 0 : index
    %c0_4 = arith.constant 0 : index
    %c0_5 = arith.constant 0 : index
    %c0_6 = arith.constant 0 : index
    %2 = vector.load %arg1[%c0_3, %c0_4, %c0_5, %c0_6] : memref<1x4x64x800xf32, #tpu.memory_space<vmem>>, vector<1x1x64x800xf32>
    %3 = vector.shape_cast %2 : vector<1x1x64x800xf32> to vector<64x800xf32>
    %cst = arith.constant dense<0.000000e+00> : vector<64x64xf32>
    %4 = tpu.matmul %3, %0, %cst {dimension_numbers = #tpu.dot_dimension_numbers<[1], [0], [0], [1], [0, 0, 1, 1], [], []>} : vector<64x800xf32>, vector<800x64xf32>, vector<64x64xf32> -> vector<64x64xf32>
    %5 = vector.broadcast %1 : vector<1x64xf32> to vector<64x64xf32>
    %6 = arith.addf %4, %5 : vector<64x64xf32>
    %cst_7 = arith.constant 0.000000e+00 : f32
    %7 = vector.broadcast %cst_7 : f32 to vector<64x64xf32>
    %8 = arith.cmpf ogt, %6, %7 : vector<64x64xf32>
    %cst_8 = arith.constant 2.000000e-01 : f32
    %9 = vector.broadcast %cst_8 : f32 to vector<64x64xf32>
    %10 = arith.mulf %6, %9 : vector<64x64xf32>
    %11 = arith.select %8, %6, %10 : vector<64x64xi1>, vector<64x64xf32>
    %c0_9 = arith.constant 0 : index
    %c1 = arith.constant 1 : index
    %c0_10 = arith.constant 0 : index
    %c0_11 = arith.constant 0 : index
    %12 = vector.load %arg1[%c0_9, %c1, %c0_10, %c0_11] : memref<1x4x64x800xf32, #tpu.memory_space<vmem>>, vector<1x1x64x800xf32>
    %13 = vector.shape_cast %12 : vector<1x1x64x800xf32> to vector<64x800xf32>
    %cst_12 = arith.constant dense<0.000000e+00> : vector<64x64xf32>
    %14 = tpu.matmul %13, %0, %cst_12 {dimension_numbers = #tpu.dot_dimension_numbers<[1], [0], [0], [1], [0, 0, 1, 1], [], []>} : vector<64x800xf32>, vector<800x64xf32>, vector<64x64xf32> -> vector<64x64xf32>
    %15 = vector.broadcast %1 : vector<1x64xf32> to vector<64x64xf32>
    %16 = arith.addf %14, %15 : vector<64x64xf32>
    %cst_13 = arith.constant 0.000000e+00 : f32
    %17 = vector.broadcast %cst_13 : f32 to vector<64x64xf32>
    %18 = arith.cmpf ogt, %16, %17 : vector<64x64xf32>
    %cst_14 = arith.constant 2.000000e-01 : f32
    %19 = vector.broadcast %cst_14 : f32 to vector<64x64xf32>
    %20 = arith.mulf %16, %19 : vector<64x64xf32>
    %21 = arith.select %18, %16, %20 : vector<64x64xi1>, vector<64x64xf32>
    %22 = arith.addf %11, %21 : vector<64x64xf32>
    %c0_15 = arith.constant 0 : index
    %c2 = arith.constant 2 : index
    %c0_16 = arith.constant 0 : index
    %c0_17 = arith.constant 0 : index
    %23 = vector.load %arg1[%c0_15, %c2, %c0_16, %c0_17] : memref<1x4x64x800xf32, #tpu.memory_space<vmem>>, vector<1x1x64x800xf32>
    %24 = vector.shape_cast %23 : vector<1x1x64x800xf32> to vector<64x800xf32>
    %cst_18 = arith.constant dense<0.000000e+00> : vector<64x64xf32>
    %25 = tpu.matmul %24, %0, %cst_18 {dimension_numbers = #tpu.dot_dimension_numbers<[1], [0], [0], [1], [0, 0, 1, 1], [], []>} : vector<64x800xf32>, vector<800x64xf32>, vector<64x64xf32> -> vector<64x64xf32>
    %26 = vector.broadcast %1 : vector<1x64xf32> to vector<64x64xf32>
    %27 = arith.addf %25, %26 : vector<64x64xf32>
    %cst_19 = arith.constant 0.000000e+00 : f32
    %28 = vector.broadcast %cst_19 : f32 to vector<64x64xf32>
    %29 = arith.cmpf ogt, %27, %28 : vector<64x64xf32>
    %cst_20 = arith.constant 2.000000e-01 : f32
    %30 = vector.broadcast %cst_20 : f32 to vector<64x64xf32>
    %31 = arith.mulf %27, %30 : vector<64x64xf32>
    %32 = arith.select %29, %27, %31 : vector<64x64xi1>, vector<64x64xf32>
    %33 = arith.addf %22, %32 : vector<64x64xf32>
    %c0_21 = arith.constant 0 : index
    %c3 = arith.constant 3 : index
    %c0_22 = arith.constant 0 : index
    %c0_23 = arith.constant 0 : index
    %34 = vector.load %arg1[%c0_21, %c3, %c0_22, %c0_23] : memref<1x4x64x800xf32, #tpu.memory_space<vmem>>, vector<1x1x64x800xf32>
    %35 = vector.shape_cast %34 : vector<1x1x64x800xf32> to vector<64x800xf32>
    %cst_24 = arith.constant dense<0.000000e+00> : vector<64x64xf32>
    %36 = tpu.matmul %35, %0, %cst_24 {dimension_numbers = #tpu.dot_dimension_numbers<[1], [0], [0], [1], [0, 0, 1, 1], [], []>} : vector<64x800xf32>, vector<800x64xf32>, vector<64x64xf32> -> vector<64x64xf32>
    %37 = vector.broadcast %1 : vector<1x64xf32> to vector<64x64xf32>
    %38 = arith.addf %36, %37 : vector<64x64xf32>
    %cst_25 = arith.constant 0.000000e+00 : f32
    %39 = vector.broadcast %cst_25 : f32 to vector<64x64xf32>
    %40 = arith.cmpf ogt, %38, %39 : vector<64x64xf32>
    %cst_26 = arith.constant 2.000000e-01 : f32
    %41 = vector.broadcast %cst_26 : f32 to vector<64x64xf32>
    %42 = arith.mulf %38, %41 : vector<64x64xf32>
    %43 = arith.select %40, %38, %42 : vector<64x64xi1>, vector<64x64xf32>
    %44 = arith.addf %33, %43 : vector<64x64xf32>
    %cst_27 = arith.constant 2.500000e-01 : f32
    %45 = vector.broadcast %cst_27 : f32 to vector<64x64xf32>
    %46 = arith.mulf %44, %45 : vector<64x64xf32>
    %c0_28 = arith.constant 0 : index
    %c0_29 = arith.constant 0 : index
    %c0_30 = arith.constant 0 : index
    %47 = vector.load %arg4[%c0_28, %c0_29, %c0_30] : memref<1x64x64xf32, #tpu.memory_space<vmem>>, vector<1x64x64xf32>
    %48 = vector.shape_cast %47 : vector<1x64x64xf32> to vector<64x64xf32>
    %49 = vector.shape_cast %46 : vector<64x64xf32> to vector<1x64x64xf32>
    tpu.vector_store %arg4[%c0_28, %c0_29, %c0_30], %49 {strides = array<i32>} : memref<1x64x64xf32, #tpu.memory_space<vmem>>, vector<1x64x64xf32>,
    return
  }
  func.func @transform_0(%arg0: i32) -> (i32, i32, i32, i32) {
    %c0_i32 = arith.constant 0 : i32
    %c0_i32_0 = arith.constant 0 : i32
    %c0_i32_1 = arith.constant 0 : i32
    %c0_i32_2 = arith.constant 0 : i32
    return %arg0, %c0_i32, %c0_i32_0, %c0_i32_1 : i32, i32, i32, i32
  }
  func.func @transform_1(%arg0: i32) -> (i32, i32) {
    %c0_i32 = arith.constant 0 : i32
    %c0_i32_0 = arith.constant 0 : i32
    %c0_i32_1 = arith.constant 0 : i32
    return %c0_i32, %c0_i32_0 : i32, i32
  }
  func.func @transform_2(%arg0: i32) -> (i32, i32) {
    %c0_i32 = arith.constant 0 : i32
    %c0_i32_0 = arith.constant 0 : i32
    %c0_i32_1 = arith.constant 0 : i32
    return %c0_i32, %c0_i32_0 : i32, i32
  }
  func.func @transform_3(%arg0: i32) -> (i32, i32, i32) {
    %c0_i32 = arith.constant 0 : i32
    %c0_i32_0 = arith.constant 0 : i32
    %c0_i32_1 = arith.constant 0 : i32
    return %arg0, %c0_i32, %c0_i32_0 : i32, i32, i32
  }
}

module attributes {stable_mosaic.version = 11 : i64} {
  func.func @_conv_pool_kernel(%arg0: i32, %arg1: memref<1x4x4x1600xf32, #tpu.memory_space<vmem>>, %arg2: memref<1600x64xf32, #tpu.memory_space<vmem>>, %arg3: memref<1x64xf32, #tpu.memory_space<vmem>>, %arg4: memref<1x4x64xf32, #tpu.memory_space<vmem>>) attributes {dimension_semantics = [#tpu.dimension_semantics<parallel>], iteration_bounds = array<i64: 2>, scalar_prefetch = 0 : i64, scratch_operands = 0 : i64, tpu.core_type = #tpu.core_type<tc>, window_params = [{transform_indices = @transform_0, window_bounds = array<i64: 1, 4, 4, 1600>}, {pipeline_mode = #tpu.pipeline_mode<synchronous>, transform_indices = @transform_1, window_bounds = array<i64: 1600, 64>}, {pipeline_mode = #tpu.pipeline_mode<synchronous>, transform_indices = @transform_2, window_bounds = array<i64: 1, 64>}, {transform_indices = @transform_3, window_bounds = array<i64: 1, 4, 64>}]} {
    %c0 = arith.constant 0 : index
    %c0_0 = arith.constant 0 : index
    %0 = vector.load %arg2[%c0, %c0_0] : memref<1600x64xf32, #tpu.memory_space<vmem>>, vector<1600x64xf32>
    %c0_1 = arith.constant 0 : index
    %c0_2 = arith.constant 0 : index
    %1 = vector.load %arg3[%c0_1, %c0_2] : memref<1x64xf32, #tpu.memory_space<vmem>>, vector<1x64xf32>
    %c0_3 = arith.constant 0 : index
    %c0_4 = arith.constant 0 : index
    %c0_5 = arith.constant 0 : index
    %c0_6 = arith.constant 0 : index
    %2 = vector.load %arg1[%c0_3, %c0_4, %c0_5, %c0_6] : memref<1x4x4x1600xf32, #tpu.memory_space<vmem>>, vector<1x1x4x1600xf32>
    %3 = vector.shape_cast %2 : vector<1x1x4x1600xf32> to vector<4x1600xf32>
    %cst = arith.constant dense<0.000000e+00> : vector<4x64xf32>
    %4 = tpu.matmul %3, %0, %cst {dimension_numbers = #tpu.dot_dimension_numbers<[1], [0], [0], [1], [0, 0, 1, 1], [], []>} : vector<4x1600xf32>, vector<1600x64xf32>, vector<4x64xf32> -> vector<4x64xf32>
    %5 = vector.broadcast %1 : vector<1x64xf32> to vector<4x64xf32>
    %6 = arith.addf %4, %5 : vector<4x64xf32>
    %cst_7 = arith.constant 0.000000e+00 : f32
    %7 = vector.broadcast %cst_7 : f32 to vector<4x64xf32>
    %8 = arith.cmpf ogt, %6, %7 : vector<4x64xf32>
    %cst_8 = arith.constant 2.000000e-01 : f32
    %9 = vector.broadcast %cst_8 : f32 to vector<4x64xf32>
    %10 = arith.mulf %6, %9 : vector<4x64xf32>
    %11 = arith.select %8, %6, %10 : vector<4x64xi1>, vector<4x64xf32>
    %c0_9 = arith.constant 0 : index
    %c1 = arith.constant 1 : index
    %c0_10 = arith.constant 0 : index
    %c0_11 = arith.constant 0 : index
    %12 = vector.load %arg1[%c0_9, %c1, %c0_10, %c0_11] : memref<1x4x4x1600xf32, #tpu.memory_space<vmem>>, vector<1x1x4x1600xf32>
    %13 = vector.shape_cast %12 : vector<1x1x4x1600xf32> to vector<4x1600xf32>
    %cst_12 = arith.constant dense<0.000000e+00> : vector<4x64xf32>
    %14 = tpu.matmul %13, %0, %cst_12 {dimension_numbers = #tpu.dot_dimension_numbers<[1], [0], [0], [1], [0, 0, 1, 1], [], []>} : vector<4x1600xf32>, vector<1600x64xf32>, vector<4x64xf32> -> vector<4x64xf32>
    %15 = vector.broadcast %1 : vector<1x64xf32> to vector<4x64xf32>
    %16 = arith.addf %14, %15 : vector<4x64xf32>
    %cst_13 = arith.constant 0.000000e+00 : f32
    %17 = vector.broadcast %cst_13 : f32 to vector<4x64xf32>
    %18 = arith.cmpf ogt, %16, %17 : vector<4x64xf32>
    %cst_14 = arith.constant 2.000000e-01 : f32
    %19 = vector.broadcast %cst_14 : f32 to vector<4x64xf32>
    %20 = arith.mulf %16, %19 : vector<4x64xf32>
    %21 = arith.select %18, %16, %20 : vector<4x64xi1>, vector<4x64xf32>
    %22 = arith.addf %11, %21 : vector<4x64xf32>
    %c0_15 = arith.constant 0 : index
    %c2 = arith.constant 2 : index
    %c0_16 = arith.constant 0 : index
    %c0_17 = arith.constant 0 : index
    %23 = vector.load %arg1[%c0_15, %c2, %c0_16, %c0_17] : memref<1x4x4x1600xf32, #tpu.memory_space<vmem>>, vector<1x1x4x1600xf32>
    %24 = vector.shape_cast %23 : vector<1x1x4x1600xf32> to vector<4x1600xf32>
    %cst_18 = arith.constant dense<0.000000e+00> : vector<4x64xf32>
    %25 = tpu.matmul %24, %0, %cst_18 {dimension_numbers = #tpu.dot_dimension_numbers<[1], [0], [0], [1], [0, 0, 1, 1], [], []>} : vector<4x1600xf32>, vector<1600x64xf32>, vector<4x64xf32> -> vector<4x64xf32>
    %26 = vector.broadcast %1 : vector<1x64xf32> to vector<4x64xf32>
    %27 = arith.addf %25, %26 : vector<4x64xf32>
    %cst_19 = arith.constant 0.000000e+00 : f32
    %28 = vector.broadcast %cst_19 : f32 to vector<4x64xf32>
    %29 = arith.cmpf ogt, %27, %28 : vector<4x64xf32>
    %cst_20 = arith.constant 2.000000e-01 : f32
    %30 = vector.broadcast %cst_20 : f32 to vector<4x64xf32>
    %31 = arith.mulf %27, %30 : vector<4x64xf32>
    %32 = arith.select %29, %27, %31 : vector<4x64xi1>, vector<4x64xf32>
    %33 = arith.addf %22, %32 : vector<4x64xf32>
    %c0_21 = arith.constant 0 : index
    %c3 = arith.constant 3 : index
    %c0_22 = arith.constant 0 : index
    %c0_23 = arith.constant 0 : index
    %34 = vector.load %arg1[%c0_21, %c3, %c0_22, %c0_23] : memref<1x4x4x1600xf32, #tpu.memory_space<vmem>>, vector<1x1x4x1600xf32>
    %35 = vector.shape_cast %34 : vector<1x1x4x1600xf32> to vector<4x1600xf32>
    %cst_24 = arith.constant dense<0.000000e+00> : vector<4x64xf32>
    %36 = tpu.matmul %35, %0, %cst_24 {dimension_numbers = #tpu.dot_dimension_numbers<[1], [0], [0], [1], [0, 0, 1, 1], [], []>} : vector<4x1600xf32>, vector<1600x64xf32>, vector<4x64xf32> -> vector<4x64xf32>
    %37 = vector.broadcast %1 : vector<1x64xf32> to vector<4x64xf32>
    %38 = arith.addf %36, %37 : vector<4x64xf32>
    %cst_25 = arith.constant 0.000000e+00 : f32
    %39 = vector.broadcast %cst_25 : f32 to vector<4x64xf32>
    %40 = arith.cmpf ogt, %38, %39 : vector<4x64xf32>
    %cst_26 = arith.constant 2.000000e-01 : f32
    %41 = vector.broadcast %cst_26 : f32 to vector<4x64xf32>
    %42 = arith.mulf %38, %41 : vector<4x64xf32>
    %43 = arith.select %40, %38, %42 : vector<4x64xi1>, vector<4x64xf32>
    %44 = arith.addf %33, %43 : vector<4x64xf32>
    %cst_27 = arith.constant 2.500000e-01 : f32
    %45 = vector.broadcast %cst_27 : f32 to vector<4x64xf32>
    %46 = arith.mulf %44, %45 : vector<4x64xf32>
    %c0_28 = arith.constant 0 : index
    %c0_29 = arith.constant 0 : index
    %c0_30 = arith.constant 0 : index
    %47 = vector.load %arg4[%c0_28, %c0_29, %c0_30] : memref<1x4x64xf32, #tpu.memory_space<vmem>>, vector<1x4x64xf32>
    %48 = vector.shape_cast %47 : vector<1x4x64xf32> to vector<4x64xf32>
    %49 = vector.shape_cast %46 : vector<4x64xf32> to vector<1x4x64xf32>
    tpu.vector_store %arg4[%c0_28, %c0_29, %c0_30], %49 {strides = array<i32>} : memref<1x4x64xf32, #tpu.memory_space<vmem>>, vector<1x4x64xf32>,
    return
  }
  func.func @transform_0(%arg0: i32) -> (i32, i32, i32, i32) {
    %c0_i32 = arith.constant 0 : i32
    %c0_i32_0 = arith.constant 0 : i32
    %c0_i32_1 = arith.constant 0 : i32
    %c0_i32_2 = arith.constant 0 : i32
    return %arg0, %c0_i32, %c0_i32_0, %c0_i32_1 : i32, i32, i32, i32
  }
  func.func @transform_1(%arg0: i32) -> (i32, i32) {
    %c0_i32 = arith.constant 0 : i32
    %c0_i32_0 = arith.constant 0 : i32
    %c0_i32_1 = arith.constant 0 : i32
    return %c0_i32, %c0_i32_0 : i32, i32
  }
  func.func @transform_2(%arg0: i32) -> (i32, i32) {
    %c0_i32 = arith.constant 0 : i32
    %c0_i32_0 = arith.constant 0 : i32
    %c0_i32_1 = arith.constant 0 : i32
    return %c0_i32, %c0_i32_0 : i32, i32
  }
  func.func @transform_3(%arg0: i32) -> (i32, i32, i32) {
    %c0_i32 = arith.constant 0 : i32
    %c0_i32_0 = arith.constant 0 : i32
    %c0_i32_1 = arith.constant 0 : i32
    return %arg0, %c0_i32, %c0_i32_0 : i32, i32, i32
  }
}

module attributes {stable_mosaic.version = 11 : i64} {
  func.func @_fc_fused_kernel(%arg0: i32, %arg1: memref<2x256xf32, #tpu.memory_space<vmem>>, %arg2: memref<256x512xf32, #tpu.memory_space<vmem>>, %arg3: memref<1x512xf32, #tpu.memory_space<vmem>>, %arg4: memref<512x64xf32, #tpu.memory_space<vmem>>, %arg5: memref<1x64xf32, #tpu.memory_space<vmem>>, %arg6: memref<64x1xf32, #tpu.memory_space<vmem>>, %arg7: memref<1x1xf32, #tpu.memory_space<vmem>>, %arg8: memref<2x1xf32, #tpu.memory_space<vmem>>) attributes {dimension_semantics = [#tpu.dimension_semantics<arbitrary>], iteration_bounds = array<i64: 1>, scalar_prefetch = 0 : i64, scratch_operands = 0 : i64, tpu.core_type = #tpu.core_type<tc>, window_params = [{pipeline_mode = #tpu.pipeline_mode<synchronous>, transform_indices = @transform_0, window_bounds = array<i64: 2, 256>}, {pipeline_mode = #tpu.pipeline_mode<synchronous>, transform_indices = @transform_1, window_bounds = array<i64: 256, 512>}, {pipeline_mode = #tpu.pipeline_mode<synchronous>, transform_indices = @transform_2, window_bounds = array<i64: 1, 512>}, {pipeline_mode = #tpu.pipeline_mode<synchronous>, transform_indices = @transform_3, window_bounds = array<i64: 512, 64>}, {pipeline_mode = #tpu.pipeline_mode<synchronous>, transform_indices = @transform_4, window_bounds = array<i64: 1, 64>}, {pipeline_mode = #tpu.pipeline_mode<synchronous>, transform_indices = @transform_5, window_bounds = array<i64: 64, 1>}, {pipeline_mode = #tpu.pipeline_mode<synchronous>, transform_indices = @transform_6, window_bounds = array<i64: 1, 1>}, {pipeline_mode = #tpu.pipeline_mode<synchronous>, transform_indices = @transform_7, window_bounds = array<i64: 2, 1>}]} {
    %c0 = arith.constant 0 : index
    %c0_0 = arith.constant 0 : index
    %0 = vector.load %arg1[%c0, %c0_0] : memref<2x256xf32, #tpu.memory_space<vmem>>, vector<2x256xf32>
    %c0_1 = arith.constant 0 : index
    %c0_2 = arith.constant 0 : index
    %1 = vector.load %arg2[%c0_1, %c0_2] : memref<256x512xf32, #tpu.memory_space<vmem>>, vector<256x512xf32>
    %cst = arith.constant dense<0.000000e+00> : vector<2x512xf32>
    %2 = tpu.matmul %0, %1, %cst {dimension_numbers = #tpu.dot_dimension_numbers<[1], [0], [0], [1], [0, 0, 1, 1], [], []>} : vector<2x256xf32>, vector<256x512xf32>, vector<2x512xf32> -> vector<2x512xf32>
    %c0_3 = arith.constant 0 : index
    %c0_4 = arith.constant 0 : index
    %3 = vector.load %arg3[%c0_3, %c0_4] : memref<1x512xf32, #tpu.memory_space<vmem>>, vector<1x512xf32>
    %4 = vector.broadcast %3 : vector<1x512xf32> to vector<2x512xf32>
    %5 = arith.addf %2, %4 : vector<2x512xf32>
    %cst_5 = arith.constant 0.000000e+00 : f32
    %6 = vector.broadcast %cst_5 : f32 to vector<2x512xf32>
    %7 = arith.cmpf ogt, %5, %6 : vector<2x512xf32>
    %cst_6 = arith.constant 2.000000e-01 : f32
    %8 = vector.broadcast %cst_6 : f32 to vector<2x512xf32>
    %9 = arith.mulf %5, %8 : vector<2x512xf32>
    %10 = arith.select %7, %5, %9 : vector<2x512xi1>, vector<2x512xf32>
    %c0_7 = arith.constant 0 : index
    %c0_8 = arith.constant 0 : index
    %11 = vector.load %arg4[%c0_7, %c0_8] : memref<512x64xf32, #tpu.memory_space<vmem>>, vector<512x64xf32>
    %cst_9 = arith.constant dense<0.000000e+00> : vector<2x64xf32>
    %12 = tpu.matmul %10, %11, %cst_9 {dimension_numbers = #tpu.dot_dimension_numbers<[1], [0], [0], [1], [0, 0, 1, 1], [], []>} : vector<2x512xf32>, vector<512x64xf32>, vector<2x64xf32> -> vector<2x64xf32>
    %c0_10 = arith.constant 0 : index
    %c0_11 = arith.constant 0 : index
    %13 = vector.load %arg5[%c0_10, %c0_11] : memref<1x64xf32, #tpu.memory_space<vmem>>, vector<1x64xf32>
    %14 = vector.broadcast %13 : vector<1x64xf32> to vector<2x64xf32>
    %15 = arith.addf %12, %14 : vector<2x64xf32>
    %cst_12 = arith.constant 0.000000e+00 : f32
    %16 = vector.broadcast %cst_12 : f32 to vector<2x64xf32>
    %17 = arith.cmpf ogt, %15, %16 : vector<2x64xf32>
    %cst_13 = arith.constant 2.000000e-01 : f32
    %18 = vector.broadcast %cst_13 : f32 to vector<2x64xf32>
    %19 = arith.mulf %15, %18 : vector<2x64xf32>
    %20 = arith.select %17, %15, %19 : vector<2x64xi1>, vector<2x64xf32>
    %c0_14 = arith.constant 0 : index
    %c0_15 = arith.constant 0 : index
    %21 = vector.load %arg6[%c0_14, %c0_15] : memref<64x1xf32, #tpu.memory_space<vmem>>, vector<64x1xf32>
    %cst_16 = arith.constant dense<0.000000e+00> : vector<2x1xf32>
    %22 = tpu.matmul %20, %21, %cst_16 {dimension_numbers = #tpu.dot_dimension_numbers<[1], [0], [0], [1], [0, 0, 1, 1], [], []>} : vector<2x64xf32>, vector<64x1xf32>, vector<2x1xf32> -> vector<2x1xf32>
    %c0_17 = arith.constant 0 : index
    %c0_18 = arith.constant 0 : index
    %23 = vector.load %arg7[%c0_17, %c0_18] : memref<1x1xf32, #tpu.memory_space<vmem>>, vector<1x1xf32>
    %24 = vector.broadcast %23 : vector<1x1xf32> to vector<2x1xf32>
    %25 = arith.addf %22, %24 : vector<2x1xf32>
    %c0_19 = arith.constant 0 : index
    %c0_20 = arith.constant 0 : index
    %26 = vector.load %arg8[%c0_19, %c0_20] : memref<2x1xf32, #tpu.memory_space<vmem>>, vector<2x1xf32>
    tpu.vector_store %arg8[%c0_19, %c0_20], %25 {strides = array<i32>} : memref<2x1xf32, #tpu.memory_space<vmem>>, vector<2x1xf32>,
    return
  }
  func.func @transform_0(%arg0: i32) -> (i32, i32) {
    %c0_i32 = arith.constant 0 : i32
    %c0_i32_0 = arith.constant 0 : i32
    %c0_i32_1 = arith.constant 0 : i32
    return %c0_i32, %c0_i32_0 : i32, i32
  }
  func.func @transform_1(%arg0: i32) -> (i32, i32) {
    %c0_i32 = arith.constant 0 : i32
    %c0_i32_0 = arith.constant 0 : i32
    %c0_i32_1 = arith.constant 0 : i32
    return %c0_i32, %c0_i32_0 : i32, i32
  }
  func.func @transform_2(%arg0: i32) -> (i32, i32) {
    %c0_i32 = arith.constant 0 : i32
    %c0_i32_0 = arith.constant 0 : i32
    %c0_i32_1 = arith.constant 0 : i32
    return %c0_i32, %c0_i32_0 : i32, i32
  }
  func.func @transform_3(%arg0: i32) -> (i32, i32) {
    %c0_i32 = arith.constant 0 : i32
    %c0_i32_0 = arith.constant 0 : i32
    %c0_i32_1 = arith.constant 0 : i32
    return %c0_i32, %c0_i32_0 : i32, i32
  }
  func.func @transform_4(%arg0: i32) -> (i32, i32) {
    %c0_i32 = arith.constant 0 : i32
    %c0_i32_0 = arith.constant 0 : i32
    %c0_i32_1 = arith.constant 0 : i32
    return %c0_i32, %c0_i32_0 : i32, i32
  }
  func.func @transform_5(%arg0: i32) -> (i32, i32) {
    %c0_i32 = arith.constant 0 : i32
    %c0_i32_0 = arith.constant 0 : i32
    %c0_i32_1 = arith.constant 0 : i32
    return %c0_i32, %c0_i32_0 : i32, i32
  }
  func.func @transform_6(%arg0: i32) -> (i32, i32) {
    %c0_i32 = arith.constant 0 : i32
    %c0_i32_0 = arith.constant 0 : i32
    %c0_i32_1 = arith.constant 0 : i32
    return %c0_i32, %c0_i32_0 : i32, i32
  }
  func.func @transform_7(%arg0: i32) -> (i32, i32) {
    %c0_i32 = arith.constant 0 : i32
    %c0_i32_0 = arith.constant 0 : i32
    %c0_i32_1 = arith.constant 0 : i32
    return %c0_i32, %c0_i32_0 : i32, i32
  }
}

</mosaic_0001>

<llo_original>
// kernel: discriminator_forward.4
$region0: #{discriminator_forward.4}
  #allocation0 [shape = 'u32[]', space=smem, size = 0x4, offset = 0x4, fixed_abs, tag = 'smem constant byte address 0x4 - core index']
  #allocation1 [shape = 'u32[144,128]{1,0:T(1,128)}', space=vmem, size = 0x12000, scoped, tag = 'internal scratch']
  %s0 = inlined_call_operand.vmem [shape: f32[2,4,400,81], index: 0, kind: input, shape index: {}]
  %s1 = inlined_call_operand.vmem [shape: f32[81,32], index: 1, kind: input, shape index: {}]
  %s2 = inlined_call_operand.vmem [shape: f32[1,32], index: 2, kind: input, shape index: {}]
  %s3 = inlined_call_operand.vmem [shape: f32[2,400,32], index: 3, kind: output, shape index: {}]
  %s4 = sld [smem:[#allocation0]]
  $region45: #{discriminator_forward.4} parent=0
    _
  %s6 = ssub.s32 1, %s4
  %s7 = scalar_select 0, %s6, %s4
  loop: start=0, step=1, limit=4
  $region2: #{discriminator_forward.4} parent=0 // loop_pre_header
    _
  $region3: #{discriminator_forward.4} parent=0 // loop_header
    %s9 = sphi 0, %s13
    %p10 = scmp.ge.s32.totalorder %s9, 4
    %s19 = sphi 0, %s21
    %s22 = sphi 0, %s19
    %s23 = sphi 0, %s22
    %s39 = sphi 0, %s23
    %s43 = sphi 0, %s43
    %s45 = sphi 0, %s43
    %s46 = sphi 0, %s45
    %s60 = sphi 0, %s46
    %s64 = sphi 0, %s64
    %s66 = sphi 0, %s64
    %s67 = sphi 0, %s66
    %s81 = sphi 0, %s67
    %s87 = sphi 0, %s89
    %s90 = sphi 0, %s87
    %s91 = sphi 0, %s90
    %s107 = sphi 0, %s91
  $region4: #{discriminator_forward.4} parent=0 // loop_header_branch
    %12 = sbr.rel (%p10) target = $region8
  $region5: #{discriminator_forward.4} parent=0 // loop_body
    %s14 = ssub.s32 %s9, 1
    %s15 = ssub.s32 %s9, 2
    %s16 = sadd.s32 %s9, 1
    %s17 = ssub.s32 %s9, %s16
    %p18 = scmp.eq.s32.totalorder %s17, 0
    %s20 = sadd.s32 %s19, 1
    %s21 = scalar_select %p18, %s19, %s20
    %p24 = pneg %p18
    %p25 = scmp.eq.s32.totalorder %s9, 1
    %p26 = por %p24, %p25
    %p27 = scmp.ne.s32.totalorder %s19, %s22
    %p28 = scmp.eq.s32.totalorder %s9, 0
    %p29 = por %p27, %p28
    %p30 = scmp.ne.s32.totalorder %s19, %s22
    %p31 = scmp.eq.s32.totalorder %s14, 1
    %p32 = por %p30, %p31
    %p33 = scmp.ne.s32.totalorder %s22, %s23
    %p34 = scmp.eq.s32.totalorder %s14, 0
    %p35 = por %p33, %p34
    %p36 = scmp.ne.s32.totalorder %s22, %s23
    %p37 = scmp.eq.s32.totalorder %s15, 1
    %p38 = por %p36, %p37
    %p40 = scmp.ne.s32.totalorder %s23, %s39
    %p41 = scmp.eq.s32.totalorder %s15, 0
    %p42 = por %p40, %p41
    %s44 = sadd.s32 %s43, 1
    %p47 = scmp.eq.s32.totalorder %s9, 1
    %p48 = scmp.ne.s32.totalorder %s43, %s45
    %p49 = scmp.eq.s32.totalorder %s9, 0
    %p50 = por %p48, %p49
    %p51 = scmp.ne.s32.totalorder %s43, %s45
    %p52 = scmp.eq.s32.totalorder %s14, 1
    %p53 = por %p51, %p52
    %p54 = scmp.ne.s32.totalorder %s45, %s46
    %p55 = scmp.eq.s32.totalorder %s14, 0
    %p56 = por %p54, %p55
    %p57 = scmp.ne.s32.totalorder %s45, %s46
    %p58 = scmp.eq.s32.totalorder %s15, 1
    %p59 = por %p57, %p58
    %p61 = scmp.ne.s32.totalorder %s46, %s60
    %p62 = scmp.eq.s32.totalorder %s15, 0
    %p63 = por %p61, %p62
    %s65 = sadd.s32 %s64, 1
    %p68 = scmp.eq.s32.totalorder %s9, 1
    %p69 = scmp.ne.s32.totalorder %s64, %s66
    %p70 = scmp.eq.s32.totalorder %s9, 0
    %p71 = por %p69, %p70
    %p72 = scmp.ne.s32.totalorder %s64, %s66
    %p73 = scmp.eq.s32.totalorder %s14, 1
    %p74 = por %p72, %p73
    %p75 = scmp.ne.s32.totalorder %s66, %s67
    %p76 = scmp.eq.s32.totalorder %s14, 0
    %p77 = por %p75, %p76
    %p78 = scmp.ne.s32.totalorder %s66, %s67
    %p79 = scmp.eq.s32.totalorder %s15, 1
    %p80 = por %p78, %p79
    %p82 = scmp.ne.s32.totalorder %s67, %s81
    %p83 = scmp.eq.s32.totalorder %s15, 0
    %p84 = por %p82, %p83
    %s85 = ssub.s32 %s9, %s16
    %p86 = scmp.eq.s32.totalorder %s85, 0
    %s88 = sadd.s32 %s87, 1
    %s89 = scalar_select %p86, %s87, %s88
    %p92 = pneg %p86
    %p93 = scmp.eq.s32.totalorder %s9, 1
    %p94 = por %p92, %p93
    %p95 = scmp.ne.s32.totalorder %s87, %s90
    %p96 = scmp.eq.s32.totalorder %s9, 0
    %p97 = por %p95, %p96
    %p98 = scmp.ne.s32.totalorder %s87, %s90
    %p99 = scmp.eq.s32.totalorder %s14, 1
    %p100 = por %p98, %p99
    %p101 = scmp.ne.s32.totalorder %s90, %s91
    %p102 = scmp.eq.s32.totalorder %s14, 0
    %p103 = por %p101, %p102
    %p104 = scmp.ne.s32.totalorder %s90, %s91
    %p105 = scmp.eq.s32.totalorder %s15, 1
    %p106 = por %p104, %p105
    %p108 = scmp.ne.s32.totalorder %s91, %s107
    %p109 = scmp.eq.s32.totalorder %s15, 0
    %p110 = por %p108, %p109
    %p111 = scmp.le.s32.totalorder 1, %s9
    %p112 = scmp.lt.s32.totalorder %s9, 3
    %p113 = pnand %p111, %p112
    %p114 = pneg %p113
    // Predicated region
    $region9: #{discriminator_forward.4} parent=5 // pred_check
      _
    $region10: #{discriminator_forward.4} parent=5 // pred_check_branch
      %116 = sbr.rel (%p113) target = $region12
    $region11: #{discriminator_forward.4} parent=5 // pred_region
      %s117 = ssub.s32 %s9, 1
      // Predicated region
      $region13: #{discriminator_forward.4} parent=11 // pred_check
        %p118 = pneg %p56
      $region14: #{discriminator_forward.4} parent=11 // pred_check_branch
        %120 = sbr.rel (%p118) target = $region16
      $region15: #{discriminator_forward.4} parent=11 // pred_region
        _
      $region16: #{discriminator_forward.4} parent=11 // pred_fallthru
        _
      // Predicated region
      $region17: #{discriminator_forward.4} parent=11 // pred_check
        %p121 = pneg %p77
      $region18: #{discriminator_forward.4} parent=11 // pred_check_branch
        %123 = sbr.rel (%p121) target = $region20
      $region19: #{discriminator_forward.4} parent=11 // pred_region
        _
      $region20: #{discriminator_forward.4} parent=11 // pred_fallthru
        _
    $region12: #{discriminator_forward.4} parent=5 // pred_fallthru
      _
    %p124 = scmp.lt.s32.totalorder %s9, 2
    // Predicated region
    $region21: #{discriminator_forward.4} parent=5 // pred_check
      %p125 = pneg %p124
    $region22: #{discriminator_forward.4} parent=5 // pred_check_branch
      %127 = sbr.rel (%p125) target = $region24
    $region23: #{discriminator_forward.4} parent=5 // pred_region
      // Predicated region
      $region25: #{discriminator_forward.4} parent=23 // pred_check
        %p128 = pneg %p29
      $region26: #{discriminator_forward.4} parent=23 // pred_check_branch
        %130 = sbr.rel (%p128) target = $region28
      $region27: #{discriminator_forward.4} parent=23 // pred_region
        %p131 = scmp.lt.s32.totalorder %s9, 1
        %s132 = scalar_select %p131, %s9, 1
        %s133 = smul.addr %s132, 200
        %s134 = smul.addr %s133, 8
        %s135 = scalar_lea.vmem %s0, %s134
      $region28: #{discriminator_forward.4} parent=23 // pred_fallthru
        _
    $region24: #{discriminator_forward.4} parent=5 // pred_fallthru
      _
    %p136 = scmp.le.s32.totalorder 1, %s9
    %p137 = scmp.lt.s32.totalorder %s9, 3
    %p138 = pnand %p136, %p137
    %p139 = pneg %p138
    // Predicated region
    $region29: #{discriminator_forward.4} parent=5 // pred_check
      _
    $region30: #{discriminator_forward.4} parent=5 // pred_check_branch
      %141 = sbr.rel (%p138) target = $region32
    $region31: #{discriminator_forward.4} parent=5 // pred_region
      %s142 = ssub.s32 %s9, 1
      %p143 = scmp.lt.s32.totalorder %s14, 1
      %s144 = scalar_select %p143, %s14, 1
      %s145 = smul.addr %s144, 200
      %s146 = smul.addr %s145, 8
      %s147 = scalar_lea.vmem %s0, %s146
      %p148 = pneg %p35
      %p149 = pneg %p32
      %p150 = pneg %p56
      %p151 = pneg %p53
      %p152 = pneg %p77
      %p153 = pneg %p74
      %p154 = pneg %p103
      %p155 = pneg %p100
      %p156 = scmp.lt.s32.totalorder %s14, 1
      %s157 = scalar_select %p156, %s14, 1
      %s158 = smul.addr %s157, 50
      %s159 = smul.addr %s158, 8
      %s160 = scalar_lea.vmem %s3, %s159
      %p161 = scmp.lt.s32.totalorder %s14, 1
      %s162 = scalar_select %p161, %s14, 1
      %s163 = smul.addr %s162, 200
      %s164 = smul.addr %s163, 8
      %s165 = scalar_lea.vmem %s0, %s164
      %p166 = scmp.lt.s32.totalorder %s14, 1
      %s167 = scalar_select %p166, %s14, 1
      %s168 = smul.addr %s167, 50
      %s169 = smul.addr %s168, 8
      %s170 = scalar_lea.vmem %s3, %s169
      %v171 = vld [vmem:[%s1] sm:$0xff]
      %v172 = vld [vmem:[%s1 + $0x8] sm:$0xff]
      %v173 = vld [vmem:[%s1 + $0x10] sm:$0xff]
      %v174 = vld [vmem:[%s1 + $0x18] sm:$0xff]
      %v175 = vld [vmem:[%s1 + $0x20] sm:$0xff]
      %v176 = vld [vmem:[%s1 + $0x28] sm:$0xff]
      %v177 = vld [vmem:[%s1 + $0x30] sm:$0xff]
      %v178 = vld [vmem:[%s1 + $0x38] sm:$0xff]
      %v179 = vld [vmem:[%s1 + $0x40] sm:$0xff]
      %v180 = vld [vmem:[%s1 + $0x48] sm:$0xff]
      %v181 = vld [vmem:[%s1 + $0x50] sm:$0x1]
      %v182 = vld [vmem:[%s2] sm:$0x1]
      %v183 = vld [vmem:[%s165] sm:$0xff]
      %v184 = vld [vmem:[%s165 + $0x8] sm:$0xff]
      %v185 = vld [vmem:[%s165 + $0x10] sm:$0xff]
      %v186 = vld [vmem:[%s165 + $0x18] sm:$0xff]
      %v187 = vld [vmem:[%s165 + $0x20] sm:$0xff]
      %v188 = vld [vmem:[%s165 + $0x28] sm:$0xff]
      %v189 = vld [vmem:[%s165 + $0x30] sm:$0xff]
      %v190 = vld [vmem:[%s165 + $0x38] sm:$0xff]
      %v191 = vld [vmem:[%s165 + $0x40] sm:$0xff]
      %v192 = vld [vmem:[%s165 + $0x48] sm:$0xff]
      %v193 = vld [vmem:[%s165 + $0x50] sm:$0xff]
      %v194 = vld [vmem:[%s165 + $0x58] sm:$0xff]
      %v195 = vld [vmem:[%s165 + $0x60] sm:$0xff]
      %v196 = vld [vmem:[%s165 + $0x68] sm:$0xff]
      %v197 = vld [vmem:[%s165 + $0x70] sm:$0xff]
      %v198 = vld [vmem:[%s165 + $0x78] sm:$0xff]
      %v199 = vld [vmem:[%s165 + $0x80] sm:$0xff]
      %v200 = vld [vmem:[%s165 + $0x88] sm:$0xff]
      %v201 = vld [vmem:[%s165 + $0x90] sm:$0xff]
      %v202 = vld [vmem:[%s165 + $0x98] sm:$0xff]
      %v203 = vld [vmem:[%s165 + $0xa0] sm:$0xff]
      %v204 = vld [vmem:[%s165 + $0xa8] sm:$0xff]
      %v205 = vld [vmem:[%s165 + $0xb0] sm:$0xff]
      %v206 = vld [vmem:[%s165 + $0xb8] sm:$0xff]
      %v207 = vld [vmem:[%s165 + $0xc0] sm:$0xff]
      %v208 = vld [vmem:[%s165 + $0xc8] sm:$0xff]
      %v209 = vld [vmem:[%s165 + $0xd0] sm:$0xff]
      %v210 = vld [vmem:[%s165 + $0xd8] sm:$0xff]
      %v211 = vld [vmem:[%s165 + $0xe0] sm:$0xff]
      %v212 = vld [vmem:[%s165 + $0xe8] sm:$0xff]
      %v213 = vld [vmem:[%s165 + $0xf0] sm:$0xff]
      %v214 = vld [vmem:[%s165 + $0xf8] sm:$0xff]
      %v215 = vld [vmem:[%s165 + $0x100] sm:$0xff]
      %v216 = vld [vmem:[%s165 + $0x108] sm:$0xff]
      %v217 = vld [vmem:[%s165 + $0x110] sm:$0xff]
      %v218 = vld [vmem:[%s165 + $0x118] sm:$0xff]
      %v219 = vld [vmem:[%s165 + $0x120] sm:$0xff]
      %v220 = vld [vmem:[%s165 + $0x128] sm:$0xff]
      %v221 = vld [vmem:[%s165 + $0x130] sm:$0xff]
      %v222 = vld [vmem:[%s165 + $0x138] sm:$0xff]
      %v223 = vld [vmem:[%s165 + $0x140] sm:$0xff]
      %v224 = vld [vmem:[%s165 + $0x148] sm:$0xff]
      %v225 = vld [vmem:[%s165 + $0x150] sm:$0xff]
      %v226 = vld [vmem:[%s165 + $0x158] sm:$0xff]
      %v227 = vld [vmem:[%s165 + $0x160] sm:$0xff]
      %v228 = vld [vmem:[%s165 + $0x168] sm:$0xff]
      %v229 = vld [vmem:[%s165 + $0x170] sm:$0xff]
      %v230 = vld [vmem:[%s165 + $0x178] sm:$0xff]
      %v231 = vld [vmem:[%s165 + $0x180] sm:$0xff]
      %v232 = vld [vmem:[%s165 + $0x188] sm:$0xff]
      %v234 = vlaneseq
      %v235 = vshrl.u32 %v234, 7
      %v236 = vsub.s32 0, %v235
      %v237 = vrot.slane %v182, %v236
      %vm239 = vcmask 662528
      %v241 = vsel %vm239, %v183, 0
      %v244 = vsel %vm239, %v184, 0
      %v247 = vsel %vm239, %v185, 0
      %v250 = vsel %vm239, %v186, 0
      %v253 = vsel %vm239, %v187, 0
      %v256 = vsel %vm239, %v188, 0
      %v259 = vsel %vm239, %v189, 0
      %v262 = vsel %vm239, %v190, 0
      %v265 = vsel %vm239, %v191, 0
      %v268 = vsel %vm239, %v192, 0
      %v271 = vsel %vm239, %v193, 0
      %v274 = vsel %vm239, %v194, 0
      %v277 = vsel %vm239, %v195, 0
      %v280 = vsel %vm239, %v196, 0
      %v283 = vsel %vm239, %v197, 0
      %v286 = vsel %vm239, %v198, 0
      %v289 = vsel %vm239, %v199, 0
      %v292 = vsel %vm239, %v200, 0
      %v295 = vsel %vm239, %v201, 0
      %v298 = vsel %vm239, %v202, 0
      %v301 = vsel %vm239, %v203, 0
      %v304 = vsel %vm239, %v204, 0
      %v307 = vsel %vm239, %v205, 0
      %v310 = vsel %vm239, %v206, 0
      %v313 = vsel %vm239, %v207, 0
      %v316 = vsel %vm239, %v208, 0
      %v319 = vsel %vm239, %v209, 0
      %v322 = vsel %vm239, %v210, 0
      %v325 = vsel %vm239, %v211, 0
      %v328 = vsel %vm239, %v212, 0
      %v331 = vsel %vm239, %v213, 0
      %v334 = vsel %vm239, %v214, 0
      %v337 = vsel %vm239, %v215, 0
      %v340 = vsel %vm239, %v216, 0
      %v343 = vsel %vm239, %v217, 0
      %v346 = vsel %vm239, %v218, 0
      %v349 = vsel %vm239, %v219, 0
      %v352 = vsel %vm239, %v220, 0
      %v355 = vsel %vm239, %v221, 0
      %v358 = vsel %vm239, %v222, 0
      %v361 = vsel %vm239, %v223, 0
      %v364 = vsel %vm239, %v224, 0
      %v367 = vsel %vm239, %v225, 0
      %v370 = vsel %vm239, %v226, 0
      %v373 = vsel %vm239, %v227, 0
      %v376 = vsel %vm239, %v228, 0
      %v379 = vsel %vm239, %v229, 0
      %v382 = vsel %vm239, %v230, 0
      %v385 = vsel %vm239, %v231, 0
      %v388 = vsel %vm239, %v232, 0
      %vm390 = vcmask 1040384
      %v392 = vsel %vm390, %v181, 0
      %394 = vmatprep.subr.mxu0 0.0
      %395 = vmatpush1.msra.mxu0 0.0
      %396 = vmatprep.subr.mxu0 0.0
      %397 = vmatpush1.msra.mxu0 0.0
      %398 = vmatprep.subr.mxu0 0.0
      %399 = vmatpush1.msra.mxu0 0.0
      %400 = vmatprep.subr.mxu0 0.0
      %401 = vmatpush1.msra.mxu0 0.0
      %402 = vmatprep.subr.mxu0 0.0
      %403 = vmatpush1.msra.mxu0 0.0
      %404 = vmatprep.subr.mxu0 0.0
      %405 = vmatpush1.msra.mxu0 %v392
      %406 = vmatprep.subr.mxu0 0.0
      %407 = vmatpush1.msra.mxu0 %v180
      %408 = vmatprep.subr.mxu0 0.0
      %409 = vmatpush1.msra.mxu0 %v179
      %410 = vmatprep.subr.mxu0 0.0
      %411 = vmatpush1.msra.mxu0 %v178
      %412 = vmatprep.subr.mxu0 0.0
      %413 = vmatpush1.msra.mxu0 %v177
      %414 = vmatprep.subr.mxu0 0.0
      %415 = vmatpush1.msra.mxu0 %v176
      %416 = vmatprep.subr.mxu0 0.0
      %417 = vmatpush1.msra.mxu0 %v175
      %418 = vmatprep.subr.mxu0 0.0
      %419 = vmatpush1.msra.mxu0 %v174
      %420 = vmatprep.subr.mxu0 0.0
      %421 = vmatpush1.msra.mxu0 %v173
      %422 = vmatprep.subr.mxu0 0.0
      %423 = vmatpush1.msra.mxu0 %v172
      %424 = vmatprep.subr.mxu0 0.0
      %425 = vmatpush1.msra.mxu0 %v171
      %426 = vmatprep.subr.mxu0 0.0
      %427 = vmatpush2.msra.mxu0 0.0
      %428 = vmatprep.subr.mxu0 0.0
      %429 = vmatpush2.msra.mxu0 0.0
      %430 = vmatprep.subr.mxu0 0.0
      %431 = vmatpush2.msra.mxu0 0.0
      %432 = vmatprep.subr.mxu0 0.0
      %433 = vmatpush2.msra.mxu0 0.0
      %434 = vmatprep.subr.mxu0 0.0
      %435 = vmatpush2.msra.mxu0 0.0
      %436 = vmatprep.subr.mxu0 0.0
      %437 = vmatpush2.msra.mxu0 0.0
      %438 = vmatprep.subr.mxu0 0.0
      %439 = vmatpush2.msra.mxu0 0.0
      %440 = vmatprep.subr.mxu0 0.0
      %441 = vmatpush2.msra.mxu0 0.0
      %442 = vmatprep.subr.mxu0 0.0
      %443 = vmatpush2.msra.mxu0 0.0
      %444 = vmatprep.subr.mxu0 0.0
      %445 = vmatpush2.msra.mxu0 0.0
      %446 = vmatprep.subr.mxu0 0.0
      %447 = vmatpush2.msra.mxu0 0.0
      %448 = vmatprep.subr.mxu0 0.0
      %449 = vmatpush2.msra.mxu0 0.0
      %450 = vmatprep.subr.mxu0 0.0
      %451 = vmatpush2.msra.mxu0 0.0
      %452 = vmatprep.subr.mxu0 0.0
      %453 = vmatpush2.msra.mxu0 0.0
      %454 = vmatprep.subr.mxu0 0.0
      %455 = vmatpush2.msra.mxu0 0.0
      %456 = vmatprep.subr.mxu0 0.0
      %457 = vmatpush2.msra.mxu0 0.0
      %458 = vmatprep.mubr.f32.mxu0 0.0
      %459 = vmatmul.mubr.f32.gmra.mxu0 %v241
      %v460 = vpop.f32.mrf.mxu0
      %v461 = vadd.f32 %v237, %v460
      %v462 = vpop.f32.mrf.mxu0
      %463 = vmatprep.mubr.f32.mxu0 0.0
      %464 = vmatmul.mubr.f32.gmra.mxu0 %v244
      %v465 = vpop.f32.mrf.mxu0
      %v466 = vadd.f32 %v237, %v465
      %v467 = vpop.f32.mrf.mxu0
      %468 = vmatprep.mubr.f32.mxu0 0.0
      %469 = vmatmul.mubr.f32.gmra.mxu0 %v247
      %v470 = vpop.f32.mrf.mxu0
      %v471 = vadd.f32 %v237, %v470
      %v472 = vpop.f32.mrf.mxu0
      %473 = vmatprep.mubr.f32.mxu0 0.0
      %474 = vmatmul.mubr.f32.gmra.mxu0 %v250
      %v475 = vpop.f32.mrf.mxu0
      %v476 = vadd.f32 %v237, %v475
      %v477 = vpop.f32.mrf.mxu0
      %478 = vmatprep.mubr.f32.mxu0 0.0
      %479 = vmatmul.mubr.f32.gmra.mxu0 %v253
      %v480 = vpop.f32.mrf.mxu0
      %v481 = vadd.f32 %v237, %v480
      %v482 = vpop.f32.mrf.mxu0
      %483 = vmatprep.mubr.f32.mxu0 0.0
      %484 = vmatmul.mubr.f32.gmra.mxu0 %v256
      %v485 = vpop.f32.mrf.mxu0
      %v486 = vadd.f32 %v237, %v485
      %v487 = vpop.f32.mrf.mxu0
      %488 = vmatprep.mubr.f32.mxu0 0.0
      %489 = vmatmul.mubr.f32.gmra.mxu0 %v259
      %v490 = vpop.f32.mrf.mxu0
      %v491 = vadd.f32 %v237, %v490
      %v492 = vpop.f32.mrf.mxu0
      %493 = vmatprep.mubr.f32.mxu0 0.0
      %494 = vmatmul.mubr.f32.gmra.mxu0 %v262
      %v495 = vpop.f32.mrf.mxu0
      %v496 = vadd.f32 %v237, %v495
      %v497 = vpop.f32.mrf.mxu0
      %498 = vmatprep.mubr.f32.mxu0 0.0
      %499 = vmatmul.mubr.f32.gmra.mxu0 %v265
      %v500 = vpop.f32.mrf.mxu0
      %v501 = vadd.f32 %v237, %v500
      %v502 = vpop.f32.mrf.mxu0
      %503 = vmatprep.mubr.f32.mxu0 0.0
      %504 = vmatmul.mubr.f32.gmra.mxu0 %v268
      %v505 = vpop.f32.mrf.mxu0
      %v506 = vadd.f32 %v237, %v505
      %v507 = vpop.f32.mrf.mxu0
      %508 = vmatprep.mubr.f32.mxu0 0.0
      %509 = vmatmul.mubr.f32.gmra.mxu0 %v271
      %v510 = vpop.f32.mrf.mxu0
      %v511 = vadd.f32 %v237, %v510
      %v512 = vpop.f32.mrf.mxu0
      %513 = vmatprep.mubr.f32.mxu0 0.0
      %514 = vmatmul.mubr.f32.gmra.mxu0 %v274
      %v515 = vpop.f32.mrf.mxu0
      %v516 = vadd.f32 %v237, %v515
      %v517 = vpop.f32.mrf.mxu0
      %518 = vmatprep.mubr.f32.mxu0 0.0
      %519 = vmatmul.mubr.f32.gmra.mxu0 %v277
      %v520 = vpop.f32.mrf.mxu0
      %v521 = vadd.f32 %v237, %v520
      %v522 = vpop.f32.mrf.mxu0
      %523 = vmatprep.mubr.f32.mxu0 0.0
      %524 = vmatmul.mubr.f32.gmra.mxu0 %v280
      %v525 = vpop.f32.mrf.mxu0
      %v526 = vadd.f32 %v237, %v525
      %v527 = vpop.f32.mrf.mxu0
      %528 = vmatprep.mubr.f32.mxu0 0.0
      %529 = vmatmul.mubr.f32.gmra.mxu0 %v283
      %v530 = vpop.f32.mrf.mxu0
      %v531 = vadd.f32 %v237, %v530
      %v532 = vpop.f32.mrf.mxu0
      %533 = vmatprep.mubr.f32.mxu0 0.0
      %534 = vmatmul.mubr.f32.gmra.mxu0 %v286
      %v535 = vpop.f32.mrf.mxu0
      %v536 = vadd.f32 %v237, %v535
      %v537 = vpop.f32.mrf.mxu0
      %538 = vmatprep.mubr.f32.mxu0 0.0
      %539 = vmatmul.mubr.f32.gmra.mxu0 %v289
      %v540 = vpop.f32.mrf.mxu0
      %v541 = vadd.f32 %v237, %v540
      %v542 = vpop.f32.mrf.mxu0
      %543 = vmatprep.mubr.f32.mxu0 0.0
      %544 = vmatmul.mubr.f32.gmra.mxu0 %v292
      %v545 = vpop.f32.mrf.mxu0
      %v546 = vadd.f32 %v237, %v545
      %v547 = vpop.f32.mrf.mxu0
      %548 = vmatprep.mubr.f32.mxu0 0.0
      %549 = vmatmul.mubr.f32.gmra.mxu0 %v295
      %v550 = vpop.f32.mrf.mxu0
      %v551 = vadd.f32 %v237, %v550
      %v552 = vpop.f32.mrf.mxu0
      %553 = vmatprep.mubr.f32.mxu0 0.0
      %554 = vmatmul.mubr.f32.gmra.mxu0 %v298
      %v555 = vpop.f32.mrf.mxu0
      %v556 = vadd.f32 %v237, %v555
      %v557 = vpop.f32.mrf.mxu0
      %558 = vmatprep.mubr.f32.mxu0 0.0
      %559 = vmatmul.mubr.f32.gmra.mxu0 %v301
      %v560 = vpop.f32.mrf.mxu0
      %v561 = vadd.f32 %v237, %v560
      %v562 = vpop.f32.mrf.mxu0
      %563 = vmatprep.mubr.f32.mxu0 0.0
      %564 = vmatmul.mubr.f32.gmra.mxu0 %v304
      %v565 = vpop.f32.mrf.mxu0
      %v566 = vadd.f32 %v237, %v565
      %v567 = vpop.f32.mrf.mxu0
      %568 = vmatprep.mubr.f32.mxu0 0.0
      %569 = vmatmul.mubr.f32.gmra.mxu0 %v307
      %v570 = vpop.f32.mrf.mxu0
      %v571 = vadd.f32 %v237, %v570
      %v572 = vpop.f32.mrf.mxu0
      %573 = vmatprep.mubr.f32.mxu0 0.0
      %574 = vmatmul.mubr.f32.gmra.mxu0 %v310
      %v575 = vpop.f32.mrf.mxu0
      %v576 = vadd.f32 %v237, %v575
      %v577 = vpop.f32.mrf.mxu0
      %578 = vmatprep.mubr.f32.mxu0 0.0
      %579 = vmatmul.mubr.f32.gmra.mxu0 %v313
      %v580 = vpop.f32.mrf.mxu0
      %v581 = vadd.f32 %v237, %v580
      %v582 = vpop.f32.mrf.mxu0
      %583 = vmatprep.mubr.f32.mxu0 0.0
      %584 = vmatmul.mubr.f32.gmra.mxu0 %v316
      %v585 = vpop.f32.mrf.mxu0
      %v586 = vadd.f32 %v237, %v585
      %v587 = vpop.f32.mrf.mxu0
      %588 = vmatprep.mubr.f32.mxu0 0.0
      %589 = vmatmul.mubr.f32.gmra.mxu0 %v319
      %v590 = vpop.f32.mrf.mxu0
      %v591 = vadd.f32 %v237, %v590
      %v592 = vpop.f32.mrf.mxu0
      %593 = vmatprep.mubr.f32.mxu0 0.0
      %594 = vmatmul.mubr.f32.gmra.mxu0 %v322
      %v595 = vpop.f32.mrf.mxu0
      %v596 = vadd.f32 %v237, %v595
      %v597 = vpop.f32.mrf.mxu0
      %598 = vmatprep.mubr.f32.mxu0 0.0
      %599 = vmatmul.mubr.f32.gmra.mxu0 %v325
      %v600 = vpop.f32.mrf.mxu0
      %v601 = vadd.f32 %v237, %v600
      %v602 = vpop.f32.mrf.mxu0
      %603 = vmatprep.mubr.f32.mxu0 0.0
      %604 = vmatmul.mubr.f32.gmra.mxu0 %v328
      %v605 = vpop.f32.mrf.mxu0
      %v606 = vadd.f32 %v237, %v605
      %v607 = vpop.f32.mrf.mxu0
      %608 = vmatprep.mubr.f32.mxu0 0.0
      %609 = vmatmul.mubr.f32.gmra.mxu0 %v331
      %v610 = vpop.f32.mrf.mxu0
      %v611 = vadd.f32 %v237, %v610
      %v612 = vpop.f32.mrf.mxu0
      %613 = vmatprep.mubr.f32.mxu0 0.0
      %614 = vmatmul.mubr.f32.gmra.mxu0 %v334
      %v615 = vpop.f32.mrf.mxu0
      %v616 = vadd.f32 %v237, %v615
      %v617 = vpop.f32.mrf.mxu0
      %618 = vmatprep.mubr.f32.mxu0 0.0
      %619 = vmatmul.mubr.f32.gmra.mxu0 %v337
      %v620 = vpop.f32.mrf.mxu0
      %v621 = vadd.f32 %v237, %v620
      %v622 = vpop.f32.mrf.mxu0
      %623 = vmatprep.mubr.f32.mxu0 0.0
      %624 = vmatmul.mubr.f32.gmra.mxu0 %v340
      %v625 = vpop.f32.mrf.mxu0
      %v626 = vadd.f32 %v237, %v625
      %v627 = vpop.f32.mrf.mxu0
      %628 = vmatprep.mubr.f32.mxu0 0.0
      %629 = vmatmul.mubr.f32.gmra.mxu0 %v343
      %v630 = vpop.f32.mrf.mxu0
      %v631 = vadd.f32 %v237, %v630
      %v632 = vpop.f32.mrf.mxu0
      %633 = vmatprep.mubr.f32.mxu0 0.0
      %634 = vmatmul.mubr.f32.gmra.mxu0 %v346
      %v635 = vpop.f32.mrf.mxu0
      %v636 = vadd.f32 %v237, %v635
      %v637 = vpop.f32.mrf.mxu0
      %638 = vmatprep.mubr.f32.mxu0 0.0
      %639 = vmatmul.mubr.f32.gmra.mxu0 %v349
      %v640 = vpop.f32.mrf.mxu0
      %v641 = vadd.f32 %v237, %v640
      %v642 = vpop.f32.mrf.mxu0
      %643 = vmatprep.mubr.f32.mxu0 0.0
      %644 = vmatmul.mubr.f32.gmra.mxu0 %v352
      %v645 = vpop.f32.mrf.mxu0
      %v646 = vadd.f32 %v237, %v645
      %v647 = vpop.f32.mrf.mxu0
      %648 = vmatprep.mubr.f32.mxu0 0.0
      %649 = vmatmul.mubr.f32.gmra.mxu0 %v355
      %v650 = vpop.f32.mrf.mxu0
      %v651 = vadd.f32 %v237, %v650
      %v652 = vpop.f32.mrf.mxu0
      %653 = vmatprep.mubr.f32.mxu0 0.0
      %654 = vmatmul.mubr.f32.gmra.mxu0 %v358
      %v655 = vpop.f32.mrf.mxu0
      %v656 = vadd.f32 %v237, %v655
      %v657 = vpop.f32.mrf.mxu0
      %658 = vmatprep.mubr.f32.mxu0 0.0
      %659 = vmatmul.mubr.f32.gmra.mxu0 %v361
      %v660 = vpop.f32.mrf.mxu0
      %v661 = vadd.f32 %v237, %v660
      %v662 = vpop.f32.mrf.mxu0
      %663 = vmatprep.mubr.f32.mxu0 0.0
      %664 = vmatmul.mubr.f32.gmra.mxu0 %v364
      %v665 = vpop.f32.mrf.mxu0
      %v666 = vadd.f32 %v237, %v665
      %v667 = vpop.f32.mrf.mxu0
      %668 = vmatprep.mubr.f32.mxu0 0.0
      %669 = vmatmul.mubr.f32.gmra.mxu0 %v367
      %v670 = vpop.f32.mrf.mxu0
      %v671 = vadd.f32 %v237, %v670
      %v672 = vpop.f32.mrf.mxu0
      %673 = vmatprep.mubr.f32.mxu0 0.0
      %674 = vmatmul.mubr.f32.gmra.mxu0 %v370
      %v675 = vpop.f32.mrf.mxu0
      %v676 = vadd.f32 %v237, %v675
      %v677 = vpop.f32.mrf.mxu0
      %678 = vmatprep.mubr.f32.mxu0 0.0
      %679 = vmatmul.mubr.f32.gmra.mxu0 %v373
      %v680 = vpop.f32.mrf.mxu0
      %v681 = vadd.f32 %v237, %v680
      %v682 = vpop.f32.mrf.mxu0
      %683 = vmatprep.mubr.f32.mxu0 0.0
      %684 = vmatmul.mubr.f32.gmra.mxu0 %v376
      %v685 = vpop.f32.mrf.mxu0
      %v686 = vadd.f32 %v237, %v685
      %v687 = vpop.f32.mrf.mxu0
      %688 = vmatprep.mubr.f32.mxu0 0.0
      %689 = vmatmul.mubr.f32.gmra.mxu0 %v379
      %v690 = vpop.f32.mrf.mxu0
      %v691 = vadd.f32 %v237, %v690
      %v692 = vpop.f32.mrf.mxu0
      %693 = vmatprep.mubr.f32.mxu0 0.0
      %694 = vmatmul.mubr.f32.gmra.mxu0 %v382
      %v695 = vpop.f32.mrf.mxu0
      %v696 = vadd.f32 %v237, %v695
      %v697 = vpop.f32.mrf.mxu0
      %698 = vmatprep.mubr.f32.mxu0 0.0
      %699 = vmatmul.mubr.f32.gmra.mxu0 %v385
      %v700 = vpop.f32.mrf.mxu0
      %v701 = vadd.f32 %v237, %v700
      %v702 = vpop.f32.mrf.mxu0
      %703 = vmatprep.mubr.f32.mxu0 0.0
      %704 = vmatmul.mubr.f32.gmra.mxu0 %v388
      %v705 = vpop.f32.mrf.mxu0
      %v706 = vadd.f32 %v237, %v705
      %v707 = vpop.f32.mrf.mxu0
      %708 = vdwg.mxu0
      %vm709 = vcmp.gt.f32.partialorder %v461, 0.0
      %vm710 = vcmp.gt.f32.partialorder %v466, 0.0
      %vm711 = vcmp.gt.f32.partialorder %v471, 0.0
      %vm712 = vcmp.gt.f32.partialorder %v476, 0.0
      %vm713 = vcmp.gt.f32.partialorder %v481, 0.0
      %vm714 = vcmp.gt.f32.partialorder %v486, 0.0
      %vm715 = vcmp.gt.f32.partialorder %v491, 0.0
      %vm716 = vcmp.gt.f32.partialorder %v496, 0.0
      %vm717 = vcmp.gt.f32.partialorder %v501, 0.0
      %vm718 = vcmp.gt.f32.partialorder %v506, 0.0
      %vm719 = vcmp.gt.f32.partialorder %v511, 0.0
      %vm720 = vcmp.gt.f32.partialorder %v516, 0.0
      %vm721 = vcmp.gt.f32.partialorder %v521, 0.0
      %vm722 = vcmp.gt.f32.partialorder %v526, 0.0
      %vm723 = vcmp.gt.f32.partialorder %v531, 0.0
      %vm724 = vcmp.gt.f32.partialorder %v536, 0.0
      %vm725 = vcmp.gt.f32.partialorder %v541, 0.0
      %vm726 = vcmp.gt.f32.partialorder %v546, 0.0
      %vm727 = vcmp.gt.f32.partialorder %v551, 0.0
      %vm728 = vcmp.gt.f32.partialorder %v556, 0.0
      %vm729 = vcmp.gt.f32.partialorder %v561, 0.0
      %vm730 = vcmp.gt.f32.partialorder %v566, 0.0
      %vm731 = vcmp.gt.f32.partialorder %v571, 0.0
      %vm732 = vcmp.gt.f32.partialorder %v576, 0.0
      %vm733 = vcmp.gt.f32.partialorder %v581, 0.0
      %vm734 = vcmp.gt.f32.partialorder %v586, 0.0
      %vm735 = vcmp.gt.f32.partialorder %v591, 0.0
      %vm736 = vcmp.gt.f32.partialorder %v596, 0.0
      %vm737 = vcmp.gt.f32.partialorder %v601, 0.0
      %vm738 = vcmp.gt.f32.partialorder %v606, 0.0
      %vm739 = vcmp.gt.f32.partialorder %v611, 0.0
      %vm740 = vcmp.gt.f32.partialorder %v616, 0.0
      %vm741 = vcmp.gt.f32.partialorder %v621, 0.0
      %vm742 = vcmp.gt.f32.partialorder %v626, 0.0
      %vm743 = vcmp.gt.f32.partialorder %v631, 0.0
      %vm744 = vcmp.gt.f32.partialorder %v636, 0.0
      %vm745 = vcmp.gt.f32.partialorder %v641, 0.0
      %vm746 = vcmp.gt.f32.partialorder %v646, 0.0
      %vm747 = vcmp.gt.f32.partialorder %v651, 0.0
      %vm748 = vcmp.gt.f32.partialorder %v656, 0.0
      %vm749 = vcmp.gt.f32.partialorder %v661, 0.0
      %vm750 = vcmp.gt.f32.partialorder %v666, 0.0
      %vm751 = vcmp.gt.f32.partialorder %v671, 0.0
      %vm752 = vcmp.gt.f32.partialorder %v676, 0.0
      %vm753 = vcmp.gt.f32.partialorder %v681, 0.0
      %vm754 = vcmp.gt.f32.partialorder %v686, 0.0
      %vm755 = vcmp.gt.f32.partialorder %v691, 0.0
      %vm756 = vcmp.gt.f32.partialorder %v696, 0.0
      %vm757 = vcmp.gt.f32.partialorder %v701, 0.0
      %vm758 = vcmp.gt.f32.partialorder %v706, 0.0
      %v759 = vmul.f32 %v461, 0.2
      %v760 = vmul.f32 %v466, 0.2
      %v761 = vmul.f32 %v471, 0.2
      %v762 = vmul.f32 %v476, 0.2
      %v763 = vmul.f32 %v481, 0.2
      %v764 = vmul.f32 %v486, 0.2
      %v765 = vmul.f32 %v491, 0.2
      %v766 = vmul.f32 %v496, 0.2
      %v767 = vmul.f32 %v501, 0.2
      %v768 = vmul.f32 %v506, 0.2
      %v769 = vmul.f32 %v511, 0.2
      %v770 = vmul.f32 %v516, 0.2
      %v771 = vmul.f32 %v521, 0.2
      %v772 = vmul.f32 %v526, 0.2
      %v773 = vmul.f32 %v531, 0.2
      %v774 = vmul.f32 %v536, 0.2
      %v775 = vmul.f32 %v541, 0.2
      %v776 = vmul.f32 %v546, 0.2
      %v777 = vmul.f32 %v551, 0.2
      %v778 = vmul.f32 %v556, 0.2
      %v779 = vmul.f32 %v561, 0.2
      %v780 = vmul.f32 %v566, 0.2
      %v781 = vmul.f32 %v571, 0.2
      %v782 = vmul.f32 %v576, 0.2
      %v783 = vmul.f32 %v581, 0.2
      %v784 = vmul.f32 %v586, 0.2
      %v785 = vmul.f32 %v591, 0.2
      %v786 = vmul.f32 %v596, 0.2
      %v787 = vmul.f32 %v601, 0.2
      %v788 = vmul.f32 %v606, 0.2
      %v789 = vmul.f32 %v611, 0.2
      %v790 = vmul.f32 %v616, 0.2
      %v791 = vmul.f32 %v621, 0.2
      %v792 = vmul.f32 %v626, 0.2
      %v793 = vmul.f32 %v631, 0.2
      %v794 = vmul.f32 %v636, 0.2
      %v795 = vmul.f32 %v641, 0.2
      %v796 = vmul.f32 %v646, 0.2
      %v797 = vmul.f32 %v651, 0.2
      %v798 = vmul.f32 %v656, 0.2
      %v799 = vmul.f32 %v661, 0.2
      %v800 = vmul.f32 %v666, 0.2
      %v801 = vmul.f32 %v671, 0.2
      %v802 = vmul.f32 %v676, 0.2
      %v803 = vmul.f32 %v681, 0.2
      %v804 = vmul.f32 %v686, 0.2
      %v805 = vmul.f32 %v691, 0.2
      %v806 = vmul.f32 %v696, 0.2
      %v807 = vmul.f32 %v701, 0.2
      %v808 = vmul.f32 %v706, 0.2
      %v809 = vsel %vm709, %v461, %v759
      %v810 = vsel %vm710, %v466, %v760
      %v811 = vsel %vm711, %v471, %v761
      %v812 = vsel %vm712, %v476, %v762
      %v813 = vsel %vm713, %v481, %v763
      %v814 = vsel %vm714, %v486, %v764
      %v815 = vsel %vm715, %v491, %v765
      %v816 = vsel %vm716, %v496, %v766
      %v817 = vsel %vm717, %v501, %v767
      %v818 = vsel %vm718, %v506, %v768
      %v819 = vsel %vm719, %v511, %v769
      %v820 = vsel %vm720, %v516, %v770
      %v821 = vsel %vm721, %v521, %v771
      %v822 = vsel %vm722, %v526, %v772
      %v823 = vsel %vm723, %v531, %v773
      %v824 = vsel %vm724, %v536, %v774
      %v825 = vsel %vm725, %v541, %v775
      %v826 = vsel %vm726, %v546, %v776
      %v827 = vsel %vm727, %v551, %v777
      %v828 = vsel %vm728, %v556, %v778
      %v829 = vsel %vm729, %v561, %v779
      %v830 = vsel %vm730, %v566, %v780
      %v831 = vsel %vm731, %v571, %v781
      %v832 = vsel %vm732, %v576, %v782
      %v833 = vsel %vm733, %v581, %v783
      %v834 = vsel %vm734, %v586, %v784
      %v835 = vsel %vm735, %v591, %v785
      %v836 = vsel %vm736, %v596, %v786
      %v837 = vsel %vm737, %v601, %v787
      %v838 = vsel %vm738, %v606, %v788
      %v839 = vsel %vm739, %v611, %v789
      %v840 = vsel %vm740, %v616, %v790
      %v841 = vsel %vm741, %v621, %v791
      %v842 = vsel %vm742, %v626, %v792
      %v843 = vsel %vm743, %v631, %v793
      %v844 = vsel %vm744, %v636, %v794
      %v845 = vsel %vm745, %v641, %v795
      %v846 = vsel %vm746, %v646, %v796
      %v847 = vsel %vm747, %v651, %v797
      %v848 = vsel %vm748, %v656, %v798
      %v849 = vsel %vm749, %v661, %v799
      %v850 = vsel %vm750, %v666, %v800
      %v851 = vsel %vm751, %v671, %v801
      %v852 = vsel %vm752, %v676, %v802
      %v853 = vsel %vm753, %v681, %v803
      %v854 = vsel %vm754, %v686, %v804
      %v855 = vsel %vm755, %v691, %v805
      %v856 = vsel %vm756, %v696, %v806
      %v857 = vsel %vm757, %v701, %v807
      %v858 = vsel %vm758, %v706, %v808
      %s859 = scalar_lea.vmem %s165, 400
      %v860 = vld [vmem:[%s859] sm:$0xff]
      %v861 = vld [vmem:[%s859 + $0x8] sm:$0xff]
      %v862 = vld [vmem:[%s859 + $0x10] sm:$0xff]
      %v863 = vld [vmem:[%s859 + $0x18] sm:$0xff]
      %v864 = vld [vmem:[%s859 + $0x20] sm:$0xff]
      %v865 = vld [vmem:[%s859 + $0x28] sm:$0xff]
      %v866 = vld [vmem:[%s859 + $0x30] sm:$0xff]
      %v867 = vld [vmem:[%s859 + $0x38] sm:$0xff]
      %v868 = vld [vmem:[%s859 + $0x40] sm:$0xff]
      %v869 = vld [vmem:[%s859 + $0x48] sm:$0xff]
      %v870 = vld [vmem:[%s859 + $0x50] sm:$0xff]
      %v871 = vld [vmem:[%s859 + $0x58] sm:$0xff]
      %v872 = vld [vmem:[%s859 + $0x60] sm:$0xff]
      %v873 = vld [vmem:[%s859 + $0x68] sm:$0xff]
      %v874 = vld [vmem:[%s859 + $0x70] sm:$0xff]
      %v875 = vld [vmem:[%s859 + $0x78] sm:$0xff]
      %v876 = vld [vmem:[%s859 + $0x80] sm:$0xff]
      %v877 = vld [vmem:[%s859 + $0x88] sm:$0xff]
      %v878 = vld [vmem:[%s859 + $0x90] sm:$0xff]
      %v879 = vld [vmem:[%s859 + $0x98] sm:$0xff]
      %v880 = vld [vmem:[%s859 + $0xa0] sm:$0xff]
      %v881 = vld [vmem:[%s859 + $0xa8] sm:$0xff]
      %v882 = vld [vmem:[%s859 + $0xb0] sm:$0xff]
      %v883 = vld [vmem:[%s859 + $0xb8] sm:$0xff]
      %v884 = vld [vmem:[%s859 + $0xc0] sm:$0xff]
      %v885 = vld [vmem:[%s859 + $0xc8] sm:$0xff]
      %v886 = vld [vmem:[%s859 + $0xd0] sm:$0xff]
      %v887 = vld [vmem:[%s859 + $0xd8] sm:$0xff]
      %v888 = vld [vmem:[%s859 + $0xe0] sm:$0xff]
      %v889 = vld [vmem:[%s859 + $0xe8] sm:$0xff]
      %v890 = vld [vmem:[%s859 + $0xf0] sm:$0xff]
      %v891 = vld [vmem:[%s859 + $0xf8] sm:$0xff]
      %v892 = vld [vmem:[%s859 + $0x100] sm:$0xff]
      %v893 = vld [vmem:[%s859 + $0x108] sm:$0xff]
      %v894 = vld [vmem:[%s859 + $0x110] sm:$0xff]
      %v895 = vld [vmem:[%s859 + $0x118] sm:$0xff]
      %v896 = vld [vmem:[%s859 + $0x120] sm:$0xff]
      %v897 = vld [vmem:[%s859 + $0x128] sm:$0xff]
      %v898 = vld [vmem:[%s859 + $0x130] sm:$0xff]
      %v899 = vld [vmem:[%s859 + $0x138] sm:$0xff]
      %v900 = vld [vmem:[%s859 + $0x140] sm:$0xff]
      %v901 = vld [vmem:[%s859 + $0x148] sm:$0xff]
      %v902 = vld [vmem:[%s859 + $0x150] sm:$0xff]
      %v903 = vld [vmem:[%s859 + $0x158] sm:$0xff]
      %v904 = vld [vmem:[%s859 + $0x160] sm:$0xff]
      %v905 = vld [vmem:[%s859 + $0x168] sm:$0xff]
      %v906 = vld [vmem:[%s859 + $0x170] sm:$0xff]
      %v907 = vld [vmem:[%s859 + $0x178] sm:$0xff]
      %v908 = vld [vmem:[%s859 + $0x180] sm:$0xff]
      %v909 = vld [vmem:[%s859 + $0x188] sm:$0xff]
      %v911 = vsel %vm239, %v860, 0
      %v914 = vsel %vm239, %v861, 0
      %v917 = vsel %vm239, %v862, 0
      %v920 = vsel %vm239, %v863, 0
      %v923 = vsel %vm239, %v864, 0
      %v926 = vsel %vm239, %v865, 0
      %v929 = vsel %vm239, %v866, 0
      %v932 = vsel %vm239, %v867, 0
      %v935 = vsel %vm239, %v868, 0
      %v938 = vsel %vm239, %v869, 0
      %v941 = vsel %vm239, %v870, 0
      %v944 = vsel %vm239, %v871, 0
      %v947 = vsel %vm239, %v872, 0
      %v950 = vsel %vm239, %v873, 0
      %v953 = vsel %vm239, %v874, 0
      %v956 = vsel %vm239, %v875, 0
      %v959 = vsel %vm239, %v876, 0
      %v962 = vsel %vm239, %v877, 0
      %v965 = vsel %vm239, %v878, 0
      %v968 = vsel %vm239, %v879, 0
      %v971 = vsel %vm239, %v880, 0
      %v974 = vsel %vm239, %v881, 0
      %v977 = vsel %vm239, %v882, 0
      %v980 = vsel %vm239, %v883, 0
      %v983 = vsel %vm239, %v884, 0
      %v986 = vsel %vm239, %v885, 0
      %v989 = vsel %vm239, %v886, 0
      %v992 = vsel %vm239, %v887, 0
      %v995 = vsel %vm239, %v888, 0
      %v998 = vsel %vm239, %v889, 0
      %v1001 = vsel %vm239, %v890, 0
      %v1004 = vsel %vm239, %v891, 0
      %v1007 = vsel %vm239, %v892, 0
      %v1010 = vsel %vm239, %v893, 0
      %v1013 = vsel %vm239, %v894, 0
      %v1016 = vsel %vm239, %v895, 0
      %v1019 = vsel %vm239, %v896, 0
      %v1022 = vsel %vm239, %v897, 0
      %v1025 = vsel %vm239, %v898, 0
      %v1028 = vsel %vm239, %v899, 0
      %v1031 = vsel %vm239, %v900, 0
      %v1034 = vsel %vm239, %v901, 0
      %v1037 = vsel %vm239, %v902, 0
      %v1040 = vsel %vm239, %v903, 0
      %v1043 = vsel %vm239, %v904, 0
      %v1046 = vsel %vm239, %v905, 0
      %v1049 = vsel %vm239, %v906, 0
      %v1052 = vsel %vm239, %v907, 0
      %v1055 = vsel %vm239, %v908, 0
      %v1058 = vsel %vm239, %v909, 0
      %1060 = vmatprep.subr.mxu0 0.0
      %1061 = vmatpush1.msra.mxu0 0.0
      %1062 = vmatprep.subr.mxu0 0.0
      %1063 = vmatpush1.msra.mxu0 0.0
      %1064 = vmatprep.subr.mxu0 0.0
      %1065 = vmatpush1.msra.mxu0 0.0
      %1066 = vmatprep.subr.mxu0 0.0
      %1067 = vmatpush1.msra.mxu0 0.0
      %1068 = vmatprep.subr.mxu0 0.0
      %1069 = vmatpush1.msra.mxu0 0.0
      %1070 = vmatprep.subr.mxu0 0.0
      %1071 = vmatpush1.msra.mxu0 %v392
      %1072 = vmatprep.subr.mxu0 0.0
      %1073 = vmatpush1.msra.mxu0 %v180
      %1074 = vmatprep.subr.mxu0 0.0
      %1075 = vmatpush1.msra.mxu0 %v179
      %1076 = vmatprep.subr.mxu0 0.0
      %1077 = vmatpush1.msra.mxu0 %v178
      %1078 = vmatprep.subr.mxu0 0.0
      %1079 = vmatpush1.msra.mxu0 %v177
      %1080 = vmatprep.subr.mxu0 0.0
      %1081 = vmatpush1.msra.mxu0 %v176
      %1082 = vmatprep.subr.mxu0 0.0
      %1083 = vmatpush1.msra.mxu0 %v175
      %1084 = vmatprep.subr.mxu0 0.0
      %1085 = vmatpush1.msra.mxu0 %v174
      %1086 = vmatprep.subr.mxu0 0.0
      %1087 = vmatpush1.msra.mxu0 %v173
      %1088 = vmatprep.subr.mxu0 0.0
      %1089 = vmatpush1.msra.mxu0 %v172
      %1090 = vmatprep.subr.mxu0 0.0
      %1091 = vmatpush1.msra.mxu0 %v171
      %1092 = vmatprep.subr.mxu0 0.0
      %1093 = vmatpush2.msra.mxu0 0.0
      %1094 = vmatprep.subr.mxu0 0.0
      %1095 = vmatpush2.msra.mxu0 0.0
      %1096 = vmatprep.subr.mxu0 0.0
      %1097 = vmatpush2.msra.mxu0 0.0
      %1098 = vmatprep.subr.mxu0 0.0
      %1099 = vmatpush2.msra.mxu0 0.0
      %1100 = vmatprep.subr.mxu0 0.0
      %1101 = vmatpush2.msra.mxu0 0.0
      %1102 = vmatprep.subr.mxu0 0.0
      %1103 = vmatpush2.msra.mxu0 0.0
      %1104 = vmatprep.subr.mxu0 0.0
      %1105 = vmatpush2.msra.mxu0 0.0
      %1106 = vmatprep.subr.mxu0 0.0
      %1107 = vmatpush2.msra.mxu0 0.0
      %1108 = vmatprep.subr.mxu0 0.0
      %1109 = vmatpush2.msra.mxu0 0.0
      %1110 = vmatprep.subr.mxu0 0.0
      %1111 = vmatpush2.msra.mxu0 0.0
      %1112 = vmatprep.subr.mxu0 0.0
      %1113 = vmatpush2.msra.mxu0 0.0
      %1114 = vmatprep.subr.mxu0 0.0
      %1115 = vmatpush2.msra.mxu0 0.0
      %1116 = vmatprep.subr.mxu0 0.0
      %1117 = vmatpush2.msra.mxu0 0.0
      %1118 = vmatprep.subr.mxu0 0.0
      %1119 = vmatpush2.msra.mxu0 0.0
      %1120 = vmatprep.subr.mxu0 0.0
      %1121 = vmatpush2.msra.mxu0 0.0
      %1122 = vmatprep.subr.mxu0 0.0
      %1123 = vmatpush2.msra.mxu0 0.0
      %1124 = vmatprep.mubr.f32.mxu0 0.0
      %1125 = vmatmul.mubr.f32.gmra.mxu0 %v911
      %v1126 = vpop.f32.mrf.mxu0
      %v1127 = vadd.f32 %v237, %v1126
      %v1128 = vpop.f32.mrf.mxu0
      %1129 = vmatprep.mubr.f32.mxu0 0.0
      %1130 = vmatmul.mubr.f32.gmra.mxu0 %v914
      %v1131 = vpop.f32.mrf.mxu0
      %v1132 = vadd.f32 %v237, %v1131
      %v1133 = vpop.f32.mrf.mxu0
      %1134 = vmatprep.mubr.f32.mxu0 0.0
      %1135 = vmatmul.mubr.f32.gmra.mxu0 %v917
      %v1136 = vpop.f32.mrf.mxu0
      %v1137 = vadd.f32 %v237, %v1136
      %v1138 = vpop.f32.mrf.mxu0
      %1139 = vmatprep.mubr.f32.mxu0 0.0
      %1140 = vmatmul.mubr.f32.gmra.mxu0 %v920
      %v1141 = vpop.f32.mrf.mxu0
      %v1142 = vadd.f32 %v237, %v1141
      %v1143 = vpop.f32.mrf.mxu0
      %1144 = vmatprep.mubr.f32.mxu0 0.0
      %1145 = vmatmul.mubr.f32.gmra.mxu0 %v923
      %v1146 = vpop.f32.mrf.mxu0
      %v1147 = vadd.f32 %v237, %v1146
      %v1148 = vpop.f32.mrf.mxu0
      %1149 = vmatprep.mubr.f32.mxu0 0.0
      %1150 = vmatmul.mubr.f32.gmra.mxu0 %v926
      %v1151 = vpop.f32.mrf.mxu0
      %v1152 = vadd.f32 %v237, %v1151
      %v1153 = vpop.f32.mrf.mxu0
      %1154 = vmatprep.mubr.f32.mxu0 0.0
      %1155 = vmatmul.mubr.f32.gmra.mxu0 %v929
      %v1156 = vpop.f32.mrf.mxu0
      %v1157 = vadd.f32 %v237, %v1156
      %v1158 = vpop.f32.mrf.mxu0
      %1159 = vmatprep.mubr.f32.mxu0 0.0
      %1160 = vmatmul.mubr.f32.gmra.mxu0 %v932
      %v1161 = vpop.f32.mrf.mxu0
      %v1162 = vadd.f32 %v237, %v1161
      %v1163 = vpop.f32.mrf.mxu0
      %1164 = vmatprep.mubr.f32.mxu0 0.0
      %1165 = vmatmul.mubr.f32.gmra.mxu0 %v935
      %v1166 = vpop.f32.mrf.mxu0
      %v1167 = vadd.f32 %v237, %v1166
      %v1168 = vpop.f32.mrf.mxu0
      %1169 = vmatprep.mubr.f32.mxu0 0.0
      %1170 = vmatmul.mubr.f32.gmra.mxu0 %v938
      %v1171 = vpop.f32.mrf.mxu0
      %v1172 = vadd.f32 %v237, %v1171
      %v1173 = vpop.f32.mrf.mxu0
      %1174 = vmatprep.mubr.f32.mxu0 0.0
      %1175 = vmatmul.mubr.f32.gmra.mxu0 %v941
      %v1176 = vpop.f32.mrf.mxu0
      %v1177 = vadd.f32 %v237, %v1176
      %v1178 = vpop.f32.mrf.mxu0
      %1179 = vmatprep.mubr.f32.mxu0 0.0
      %1180 = vmatmul.mubr.f32.gmra.mxu0 %v944
      %v1181 = vpop.f32.mrf.mxu0
      %v1182 = vadd.f32 %v237, %v1181
      %v1183 = vpop.f32.mrf.mxu0
      %1184 = vmatprep.mubr.f32.mxu0 0.0
      %1185 = vmatmul.mubr.f32.gmra.mxu0 %v947
      %v1186 = vpop.f32.mrf.mxu0
      %v1187 = vadd.f32 %v237, %v1186
      %v1188 = vpop.f32.mrf.mxu0
      %1189 = vmatprep.mubr.f32.mxu0 0.0
      %1190 = vmatmul.mubr.f32.gmra.mxu0 %v950
      %v1191 = vpop.f32.mrf.mxu0
      %v1192 = vadd.f32 %v237, %v1191
      %v1193 = vpop.f32.mrf.mxu0
      %1194 = vmatprep.mubr.f32.mxu0 0.0
      %1195 = vmatmul.mubr.f32.gmra.mxu0 %v953
      %v1196 = vpop.f32.mrf.mxu0
      %v1197 = vadd.f32 %v237, %v1196
      %v1198 = vpop.f32.mrf.mxu0
      %1199 = vmatprep.mubr.f32.mxu0 0.0
      %1200 = vmatmul.mubr.f32.gmra.mxu0 %v956
      %v1201 = vpop.f32.mrf.mxu0
      %v1202 = vadd.f32 %v237, %v1201
      %v1203 = vpop.f32.mrf.mxu0
      %1204 = vmatprep.mubr.f32.mxu0 0.0
      %1205 = vmatmul.mubr.f32.gmra.mxu0 %v959
      %v1206 = vpop.f32.mrf.mxu0
      %v1207 = vadd.f32 %v237, %v1206
      %v1208 = vpop.f32.mrf.mxu0
      %1209 = vmatprep.mubr.f32.mxu0 0.0
      %1210 = vmatmul.mubr.f32.gmra.mxu0 %v962
      %v1211 = vpop.f32.mrf.mxu0
      %v1212 = vadd.f32 %v237, %v1211
      %v1213 = vpop.f32.mrf.mxu0
      %1214 = vmatprep.mubr.f32.mxu0 0.0
      %1215 = vmatmul.mubr.f32.gmra.mxu0 %v965
      %v1216 = vpop.f32.mrf.mxu0
      %v1217 = vadd.f32 %v237, %v1216
      %v1218 = vpop.f32.mrf.mxu0
      %1219 = vmatprep.mubr.f32.mxu0 0.0
      %1220 = vmatmul.mubr.f32.gmra.mxu0 %v968
      %v1221 = vpop.f32.mrf.mxu0
      %v1222 = vadd.f32 %v237, %v1221
      %v1223 = vpop.f32.mrf.mxu0
      %1224 = vmatprep.mubr.f32.mxu0 0.0
      %1225 = vmatmul.mubr.f32.gmra.mxu0 %v971
      %v1226 = vpop.f32.mrf.mxu0
      %v1227 = vadd.f32 %v237, %v1226
      %v1228 = vpop.f32.mrf.mxu0
      %1229 = vmatprep.mubr.f32.mxu0 0.0
      %1230 = vmatmul.mubr.f32.gmra.mxu0 %v974
      %v1231 = vpop.f32.mrf.mxu0
      %v1232 = vadd.f32 %v237, %v1231
      %v1233 = vpop.f32.mrf.mxu0
      %1234 = vmatprep.mubr.f32.mxu0 0.0
      %1235 = vmatmul.mubr.f32.gmra.mxu0 %v977
      %v1236 = vpop.f32.mrf.mxu0
      %v1237 = vadd.f32 %v237, %v1236
      %v1238 = vpop.f32.mrf.mxu0
      %1239 = vmatprep.mubr.f32.mxu0 0.0
      %1240 = vmatmul.mubr.f32.gmra.mxu0 %v980
      %v1241 = vpop.f32.mrf.mxu0
      %v1242 = vadd.f32 %v237, %v1241
      %v1243 = vpop.f32.mrf.mxu0
      %1244 = vmatprep.mubr.f32.mxu0 0.0
      %1245 = vmatmul.mubr.f32.gmra.mxu0 %v983
      %v1246 = vpop.f32.mrf.mxu0
      %v1247 = vadd.f32 %v237, %v1246
      %v1248 = vpop.f32.mrf.mxu0
      %1249 = vmatprep.mubr.f32.mxu0 0.0
      %1250 = vmatmul.mubr.f32.gmra.mxu0 %v986
      %v1251 = vpop.f32.mrf.mxu0
      %v1252 = vadd.f32 %v237, %v1251
      %v1253 = vpop.f32.mrf.mxu0
      %1254 = vmatprep.mubr.f32.mxu0 0.0
      %1255 = vmatmul.mubr.f32.gmra.mxu0 %v989
      %v1256 = vpop.f32.mrf.mxu0
      %v1257 = vadd.f32 %v237, %v1256
      %v1258 = vpop.f32.mrf.mxu0
      %1259 = vmatprep.mubr.f32.mxu0 0.0
      %1260 = vmatmul.mubr.f32.gmra.mxu0 %v992
      %v1261 = vpop.f32.mrf.mxu0
      %v1262 = vadd.f32 %v237, %v1261
      %v1263 = vpop.f32.mrf.mxu0
      %1264 = vmatprep.mubr.f32.mxu0 0.0
      %1265 = vmatmul.mubr.f32.gmra.mxu0 %v995
      %v1266 = vpop.f32.mrf.mxu0
      %v1267 = vadd.f32 %v237, %v1266
      %v1268 = vpop.f32.mrf.mxu0
      %1269 = vmatprep.mubr.f32.mxu0 0.0
      %1270 = vmatmul.mubr.f32.gmra.mxu0 %v998
      %v1271 = vpop.f32.mrf.mxu0
      %v1272 = vadd.f32 %v237, %v1271
      %v1273 = vpop.f32.mrf.mxu0
      %1274 = vmatprep.mubr.f32.mxu0 0.0
      %1275 = vmatmul.mubr.f32.gmra.mxu0 %v1001
      %v1276 = vpop.f32.mrf.mxu0
      %v1277 = vadd.f32 %v237, %v1276
      %v1278 = vpop.f32.mrf.mxu0
      %1279 = vmatprep.mubr.f32.mxu0 0.0
      %1280 = vmatmul.mubr.f32.gmra.mxu0 %v1004
      %v1281 = vpop.f32.mrf.mxu0
      %v1282 = vadd.f32 %v237, %v1281
      %v1283 = vpop.f32.mrf.mxu0
      %1284 = vmatprep.mubr.f32.mxu0 0.0
      %1285 = vmatmul.mubr.f32.gmra.mxu0 %v1007
      %v1286 = vpop.f32.mrf.mxu0
      %v1287 = vadd.f32 %v237, %v1286
      %v1288 = vpop.f32.mrf.mxu0
      %1289 = vmatprep.mubr.f32.mxu0 0.0
      %1290 = vmatmul.mubr.f32.gmra.mxu0 %v1010
      %v1291 = vpop.f32.mrf.mxu0
      %v1292 = vadd.f32 %v237, %v1291
      %v1293 = vpop.f32.mrf.mxu0
      %1294 = vmatprep.mubr.f32.mxu0 0.0
      %1295 = vmatmul.mubr.f32.gmra.mxu0 %v1013
      %v1296 = vpop.f32.mrf.mxu0
      %v1297 = vadd.f32 %v237, %v1296
      %v1298 = vpop.f32.mrf.mxu0
      %1299 = vmatprep.mubr.f32.mxu0 0.0
      %1300 = vmatmul.mubr.f32.gmra.mxu0 %v1016
      %v1301 = vpop.f32.mrf.mxu0
      %v1302 = vadd.f32 %v237, %v1301
      %v1303 = vpop.f32.mrf.mxu0
      %1304 = vmatprep.mubr.f32.mxu0 0.0
      %1305 = vmatmul.mubr.f32.gmra.mxu0 %v1019
      %v1306 = vpop.f32.mrf.mxu0
      %v1307 = vadd.f32 %v237, %v1306
      %v1308 = vpop.f32.mrf.mxu0
      %1309 = vmatprep.mubr.f32.mxu0 0.0
      %1310 = vmatmul.mubr.f32.gmra.mxu0 %v1022
      %v1311 = vpop.f32.mrf.mxu0
      %v1312 = vadd.f32 %v237, %v1311
      %v1313 = vpop.f32.mrf.mxu0
      %1314 = vmatprep.mubr.f32.mxu0 0.0
      %1315 = vmatmul.mubr.f32.gmra.mxu0 %v1025
      %v1316 = vpop.f32.mrf.mxu0
      %v1317 = vadd.f32 %v237, %v1316
      %v1318 = vpop.f32.mrf.mxu0
      %1319 = vmatprep.mubr.f32.mxu0 0.0
      %1320 = vmatmul.mubr.f32.gmra.mxu0 %v1028
      %v1321 = vpop.f32.mrf.mxu0
      %v1322 = vadd.f32 %v237, %v1321
      %v1323 = vpop.f32.mrf.mxu0
      %1324 = vmatprep.mubr.f32.mxu0 0.0
      %1325 = vmatmul.mubr.f32.gmra.mxu0 %v1031
      %v1326 = vpop.f32.mrf.mxu0
      %v1327 = vadd.f32 %v237, %v1326
      %v1328 = vpop.f32.mrf.mxu0
      %1329 = vmatprep.mubr.f32.mxu0 0.0
      %1330 = vmatmul.mubr.f32.gmra.mxu0 %v1034
      %v1331 = vpop.f32.mrf.mxu0
      %v1332 = vadd.f32 %v237, %v1331
      %v1333 = vpop.f32.mrf.mxu0
      %1334 = vmatprep.mubr.f32.mxu0 0.0
      %1335 = vmatmul.mubr.f32.gmra.mxu0 %v1037
      %v1336 = vpop.f32.mrf.mxu0
      %v1337 = vadd.f32 %v237, %v1336
      %v1338 = vpop.f32.mrf.mxu0
      %1339 = vmatprep.mubr.f32.mxu0 0.0
      %1340 = vmatmul.mubr.f32.gmra.mxu0 %v1040
      %v1341 = vpop.f32.mrf.mxu0
      %v1342 = vadd.f32 %v237, %v1341
      %v1343 = vpop.f32.mrf.mxu0
      %1344 = vmatprep.mubr.f32.mxu0 0.0
      %1345 = vmatmul.mubr.f32.gmra.mxu0 %v1043
      %v1346 = vpop.f32.mrf.mxu0
      %v1347 = vadd.f32 %v237, %v1346
      %v1348 = vpop.f32.mrf.mxu0
      %1349 = vmatprep.mubr.f32.mxu0 0.0
      %1350 = vmatmul.mubr.f32.gmra.mxu0 %v1046
      %v1351 = vpop.f32.mrf.mxu0
      %v1352 = vadd.f32 %v237, %v1351
      %v1353 = vpop.f32.mrf.mxu0
      %1354 = vmatprep.mubr.f32.mxu0 0.0
      %1355 = vmatmul.mubr.f32.gmra.mxu0 %v1049
      %v1356 = vpop.f32.mrf.mxu0
      %v1357 = vadd.f32 %v237, %v1356
      %v1358 = vpop.f32.mrf.mxu0
      %1359 = vmatprep.mubr.f32.mxu0 0.0
      %1360 = vmatmul.mubr.f32.gmra.mxu0 %v1052
      %v1361 = vpop.f32.mrf.mxu0
      %v1362 = vadd.f32 %v237, %v1361
      %v1363 = vpop.f32.mrf.mxu0
      %1364 = vmatprep.mubr.f32.mxu0 0.0
      %1365 = vmatmul.mubr.f32.gmra.mxu0 %v1055
      %v1366 = vpop.f32.mrf.mxu0
      %v1367 = vadd.f32 %v237, %v1366
      %v1368 = vpop.f32.mrf.mxu0
      %1369 = vmatprep.mubr.f32.mxu0 0.0
      %1370 = vmatmul.mubr.f32.gmra.mxu0 %v1058
      %v1371 = vpop.f32.mrf.mxu0
      %v1372 = vadd.f32 %v237, %v1371
      %v1373 = vpop.f32.mrf.mxu0
      %1374 = vdwg.mxu0
      %vm1375 = vcmp.gt.f32.partialorder %v1127, 0.0
      %vm1376 = vcmp.gt.f32.partialorder %v1132, 0.0
      %vm1377 = vcmp.gt.f32.partialorder %v1137, 0.0
      %vm1378 = vcmp.gt.f32.partialorder %v1142, 0.0
      %vm1379 = vcmp.gt.f32.partialorder %v1147, 0.0
      %vm1380 = vcmp.gt.f32.partialorder %v1152, 0.0
      %vm1381 = vcmp.gt.f32.partialorder %v1157, 0.0
      %vm1382 = vcmp.gt.f32.partialorder %v1162, 0.0
      %vm1383 = vcmp.gt.f32.partialorder %v1167, 0.0
      %vm1384 = vcmp.gt.f32.partialorder %v1172, 0.0
      %vm1385 = vcmp.gt.f32.partialorder %v1177, 0.0
      %vm1386 = vcmp.gt.f32.partialorder %v1182, 0.0
      %vm1387 = vcmp.gt.f32.partialorder %v1187, 0.0
      %vm1388 = vcmp.gt.f32.partialorder %v1192, 0.0
      %vm1389 = vcmp.gt.f32.partialorder %v1197, 0.0
      %vm1390 = vcmp.gt.f32.partialorder %v1202, 0.0
      %vm1391 = vcmp.gt.f32.partialorder %v1207, 0.0
      %vm1392 = vcmp.gt.f32.partialorder %v1212, 0.0
      %vm1393 = vcmp.gt.f32.partialorder %v1217, 0.0
      %vm1394 = vcmp.gt.f32.partialorder %v1222, 0.0
      %vm1395 = vcmp.gt.f32.partialorder %v1227, 0.0
      %vm1396 = vcmp.gt.f32.partialorder %v1232, 0.0
      %vm1397 = vcmp.gt.f32.partialorder %v1237, 0.0
      %vm1398 = vcmp.gt.f32.partialorder %v1242, 0.0
      %vm1399 = vcmp.gt.f32.partialorder %v1247, 0.0
      %vm1400 = vcmp.gt.f32.partialorder %v1252, 0.0
      %vm1401 = vcmp.gt.f32.partialorder %v1257, 0.0
      %vm1402 = vcmp.gt.f32.partialorder %v1262, 0.0
      %vm1403 = vcmp.gt.f32.partialorder %v1267, 0.0
      %vm1404 = vcmp.gt.f32.partialorder %v1272, 0.0
      %vm1405 = vcmp.gt.f32.partialorder %v1277, 0.0
      %vm1406 = vcmp.gt.f32.partialorder %v1282, 0.0
      %vm1407 = vcmp.gt.f32.partialorder %v1287, 0.0
      %vm1408 = vcmp.gt.f32.partialorder %v1292, 0.0
      %vm1409 = vcmp.gt.f32.partialorder %v1297, 0.0
      %vm1410 = vcmp.gt.f32.partialorder %v1302, 0.0
      %vm1411 = vcmp.gt.f32.partialorder %v1307, 0.0
      %vm1412 = vcmp.gt.f32.partialorder %v1312, 0.0
      %vm1413 = vcmp.gt.f32.partialorder %v1317, 0.0
      %vm1414 = vcmp.gt.f32.partialorder %v1322, 0.0
      %vm1415 = vcmp.gt.f32.partialorder %v1327, 0.0
      %vm1416 = vcmp.gt.f32.partialorder %v1332, 0.0
      %vm1417 = vcmp.gt.f32.partialorder %v1337, 0.0
      %vm1418 = vcmp.gt.f32.partialorder %v1342, 0.0
      %vm1419 = vcmp.gt.f32.partialorder %v1347, 0.0
      %vm1420 = vcmp.gt.f32.partialorder %v1352, 0.0
      %vm1421 = vcmp.gt.f32.partialorder %v1357, 0.0
      %vm1422 = vcmp.gt.f32.partialorder %v1362, 0.0
      %vm1423 = vcmp.gt.f32.partialorder %v1367, 0.0
      %vm1424 = vcmp.gt.f32.partialorder %v1372, 0.0
      %v1425 = vmul.f32 %v1127, 0.2
      %v1426 = vmul.f32 %v1132, 0.2
      %v1427 = vmul.f32 %v1137, 0.2
      %v1428 = vmul.f32 %v1142, 0.2
      %v1429 = vmul.f32 %v1147, 0.2
      %v1430 = vmul.f32 %v1152, 0.2
      %v1431 = vmul.f32 %v1157, 0.2
      %v1432 = vmul.f32 %v1162, 0.2
      %v1433 = vmul.f32 %v1167, 0.2
      %v1434 = vmul.f32 %v1172, 0.2
      %v1435 = vmul.f32 %v1177, 0.2
      %v1436 = vmul.f32 %v1182, 0.2
      %v1437 = vmul.f32 %v1187, 0.2
      %v1438 = vmul.f32 %v1192, 0.2
      %v1439 = vmul.f32 %v1197, 0.2
      %v1440 = vmul.f32 %v1202, 0.2
      %v1441 = vmul.f32 %v1207, 0.2
      %v1442 = vmul.f32 %v1212, 0.2
      %v1443 = vmul.f32 %v1217, 0.2
      %v1444 = vmul.f32 %v1222, 0.2
      %v1445 = vmul.f32 %v1227, 0.2
      %v1446 = vmul.f32 %v1232, 0.2
      %v1447 = vmul.f32 %v1237, 0.2
      %v1448 = vmul.f32 %v1242, 0.2
      %v1449 = vmul.f32 %v1247, 0.2
      %v1450 = vmul.f32 %v1252, 0.2
      %v1451 = vmul.f32 %v1257, 0.2
      %v1452 = vmul.f32 %v1262, 0.2
      %v1453 = vmul.f32 %v1267, 0.2
      %v1454 = vmul.f32 %v1272, 0.2
      %v1455 = vmul.f32 %v1277, 0.2
      %v1456 = vmul.f32 %v1282, 0.2
      %v1457 = vmul.f32 %v1287, 0.2
      %v1458 = vmul.f32 %v1292, 0.2
      %v1459 = vmul.f32 %v1297, 0.2
      %v1460 = vmul.f32 %v1302, 0.2
      %v1461 = vmul.f32 %v1307, 0.2
      %v1462 = vmul.f32 %v1312, 0.2
      %v1463 = vmul.f32 %v1317, 0.2
      %v1464 = vmul.f32 %v1322, 0.2
      %v1465 = vmul.f32 %v1327, 0.2
      %v1466 = vmul.f32 %v1332, 0.2
      %v1467 = vmul.f32 %v1337, 0.2
      %v1468 = vmul.f32 %v1342, 0.2
      %v1469 = vmul.f32 %v1347, 0.2
      %v1470 = vmul.f32 %v1352, 0.2
      %v1471 = vmul.f32 %v1357, 0.2
      %v1472 = vmul.f32 %v1362, 0.2
      %v1473 = vmul.f32 %v1367, 0.2
      %v1474 = vmul.f32 %v1372, 0.2
      %v1475 = vsel %vm1375, %v1127, %v1425
      %v1476 = vsel %vm1376, %v1132, %v1426
      %v1477 = vsel %vm1377, %v1137, %v1427
      %v1478 = vsel %vm1378, %v1142, %v1428
      %v1479 = vsel %vm1379, %v1147, %v1429
      %v1480 = vsel %vm1380, %v1152, %v1430
      %v1481 = vsel %vm1381, %v1157, %v1431
      %v1482 = vsel %vm1382, %v1162, %v1432
      %v1483 = vsel %vm1383, %v1167, %v1433
      %v1484 = vsel %vm1384, %v1172, %v1434
      %v1485 = vsel %vm1385, %v1177, %v1435
      %v1486 = vsel %vm1386, %v1182, %v1436
      %v1487 = vsel %vm1387, %v1187, %v1437
      %v1488 = vsel %vm1388, %v1192, %v1438
      %v1489 = vsel %vm1389, %v1197, %v1439
      %v1490 = vsel %vm1390, %v1202, %v1440
      %v1491 = vsel %vm1391, %v1207, %v1441
      %v1492 = vsel %vm1392, %v1212, %v1442
      %v1493 = vsel %vm1393, %v1217, %v1443
      %v1494 = vsel %vm1394, %v1222, %v1444
      %v1495 = vsel %vm1395, %v1227, %v1445
      %v1496 = vsel %vm1396, %v1232, %v1446
      %v1497 = vsel %vm1397, %v1237, %v1447
      %v1498 = vsel %vm1398, %v1242, %v1448
      %v1499 = vsel %vm1399, %v1247, %v1449
      %v1500 = vsel %vm1400, %v1252, %v1450
      %v1501 = vsel %vm1401, %v1257, %v1451
      %v1502 = vsel %vm1402, %v1262, %v1452
      %v1503 = vsel %vm1403, %v1267, %v1453
      %v1504 = vsel %vm1404, %v1272, %v1454
      %v1505 = vsel %vm1405, %v1277, %v1455
      %v1506 = vsel %vm1406, %v1282, %v1456
      %v1507 = vsel %vm1407, %v1287, %v1457
      %v1508 = vsel %vm1408, %v1292, %v1458
      %v1509 = vsel %vm1409, %v1297, %v1459
      %v1510 = vsel %vm1410, %v1302, %v1460
      %v1511 = vsel %vm1411, %v1307, %v1461
      %v1512 = vsel %vm1412, %v1312, %v1462
      %v1513 = vsel %vm1413, %v1317, %v1463
      %v1514 = vsel %vm1414, %v1322, %v1464
      %v1515 = vsel %vm1415, %v1327, %v1465
      %v1516 = vsel %vm1416, %v1332, %v1466
      %v1517 = vsel %vm1417, %v1337, %v1467
      %v1518 = vsel %vm1418, %v1342, %v1468
      %v1519 = vsel %vm1419, %v1347, %v1469
      %v1520 = vsel %vm1420, %v1352, %v1470
      %v1521 = vsel %vm1421, %v1357, %v1471
      %v1522 = vsel %vm1422, %v1362, %v1472
      %v1523 = vsel %vm1423, %v1367, %v1473
      %v1524 = vsel %vm1424, %v1372, %v1474
      %v1525 = vadd.f32 %v809, %v1475
      %v1526 = vadd.f32 %v810, %v1476
      %v1527 = vadd.f32 %v811, %v1477
      %v1528 = vadd.f32 %v812, %v1478
      %v1529 = vadd.f32 %v813, %v1479
      %v1530 = vadd.f32 %v814, %v1480
      %v1531 = vadd.f32 %v815, %v1481
      %v1532 = vadd.f32 %v816, %v1482
      %v1533 = vadd.f32 %v817, %v1483
      %v1534 = vadd.f32 %v818, %v1484
      %v1535 = vadd.f32 %v819, %v1485
      %v1536 = vadd.f32 %v820, %v1486
      %v1537 = vadd.f32 %v821, %v1487
      %v1538 = vadd.f32 %v822, %v1488
      %v1539 = vadd.f32 %v823, %v1489
      %v1540 = vadd.f32 %v824, %v1490
      %v1541 = vadd.f32 %v825, %v1491
      %v1542 = vadd.f32 %v826, %v1492
      %v1543 = vadd.f32 %v827, %v1493
      %v1544 = vadd.f32 %v828, %v1494
      %v1545 = vadd.f32 %v829, %v1495
      %v1546 = vadd.f32 %v830, %v1496
      %v1547 = vadd.f32 %v831, %v1497
      %v1548 = vadd.f32 %v832, %v1498
      %v1549 = vadd.f32 %v833, %v1499
      %v1550 = vadd.f32 %v834, %v1500
      %v1551 = vadd.f32 %v835, %v1501
      %v1552 = vadd.f32 %v836, %v1502
      %v1553 = vadd.f32 %v837, %v1503
      %v1554 = vadd.f32 %v838, %v1504
      %v1555 = vadd.f32 %v839, %v1505
      %v1556 = vadd.f32 %v840, %v1506
      %v1557 = vadd.f32 %v841, %v1507
      %v1558 = vadd.f32 %v842, %v1508
      %v1559 = vadd.f32 %v843, %v1509
      %v1560 = vadd.f32 %v844, %v1510
      %v1561 = vadd.f32 %v845, %v1511
      %v1562 = vadd.f32 %v846, %v1512
      %v1563 = vadd.f32 %v847, %v1513
      %v1564 = vadd.f32 %v848, %v1514
      %v1565 = vadd.f32 %v849, %v1515
      %v1566 = vadd.f32 %v850, %v1516
      %v1567 = vadd.f32 %v851, %v1517
      %v1568 = vadd.f32 %v852, %v1518
      %v1569 = vadd.f32 %v853, %v1519
      %v1570 = vadd.f32 %v854, %v1520
      %v1571 = vadd.f32 %v855, %v1521
      %v1572 = vadd.f32 %v856, %v1522
      %v1573 = vadd.f32 %v857, %v1523
      %v1574 = vadd.f32 %v858, %v1524
      %s1575 = scalar_lea.vmem %s165, 800
      %v1576 = vld [vmem:[%s1575] sm:$0xff]
      %v1577 = vld [vmem:[%s1575 + $0x8] sm:$0xff]
      %v1578 = vld [vmem:[%s1575 + $0x10] sm:$0xff]
      %v1579 = vld [vmem:[%s1575 + $0x18] sm:$0xff]
      %v1580 = vld [vmem:[%s1575 + $0x20] sm:$0xff]
      %v1581 = vld [vmem:[%s1575 + $0x28] sm:$0xff]
      %v1582 = vld [vmem:[%s1575 + $0x30] sm:$0xff]
      %v1583 = vld [vmem:[%s1575 + $0x38] sm:$0xff]
      %v1584 = vld [vmem:[%s1575 + $0x40] sm:$0xff]
      %v1585 = vld [vmem:[%s1575 + $0x48] sm:$0xff]
      %v1586 = vld [vmem:[%s1575 + $0x50] sm:$0xff]
      %v1587 = vld [vmem:[%s1575 + $0x58] sm:$0xff]
      %v1588 = vld [vmem:[%s1575 + $0x60] sm:$0xff]
      %v1589 = vld [vmem:[%s1575 + $0x68] sm:$0xff]
      %v1590 = vld [vmem:[%s1575 + $0x70] sm:$0xff]
      %v1591 = vld [vmem:[%s1575 + $0x78] sm:$0xff]
      %v1592 = vld [vmem:[%s1575 + $0x80] sm:$0xff]
      %v1593 = vld [vmem:[%s1575 + $0x88] sm:$0xff]
      %v1594 = vld [vmem:[%s1575 + $0x90] sm:$0xff]
      %v1595 = vld [vmem:[%s1575 + $0x98] sm:$0xff]
      %v1596 = vld [vmem:[%s1575 + $0xa0] sm:$0xff]
      %v1597 = vld [vmem:[%s1575 + $0xa8] sm:$0xff]
      %v1598 = vld [vmem:[%s1575 + $0xb0] sm:$0xff]
      %v1599 = vld [vmem:[%s1575 + $0xb8] sm:$0xff]
      %v1600 = vld [vmem:[%s1575 + $0xc0] sm:$0xff]
      %v1601 = vld [vmem:[%s1575 + $0xc8] sm:$0xff]
      %v1602 = vld [vmem:[%s1575 + $0xd0] sm:$0xff]
      %v1603 = vld [vmem:[%s1575 + $0xd8] sm:$0xff]
      %v1604 = vld [vmem:[%s1575 + $0xe0] sm:$0xff]
      %v1605 = vld [vmem:[%s1575 + $0xe8] sm:$0xff]
      %v1606 = vld [vmem:[%s1575 + $0xf0] sm:$0xff]
      %v1607 = vld [vmem:[%s1575 + $0xf8] sm:$0xff]
      %v1608 = vld [vmem:[%s1575 + $0x100] sm:$0xff]
      %v1609 = vld [vmem:[%s1575 + $0x108] sm:$0xff]
      %v1610 = vld [vmem:[%s1575 + $0x110] sm:$0xff]
      %v1611 = vld [vmem:[%s1575 + $0x118] sm:$0xff]
      %v1612 = vld [vmem:[%s1575 + $0x120] sm:$0xff]
      %v1613 = vld [vmem:[%s1575 + $0x128] sm:$0xff]
      %v1614 = vld [vmem:[%s1575 + $0x130] sm:$0xff]
      %v1615 = vld [vmem:[%s1575 + $0x138] sm:$0xff]
      %v1616 = vld [vmem:[%s1575 + $0x140] sm:$0xff]
      %v1617 = vld [vmem:[%s1575 + $0x148] sm:$0xff]
      %v1618 = vld [vmem:[%s1575 + $0x150] sm:$0xff]
      %v1619 = vld [vmem:[%s1575 + $0x158] sm:$0xff]
      %v1620 = vld [vmem:[%s1575 + $0x160] sm:$0xff]
      %v1621 = vld [vmem:[%s1575 + $0x168] sm:$0xff]
      %v1622 = vld [vmem:[%s1575 + $0x170] sm:$0xff]
      %v1623 = vld [vmem:[%s1575 + $0x178] sm:$0xff]
      %v1624 = vld [vmem:[%s1575 + $0x180] sm:$0xff]
      %v1625 = vld [vmem:[%s1575 + $0x188] sm:$0xff]
      %v1627 = vsel %vm239, %v1576, 0
      %v1630 = vsel %vm239, %v1577, 0
      %v1633 = vsel %vm239, %v1578, 0
      %v1636 = vsel %vm239, %v1579, 0
      %v1639 = vsel %vm239, %v1580, 0
      %v1642 = vsel %vm239, %v1581, 0
      %v1645 = vsel %vm239, %v1582, 0
      %v1648 = vsel %vm239, %v1583, 0
      %v1651 = vsel %vm239, %v1584, 0
      %v1654 = vsel %vm239, %v1585, 0
      %v1657 = vsel %vm239, %v1586, 0
      %v1660 = vsel %vm239, %v1587, 0
      %v1663 = vsel %vm239, %v1588, 0
      %v1666 = vsel %vm239, %v1589, 0
      %v1669 = vsel %vm239, %v1590, 0
      %v1672 = vsel %vm239, %v1591, 0
      %v1675 = vsel %vm239, %v1592, 0
      %v1678 = vsel %vm239, %v1593, 0
      %v1681 = vsel %vm239, %v1594, 0
      %v1684 = vsel %vm239, %v1595, 0
      %v1687 = vsel %vm239, %v1596, 0
      %v1690 = vsel %vm239, %v1597, 0
      %v1693 = vsel %vm239, %v1598, 0
      %v1696 = vsel %vm239, %v1599, 0
      %v1699 = vsel %vm239, %v1600, 0
      %v1702 = vsel %vm239, %v1601, 0
      %v1705 = vsel %vm239, %v1602, 0
      %v1708 = vsel %vm239, %v1603, 0
      %v1711 = vsel %vm239, %v1604, 0
      %v1714 = vsel %vm239, %v1605, 0
      %v1717 = vsel %vm239, %v1606, 0
      %v1720 = vsel %vm239, %v1607, 0
      %v1723 = vsel %vm239, %v1608, 0
      %v1726 = vsel %vm239, %v1609, 0
      %v1729 = vsel %vm239, %v1610, 0
      %v1732 = vsel %vm239, %v1611, 0
      %v1735 = vsel %vm239, %v1612, 0
      %v1738 = vsel %vm239, %v1613, 0
      %v1741 = vsel %vm239, %v1614, 0
      %v1744 = vsel %vm239, %v1615, 0
      %v1747 = vsel %vm239, %v1616, 0
      %v1750 = vsel %vm239, %v1617, 0
      %v1753 = vsel %vm239, %v1618, 0
      %v1756 = vsel %vm239, %v1619, 0
      %v1759 = vsel %vm239, %v1620, 0
      %v1762 = vsel %vm239, %v1621, 0
      %v1765 = vsel %vm239, %v1622, 0
      %v1768 = vsel %vm239, %v1623, 0
      %v1771 = vsel %vm239, %v1624, 0
      %v1774 = vsel %vm239, %v1625, 0
      %1776 = vmatprep.subr.mxu0 0.0
      %1777 = vmatpush1.msra.mxu0 0.0
      %1778 = vmatprep.subr.mxu0 0.0
      %1779 = vmatpush1.msra.mxu0 0.0
      %1780 = vmatprep.subr.mxu0 0.0
      %1781 = vmatpush1.msra.mxu0 0.0
      %1782 = vmatprep.subr.mxu0 0.0
      %1783 = vmatpush1.msra.mxu0 0.0
      %1784 = vmatprep.subr.mxu0 0.0
      %1785 = vmatpush1.msra.mxu0 0.0
      %1786 = vmatprep.subr.mxu0 0.0
      %1787 = vmatpush1.msra.mxu0 %v392
      %1788 = vmatprep.subr.mxu0 0.0
      %1789 = vmatpush1.msra.mxu0 %v180
      %1790 = vmatprep.subr.mxu0 0.0
      %1791 = vmatpush1.msra.mxu0 %v179
      %1792 = vmatprep.subr.mxu0 0.0
      %1793 = vmatpush1.msra.mxu0 %v178
      %1794 = vmatprep.subr.mxu0 0.0
      %1795 = vmatpush1.msra.mxu0 %v177
      %1796 = vmatprep.subr.mxu0 0.0
      %1797 = vmatpush1.msra.mxu0 %v176
      %1798 = vmatprep.subr.mxu0 0.0
      %1799 = vmatpush1.msra.mxu0 %v175
      %1800 = vmatprep.subr.mxu0 0.0
      %1801 = vmatpush1.msra.mxu0 %v174
      %1802 = vmatprep.subr.mxu0 0.0
      %1803 = vmatpush1.msra.mxu0 %v173
      %1804 = vmatprep.subr.mxu0 0.0
      %1805 = vmatpush1.msra.mxu0 %v172
      %1806 = vmatprep.subr.mxu0 0.0
      %1807 = vmatpush1.msra.mxu0 %v171
      %1808 = vmatprep.subr.mxu0 0.0
      %1809 = vmatpush2.msra.mxu0 0.0
      %1810 = vmatprep.subr.mxu0 0.0
      %1811 = vmatpush2.msra.mxu0 0.0
      %1812 = vmatprep.subr.mxu0 0.0
      %1813 = vmatpush2.msra.mxu0 0.0
      %1814 = vmatprep.subr.mxu0 0.0
      %1815 = vmatpush2.msra.mxu0 0.0
      %1816 = vmatprep.subr.mxu0 0.0
      %1817 = vmatpush2.msra.mxu0 0.0
      %1818 = vmatprep.subr.mxu0 0.0
      %1819 = vmatpush2.msra.mxu0 0.0
      %1820 = vmatprep.subr.mxu0 0.0
      %1821 = vmatpush2.msra.mxu0 0.0
      %1822 = vmatprep.subr.mxu0 0.0
      %1823 = vmatpush2.msra.mxu0 0.0
      %1824 = vmatprep.subr.mxu0 0.0
      %1825 = vmatpush2.msra.mxu0 0.0
      %1826 = vmatprep.subr.mxu0 0.0
      %1827 = vmatpush2.msra.mxu0 0.0
      %1828 = vmatprep.subr.mxu0 0.0
      %1829 = vmatpush2.msra.mxu0 0.0
      %1830 = vmatprep.subr.mxu0 0.0
      %1831 = vmatpush2.msra.mxu0 0.0
      %1832 = vmatprep.subr.mxu0 0.0
      %1833 = vmatpush2.msra.mxu0 0.0
      %1834 = vmatprep.subr.mxu0 0.0
      %1835 = vmatpush2.msra.mxu0 0.0
      %1836 = vmatprep.subr.mxu0 0.0
      %1837 = vmatpush2.msra.mxu0 0.0
      %1838 = vmatprep.subr.mxu0 0.0
      %1839 = vmatpush2.msra.mxu0 0.0
      %1840 = vmatprep.mubr.f32.mxu0 0.0
      %1841 = vmatmul.mubr.f32.gmra.mxu0 %v1627
      %v1842 = vpop.f32.mrf.mxu0
      %v1843 = vadd.f32 %v237, %v1842
      %v1844 = vpop.f32.mrf.mxu0
      %1845 = vmatprep.mubr.f32.mxu0 0.0
      %1846 = vmatmul.mubr.f32.gmra.mxu0 %v1630
      %v1847 = vpop.f32.mrf.mxu0
      %v1848 = vadd.f32 %v237, %v1847
      %v1849 = vpop.f32.mrf.mxu0
      %1850 = vmatprep.mubr.f32.mxu0 0.0
      %1851 = vmatmul.mubr.f32.gmra.mxu0 %v1633
      %v1852 = vpop.f32.mrf.mxu0
      %v1853 = vadd.f32 %v237, %v1852
      %v1854 = vpop.f32.mrf.mxu0
      %1855 = vmatprep.mubr.f32.mxu0 0.0
      %1856 = vmatmul.mubr.f32.gmra.mxu0 %v1636
      %v1857 = vpop.f32.mrf.mxu0
      %v1858 = vadd.f32 %v237, %v1857
      %v1859 = vpop.f32.mrf.mxu0
      %1860 = vmatprep.mubr.f32.mxu0 0.0
      %1861 = vmatmul.mubr.f32.gmra.mxu0 %v1639
      %v1862 = vpop.f32.mrf.mxu0
      %v1863 = vadd.f32 %v237, %v1862
      %v1864 = vpop.f32.mrf.mxu0
      %1865 = vmatprep.mubr.f32.mxu0 0.0
      %1866 = vmatmul.mubr.f32.gmra.mxu0 %v1642
      %v1867 = vpop.f32.mrf.mxu0
      %v1868 = vadd.f32 %v237, %v1867
      %v1869 = vpop.f32.mrf.mxu0
      %1870 = vmatprep.mubr.f32.mxu0 0.0
      %1871 = vmatmul.mubr.f32.gmra.mxu0 %v1645
      %v1872 = vpop.f32.mrf.mxu0
      %v1873 = vadd.f32 %v237, %v1872
      %v1874 = vpop.f32.mrf.mxu0
      %1875 = vmatprep.mubr.f32.mxu0 0.0
      %1876 = vmatmul.mubr.f32.gmra.mxu0 %v1648
      %v1877 = vpop.f32.mrf.mxu0
      %v1878 = vadd.f32 %v237, %v1877
      %v1879 = vpop.f32.mrf.mxu0
      %1880 = vmatprep.mubr.f32.mxu0 0.0
      %1881 = vmatmul.mubr.f32.gmra.mxu0 %v1651
      %v1882 = vpop.f32.mrf.mxu0
      %v1883 = vadd.f32 %v237, %v1882
      %v1884 = vpop.f32.mrf.mxu0
      %1885 = vmatprep.mubr.f32.mxu0 0.0
      %1886 = vmatmul.mubr.f32.gmra.mxu0 %v1654
      %v1887 = vpop.f32.mrf.mxu0
      %v1888 = vadd.f32 %v237, %v1887
      %v1889 = vpop.f32.mrf.mxu0
      %1890 = vmatprep.mubr.f32.mxu0 0.0
      %1891 = vmatmul.mubr.f32.gmra.mxu0 %v1657
      %v1892 = vpop.f32.mrf.mxu0
      %v1893 = vadd.f32 %v237, %v1892
      %v1894 = vpop.f32.mrf.mxu0
      %1895 = vmatprep.mubr.f32.mxu0 0.0
      %1896 = vmatmul.mubr.f32.gmra.mxu0 %v1660
      %v1897 = vpop.f32.mrf.mxu0
      %v1898 = vadd.f32 %v237, %v1897
      %v1899 = vpop.f32.mrf.mxu0
      %1900 = vmatprep.mubr.f32.mxu0 0.0
      %1901 = vmatmul.mubr.f32.gmra.mxu0 %v1663
      %v1902 = vpop.f32.mrf.mxu0
      %v1903 = vadd.f32 %v237, %v1902
      %v1904 = vpop.f32.mrf.mxu0
      %1905 = vmatprep.mubr.f32.mxu0 0.0
      %1906 = vmatmul.mubr.f32.gmra.mxu0 %v1666
      %v1907 = vpop.f32.mrf.mxu0
      %v1908 = vadd.f32 %v237, %v1907
      %v1909 = vpop.f32.mrf.mxu0
      %1910 = vmatprep.mubr.f32.mxu0 0.0
      %1911 = vmatmul.mubr.f32.gmra.mxu0 %v1669
      %v1912 = vpop.f32.mrf.mxu0
      %v1913 = vadd.f32 %v237, %v1912
      %v1914 = vpop.f32.mrf.mxu0
      %1915 = vmatprep.mubr.f32.mxu0 0.0
      %1916 = vmatmul.mubr.f32.gmra.mxu0 %v1672
      %v1917 = vpop.f32.mrf.mxu0
      %v1918 = vadd.f32 %v237, %v1917
      %v1919 = vpop.f32.mrf.mxu0
      %1920 = vmatprep.mubr.f32.mxu0 0.0
      %1921 = vmatmul.mubr.f32.gmra.mxu0 %v1675
      %v1922 = vpop.f32.mrf.mxu0
      %v1923 = vadd.f32 %v237, %v1922
      %v1924 = vpop.f32.mrf.mxu0
      %1925 = vmatprep.mubr.f32.mxu0 0.0
      %1926 = vmatmul.mubr.f32.gmra.mxu0 %v1678
      %v1927 = vpop.f32.mrf.mxu0
      %v1928 = vadd.f32 %v237, %v1927
      %v1929 = vpop.f32.mrf.mxu0
      %1930 = vmatprep.mubr.f32.mxu0 0.0
      %1931 = vmatmul.mubr.f32.gmra.mxu0 %v1681
      %v1932 = vpop.f32.mrf.mxu0
      %v1933 = vadd.f32 %v237, %v1932
      %v1934 = vpop.f32.mrf.mxu0
      %1935 = vmatprep.mubr.f32.mxu0 0.0
      %1936 = vmatmul.mubr.f32.gmra.mxu0 %v1684
      %v1937 = vpop.f32.mrf.mxu0
      %v1938 = vadd.f32 %v237, %v1937
      %v1939 = vpop.f32.mrf.mxu0
      %1940 = vmatprep.mubr.f32.mxu0 0.0
      %1941 = vmatmul.mubr.f32.gmra.mxu0 %v1687
      %v1942 = vpop.f32.mrf.mxu0
      %v1943 = vadd.f32 %v237, %v1942
      %v1944 = vpop.f32.mrf.mxu0
      %1945 = vmatprep.mubr.f32.mxu0 0.0
      %1946 = vmatmul.mubr.f32.gmra.mxu0 %v1690
      %v1947 = vpop.f32.mrf.mxu0
      %v1948 = vadd.f32 %v237, %v1947
      %v1949 = vpop.f32.mrf.mxu0
      %1950 = vmatprep.mubr.f32.mxu0 0.0
      %1951 = vmatmul.mubr.f32.gmra.mxu0 %v1693
      %v1952 = vpop.f32.mrf.mxu0
      %v1953 = vadd.f32 %v237, %v1952
      %v1954 = vpop.f32.mrf.mxu0
      %1955 = vmatprep.mubr.f32.mxu0 0.0
      %1956 = vmatmul.mubr.f32.gmra.mxu0 %v1696
      %v1957 = vpop.f32.mrf.mxu0
      %v1958 = vadd.f32 %v237, %v1957
      %v1959 = vpop.f32.mrf.mxu0
      %1960 = vmatprep.mubr.f32.mxu0 0.0
      %1961 = vmatmul.mubr.f32.gmra.mxu0 %v1699
      %v1962 = vpop.f32.mrf.mxu0
      %v1963 = vadd.f32 %v237, %v1962
      %v1964 = vpop.f32.mrf.mxu0
      %1965 = vmatprep.mubr.f32.mxu0 0.0
      %1966 = vmatmul.mubr.f32.gmra.mxu0 %v1702
      %v1967 = vpop.f32.mrf.mxu0
      %v1968 = vadd.f32 %v237, %v1967
      %v1969 = vpop.f32.mrf.mxu0
      %1970 = vmatprep.mubr.f32.mxu0 0.0
      %1971 = vmatmul.mubr.f32.gmra.mxu0 %v1705
      %v1972 = vpop.f32.mrf.mxu0
      %v1973 = vadd.f32 %v237, %v1972
      %v1974 = vpop.f32.mrf.mxu0
      %1975 = vmatprep.mubr.f32.mxu0 0.0
      %1976 = vmatmul.mubr.f32.gmra.mxu0 %v1708
      %v1977 = vpop.f32.mrf.mxu0
      %v1978 = vadd.f32 %v237, %v1977
      %v1979 = vpop.f32.mrf.mxu0
      %1980 = vmatprep.mubr.f32.mxu0 0.0
      %1981 = vmatmul.mubr.f32.gmra.mxu0 %v1711
      %v1982 = vpop.f32.mrf.mxu0
      %v1983 = vadd.f32 %v237, %v1982
      %v1984 = vpop.f32.mrf.mxu0
      %1985 = vmatprep.mubr.f32.mxu0 0.0
      %1986 = vmatmul.mubr.f32.gmra.mxu0 %v1714
      %v1987 = vpop.f32.mrf.mxu0
      %v1988 = vadd.f32 %v237, %v1987
      %v1989 = vpop.f32.mrf.mxu0
      %1990 = vmatprep.mubr.f32.mxu0 0.0
      %1991 = vmatmul.mubr.f32.gmra.mxu0 %v1717
      %v1992 = vpop.f32.mrf.mxu0
      %v1993 = vadd.f32 %v237, %v1992
      %v1994 = vpop.f32.mrf.mxu0
      %1995 = vmatprep.mubr.f32.mxu0 0.0
      %1996 = vmatmul.mubr.f32.gmra.mxu0 %v1720
      %v1997 = vpop.f32.mrf.mxu0
      %v1998 = vadd.f32 %v237, %v1997
      %v1999 = vpop.f32.mrf.mxu0
      %2000 = vmatprep.mubr.f32.mxu0 0.0
      %2001 = vmatmul.mubr.f32.gmra.mxu0 %v1723
      %v2002 = vpop.f32.mrf.mxu0
      %v2003 = vadd.f32 %v237, %v2002
      %v2004 = vpop.f32.mrf.mxu0
      %2005 = vmatprep.mubr.f32.mxu0 0.0
      %2006 = vmatmul.mubr.f32.gmra.mxu0 %v1726
      %v2007 = vpop.f32.mrf.mxu0
      %v2008 = vadd.f32 %v237, %v2007
      %v2009 = vpop.f32.mrf.mxu0
      %2010 = vmatprep.mubr.f32.mxu0 0.0
      %2011 = vmatmul.mubr.f32.gmra.mxu0 %v1729
      %v2012 = vpop.f32.mrf.mxu0
      %v2013 = vadd.f32 %v237, %v2012
      %v2014 = vpop.f32.mrf.mxu0
      %2015 = vmatprep.mubr.f32.mxu0 0.0
      %2016 = vmatmul.mubr.f32.gmra.mxu0 %v1732
      %v2017 = vpop.f32.mrf.mxu0
      %v2018 = vadd.f32 %v237, %v2017
      %v2019 = vpop.f32.mrf.mxu0
      %2020 = vmatprep.mubr.f32.mxu0 0.0
      %2021 = vmatmul.mubr.f32.gmra.mxu0 %v1735
      %v2022 = vpop.f32.mrf.mxu0
      %v2023 = vadd.f32 %v237, %v2022
      %v2024 = vpop.f32.mrf.mxu0
      %2025 = vmatprep.mubr.f32.mxu0 0.0
      %2026 = vmatmul.mubr.f32.gmra.mxu0 %v1738
      %v2027 = vpop.f32.mrf.mxu0
      %v2028 = vadd.f32 %v237, %v2027
      %v2029 = vpop.f32.mrf.mxu0
      %2030 = vmatprep.mubr.f32.mxu0 0.0
      %2031 = vmatmul.mubr.f32.gmra.mxu0 %v1741
      %v2032 = vpop.f32.mrf.mxu0
      %v2033 = vadd.f32 %v237, %v2032
      %v2034 = vpop.f32.mrf.mxu0
      %2035 = vmatprep.mubr.f32.mxu0 0.0
      %2036 = vmatmul.mubr.f32.gmra.mxu0 %v1744
      %v2037 = vpop.f32.mrf.mxu0
      %v2038 = vadd.f32 %v237, %v2037
      %v2039 = vpop.f32.mrf.mxu0
      %2040 = vmatprep.mubr.f32.mxu0 0.0
      %2041 = vmatmul.mubr.f32.gmra.mxu0 %v1747
      %v2042 = vpop.f32.mrf.mxu0
      %v2043 = vadd.f32 %v237, %v2042
      %v2044 = vpop.f32.mrf.mxu0
      %2045 = vmatprep.mubr.f32.mxu0 0.0
      %2046 = vmatmul.mubr.f32.gmra.mxu0 %v1750
      %v2047 = vpop.f32.mrf.mxu0
      %v2048 = vadd.f32 %v237, %v2047
      %v2049 = vpop.f32.mrf.mxu0
      %2050 = vmatprep.mubr.f32.mxu0 0.0
      %2051 = vmatmul.mubr.f32.gmra.mxu0 %v1753
      %v2052 = vpop.f32.mrf.mxu0
      %v2053 = vadd.f32 %v237, %v2052
      %v2054 = vpop.f32.mrf.mxu0
      %2055 = vmatprep.mubr.f32.mxu0 0.0
      %2056 = vmatmul.mubr.f32.gmra.mxu0 %v1756
      %v2057 = vpop.f32.mrf.mxu0
      %v2058 = vadd.f32 %v237, %v2057
      %v2059 = vpop.f32.mrf.mxu0
      %2060 = vmatprep.mubr.f32.mxu0 0.0
      %2061 = vmatmul.mubr.f32.gmra.mxu0 %v1759
      %v2062 = vpop.f32.mrf.mxu0
      %v2063 = vadd.f32 %v237, %v2062
      %v2064 = vpop.f32.mrf.mxu0
      %2065 = vmatprep.mubr.f32.mxu0 0.0
      %2066 = vmatmul.mubr.f32.gmra.mxu0 %v1762
      %v2067 = vpop.f32.mrf.mxu0
      %v2068 = vadd.f32 %v237, %v2067
      %v2069 = vpop.f32.mrf.mxu0
      %2070 = vmatprep.mubr.f32.mxu0 0.0
      %2071 = vmatmul.mubr.f32.gmra.mxu0 %v1765
      %v2072 = vpop.f32.mrf.mxu0
      %v2073 = vadd.f32 %v237, %v2072
      %v2074 = vpop.f32.mrf.mxu0
      %2075 = vmatprep.mubr.f32.mxu0 0.0
      %2076 = vmatmul.mubr.f32.gmra.mxu0 %v1768
      %v2077 = vpop.f32.mrf.mxu0
      %v2078 = vadd.f32 %v237, %v2077
      %v2079 = vpop.f32.mrf.mxu0
      %2080 = vmatprep.mubr.f32.mxu0 0.0
      %2081 = vmatmul.mubr.f32.gmra.mxu0 %v1771
      %v2082 = vpop.f32.mrf.mxu0
      %v2083 = vadd.f32 %v237, %v2082
      %v2084 = vpop.f32.mrf.mxu0
      %2085 = vmatprep.mubr.f32.mxu0 0.0
      %2086 = vmatmul.mubr.f32.gmra.mxu0 %v1774
      %v2087 = vpop.f32.mrf.mxu0
      %v2088 = vadd.f32 %v237, %v2087
      %v2089 = vpop.f32.mrf.mxu0
      %2090 = vdwg.mxu0
      %vm2091 = vcmp.gt.f32.partialorder %v1843, 0.0
      %vm2092 = vcmp.gt.f32.partialorder %v1848, 0.0
      %vm2093 = vcmp.gt.f32.partialorder %v1853, 0.0
      %vm2094 = vcmp.gt.f32.partialorder %v1858, 0.0
      %vm2095 = vcmp.gt.f32.partialorder %v1863, 0.0
      %vm2096 = vcmp.gt.f32.partialorder %v1868, 0.0
      %vm2097 = vcmp.gt.f32.partialorder %v1873, 0.0
      %vm2098 = vcmp.gt.f32.partialorder %v1878, 0.0
      %vm2099 = vcmp.gt.f32.partialorder %v1883, 0.0
      %vm2100 = vcmp.gt.f32.partialorder %v1888, 0.0
      %vm2101 = vcmp.gt.f32.partialorder %v1893, 0.0
      %vm2102 = vcmp.gt.f32.partialorder %v1898, 0.0
      %vm2103 = vcmp.gt.f32.partialorder %v1903, 0.0
      %vm2104 = vcmp.gt.f32.partialorder %v1908, 0.0
      %vm2105 = vcmp.gt.f32.partialorder %v1913, 0.0
      %vm2106 = vcmp.gt.f32.partialorder %v1918, 0.0
      %vm2107 = vcmp.gt.f32.partialorder %v1923, 0.0
      %vm2108 = vcmp.gt.f32.partialorder %v1928, 0.0
      %vm2109 = vcmp.gt.f32.partialorder %v1933, 0.0
      %vm2110 = vcmp.gt.f32.partialorder %v1938, 0.0
      %vm2111 = vcmp.gt.f32.partialorder %v1943, 0.0
      %vm2112 = vcmp.gt.f32.partialorder %v1948, 0.0
      %vm2113 = vcmp.gt.f32.partialorder %v1953, 0.0
      %vm2114 = vcmp.gt.f32.partialorder %v1958, 0.0
      %vm2115 = vcmp.gt.f32.partialorder %v1963, 0.0
      %vm2116 = vcmp.gt.f32.partialorder %v1968, 0.0
      %vm2117 = vcmp.gt.f32.partialorder %v1973, 0.0
      %vm2118 = vcmp.gt.f32.partialorder %v1978, 0.0
      %vm2119 = vcmp.gt.f32.partialorder %v1983, 0.0
      %vm2120 = vcmp.gt.f32.partialorder %v1988, 0.0
      %vm2121 = vcmp.gt.f32.partialorder %v1993, 0.0
      %vm2122 = vcmp.gt.f32.partialorder %v1998, 0.0
      %vm2123 = vcmp.gt.f32.partialorder %v2003, 0.0
      %vm2124 = vcmp.gt.f32.partialorder %v2008, 0.0
      %vm2125 = vcmp.gt.f32.partialorder %v2013, 0.0
      %vm2126 = vcmp.gt.f32.partialorder %v2018, 0.0
      %vm2127 = vcmp.gt.f32.partialorder %v2023, 0.0
      %vm2128 = vcmp.gt.f32.partialorder %v2028, 0.0
      %vm2129 = vcmp.gt.f32.partialorder %v2033, 0.0
      %vm2130 = vcmp.gt.f32.partialorder %v2038, 0.0
      %vm2131 = vcmp.gt.f32.partialorder %v2043, 0.0
      %vm2132 = vcmp.gt.f32.partialorder %v2048, 0.0
      %vm2133 = vcmp.gt.f32.partialorder %v2053, 0.0
      %vm2134 = vcmp.gt.f32.partialorder %v2058, 0.0
      %vm2135 = vcmp.gt.f32.partialorder %v2063, 0.0
      %vm2136 = vcmp.gt.f32.partialorder %v2068, 0.0
      %vm2137 = vcmp.gt.f32.partialorder %v2073, 0.0
      %vm2138 = vcmp.gt.f32.partialorder %v2078, 0.0
      %vm2139 = vcmp.gt.f32.partialorder %v2083, 0.0
      %vm2140 = vcmp.gt.f32.partialorder %v2088, 0.0
      %v2141 = vmul.f32 %v1843, 0.2
      %v2142 = vmul.f32 %v1848, 0.2
      %v2143 = vmul.f32 %v1853, 0.2
      %v2144 = vmul.f32 %v1858, 0.2
      %v2145 = vmul.f32 %v1863, 0.2
      %v2146 = vmul.f32 %v1868, 0.2
      %v2147 = vmul.f32 %v1873, 0.2
      %v2148 = vmul.f32 %v1878, 0.2
      %v2149 = vmul.f32 %v1883, 0.2
      %v2150 = vmul.f32 %v1888, 0.2
      %v2151 = vmul.f32 %v1893, 0.2
      %v2152 = vmul.f32 %v1898, 0.2
      %v2153 = vmul.f32 %v1903, 0.2
      %v2154 = vmul.f32 %v1908, 0.2
      %v2155 = vmul.f32 %v1913, 0.2
      %v2156 = vmul.f32 %v1918, 0.2
      %v2157 = vmul.f32 %v1923, 0.2
      %v2158 = vmul.f32 %v1928, 0.2
      %v2159 = vmul.f32 %v1933, 0.2
      %v2160 = vmul.f32 %v1938, 0.2
      %v2161 = vmul.f32 %v1943, 0.2
      %v2162 = vmul.f32 %v1948, 0.2
      %v2163 = vmul.f32 %v1953, 0.2
      %v2164 = vmul.f32 %v1958, 0.2
      %v2165 = vmul.f32 %v1963, 0.2
      %v2166 = vmul.f32 %v1968, 0.2
      %v2167 = vmul.f32 %v1973, 0.2
      %v2168 = vmul.f32 %v1978, 0.2
      %v2169 = vmul.f32 %v1983, 0.2
      %v2170 = vmul.f32 %v1988, 0.2
      %v2171 = vmul.f32 %v1993, 0.2
      %v2172 = vmul.f32 %v1998, 0.2
      %v2173 = vmul.f32 %v2003, 0.2
      %v2174 = vmul.f32 %v2008, 0.2
      %v2175 = vmul.f32 %v2013, 0.2
      %v2176 = vmul.f32 %v2018, 0.2
      %v2177 = vmul.f32 %v2023, 0.2
      %v2178 = vmul.f32 %v2028, 0.2
      %v2179 = vmul.f32 %v2033, 0.2
      %v2180 = vmul.f32 %v2038, 0.2
      %v2181 = vmul.f32 %v2043, 0.2
      %v2182 = vmul.f32 %v2048, 0.2
      %v2183 = vmul.f32 %v2053, 0.2
      %v2184 = vmul.f32 %v2058, 0.2
      %v2185 = vmul.f32 %v2063, 0.2
      %v2186 = vmul.f32 %v2068, 0.2
      %v2187 = vmul.f32 %v2073, 0.2
      %v2188 = vmul.f32 %v2078, 0.2
      %v2189 = vmul.f32 %v2083, 0.2
      %v2190 = vmul.f32 %v2088, 0.2
      %v2191 = vsel %vm2091, %v1843, %v2141
      %v2192 = vsel %vm2092, %v1848, %v2142
      %v2193 = vsel %vm2093, %v1853, %v2143
      %v2194 = vsel %vm2094, %v1858, %v2144
      %v2195 = vsel %vm2095, %v1863, %v2145
      %v2196 = vsel %vm2096, %v1868, %v2146
      %v2197 = vsel %vm2097, %v1873, %v2147
      %v2198 = vsel %vm2098, %v1878, %v2148
      %v2199 = vsel %vm2099, %v1883, %v2149
      %v2200 = vsel %vm2100, %v1888, %v2150
      %v2201 = vsel %vm2101, %v1893, %v2151
      %v2202 = vsel %vm2102, %v1898, %v2152
      %v2203 = vsel %vm2103, %v1903, %v2153
      %v2204 = vsel %vm2104, %v1908, %v2154
      %v2205 = vsel %vm2105, %v1913, %v2155
      %v2206 = vsel %vm2106, %v1918, %v2156
      %v2207 = vsel %vm2107, %v1923, %v2157
      %v2208 = vsel %vm2108, %v1928, %v2158
      %v2209 = vsel %vm2109, %v1933, %v2159
      %v2210 = vsel %vm2110, %v1938, %v2160
      %v2211 = vsel %vm2111, %v1943, %v2161
      %v2212 = vsel %vm2112, %v1948, %v2162
      %v2213 = vsel %vm2113, %v1953, %v2163
      %v2214 = vsel %vm2114, %v1958, %v2164
      %v2215 = vsel %vm2115, %v1963, %v2165
      %v2216 = vsel %vm2116, %v1968, %v2166
      %v2217 = vsel %vm2117, %v1973, %v2167
      %v2218 = vsel %vm2118, %v1978, %v2168
      %v2219 = vsel %vm2119, %v1983, %v2169
      %v2220 = vsel %vm2120, %v1988, %v2170
      %v2221 = vsel %vm2121, %v1993, %v2171
      %v2222 = vsel %vm2122, %v1998, %v2172
      %v2223 = vsel %vm2123, %v2003, %v2173
      %v2224 = vsel %vm2124, %v2008, %v2174
      %v2225 = vsel %vm2125, %v2013, %v2175
      %v2226 = vsel %vm2126, %v2018, %v2176
      %v2227 = vsel %vm2127, %v2023, %v2177
      %v2228 = vsel %vm2128, %v2028, %v2178
      %v2229 = vsel %vm2129, %v2033, %v2179
      %v2230 = vsel %vm2130, %v2038, %v2180
      %v2231 = vsel %vm2131, %v2043, %v2181
      %v2232 = vsel %vm2132, %v2048, %v2182
      %v2233 = vsel %vm2133, %v2053, %v2183
      %v2234 = vsel %vm2134, %v2058, %v2184
      %v2235 = vsel %vm2135, %v2063, %v2185
      %v2236 = vsel %vm2136, %v2068, %v2186
      %v2237 = vsel %vm2137, %v2073, %v2187
      %v2238 = vsel %vm2138, %v2078, %v2188
      %v2239 = vsel %vm2139, %v2083, %v2189
      %v2240 = vsel %vm2140, %v2088, %v2190
      %v2241 = vadd.f32 %v1525, %v2191
      %v2242 = vadd.f32 %v1526, %v2192
      %v2243 = vadd.f32 %v1527, %v2193
      %v2244 = vadd.f32 %v1528, %v2194
      %v2245 = vadd.f32 %v1529, %v2195
      %v2246 = vadd.f32 %v1530, %v2196
      %v2247 = vadd.f32 %v1531, %v2197
      %v2248 = vadd.f32 %v1532, %v2198
      %v2249 = vadd.f32 %v1533, %v2199
      %v2250 = vadd.f32 %v1534, %v2200
      %v2251 = vadd.f32 %v1535, %v2201
      %v2252 = vadd.f32 %v1536, %v2202
      %v2253 = vadd.f32 %v1537, %v2203
      %v2254 = vadd.f32 %v1538, %v2204
      %v2255 = vadd.f32 %v1539, %v2205
      %v2256 = vadd.f32 %v1540, %v2206
      %v2257 = vadd.f32 %v1541, %v2207
      %v2258 = vadd.f32 %v1542, %v2208
      %v2259 = vadd.f32 %v1543, %v2209
      %v2260 = vadd.f32 %v1544, %v2210
      %v2261 = vadd.f32 %v1545, %v2211
      %v2262 = vadd.f32 %v1546, %v2212
      %v2263 = vadd.f32 %v1547, %v2213
      %v2264 = vadd.f32 %v1548, %v2214
      %v2265 = vadd.f32 %v1549, %v2215
      %v2266 = vadd.f32 %v1550, %v2216
      %v2267 = vadd.f32 %v1551, %v2217
      %v2268 = vadd.f32 %v1552, %v2218
      %v2269 = vadd.f32 %v1553, %v2219
      %v2270 = vadd.f32 %v1554, %v2220
      %v2271 = vadd.f32 %v1555, %v2221
      %v2272 = vadd.f32 %v1556, %v2222
      %v2273 = vadd.f32 %v1557, %v2223
      %v2274 = vadd.f32 %v1558, %v2224
      %v2275 = vadd.f32 %v1559, %v2225
      %v2276 = vadd.f32 %v1560, %v2226
      %v2277 = vadd.f32 %v1561, %v2227
      %v2278 = vadd.f32 %v1562, %v2228
      %v2279 = vadd.f32 %v1563, %v2229
      %v2280 = vadd.f32 %v1564, %v2230
      %v2281 = vadd.f32 %v1565, %v2231
      %v2282 = vadd.f32 %v1566, %v2232
      %v2283 = vadd.f32 %v1567, %v2233
      %v2284 = vadd.f32 %v1568, %v2234
      %v2285 = vadd.f32 %v1569, %v2235
      %v2286 = vadd.f32 %v1570, %v2236
      %v2287 = vadd.f32 %v1571, %v2237
      %v2288 = vadd.f32 %v1572, %v2238
      %v2289 = vadd.f32 %v1573, %v2239
      %v2290 = vadd.f32 %v1574, %v2240
      %s2291 = scalar_lea.vmem %s165, 1200
      %v2292 = vld [vmem:[%s2291] sm:$0xff]
      %v2293 = vld [vmem:[%s2291 + $0x8] sm:$0xff]
      %v2294 = vld [vmem:[%s2291 + $0x10] sm:$0xff]
      %v2295 = vld [vmem:[%s2291 + $0x18] sm:$0xff]
      %v2296 = vld [vmem:[%s2291 + $0x20] sm:$0xff]
      %v2297 = vld [vmem:[%s2291 + $0x28] sm:$0xff]
      %v2298 = vld [vmem:[%s2291 + $0x30] sm:$0xff]
      %v2299 = vld [vmem:[%s2291 + $0x38] sm:$0xff]
      %v2300 = vld [vmem:[%s2291 + $0x40] sm:$0xff]
      %v2301 = vld [vmem:[%s2291 + $0x48] sm:$0xff]
      %v2302 = vld [vmem:[%s2291 + $0x50] sm:$0xff]
      %v2303 = vld [vmem:[%s2291 + $0x58] sm:$0xff]
      %v2304 = vld [vmem:[%s2291 + $0x60] sm:$0xff]
      %v2305 = vld [vmem:[%s2291 + $0x68] sm:$0xff]
      %v2306 = vld [vmem:[%s2291 + $0x70] sm:$0xff]
      %v2307 = vld [vmem:[%s2291 + $0x78] sm:$0xff]
      %v2308 = vld [vmem:[%s2291 + $0x80] sm:$0xff]
      %v2309 = vld [vmem:[%s2291 + $0x88] sm:$0xff]
      %v2310 = vld [vmem:[%s2291 + $0x90] sm:$0xff]
      %v2311 = vld [vmem:[%s2291 + $0x98] sm:$0xff]
      %v2312 = vld [vmem:[%s2291 + $0xa0] sm:$0xff]
      %v2313 = vld [vmem:[%s2291 + $0xa8] sm:$0xff]
      %v2314 = vld [vmem:[%s2291 + $0xb0] sm:$0xff]
      %v2315 = vld [vmem:[%s2291 + $0xb8] sm:$0xff]
      %v2316 = vld [vmem:[%s2291 + $0xc0] sm:$0xff]
      %v2317 = vld [vmem:[%s2291 + $0xc8] sm:$0xff]
      %v2318 = vld [vmem:[%s2291 + $0xd0] sm:$0xff]
      %v2319 = vld [vmem:[%s2291 + $0xd8] sm:$0xff]
      %v2320 = vld [vmem:[%s2291 + $0xe0] sm:$0xff]
      %v2321 = vld [vmem:[%s2291 + $0xe8] sm:$0xff]
      %v2322 = vld [vmem:[%s2291 + $0xf0] sm:$0xff]
      %v2323 = vld [vmem:[%s2291 + $0xf8] sm:$0xff]
      %v2324 = vld [vmem:[%s2291 + $0x100] sm:$0xff]
      %v2325 = vld [vmem:[%s2291 + $0x108] sm:$0xff]
      %v2326 = vld [vmem:[%s2291 + $0x110] sm:$0xff]
      %v2327 = vld [vmem:[%s2291 + $0x118] sm:$0xff]
      %v2328 = vld [vmem:[%s2291 + $0x120] sm:$0xff]
      %v2329 = vld [vmem:[%s2291 + $0x128] sm:$0xff]
      %v2330 = vld [vmem:[%s2291 + $0x130] sm:$0xff]
      %v2331 = vld [vmem:[%s2291 + $0x138] sm:$0xff]
      %v2332 = vld [vmem:[%s2291 + $0x140] sm:$0xff]
      %v2333 = vld [vmem:[%s2291 + $0x148] sm:$0xff]
      %v2334 = vld [vmem:[%s2291 + $0x150] sm:$0xff]
      %v2335 = vld [vmem:[%s2291 + $0x158] sm:$0xff]
      %v2336 = vld [vmem:[%s2291 + $0x160] sm:$0xff]
      %v2337 = vld [vmem:[%s2291 + $0x168] sm:$0xff]
      %v2338 = vld [vmem:[%s2291 + $0x170] sm:$0xff]
      %v2339 = vld [vmem:[%s2291 + $0x178] sm:$0xff]
      %v2340 = vld [vmem:[%s2291 + $0x180] sm:$0xff]
      %v2341 = vld [vmem:[%s2291 + $0x188] sm:$0xff]
      %v2343 = vsel %vm239, %v2292, 0
      %v2346 = vsel %vm239, %v2293, 0
      %v2349 = vsel %vm239, %v2294, 0
      %v2352 = vsel %vm239, %v2295, 0
      %v2355 = vsel %vm239, %v2296, 0
      %v2358 = vsel %vm239, %v2297, 0
      %v2361 = vsel %vm239, %v2298, 0
      %v2364 = vsel %vm239, %v2299, 0
      %v2367 = vsel %vm239, %v2300, 0
      %v2370 = vsel %vm239, %v2301, 0
      %v2373 = vsel %vm239, %v2302, 0
      %v2376 = vsel %vm239, %v2303, 0
      %v2379 = vsel %vm239, %v2304, 0
      %v2382 = vsel %vm239, %v2305, 0
      %v2385 = vsel %vm239, %v2306, 0
      %v2388 = vsel %vm239, %v2307, 0
      %v2391 = vsel %vm239, %v2308, 0
      %v2394 = vsel %vm239, %v2309, 0
      %v2397 = vsel %vm239, %v2310, 0
      %v2400 = vsel %vm239, %v2311, 0
      %v2403 = vsel %vm239, %v2312, 0
      %v2406 = vsel %vm239, %v2313, 0
      %v2409 = vsel %vm239, %v2314, 0
      %v2412 = vsel %vm239, %v2315, 0
      %v2415 = vsel %vm239, %v2316, 0
      %v2418 = vsel %vm239, %v2317, 0
      %v2421 = vsel %vm239, %v2318, 0
      %v2424 = vsel %vm239, %v2319, 0
      %v2427 = vsel %vm239, %v2320, 0
      %v2430 = vsel %vm239, %v2321, 0
      %v2433 = vsel %vm239, %v2322, 0
      %v2436 = vsel %vm239, %v2323, 0
      %v2439 = vsel %vm239, %v2324, 0
      %v2442 = vsel %vm239, %v2325, 0
      %v2445 = vsel %vm239, %v2326, 0
      %v2448 = vsel %vm239, %v2327, 0
      %v2451 = vsel %vm239, %v2328, 0
      %v2454 = vsel %vm239, %v2329, 0
      %v2457 = vsel %vm239, %v2330, 0
      %v2460 = vsel %vm239, %v2331, 0
      %v2463 = vsel %vm239, %v2332, 0
      %v2466 = vsel %vm239, %v2333, 0
      %v2469 = vsel %vm239, %v2334, 0
      %v2472 = vsel %vm239, %v2335, 0
      %v2475 = vsel %vm239, %v2336, 0
      %v2478 = vsel %vm239, %v2337, 0
      %v2481 = vsel %vm239, %v2338, 0
      %v2484 = vsel %vm239, %v2339, 0
      %v2487 = vsel %vm239, %v2340, 0
      %v2490 = vsel %vm239, %v2341, 0
      %2492 = vmatprep.subr.mxu0 0.0
      %2493 = vmatpush1.msra.mxu0 0.0
      %2494 = vmatprep.subr.mxu0 0.0
      %2495 = vmatpush1.msra.mxu0 0.0
      %2496 = vmatprep.subr.mxu0 0.0
      %2497 = vmatpush1.msra.mxu0 0.0
      %2498 = vmatprep.subr.mxu0 0.0
      %2499 = vmatpush1.msra.mxu0 0.0
      %2500 = vmatprep.subr.mxu0 0.0
      %2501 = vmatpush1.msra.mxu0 0.0
      %2502 = vmatprep.subr.mxu0 0.0
      %2503 = vmatpush1.msra.mxu0 %v392
      %2504 = vmatprep.subr.mxu0 0.0
      %2505 = vmatpush1.msra.mxu0 %v180
      %2506 = vmatprep.subr.mxu0 0.0
      %2507 = vmatpush1.msra.mxu0 %v179
      %2508 = vmatprep.subr.mxu0 0.0
      %2509 = vmatpush1.msra.mxu0 %v178
      %2510 = vmatprep.subr.mxu0 0.0
      %2511 = vmatpush1.msra.mxu0 %v177
      %2512 = vmatprep.subr.mxu0 0.0
      %2513 = vmatpush1.msra.mxu0 %v176
      %2514 = vmatprep.subr.mxu0 0.0
      %2515 = vmatpush1.msra.mxu0 %v175
      %2516 = vmatprep.subr.mxu0 0.0
      %2517 = vmatpush1.msra.mxu0 %v174
      %2518 = vmatprep.subr.mxu0 0.0
      %2519 = vmatpush1.msra.mxu0 %v173
      %2520 = vmatprep.subr.mxu0 0.0
      %2521 = vmatpush1.msra.mxu0 %v172
      %2522 = vmatprep.subr.mxu0 0.0
      %2523 = vmatpush1.msra.mxu0 %v171
      %2524 = vmatprep.subr.mxu0 0.0
      %2525 = vmatpush2.msra.mxu0 0.0
      %2526 = vmatprep.subr.mxu0 0.0
      %2527 = vmatpush2.msra.mxu0 0.0
      %2528 = vmatprep.subr.mxu0 0.0
      %2529 = vmatpush2.msra.mxu0 0.0
      %2530 = vmatprep.subr.mxu0 0.0
      %2531 = vmatpush2.msra.mxu0 0.0
      %2532 = vmatprep.subr.mxu0 0.0
      %2533 = vmatpush2.msra.mxu0 0.0
      %2534 = vmatprep.subr.mxu0 0.0
      %2535 = vmatpush2.msra.mxu0 0.0
      %2536 = vmatprep.subr.mxu0 0.0
      %2537 = vmatpush2.msra.mxu0 0.0
      %2538 = vmatprep.subr.mxu0 0.0
      %2539 = vmatpush2.msra.mxu0 0.0
      %2540 = vmatprep.subr.mxu0 0.0
      %2541 = vmatpush2.msra.mxu0 0.0
      %2542 = vmatprep.subr.mxu0 0.0
      %2543 = vmatpush2.msra.mxu0 0.0
      %2544 = vmatprep.subr.mxu0 0.0
      %2545 = vmatpush2.msra.mxu0 0.0
      %2546 = vmatprep.subr.mxu0 0.0
      %2547 = vmatpush2.msra.mxu0 0.0
      %2548 = vmatprep.subr.mxu0 0.0
      %2549 = vmatpush2.msra.mxu0 0.0
      %2550 = vmatprep.subr.mxu0 0.0
      %2551 = vmatpush2.msra.mxu0 0.0
      %2552 = vmatprep.subr.mxu0 0.0
      %2553 = vmatpush2.msra.mxu0 0.0
      %2554 = vmatprep.subr.mxu0 0.0
      %2555 = vmatpush2.msra.mxu0 0.0
      %2556 = vmatprep.mubr.f32.mxu0 0.0
      %2557 = vmatmul.mubr.f32.gmra.mxu0 %v2343
      %v2558 = vpop.f32.mrf.mxu0
      %v2559 = vadd.f32 %v237, %v2558
      %v2560 = vpop.f32.mrf.mxu0
      %2561 = vmatprep.mubr.f32.mxu0 0.0
      %2562 = vmatmul.mubr.f32.gmra.mxu0 %v2346
      %v2563 = vpop.f32.mrf.mxu0
      %v2564 = vadd.f32 %v237, %v2563
      %v2565 = vpop.f32.mrf.mxu0
      %2566 = vmatprep.mubr.f32.mxu0 0.0
      %2567 = vmatmul.mubr.f32.gmra.mxu0 %v2349
      %v2568 = vpop.f32.mrf.mxu0
      %v2569 = vadd.f32 %v237, %v2568
      %v2570 = vpop.f32.mrf.mxu0
      %2571 = vmatprep.mubr.f32.mxu0 0.0
      %2572 = vmatmul.mubr.f32.gmra.mxu0 %v2352
      %v2573 = vpop.f32.mrf.mxu0
      %v2574 = vadd.f32 %v237, %v2573
      %v2575 = vpop.f32.mrf.mxu0
      %2576 = vmatprep.mubr.f32.mxu0 0.0
      %2577 = vmatmul.mubr.f32.gmra.mxu0 %v2355
      %v2578 = vpop.f32.mrf.mxu0
      %v2579 = vadd.f32 %v237, %v2578
      %v2580 = vpop.f32.mrf.mxu0
      %2581 = vmatprep.mubr.f32.mxu0 0.0
      %2582 = vmatmul.mubr.f32.gmra.mxu0 %v2358
      %v2583 = vpop.f32.mrf.mxu0
      %v2584 = vadd.f32 %v237, %v2583
      %v2585 = vpop.f32.mrf.mxu0
      %2586 = vmatprep.mubr.f32.mxu0 0.0
      %2587 = vmatmul.mubr.f32.gmra.mxu0 %v2361
      %v2588 = vpop.f32.mrf.mxu0
      %v2589 = vadd.f32 %v237, %v2588
      %v2590 = vpop.f32.mrf.mxu0
      %2591 = vmatprep.mubr.f32.mxu0 0.0
      %2592 = vmatmul.mubr.f32.gmra.mxu0 %v2364
      %v2593 = vpop.f32.mrf.mxu0
      %v2594 = vadd.f32 %v237, %v2593
      %v2595 = vpop.f32.mrf.mxu0
      %2596 = vmatprep.mubr.f32.mxu0 0.0
      %2597 = vmatmul.mubr.f32.gmra.mxu0 %v2367
      %v2598 = vpop.f32.mrf.mxu0
      %v2599 = vadd.f32 %v237, %v2598
      %v2600 = vpop.f32.mrf.mxu0
      %2601 = vmatprep.mubr.f32.mxu0 0.0
      %2602 = vmatmul.mubr.f32.gmra.mxu0 %v2370
      %v2603 = vpop.f32.mrf.mxu0
      %v2604 = vadd.f32 %v237, %v2603
      %v2605 = vpop.f32.mrf.mxu0
      %2606 = vmatprep.mubr.f32.mxu0 0.0
      %2607 = vmatmul.mubr.f32.gmra.mxu0 %v2373
      %v2608 = vpop.f32.mrf.mxu0
      %v2609 = vadd.f32 %v237, %v2608
      %v2610 = vpop.f32.mrf.mxu0
      %2611 = vmatprep.mubr.f32.mxu0 0.0
      %2612 = vmatmul.mubr.f32.gmra.mxu0 %v2376
      %v2613 = vpop.f32.mrf.mxu0
      %v2614 = vadd.f32 %v237, %v2613
      %v2615 = vpop.f32.mrf.mxu0
      %2616 = vmatprep.mubr.f32.mxu0 0.0
      %2617 = vmatmul.mubr.f32.gmra.mxu0 %v2379
      %v2618 = vpop.f32.mrf.mxu0
      %v2619 = vadd.f32 %v237, %v2618
      %v2620 = vpop.f32.mrf.mxu0
      %2621 = vmatprep.mubr.f32.mxu0 0.0
      %2622 = vmatmul.mubr.f32.gmra.mxu0 %v2382
      %v2623 = vpop.f32.mrf.mxu0
      %v2624 = vadd.f32 %v237, %v2623
      %v2625 = vpop.f32.mrf.mxu0
      %2626 = vmatprep.mubr.f32.mxu0 0.0
      %2627 = vmatmul.mubr.f32.gmra.mxu0 %v2385
      %v2628 = vpop.f32.mrf.mxu0
      %v2629 = vadd.f32 %v237, %v2628
      %v2630 = vpop.f32.mrf.mxu0
      %2631 = vmatprep.mubr.f32.mxu0 0.0
      %2632 = vmatmul.mubr.f32.gmra.mxu0 %v2388
      %v2633 = vpop.f32.mrf.mxu0
      %v2634 = vadd.f32 %v237, %v2633
      %v2635 = vpop.f32.mrf.mxu0
      %2636 = vmatprep.mubr.f32.mxu0 0.0
      %2637 = vmatmul.mubr.f32.gmra.mxu0 %v2391
      %v2638 = vpop.f32.mrf.mxu0
      %v2639 = vadd.f32 %v237, %v2638
      %v2640 = vpop.f32.mrf.mxu0
      %2641 = vmatprep.mubr.f32.mxu0 0.0
      %2642 = vmatmul.mubr.f32.gmra.mxu0 %v2394
      %v2643 = vpop.f32.mrf.mxu0
      %v2644 = vadd.f32 %v237, %v2643
      %v2645 = vpop.f32.mrf.mxu0
      %2646 = vmatprep.mubr.f32.mxu0 0.0
      %2647 = vmatmul.mubr.f32.gmra.mxu0 %v2397
      %v2648 = vpop.f32.mrf.mxu0
      %v2649 = vadd.f32 %v237, %v2648
      %v2650 = vpop.f32.mrf.mxu0
      %2651 = vmatprep.mubr.f32.mxu0 0.0
      %2652 = vmatmul.mubr.f32.gmra.mxu0 %v2400
      %v2653 = vpop.f32.mrf.mxu0
      %v2654 = vadd.f32 %v237, %v2653
      %v2655 = vpop.f32.mrf.mxu0
      %2656 = vmatprep.mubr.f32.mxu0 0.0
      %2657 = vmatmul.mubr.f32.gmra.mxu0 %v2403
      %v2658 = vpop.f32.mrf.mxu0
      %v2659 = vadd.f32 %v237, %v2658
      %v2660 = vpop.f32.mrf.mxu0
      %2661 = vmatprep.mubr.f32.mxu0 0.0
      %2662 = vmatmul.mubr.f32.gmra.mxu0 %v2406
      %v2663 = vpop.f32.mrf.mxu0
      %v2664 = vadd.f32 %v237, %v2663
      %v2665 = vpop.f32.mrf.mxu0
      %2666 = vmatprep.mubr.f32.mxu0 0.0
      %2667 = vmatmul.mubr.f32.gmra.mxu0 %v2409
      %v2668 = vpop.f32.mrf.mxu0
      %v2669 = vadd.f32 %v237, %v2668
      %v2670 = vpop.f32.mrf.mxu0
      %2671 = vmatprep.mubr.f32.mxu0 0.0
      %2672 = vmatmul.mubr.f32.gmra.mxu0 %v2412
      %v2673 = vpop.f32.mrf.mxu0
      %v2674 = vadd.f32 %v237, %v2673
      %v2675 = vpop.f32.mrf.mxu0
      %2676 = vmatprep.mubr.f32.mxu0 0.0
      %2677 = vmatmul.mubr.f32.gmra.mxu0 %v2415
      %v2678 = vpop.f32.mrf.mxu0
      %v2679 = vadd.f32 %v237, %v2678
      %v2680 = vpop.f32.mrf.mxu0
      %2681 = vmatprep.mubr.f32.mxu0 0.0
      %2682 = vmatmul.mubr.f32.gmra.mxu0 %v2418
      %v2683 = vpop.f32.mrf.mxu0
      %v2684 = vadd.f32 %v237, %v2683
      %v2685 = vpop.f32.mrf.mxu0
      %2686 = vmatprep.mubr.f32.mxu0 0.0
      %2687 = vmatmul.mubr.f32.gmra.mxu0 %v2421
      %v2688 = vpop.f32.mrf.mxu0
      %v2689 = vadd.f32 %v237, %v2688
      %v2690 = vpop.f32.mrf.mxu0
      %2691 = vmatprep.mubr.f32.mxu0 0.0
      %2692 = vmatmul.mubr.f32.gmra.mxu0 %v2424
      %v2693 = vpop.f32.mrf.mxu0
      %v2694 = vadd.f32 %v237, %v2693
      %v2695 = vpop.f32.mrf.mxu0
      %2696 = vmatprep.mubr.f32.mxu0 0.0
      %2697 = vmatmul.mubr.f32.gmra.mxu0 %v2427
      %v2698 = vpop.f32.mrf.mxu0
      %v2699 = vadd.f32 %v237, %v2698
      %v2700 = vpop.f32.mrf.mxu0
      %2701 = vmatprep.mubr.f32.mxu0 0.0
      %2702 = vmatmul.mubr.f32.gmra.mxu0 %v2430
      %v2703 = vpop.f32.mrf.mxu0
      %v2704 = vadd.f32 %v237, %v2703
      %v2705 = vpop.f32.mrf.mxu0
      %2706 = vmatprep.mubr.f32.mxu0 0.0
      %2707 = vmatmul.mubr.f32.gmra.mxu0 %v2433
      %v2708 = vpop.f32.mrf.mxu0
      %v2709 = vadd.f32 %v237, %v2708
      %v2710 = vpop.f32.mrf.mxu0
      %2711 = vmatprep.mubr.f32.mxu0 0.0
      %2712 = vmatmul.mubr.f32.gmra.mxu0 %v2436
      %v2713 = vpop.f32.mrf.mxu0
      %v2714 = vadd.f32 %v237, %v2713
      %v2715 = vpop.f32.mrf.mxu0
      %2716 = vmatprep.mubr.f32.mxu0 0.0
      %2717 = vmatmul.mubr.f32.gmra.mxu0 %v2439
      %v2718 = vpop.f32.mrf.mxu0
      %v2719 = vadd.f32 %v237, %v2718
      %v2720 = vpop.f32.mrf.mxu0
      %2721 = vmatprep.mubr.f32.mxu0 0.0
      %2722 = vmatmul.mubr.f32.gmra.mxu0 %v2442
      %v2723 = vpop.f32.mrf.mxu0
      %v2724 = vadd.f32 %v237, %v2723
      %v2725 = vpop.f32.mrf.mxu0
      %2726 = vmatprep.mubr.f32.mxu0 0.0
      %2727 = vmatmul.mubr.f32.gmra.mxu0 %v2445
      %v2728 = vpop.f32.mrf.mxu0
      %v2729 = vadd.f32 %v237, %v2728
      %v2730 = vpop.f32.mrf.mxu0
      %2731 = vmatprep.mubr.f32.mxu0 0.0
      %2732 = vmatmul.mubr.f32.gmra.mxu0 %v2448
      %v2733 = vpop.f32.mrf.mxu0
      %v2734 = vadd.f32 %v237, %v2733
      %v2735 = vpop.f32.mrf.mxu0
      %2736 = vmatprep.mubr.f32.mxu0 0.0
      %2737 = vmatmul.mubr.f32.gmra.mxu0 %v2451
      %v2738 = vpop.f32.mrf.mxu0
      %v2739 = vadd.f32 %v237, %v2738
      %v2740 = vpop.f32.mrf.mxu0
      %2741 = vmatprep.mubr.f32.mxu0 0.0
      %2742 = vmatmul.mubr.f32.gmra.mxu0 %v2454
      %v2743 = vpop.f32.mrf.mxu0
      %v2744 = vadd.f32 %v237, %v2743
      %v2745 = vpop.f32.mrf.mxu0
      %2746 = vmatprep.mubr.f32.mxu0 0.0
      %2747 = vmatmul.mubr.f32.gmra.mxu0 %v2457
      %v2748 = vpop.f32.mrf.mxu0
      %v2749 = vadd.f32 %v237, %v2748
      %v2750 = vpop.f32.mrf.mxu0
      %2751 = vmatprep.mubr.f32.mxu0 0.0
      %2752 = vmatmul.mubr.f32.gmra.mxu0 %v2460
      %v2753 = vpop.f32.mrf.mxu0
      %v2754 = vadd.f32 %v237, %v2753
      %v2755 = vpop.f32.mrf.mxu0
      %2756 = vmatprep.mubr.f32.mxu0 0.0
      %2757 = vmatmul.mubr.f32.gmra.mxu0 %v2463
      %v2758 = vpop.f32.mrf.mxu0
      %v2759 = vadd.f32 %v237, %v2758
      %v2760 = vpop.f32.mrf.mxu0
      %2761 = vmatprep.mubr.f32.mxu0 0.0
      %2762 = vmatmul.mubr.f32.gmra.mxu0 %v2466
      %v2763 = vpop.f32.mrf.mxu0
      %v2764 = vadd.f32 %v237, %v2763
      %v2765 = vpop.f32.mrf.mxu0
      %2766 = vmatprep.mubr.f32.mxu0 0.0
      %2767 = vmatmul.mubr.f32.gmra.mxu0 %v2469
      %v2768 = vpop.f32.mrf.mxu0
      %v2769 = vadd.f32 %v237, %v2768
      %v2770 = vpop.f32.mrf.mxu0
      %2771 = vmatprep.mubr.f32.mxu0 0.0
      %2772 = vmatmul.mubr.f32.gmra.mxu0 %v2472
      %v2773 = vpop.f32.mrf.mxu0
      %v2774 = vadd.f32 %v237, %v2773
      %v2775 = vpop.f32.mrf.mxu0
      %2776 = vmatprep.mubr.f32.mxu0 0.0
      %2777 = vmatmul.mubr.f32.gmra.mxu0 %v2475
      %v2778 = vpop.f32.mrf.mxu0
      %v2779 = vadd.f32 %v237, %v2778
      %v2780 = vpop.f32.mrf.mxu0
      %2781 = vmatprep.mubr.f32.mxu0 0.0
      %2782 = vmatmul.mubr.f32.gmra.mxu0 %v2478
      %v2783 = vpop.f32.mrf.mxu0
      %v2784 = vadd.f32 %v237, %v2783
      %v2785 = vpop.f32.mrf.mxu0
      %2786 = vmatprep.mubr.f32.mxu0 0.0
      %2787 = vmatmul.mubr.f32.gmra.mxu0 %v2481
      %v2788 = vpop.f32.mrf.mxu0
      %v2789 = vadd.f32 %v237, %v2788
      %v2790 = vpop.f32.mrf.mxu0
      %2791 = vmatprep.mubr.f32.mxu0 0.0
      %2792 = vmatmul.mubr.f32.gmra.mxu0 %v2484
      %v2793 = vpop.f32.mrf.mxu0
      %v2794 = vadd.f32 %v237, %v2793
      %v2795 = vpop.f32.mrf.mxu0
      %2796 = vmatprep.mubr.f32.mxu0 0.0
      %2797 = vmatmul.mubr.f32.gmra.mxu0 %v2487
      %v2798 = vpop.f32.mrf.mxu0
      %v2799 = vadd.f32 %v237, %v2798
      %v2800 = vpop.f32.mrf.mxu0
      %2801 = vmatprep.mubr.f32.mxu0 0.0
      %2802 = vmatmul.mubr.f32.gmra.mxu0 %v2490
      %v2803 = vpop.f32.mrf.mxu0
      %v2804 = vadd.f32 %v237, %v2803
      %v2805 = vpop.f32.mrf.mxu0
      %2806 = vdwg.mxu0
      %vm2807 = vcmp.gt.f32.partialorder %v2559, 0.0
      %vm2808 = vcmp.gt.f32.partialorder %v2564, 0.0
      %vm2809 = vcmp.gt.f32.partialorder %v2569, 0.0
      %vm2810 = vcmp.gt.f32.partialorder %v2574, 0.0
      %vm2811 = vcmp.gt.f32.partialorder %v2579, 0.0
      %vm2812 = vcmp.gt.f32.partialorder %v2584, 0.0
      %vm2813 = vcmp.gt.f32.partialorder %v2589, 0.0
      %vm2814 = vcmp.gt.f32.partialorder %v2594, 0.0
      %vm2815 = vcmp.gt.f32.partialorder %v2599, 0.0
      %vm2816 = vcmp.gt.f32.partialorder %v2604, 0.0
      %vm2817 = vcmp.gt.f32.partialorder %v2609, 0.0
      %vm2818 = vcmp.gt.f32.partialorder %v2614, 0.0
      %vm2819 = vcmp.gt.f32.partialorder %v2619, 0.0
      %vm2820 = vcmp.gt.f32.partialorder %v2624, 0.0
      %vm2821 = vcmp.gt.f32.partialorder %v2629, 0.0
      %vm2822 = vcmp.gt.f32.partialorder %v2634, 0.0
      %vm2823 = vcmp.gt.f32.partialorder %v2639, 0.0
      %vm2824 = vcmp.gt.f32.partialorder %v2644, 0.0
      %vm2825 = vcmp.gt.f32.partialorder %v2649, 0.0
      %vm2826 = vcmp.gt.f32.partialorder %v2654, 0.0
      %vm2827 = vcmp.gt.f32.partialorder %v2659, 0.0
      %vm2828 = vcmp.gt.f32.partialorder %v2664, 0.0
      %vm2829 = vcmp.gt.f32.partialorder %v2669, 0.0
      %vm2830 = vcmp.gt.f32.partialorder %v2674, 0.0
      %vm2831 = vcmp.gt.f32.partialorder %v2679, 0.0
      %vm2832 = vcmp.gt.f32.partialorder %v2684, 0.0
      %vm2833 = vcmp.gt.f32.partialorder %v2689, 0.0
      %vm2834 = vcmp.gt.f32.partialorder %v2694, 0.0
      %vm2835 = vcmp.gt.f32.partialorder %v2699, 0.0
      %vm2836 = vcmp.gt.f32.partialorder %v2704, 0.0
      %vm2837 = vcmp.gt.f32.partialorder %v2709, 0.0
      %vm2838 = vcmp.gt.f32.partialorder %v2714, 0.0
      %vm2839 = vcmp.gt.f32.partialorder %v2719, 0.0
      %vm2840 = vcmp.gt.f32.partialorder %v2724, 0.0
      %vm2841 = vcmp.gt.f32.partialorder %v2729, 0.0
      %vm2842 = vcmp.gt.f32.partialorder %v2734, 0.0
      %vm2843 = vcmp.gt.f32.partialorder %v2739, 0.0
      %vm2844 = vcmp.gt.f32.partialorder %v2744, 0.0
      %vm2845 = vcmp.gt.f32.partialorder %v2749, 0.0
      %vm2846 = vcmp.gt.f32.partialorder %v2754, 0.0
      %vm2847 = vcmp.gt.f32.partialorder %v2759, 0.0
      %vm2848 = vcmp.gt.f32.partialorder %v2764, 0.0
      %vm2849 = vcmp.gt.f32.partialorder %v2769, 0.0
      %vm2850 = vcmp.gt.f32.partialorder %v2774, 0.0
      %vm2851 = vcmp.gt.f32.partialorder %v2779, 0.0
      %vm2852 = vcmp.gt.f32.partialorder %v2784, 0.0
      %vm2853 = vcmp.gt.f32.partialorder %v2789, 0.0
      %vm2854 = vcmp.gt.f32.partialorder %v2794, 0.0
      %vm2855 = vcmp.gt.f32.partialorder %v2799, 0.0
      %vm2856 = vcmp.gt.f32.partialorder %v2804, 0.0
      %v2857 = vmul.f32 %v2559, 0.2
      %v2858 = vmul.f32 %v2564, 0.2
      %v2859 = vmul.f32 %v2569, 0.2
      %v2860 = vmul.f32 %v2574, 0.2
      %v2861 = vmul.f32 %v2579, 0.2
      %v2862 = vmul.f32 %v2584, 0.2
      %v2863 = vmul.f32 %v2589, 0.2
      %v2864 = vmul.f32 %v2594, 0.2
      %v2865 = vmul.f32 %v2599, 0.2
      %v2866 = vmul.f32 %v2604, 0.2
      %v2867 = vmul.f32 %v2609, 0.2
      %v2868 = vmul.f32 %v2614, 0.2
      %v2869 = vmul.f32 %v2619, 0.2
      %v2870 = vmul.f32 %v2624, 0.2
      %v2871 = vmul.f32 %v2629, 0.2
      %v2872 = vmul.f32 %v2634, 0.2
      %v2873 = vmul.f32 %v2639, 0.2
      %v2874 = vmul.f32 %v2644, 0.2
      %v2875 = vmul.f32 %v2649, 0.2
      %v2876 = vmul.f32 %v2654, 0.2
      %v2877 = vmul.f32 %v2659, 0.2
      %v2878 = vmul.f32 %v2664, 0.2
      %v2879 = vmul.f32 %v2669, 0.2
      %v2880 = vmul.f32 %v2674, 0.2
      %v2881 = vmul.f32 %v2679, 0.2
      %v2882 = vmul.f32 %v2684, 0.2
      %v2883 = vmul.f32 %v2689, 0.2
      %v2884 = vmul.f32 %v2694, 0.2
      %v2885 = vmul.f32 %v2699, 0.2
      %v2886 = vmul.f32 %v2704, 0.2
      %v2887 = vmul.f32 %v2709, 0.2
      %v2888 = vmul.f32 %v2714, 0.2
      %v2889 = vmul.f32 %v2719, 0.2
      %v2890 = vmul.f32 %v2724, 0.2
      %v2891 = vmul.f32 %v2729, 0.2
      %v2892 = vmul.f32 %v2734, 0.2
      %v2893 = vmul.f32 %v2739, 0.2
      %v2894 = vmul.f32 %v2744, 0.2
      %v2895 = vmul.f32 %v2749, 0.2
      %v2896 = vmul.f32 %v2754, 0.2
      %v2897 = vmul.f32 %v2759, 0.2
      %v2898 = vmul.f32 %v2764, 0.2
      %v2899 = vmul.f32 %v2769, 0.2
      %v2900 = vmul.f32 %v2774, 0.2
      %v2901 = vmul.f32 %v2779, 0.2
      %v2902 = vmul.f32 %v2784, 0.2
      %v2903 = vmul.f32 %v2789, 0.2
      %v2904 = vmul.f32 %v2794, 0.2
      %v2905 = vmul.f32 %v2799, 0.2
      %v2906 = vmul.f32 %v2804, 0.2
      %v2907 = vsel %vm2807, %v2559, %v2857
      %v2908 = vsel %vm2808, %v2564, %v2858
      %v2909 = vsel %vm2809, %v2569, %v2859
      %v2910 = vsel %vm2810, %v2574, %v2860
      %v2911 = vsel %vm2811, %v2579, %v2861
      %v2912 = vsel %vm2812, %v2584, %v2862
      %v2913 = vsel %vm2813, %v2589, %v2863
      %v2914 = vsel %vm2814, %v2594, %v2864
      %v2915 = vsel %vm2815, %v2599, %v2865
      %v2916 = vsel %vm2816, %v2604, %v2866
      %v2917 = vsel %vm2817, %v2609, %v2867
      %v2918 = vsel %vm2818, %v2614, %v2868
      %v2919 = vsel %vm2819, %v2619, %v2869
      %v2920 = vsel %vm2820, %v2624, %v2870
      %v2921 = vsel %vm2821, %v2629, %v2871
      %v2922 = vsel %vm2822, %v2634, %v2872
      %v2923 = vsel %vm2823, %v2639, %v2873
      %v2924 = vsel %vm2824, %v2644, %v2874
      %v2925 = vsel %vm2825, %v2649, %v2875
      %v2926 = vsel %vm2826, %v2654, %v2876
      %v2927 = vsel %vm2827, %v2659, %v2877
      %v2928 = vsel %vm2828, %v2664, %v2878
      %v2929 = vsel %vm2829, %v2669, %v2879
      %v2930 = vsel %vm2830, %v2674, %v2880
      %v2931 = vsel %vm2831, %v2679, %v2881
      %v2932 = vsel %vm2832, %v2684, %v2882
      %v2933 = vsel %vm2833, %v2689, %v2883
      %v2934 = vsel %vm2834, %v2694, %v2884
      %v2935 = vsel %vm2835, %v2699, %v2885
      %v2936 = vsel %vm2836, %v2704, %v2886
      %v2937 = vsel %vm2837, %v2709, %v2887
      %v2938 = vsel %vm2838, %v2714, %v2888
      %v2939 = vsel %vm2839, %v2719, %v2889
      %v2940 = vsel %vm2840, %v2724, %v2890
      %v2941 = vsel %vm2841, %v2729, %v2891
      %v2942 = vsel %vm2842, %v2734, %v2892
      %v2943 = vsel %vm2843, %v2739, %v2893
      %v2944 = vsel %vm2844, %v2744, %v2894
      %v2945 = vsel %vm2845, %v2749, %v2895
      %v2946 = vsel %vm2846, %v2754, %v2896
      %v2947 = vsel %vm2847, %v2759, %v2897
      %v2948 = vsel %vm2848, %v2764, %v2898
      %v2949 = vsel %vm2849, %v2769, %v2899
      %v2950 = vsel %vm2850, %v2774, %v2900
      %v2951 = vsel %vm2851, %v2779, %v2901
      %v2952 = vsel %vm2852, %v2784, %v2902
      %v2953 = vsel %vm2853, %v2789, %v2903
      %v2954 = vsel %vm2854, %v2794, %v2904
      %v2955 = vsel %vm2855, %v2799, %v2905
      %v2956 = vsel %vm2856, %v2804, %v2906
      %v2957 = vadd.f32 %v2241, %v2907
      %v2958 = vadd.f32 %v2242, %v2908
      %v2959 = vadd.f32 %v2243, %v2909
      %v2960 = vadd.f32 %v2244, %v2910
      %v2961 = vadd.f32 %v2245, %v2911
      %v2962 = vadd.f32 %v2246, %v2912
      %v2963 = vadd.f32 %v2247, %v2913
      %v2964 = vadd.f32 %v2248, %v2914
      %v2965 = vadd.f32 %v2249, %v2915
      %v2966 = vadd.f32 %v2250, %v2916
      %v2967 = vadd.f32 %v2251, %v2917
      %v2968 = vadd.f32 %v2252, %v2918
      %v2969 = vadd.f32 %v2253, %v2919
      %v2970 = vadd.f32 %v2254, %v2920
      %v2971 = vadd.f32 %v2255, %v2921
      %v2972 = vadd.f32 %v2256, %v2922
      %v2973 = vadd.f32 %v2257, %v2923
      %v2974 = vadd.f32 %v2258, %v2924
      %v2975 = vadd.f32 %v2259, %v2925
      %v2976 = vadd.f32 %v2260, %v2926
      %v2977 = vadd.f32 %v2261, %v2927
      %v2978 = vadd.f32 %v2262, %v2928
      %v2979 = vadd.f32 %v2263, %v2929
      %v2980 = vadd.f32 %v2264, %v2930
      %v2981 = vadd.f32 %v2265, %v2931
      %v2982 = vadd.f32 %v2266, %v2932
      %v2983 = vadd.f32 %v2267, %v2933
      %v2984 = vadd.f32 %v2268, %v2934
      %v2985 = vadd.f32 %v2269, %v2935
      %v2986 = vadd.f32 %v2270, %v2936
      %v2987 = vadd.f32 %v2271, %v2937
      %v2988 = vadd.f32 %v2272, %v2938
      %v2989 = vadd.f32 %v2273, %v2939
      %v2990 = vadd.f32 %v2274, %v2940
      %v2991 = vadd.f32 %v2275, %v2941
      %v2992 = vadd.f32 %v2276, %v2942
      %v2993 = vadd.f32 %v2277, %v2943
      %v2994 = vadd.f32 %v2278, %v2944
      %v2995 = vadd.f32 %v2279, %v2945
      %v2996 = vadd.f32 %v2280, %v2946
      %v2997 = vadd.f32 %v2281, %v2947
      %v2998 = vadd.f32 %v2282, %v2948
      %v2999 = vadd.f32 %v2283, %v2949
      %v3000 = vadd.f32 %v2284, %v2950
      %v3001 = vadd.f32 %v2285, %v2951
      %v3002 = vadd.f32 %v2286, %v2952
      %v3003 = vadd.f32 %v2287, %v2953
      %v3004 = vadd.f32 %v2288, %v2954
      %v3005 = vadd.f32 %v2289, %v2955
      %v3006 = vadd.f32 %v2290, %v2956
      %v3007 = vmul.f32 %v2957, 0.25
      %v3008 = vmul.f32 %v2958, 0.25
      %v3009 = vmul.f32 %v2959, 0.25
      %v3010 = vmul.f32 %v2960, 0.25
      %v3011 = vmul.f32 %v2961, 0.25
      %v3012 = vmul.f32 %v2962, 0.25
      %v3013 = vmul.f32 %v2963, 0.25
      %v3014 = vmul.f32 %v2964, 0.25
      %v3015 = vmul.f32 %v2965, 0.25
      %v3016 = vmul.f32 %v2966, 0.25
      %v3017 = vmul.f32 %v2967, 0.25
      %v3018 = vmul.f32 %v2968, 0.25
      %v3019 = vmul.f32 %v2969, 0.25
      %v3020 = vmul.f32 %v2970, 0.25
      %v3021 = vmul.f32 %v2971, 0.25
      %v3022 = vmul.f32 %v2972, 0.25
      %v3023 = vmul.f32 %v2973, 0.25
      %v3024 = vmul.f32 %v2974, 0.25
      %v3025 = vmul.f32 %v2975, 0.25
      %v3026 = vmul.f32 %v2976, 0.25
      %v3027 = vmul.f32 %v2977, 0.25
      %v3028 = vmul.f32 %v2978, 0.25
      %v3029 = vmul.f32 %v2979, 0.25
      %v3030 = vmul.f32 %v2980, 0.25
      %v3031 = vmul.f32 %v2981, 0.25
      %v3032 = vmul.f32 %v2982, 0.25
      %v3033 = vmul.f32 %v2983, 0.25
      %v3034 = vmul.f32 %v2984, 0.25
      %v3035 = vmul.f32 %v2985, 0.25
      %v3036 = vmul.f32 %v2986, 0.25
      %v3037 = vmul.f32 %v2987, 0.25
      %v3038 = vmul.f32 %v2988, 0.25
      %v3039 = vmul.f32 %v2989, 0.25
      %v3040 = vmul.f32 %v2990, 0.25
      %v3041 = vmul.f32 %v2991, 0.25
      %v3042 = vmul.f32 %v2992, 0.25
      %v3043 = vmul.f32 %v2993, 0.25
      %v3044 = vmul.f32 %v2994, 0.25
      %v3045 = vmul.f32 %v2995, 0.25
      %v3046 = vmul.f32 %v2996, 0.25
      %v3047 = vmul.f32 %v2997, 0.25
      %v3048 = vmul.f32 %v2998, 0.25
      %v3049 = vmul.f32 %v2999, 0.25
      %v3050 = vmul.f32 %v3000, 0.25
      %v3051 = vmul.f32 %v3001, 0.25
      %v3052 = vmul.f32 %v3002, 0.25
      %v3053 = vmul.f32 %v3003, 0.25
      %v3054 = vmul.f32 %v3004, 0.25
      %v3055 = vmul.f32 %v3005, 0.25
      %v3056 = vmul.f32 %v3006, 0.25
      %vm3057 = vcmask 261120
      %3058 = vst.msk [vmem:[%s170] sm:$0xff] %vm3057, %v3007
      %3059 = vst.msk [vmem:[%s170 + $0x8] sm:$0xff] %vm3057, %v3008
      %3060 = vst.msk [vmem:[%s170 + $0x10] sm:$0xff] %vm3057, %v3009
      %3061 = vst.msk [vmem:[%s170 + $0x18] sm:$0xff] %vm3057, %v3010
      %3062 = vst.msk [vmem:[%s170 + $0x20] sm:$0xff] %vm3057, %v3011
      %3063 = vst.msk [vmem:[%s170 + $0x28] sm:$0xff] %vm3057, %v3012
      %3064 = vst.msk [vmem:[%s170 + $0x30] sm:$0xff] %vm3057, %v3013
      %3065 = vst.msk [vmem:[%s170 + $0x38] sm:$0xff] %vm3057, %v3014
      %3066 = vst.msk [vmem:[%s170 + $0x40] sm:$0xff] %vm3057, %v3015
      %3067 = vst.msk [vmem:[%s170 + $0x48] sm:$0xff] %vm3057, %v3016
      %3068 = vst.msk [vmem:[%s170 + $0x50] sm:$0xff] %vm3057, %v3017
      %3069 = vst.msk [vmem:[%s170 + $0x58] sm:$0xff] %vm3057, %v3018
      %3070 = vst.msk [vmem:[%s170 + $0x60] sm:$0xff] %vm3057, %v3019
      %3071 = vst.msk [vmem:[%s170 + $0x68] sm:$0xff] %vm3057, %v3020
      %3072 = vst.msk [vmem:[%s170 + $0x70] sm:$0xff] %vm3057, %v3021
      %3073 = vst.msk [vmem:[%s170 + $0x78] sm:$0xff] %vm3057, %v3022
      %3074 = vst.msk [vmem:[%s170 + $0x80] sm:$0xff] %vm3057, %v3023
      %3075 = vst.msk [vmem:[%s170 + $0x88] sm:$0xff] %vm3057, %v3024
      %3076 = vst.msk [vmem:[%s170 + $0x90] sm:$0xff] %vm3057, %v3025
      %3077 = vst.msk [vmem:[%s170 + $0x98] sm:$0xff] %vm3057, %v3026
      %3078 = vst.msk [vmem:[%s170 + $0xa0] sm:$0xff] %vm3057, %v3027
      %3079 = vst.msk [vmem:[%s170 + $0xa8] sm:$0xff] %vm3057, %v3028
      %3080 = vst.msk [vmem:[%s170 + $0xb0] sm:$0xff] %vm3057, %v3029
      %3081 = vst.msk [vmem:[%s170 + $0xb8] sm:$0xff] %vm3057, %v3030
      %3082 = vst.msk [vmem:[%s170 + $0xc0] sm:$0xff] %vm3057, %v3031
      %3083 = vst.msk [vmem:[%s170 + $0xc8] sm:$0xff] %vm3057, %v3032
      %3084 = vst.msk [vmem:[%s170 + $0xd0] sm:$0xff] %vm3057, %v3033
      %3085 = vst.msk [vmem:[%s170 + $0xd8] sm:$0xff] %vm3057, %v3034
      %3086 = vst.msk [vmem:[%s170 + $0xe0] sm:$0xff] %vm3057, %v3035
      %3087 = vst.msk [vmem:[%s170 + $0xe8] sm:$0xff] %vm3057, %v3036
      %3088 = vst.msk [vmem:[%s170 + $0xf0] sm:$0xff] %vm3057, %v3037
      %3089 = vst.msk [vmem:[%s170 + $0xf8] sm:$0xff] %vm3057, %v3038
      %3090 = vst.msk [vmem:[%s170 + $0x100] sm:$0xff] %vm3057, %v3039
      %3091 = vst.msk [vmem:[%s170 + $0x108] sm:$0xff] %vm3057, %v3040
      %3092 = vst.msk [vmem:[%s170 + $0x110] sm:$0xff] %vm3057, %v3041
      %3093 = vst.msk [vmem:[%s170 + $0x118] sm:$0xff] %vm3057, %v3042
      %3094 = vst.msk [vmem:[%s170 + $0x120] sm:$0xff] %vm3057, %v3043
      %3095 = vst.msk [vmem:[%s170 + $0x128] sm:$0xff] %vm3057, %v3044
      %3096 = vst.msk [vmem:[%s170 + $0x130] sm:$0xff] %vm3057, %v3045
      %3097 = vst.msk [vmem:[%s170 + $0x138] sm:$0xff] %vm3057, %v3046
      %3098 = vst.msk [vmem:[%s170 + $0x140] sm:$0xff] %vm3057, %v3047
      %3099 = vst.msk [vmem:[%s170 + $0x148] sm:$0xff] %vm3057, %v3048
      %3100 = vst.msk [vmem:[%s170 + $0x150] sm:$0xff] %vm3057, %v3049
      %3101 = vst.msk [vmem:[%s170 + $0x158] sm:$0xff] %vm3057, %v3050
      %3102 = vst.msk [vmem:[%s170 + $0x160] sm:$0xff] %vm3057, %v3051
      %3103 = vst.msk [vmem:[%s170 + $0x168] sm:$0xff] %vm3057, %v3052
      %3104 = vst.msk [vmem:[%s170 + $0x170] sm:$0xff] %vm3057, %v3053
      %3105 = vst.msk [vmem:[%s170 + $0x178] sm:$0xff] %vm3057, %v3054
      %3106 = vst.msk [vmem:[%s170 + $0x180] sm:$0xff] %vm3057, %v3055
      %3107 = vst.msk [vmem:[%s170 + $0x188] sm:$0xff] %vm3057, %v3056
      %p3108 = scmp.lt.s32.totalorder %s14, 1
      %s3109 = scalar_select %p3108, %s14, 1
      %s3110 = smul.addr %s3109, 50
      %s3111 = smul.addr %s3110, 8
      %s3112 = scalar_lea.vmem %s3, %s3111
      // Predicated region
      $region33: #{discriminator_forward.4} parent=31 // pred_check
        %p3113 = pneg %p100
      $region34: #{discriminator_forward.4} parent=31 // pred_check_branch
        %3115 = sbr.rel (%p3113) target = $region36
      $region35: #{discriminator_forward.4} parent=31 // pred_region
        _
      $region36: #{discriminator_forward.4} parent=31 // pred_fallthru
        _
    $region32: #{discriminator_forward.4} parent=5 // pred_fallthru
      _
    %p3116 = scmp.le.s32.totalorder 2, %s9
    // Predicated region
    $region37: #{discriminator_forward.4} parent=5 // pred_check
      %p3117 = pneg %p3116
    $region38: #{discriminator_forward.4} parent=5 // pred_check_branch
      %3119 = sbr.rel (%p3117) target = $region40
    $region39: #{discriminator_forward.4} parent=5 // pred_region
      %s3120 = ssub.s32 %s9, 2
      // Predicated region
      $region41: #{discriminator_forward.4} parent=39 // pred_check
        %p3121 = pneg %p106
      $region42: #{discriminator_forward.4} parent=39 // pred_check_branch
        %3123 = sbr.rel (%p3121) target = $region44
      $region43: #{discriminator_forward.4} parent=39 // pred_region
        %p3124 = scmp.lt.s32.totalorder %s15, 1
        %s3125 = scalar_select %p3124, %s15, 1
        %s3126 = smul.addr %s3125, 50
        %s3127 = smul.addr %s3126, 8
        %s3128 = scalar_lea.vmem %s3, %s3127
      $region44: #{discriminator_forward.4} parent=39 // pred_fallthru
        _
    $region40: #{discriminator_forward.4} parent=5 // pred_fallthru
      _
  $region6: #{discriminator_forward.4} parent=0 // loop_footer
    %s13 = sadd.s32 1, %s9
  $region7: #{discriminator_forward.4} parent=0 // loop_footer_branch
    %8 = sbr.rel target = $region3
  $region8: #{discriminator_forward.4} parent=0 // loop_exit
    _

// kernel: discriminator_forward.5
$region0: #{discriminator_forward.5}
  #allocation0 [shape = 'u32[]', space=smem, size = 0x4, offset = 0x4, fixed_abs, tag = 'smem constant byte address 0x4 - core index']
  #allocation1 [shape = 'u32[144,128]{1,0:T(1,128)}', space=vmem, size = 0x12000, scoped, tag = 'internal scratch']
  %s0 = inlined_call_operand.vmem [shape: f32[2,4,64,800], index: 0, kind: input, shape index: {}]
  %s1 = inlined_call_operand.vmem [shape: f32[800,64], index: 1, kind: input, shape index: {}]
  %s2 = inlined_call_operand.vmem [shape: f32[1,64], index: 2, kind: input, shape index: {}]
  %s3 = inlined_call_operand.vmem [shape: f32[2,64,64], index: 3, kind: output, shape index: {}]
  %s4 = sld [smem:[#allocation0]]
  $region45: #{discriminator_forward.5} parent=0
    _
  %s6 = ssub.s32 1, %s4
  %s7 = scalar_select 0, %s6, %s4
  loop: start=0, step=1, limit=4
  $region2: #{discriminator_forward.5} parent=0 // loop_pre_header
    _
  $region3: #{discriminator_forward.5} parent=0 // loop_header
    %s9 = sphi 0, %s13
    %p10 = scmp.ge.s32.totalorder %s9, 4
    %s19 = sphi 0, %s21
    %s22 = sphi 0, %s19
    %s23 = sphi 0, %s22
    %s39 = sphi 0, %s23
    %s43 = sphi 0, %s43
    %s45 = sphi 0, %s43
    %s46 = sphi 0, %s45
    %s60 = sphi 0, %s46
    %s64 = sphi 0, %s64
    %s66 = sphi 0, %s64
    %s67 = sphi 0, %s66
    %s81 = sphi 0, %s67
    %s87 = sphi 0, %s89
    %s90 = sphi 0, %s87
    %s91 = sphi 0, %s90
    %s107 = sphi 0, %s91
  $region4: #{discriminator_forward.5} parent=0 // loop_header_branch
    %12 = sbr.rel (%p10) target = $region8
  $region5: #{discriminator_forward.5} parent=0 // loop_body
    %s14 = ssub.s32 %s9, 1
    %s15 = ssub.s32 %s9, 2
    %s16 = sadd.s32 %s9, 1
    %s17 = ssub.s32 %s9, %s16
    %p18 = scmp.eq.s32.totalorder %s17, 0
    %s20 = sadd.s32 %s19, 1
    %s21 = scalar_select %p18, %s19, %s20
    %p24 = pneg %p18
    %p25 = scmp.eq.s32.totalorder %s9, 1
    %p26 = por %p24, %p25
    %p27 = scmp.ne.s32.totalorder %s19, %s22
    %p28 = scmp.eq.s32.totalorder %s9, 0
    %p29 = por %p27, %p28
    %p30 = scmp.ne.s32.totalorder %s19, %s22
    %p31 = scmp.eq.s32.totalorder %s14, 1
    %p32 = por %p30, %p31
    %p33 = scmp.ne.s32.totalorder %s22, %s23
    %p34 = scmp.eq.s32.totalorder %s14, 0
    %p35 = por %p33, %p34
    %p36 = scmp.ne.s32.totalorder %s22, %s23
    %p37 = scmp.eq.s32.totalorder %s15, 1
    %p38 = por %p36, %p37
    %p40 = scmp.ne.s32.totalorder %s23, %s39
    %p41 = scmp.eq.s32.totalorder %s15, 0
    %p42 = por %p40, %p41
    %s44 = sadd.s32 %s43, 1
    %p47 = scmp.eq.s32.totalorder %s9, 1
    %p48 = scmp.ne.s32.totalorder %s43, %s45
    %p49 = scmp.eq.s32.totalorder %s9, 0
    %p50 = por %p48, %p49
    %p51 = scmp.ne.s32.totalorder %s43, %s45
    %p52 = scmp.eq.s32.totalorder %s14, 1
    %p53 = por %p51, %p52
    %p54 = scmp.ne.s32.totalorder %s45, %s46
    %p55 = scmp.eq.s32.totalorder %s14, 0
    %p56 = por %p54, %p55
    %p57 = scmp.ne.s32.totalorder %s45, %s46
    %p58 = scmp.eq.s32.totalorder %s15, 1
    %p59 = por %p57, %p58
    %p61 = scmp.ne.s32.totalorder %s46, %s60
    %p62 = scmp.eq.s32.totalorder %s15, 0
    %p63 = por %p61, %p62
    %s65 = sadd.s32 %s64, 1
    %p68 = scmp.eq.s32.totalorder %s9, 1
    %p69 = scmp.ne.s32.totalorder %s64, %s66
    %p70 = scmp.eq.s32.totalorder %s9, 0
    %p71 = por %p69, %p70
    %p72 = scmp.ne.s32.totalorder %s64, %s66
    %p73 = scmp.eq.s32.totalorder %s14, 1
    %p74 = por %p72, %p73
    %p75 = scmp.ne.s32.totalorder %s66, %s67
    %p76 = scmp.eq.s32.totalorder %s14, 0
    %p77 = por %p75, %p76
    %p78 = scmp.ne.s32.totalorder %s66, %s67
    %p79 = scmp.eq.s32.totalorder %s15, 1
    %p80 = por %p78, %p79
    %p82 = scmp.ne.s32.totalorder %s67, %s81
    %p83 = scmp.eq.s32.totalorder %s15, 0
    %p84 = por %p82, %p83
    %s85 = ssub.s32 %s9, %s16
    %p86 = scmp.eq.s32.totalorder %s85, 0
    %s88 = sadd.s32 %s87, 1
    %s89 = scalar_select %p86, %s87, %s88
    %p92 = pneg %p86
    %p93 = scmp.eq.s32.totalorder %s9, 1
    %p94 = por %p92, %p93
    %p95 = scmp.ne.s32.totalorder %s87, %s90
    %p96 = scmp.eq.s32.totalorder %s9, 0
    %p97 = por %p95, %p96
    %p98 = scmp.ne.s32.totalorder %s87, %s90
    %p99 = scmp.eq.s32.totalorder %s14, 1
    %p100 = por %p98, %p99
    %p101 = scmp.ne.s32.totalorder %s90, %s91
    %p102 = scmp.eq.s32.totalorder %s14, 0
    %p103 = por %p101, %p102
    %p104 = scmp.ne.s32.totalorder %s90, %s91
    %p105 = scmp.eq.s32.totalorder %s15, 1
    %p106 = por %p104, %p105
    %p108 = scmp.ne.s32.totalorder %s91, %s107
    %p109 = scmp.eq.s32.totalorder %s15, 0
    %p110 = por %p108, %p109
    %p111 = scmp.le.s32.totalorder 1, %s9
    %p112 = scmp.lt.s32.totalorder %s9, 3
    %p113 = pnand %p111, %p112
    %p114 = pneg %p113
    // Predicated region
    $region9: #{discriminator_forward.5} parent=5 // pred_check
      _
    $region10: #{discriminator_forward.5} parent=5 // pred_check_branch
      %116 = sbr.rel (%p113) target = $region12
    $region11: #{discriminator_forward.5} parent=5 // pred_region
      %s117 = ssub.s32 %s9, 1
      // Predicated region
      $region13: #{discriminator_forward.5} parent=11 // pred_check
        %p118 = pneg %p56
      $region14: #{discriminator_forward.5} parent=11 // pred_check_branch
        %120 = sbr.rel (%p118) target = $region16
      $region15: #{discriminator_forward.5} parent=11 // pred_region
        _
      $region16: #{discriminator_forward.5} parent=11 // pred_fallthru
        _
      // Predicated region
      $region17: #{discriminator_forward.5} parent=11 // pred_check
        %p121 = pneg %p77
      $region18: #{discriminator_forward.5} parent=11 // pred_check_branch
        %123 = sbr.rel (%p121) target = $region20
      $region19: #{discriminator_forward.5} parent=11 // pred_region
        _
      $region20: #{discriminator_forward.5} parent=11 // pred_fallthru
        _
    $region12: #{discriminator_forward.5} parent=5 // pred_fallthru
      _
    %p124 = scmp.lt.s32.totalorder %s9, 2
    // Predicated region
    $region21: #{discriminator_forward.5} parent=5 // pred_check
      %p125 = pneg %p124
    $region22: #{discriminator_forward.5} parent=5 // pred_check_branch
      %127 = sbr.rel (%p125) target = $region24
    $region23: #{discriminator_forward.5} parent=5 // pred_region
      // Predicated region
      $region25: #{discriminator_forward.5} parent=23 // pred_check
        %p128 = pneg %p29
      $region26: #{discriminator_forward.5} parent=23 // pred_check_branch
        %130 = sbr.rel (%p128) target = $region28
      $region27: #{discriminator_forward.5} parent=23 // pred_region
        %p131 = scmp.lt.s32.totalorder %s9, 1
        %s132 = scalar_select %p131, %s9, 1
        %s133 = smul.addr %s132, 224
        %s134 = smul.addr %s133, 8
        %s135 = scalar_lea.vmem %s0, %s134
      $region28: #{discriminator_forward.5} parent=23 // pred_fallthru
        _
    $region24: #{discriminator_forward.5} parent=5 // pred_fallthru
      _
    %p136 = scmp.le.s32.totalorder 1, %s9
    %p137 = scmp.lt.s32.totalorder %s9, 3
    %p138 = pnand %p136, %p137
    %p139 = pneg %p138
    // Predicated region
    $region29: #{discriminator_forward.5} parent=5 // pred_check
      _
    $region30: #{discriminator_forward.5} parent=5 // pred_check_branch
      %141 = sbr.rel (%p138) target = $region32
    $region31: #{discriminator_forward.5} parent=5 // pred_region
      %s142 = ssub.s32 %s9, 1
      %p143 = scmp.lt.s32.totalorder %s14, 1
      %s144 = scalar_select %p143, %s14, 1
      %s145 = smul.addr %s144, 224
      %s146 = smul.addr %s145, 8
      %s147 = scalar_lea.vmem %s0, %s146
      %p148 = pneg %p35
      %p149 = pneg %p32
      %p150 = pneg %p56
      %p151 = pneg %p53
      %p152 = pneg %p77
      %p153 = pneg %p74
      %p154 = pneg %p103
      %p155 = pneg %p100
      %p156 = scmp.lt.s32.totalorder %s14, 1
      %s157 = scalar_select %p156, %s14, 1
      %s158 = smul.addr %s157, 8
      %s159 = smul.addr %s158, 8
      %s160 = scalar_lea.vmem %s3, %s159
      %p161 = scmp.lt.s32.totalorder %s14, 1
      %s162 = scalar_select %p161, %s14, 1
      %s163 = smul.addr %s162, 224
      %s164 = smul.addr %s163, 8
      %s165 = scalar_lea.vmem %s0, %s164
      %p166 = scmp.lt.s32.totalorder %s14, 1
      %s167 = scalar_select %p166, %s14, 1
      %s168 = smul.addr %s167, 8
      %s169 = smul.addr %s168, 8
      %s170 = scalar_lea.vmem %s3, %s169
      %v171 = vld [vmem:[%s1] sm:$0xff]
      %v172 = vld [vmem:[%s1 + $0x8] sm:$0xff]
      %v173 = vld [vmem:[%s1 + $0x10] sm:$0xff]
      %v174 = vld [vmem:[%s1 + $0x18] sm:$0xff]
      %v175 = vld [vmem:[%s1 + $0x20] sm:$0xff]
      %v176 = vld [vmem:[%s1 + $0x28] sm:$0xff]
      %v177 = vld [vmem:[%s1 + $0x30] sm:$0xff]
      %v178 = vld [vmem:[%s1 + $0x38] sm:$0xff]
      %v179 = vld [vmem:[%s1 + $0x40] sm:$0xff]
      %v180 = vld [vmem:[%s1 + $0x48] sm:$0xff]
      %v181 = vld [vmem:[%s1 + $0x50] sm:$0xff]
      %v182 = vld [vmem:[%s1 + $0x58] sm:$0xff]
      %v183 = vld [vmem:[%s1 + $0x60] sm:$0xff]
      %v184 = vld [vmem:[%s1 + $0x68] sm:$0xff]
      %v185 = vld [vmem:[%s1 + $0x70] sm:$0xff]
      %v186 = vld [vmem:[%s1 + $0x78] sm:$0xff]
      %v187 = vld [vmem:[%s1 + $0x80] sm:$0xff]
      %v188 = vld [vmem:[%s1 + $0x88] sm:$0xff]
      %v189 = vld [vmem:[%s1 + $0x90] sm:$0xff]
      %v190 = vld [vmem:[%s1 + $0x98] sm:$0xff]
      %v191 = vld [vmem:[%s1 + $0xa0] sm:$0xff]
      %v192 = vld [vmem:[%s1 + $0xa8] sm:$0xff]
      %v193 = vld [vmem:[%s1 + $0xb0] sm:$0xff]
      %v194 = vld [vmem:[%s1 + $0xb8] sm:$0xff]
      %v195 = vld [vmem:[%s1 + $0xc0] sm:$0xff]
      %v196 = vld [vmem:[%s1 + $0xc8] sm:$0xff]
      %v197 = vld [vmem:[%s1 + $0xd0] sm:$0xff]
      %v198 = vld [vmem:[%s1 + $0xd8] sm:$0xff]
      %v199 = vld [vmem:[%s1 + $0xe0] sm:$0xff]
      %v200 = vld [vmem:[%s1 + $0xe8] sm:$0xff]
      %v201 = vld [vmem:[%s1 + $0xf0] sm:$0xff]
      %v202 = vld [vmem:[%s1 + $0xf8] sm:$0xff]
      %v203 = vld [vmem:[%s1 + $0x100] sm:$0xff]
      %v204 = vld [vmem:[%s1 + $0x108] sm:$0xff]
      %v205 = vld [vmem:[%s1 + $0x110] sm:$0xff]
      %v206 = vld [vmem:[%s1 + $0x118] sm:$0xff]
      %v207 = vld [vmem:[%s1 + $0x120] sm:$0xff]
      %v208 = vld [vmem:[%s1 + $0x128] sm:$0xff]
      %v209 = vld [vmem:[%s1 + $0x130] sm:$0xff]
      %v210 = vld [vmem:[%s1 + $0x138] sm:$0xff]
      %v211 = vld [vmem:[%s1 + $0x140] sm:$0xff]
      %v212 = vld [vmem:[%s1 + $0x148] sm:$0xff]
      %v213 = vld [vmem:[%s1 + $0x150] sm:$0xff]
      %v214 = vld [vmem:[%s1 + $0x158] sm:$0xff]
      %v215 = vld [vmem:[%s1 + $0x160] sm:$0xff]
      %v216 = vld [vmem:[%s1 + $0x168] sm:$0xff]
      %v217 = vld [vmem:[%s1 + $0x170] sm:$0xff]
      %v218 = vld [vmem:[%s1 + $0x178] sm:$0xff]
      %v219 = vld [vmem:[%s1 + $0x180] sm:$0xff]
      %v220 = vld [vmem:[%s1 + $0x188] sm:$0xff]
      %v221 = vld [vmem:[%s1 + $0x190] sm:$0xff]
      %v222 = vld [vmem:[%s1 + $0x198] sm:$0xff]
      %v223 = vld [vmem:[%s1 + $0x1a0] sm:$0xff]
      %v224 = vld [vmem:[%s1 + $0x1a8] sm:$0xff]
      %v225 = vld [vmem:[%s1 + $0x1b0] sm:$0xff]
      %v226 = vld [vmem:[%s1 + $0x1b8] sm:$0xff]
      %v227 = vld [vmem:[%s1 + $0x1c0] sm:$0xff]
      %v228 = vld [vmem:[%s1 + $0x1c8] sm:$0xff]
      %v229 = vld [vmem:[%s1 + $0x1d0] sm:$0xff]
      %v230 = vld [vmem:[%s1 + $0x1d8] sm:$0xff]
      %v231 = vld [vmem:[%s1 + $0x1e0] sm:$0xff]
      %v232 = vld [vmem:[%s1 + $0x1e8] sm:$0xff]
      %v233 = vld [vmem:[%s1 + $0x1f0] sm:$0xff]
      %v234 = vld [vmem:[%s1 + $0x1f8] sm:$0xff]
      %v235 = vld [vmem:[%s1 + $0x200] sm:$0xff]
      %v236 = vld [vmem:[%s1 + $0x208] sm:$0xff]
      %v237 = vld [vmem:[%s1 + $0x210] sm:$0xff]
      %v238 = vld [vmem:[%s1 + $0x218] sm:$0xff]
      %v239 = vld [vmem:[%s1 + $0x220] sm:$0xff]
      %v240 = vld [vmem:[%s1 + $0x228] sm:$0xff]
      %v241 = vld [vmem:[%s1 + $0x230] sm:$0xff]
      %v242 = vld [vmem:[%s1 + $0x238] sm:$0xff]
      %v243 = vld [vmem:[%s1 + $0x240] sm:$0xff]
      %v244 = vld [vmem:[%s1 + $0x248] sm:$0xff]
      %v245 = vld [vmem:[%s1 + $0x250] sm:$0xff]
      %v246 = vld [vmem:[%s1 + $0x258] sm:$0xff]
      %v247 = vld [vmem:[%s1 + $0x260] sm:$0xff]
      %v248 = vld [vmem:[%s1 + $0x268] sm:$0xff]
      %v249 = vld [vmem:[%s1 + $0x270] sm:$0xff]
      %v250 = vld [vmem:[%s1 + $0x278] sm:$0xff]
      %v251 = vld [vmem:[%s1 + $0x280] sm:$0xff]
      %v252 = vld [vmem:[%s1 + $0x288] sm:$0xff]
      %v253 = vld [vmem:[%s1 + $0x290] sm:$0xff]
      %v254 = vld [vmem:[%s1 + $0x298] sm:$0xff]
      %v255 = vld [vmem:[%s1 + $0x2a0] sm:$0xff]
      %v256 = vld [vmem:[%s1 + $0x2a8] sm:$0xff]
      %v257 = vld [vmem:[%s1 + $0x2b0] sm:$0xff]
      %v258 = vld [vmem:[%s1 + $0x2b8] sm:$0xff]
      %v259 = vld [vmem:[%s1 + $0x2c0] sm:$0xff]
      %v260 = vld [vmem:[%s1 + $0x2c8] sm:$0xff]
      %v261 = vld [vmem:[%s1 + $0x2d0] sm:$0xff]
      %v262 = vld [vmem:[%s1 + $0x2d8] sm:$0xff]
      %v263 = vld [vmem:[%s1 + $0x2e0] sm:$0xff]
      %v264 = vld [vmem:[%s1 + $0x2e8] sm:$0xff]
      %v265 = vld [vmem:[%s1 + $0x2f0] sm:$0xff]
      %v266 = vld [vmem:[%s1 + $0x2f8] sm:$0xff]
      %v267 = vld [vmem:[%s1 + $0x300] sm:$0xff]
      %v268 = vld [vmem:[%s1 + $0x308] sm:$0xff]
      %v269 = vld [vmem:[%s1 + $0x310] sm:$0xff]
      %v270 = vld [vmem:[%s1 + $0x318] sm:$0xff]
      %v271 = vld [vmem:[%s2] sm:$0x1]
      %v272 = vld [vmem:[%s165] sm:$0xff]
      %v273 = vld [vmem:[%s165 + $0x8] sm:$0xff]
      %v274 = vld [vmem:[%s165 + $0x10] sm:$0xff]
      %v275 = vld [vmem:[%s165 + $0x18] sm:$0xff]
      %v276 = vld [vmem:[%s165 + $0x20] sm:$0xff]
      %v277 = vld [vmem:[%s165 + $0x28] sm:$0xff]
      %v278 = vld [vmem:[%s165 + $0x30] sm:$0xff]
      %v279 = vld [vmem:[%s165 + $0x38] sm:$0xff]
      %v280 = vld [vmem:[%s165 + $0x40] sm:$0xff]
      %v281 = vld [vmem:[%s165 + $0x48] sm:$0xff]
      %v282 = vld [vmem:[%s165 + $0x50] sm:$0xff]
      %v283 = vld [vmem:[%s165 + $0x58] sm:$0xff]
      %v284 = vld [vmem:[%s165 + $0x60] sm:$0xff]
      %v285 = vld [vmem:[%s165 + $0x68] sm:$0xff]
      %v286 = vld [vmem:[%s165 + $0x70] sm:$0xff]
      %v287 = vld [vmem:[%s165 + $0x78] sm:$0xff]
      %v288 = vld [vmem:[%s165 + $0x80] sm:$0xff]
      %v289 = vld [vmem:[%s165 + $0x88] sm:$0xff]
      %v290 = vld [vmem:[%s165 + $0x90] sm:$0xff]
      %v291 = vld [vmem:[%s165 + $0x98] sm:$0xff]
      %v292 = vld [vmem:[%s165 + $0xa0] sm:$0xff]
      %v293 = vld [vmem:[%s165 + $0xa8] sm:$0xff]
      %v294 = vld [vmem:[%s165 + $0xb0] sm:$0xff]
      %v295 = vld [vmem:[%s165 + $0xb8] sm:$0xff]
      %v296 = vld [vmem:[%s165 + $0xc0] sm:$0xff]
      %v297 = vld [vmem:[%s165 + $0xc8] sm:$0xff]
      %v298 = vld [vmem:[%s165 + $0xd0] sm:$0xff]
      %v299 = vld [vmem:[%s165 + $0xd8] sm:$0xff]
      %v300 = vld [vmem:[%s165 + $0xe0] sm:$0xff]
      %v301 = vld [vmem:[%s165 + $0xe8] sm:$0xff]
      %v302 = vld [vmem:[%s165 + $0xf0] sm:$0xff]
      %v303 = vld [vmem:[%s165 + $0xf8] sm:$0xff]
      %v304 = vld [vmem:[%s165 + $0x100] sm:$0xff]
      %v305 = vld [vmem:[%s165 + $0x108] sm:$0xff]
      %v306 = vld [vmem:[%s165 + $0x110] sm:$0xff]
      %v307 = vld [vmem:[%s165 + $0x118] sm:$0xff]
      %v308 = vld [vmem:[%s165 + $0x120] sm:$0xff]
      %v309 = vld [vmem:[%s165 + $0x128] sm:$0xff]
      %v310 = vld [vmem:[%s165 + $0x130] sm:$0xff]
      %v311 = vld [vmem:[%s165 + $0x138] sm:$0xff]
      %v312 = vld [vmem:[%s165 + $0x140] sm:$0xff]
      %v313 = vld [vmem:[%s165 + $0x148] sm:$0xff]
      %v314 = vld [vmem:[%s165 + $0x150] sm:$0xff]
      %v315 = vld [vmem:[%s165 + $0x158] sm:$0xff]
      %v316 = vld [vmem:[%s165 + $0x160] sm:$0xff]
      %v317 = vld [vmem:[%s165 + $0x168] sm:$0xff]
      %v318 = vld [vmem:[%s165 + $0x170] sm:$0xff]
      %v319 = vld [vmem:[%s165 + $0x178] sm:$0xff]
      %v320 = vld [vmem:[%s165 + $0x180] sm:$0xff]
      %v321 = vld [vmem:[%s165 + $0x188] sm:$0xff]
      %v322 = vld [vmem:[%s165 + $0x190] sm:$0xff]
      %v323 = vld [vmem:[%s165 + $0x198] sm:$0xff]
      %v324 = vld [vmem:[%s165 + $0x1a0] sm:$0xff]
      %v325 = vld [vmem:[%s165 + $0x1a8] sm:$0xff]
      %v326 = vld [vmem:[%s165 + $0x1b0] sm:$0xff]
      %v327 = vld [vmem:[%s165 + $0x1b8] sm:$0xff]
      %v329 = vlaneseq
      %v330 = vshrl.u32 %v329, 7
      %v331 = vsub.s32 0, %v330
      %v332 = vrot.slane %v271, %v331
      %vm334 = vcmask 261120
      %v336 = vsel %vm334, %v278, 0
      %v339 = vsel %vm334, %v285, 0
      %v342 = vsel %vm334, %v292, 0
      %v345 = vsel %vm334, %v299, 0
      %v348 = vsel %vm334, %v306, 0
      %v351 = vsel %vm334, %v313, 0
      %v354 = vsel %vm334, %v320, 0
      %v357 = vsel %vm334, %v327, 0
      %359 = vmatprep.subr.mxu0 0.0
      %360 = vmatpush1.msra.mxu0 %v186
      %361 = vmatprep.subr.mxu0 0.0
      %362 = vmatpush1.msra.mxu0 %v185
      %363 = vmatprep.subr.mxu0 0.0
      %364 = vmatpush1.msra.mxu0 %v184
      %365 = vmatprep.subr.mxu0 0.0
      %366 = vmatpush1.msra.mxu0 %v183
      %367 = vmatprep.subr.mxu0 0.0
      %368 = vmatpush1.msra.mxu0 %v182
      %369 = vmatprep.subr.mxu0 0.0
      %370 = vmatpush1.msra.mxu0 %v181
      %371 = vmatprep.subr.mxu0 0.0
      %372 = vmatpush1.msra.mxu0 %v180
      %373 = vmatprep.subr.mxu0 0.0
      %374 = vmatpush1.msra.mxu0 %v179
      %375 = vmatprep.subr.mxu0 0.0
      %376 = vmatpush1.msra.mxu0 %v178
      %377 = vmatprep.subr.mxu0 0.0
      %378 = vmatpush1.msra.mxu0 %v177
      %379 = vmatprep.subr.mxu0 0.0
      %380 = vmatpush1.msra.mxu0 %v176
      %381 = vmatprep.subr.mxu0 0.0
      %382 = vmatpush1.msra.mxu0 %v175
      %383 = vmatprep.subr.mxu0 0.0
      %384 = vmatpush1.msra.mxu0 %v174
      %385 = vmatprep.subr.mxu0 0.0
      %386 = vmatpush1.msra.mxu0 %v173
      %387 = vmatprep.subr.mxu0 0.0
      %388 = vmatpush1.msra.mxu0 %v172
      %389 = vmatprep.subr.mxu0 0.0
      %390 = vmatpush1.msra.mxu0 %v171
      %391 = vmatprep.subr.mxu0 0.0
      %392 = vmatpush2.msra.mxu0 %v202
      %393 = vmatprep.subr.mxu0 0.0
      %394 = vmatpush2.msra.mxu0 %v201
      %395 = vmatprep.subr.mxu0 0.0
      %396 = vmatpush2.msra.mxu0 %v200
      %397 = vmatprep.subr.mxu0 0.0
      %398 = vmatpush2.msra.mxu0 %v199
      %399 = vmatprep.subr.mxu0 0.0
      %400 = vmatpush2.msra.mxu0 %v198
      %401 = vmatprep.subr.mxu0 0.0
      %402 = vmatpush2.msra.mxu0 %v197
      %403 = vmatprep.subr.mxu0 0.0
      %404 = vmatpush2.msra.mxu0 %v196
      %405 = vmatprep.subr.mxu0 0.0
      %406 = vmatpush2.msra.mxu0 %v195
      %407 = vmatprep.subr.mxu0 0.0
      %408 = vmatpush2.msra.mxu0 %v194
      %409 = vmatprep.subr.mxu0 0.0
      %410 = vmatpush2.msra.mxu0 %v193
      %411 = vmatprep.subr.mxu0 0.0
      %412 = vmatpush2.msra.mxu0 %v192
      %413 = vmatprep.subr.mxu0 0.0
      %414 = vmatpush2.msra.mxu0 %v191
      %415 = vmatprep.subr.mxu0 0.0
      %416 = vmatpush2.msra.mxu0 %v190
      %417 = vmatprep.subr.mxu0 0.0
      %418 = vmatpush2.msra.mxu0 %v189
      %419 = vmatprep.subr.mxu0 0.0
      %420 = vmatpush2.msra.mxu0 %v188
      %421 = vmatprep.subr.mxu0 0.0
      %422 = vmatpush2.msra.mxu0 %v187
      %423 = vmatprep.mubr.f32.mxu0 %v273
      %424 = vmatmul.mubr.f32.gmra.mxu0 %v272
      %v425 = vpop.f32.mrf.mxu0
      %v426 = vadd.f32 %v332, %v425
      %v427 = vpop.f32.mrf.mxu0
      %428 = vmatprep.mubr.f32.mxu0 %v280
      %429 = vmatmul.mubr.f32.gmra.mxu0 %v279
      %v430 = vpop.f32.mrf.mxu0
      %v431 = vadd.f32 %v332, %v430
      %v432 = vpop.f32.mrf.mxu0
      %433 = vmatprep.mubr.f32.mxu0 %v287
      %434 = vmatmul.mubr.f32.gmra.mxu0 %v286
      %v435 = vpop.f32.mrf.mxu0
      %v436 = vadd.f32 %v332, %v435
      %v437 = vpop.f32.mrf.mxu0
      %438 = vmatprep.mubr.f32.mxu0 %v294
      %439 = vmatmul.mubr.f32.gmra.mxu0 %v293
      %v440 = vpop.f32.mrf.mxu0
      %v441 = vadd.f32 %v332, %v440
      %v442 = vpop.f32.mrf.mxu0
      %443 = vmatprep.mubr.f32.mxu0 %v301
      %444 = vmatmul.mubr.f32.gmra.mxu0 %v300
      %v445 = vpop.f32.mrf.mxu0
      %v446 = vadd.f32 %v332, %v445
      %v447 = vpop.f32.mrf.mxu0
      %448 = vmatprep.mubr.f32.mxu0 %v308
      %449 = vmatmul.mubr.f32.gmra.mxu0 %v307
      %v450 = vpop.f32.mrf.mxu0
      %v451 = vadd.f32 %v332, %v450
      %v452 = vpop.f32.mrf.mxu0
      %453 = vmatprep.mubr.f32.mxu0 %v315
      %454 = vmatmul.mubr.f32.gmra.mxu0 %v314
      %v455 = vpop.f32.mrf.mxu0
      %v456 = vadd.f32 %v332, %v455
      %v457 = vpop.f32.mrf.mxu0
      %458 = vmatprep.mubr.f32.mxu0 %v322
      %459 = vmatmul.mubr.f32.gmra.mxu0 %v321
      %v460 = vpop.f32.mrf.mxu0
      %v461 = vadd.f32 %v332, %v460
      %v462 = vpop.f32.mrf.mxu0
      %463 = vdwg.mxu0
      %464 = vmatprep.subr.mxu0 0.0
      %465 = vmatpush1.msra.mxu0 %v218
      %466 = vmatprep.subr.mxu0 0.0
      %467 = vmatpush1.msra.mxu0 %v217
      %468 = vmatprep.subr.mxu0 0.0
      %469 = vmatpush1.msra.mxu0 %v216
      %470 = vmatprep.subr.mxu0 0.0
      %471 = vmatpush1.msra.mxu0 %v215
      %472 = vmatprep.subr.mxu0 0.0
      %473 = vmatpush1.msra.mxu0 %v214
      %474 = vmatprep.subr.mxu0 0.0
      %475 = vmatpush1.msra.mxu0 %v213
      %476 = vmatprep.subr.mxu0 0.0
      %477 = vmatpush1.msra.mxu0 %v212
      %478 = vmatprep.subr.mxu0 0.0
      %479 = vmatpush1.msra.mxu0 %v211
      %480 = vmatprep.subr.mxu0 0.0
      %481 = vmatpush1.msra.mxu0 %v210
      %482 = vmatprep.subr.mxu0 0.0
      %483 = vmatpush1.msra.mxu0 %v209
      %484 = vmatprep.subr.mxu0 0.0
      %485 = vmatpush1.msra.mxu0 %v208
      %486 = vmatprep.subr.mxu0 0.0
      %487 = vmatpush1.msra.mxu0 %v207
      %488 = vmatprep.subr.mxu0 0.0
      %489 = vmatpush1.msra.mxu0 %v206
      %490 = vmatprep.subr.mxu0 0.0
      %491 = vmatpush1.msra.mxu0 %v205
      %492 = vmatprep.subr.mxu0 0.0
      %493 = vmatpush1.msra.mxu0 %v204
      %494 = vmatprep.subr.mxu0 0.0
      %495 = vmatpush1.msra.mxu0 %v203
      %496 = vmatprep.subr.mxu0 0.0
      %497 = vmatpush2.msra.mxu0 %v234
      %498 = vmatprep.subr.mxu0 0.0
      %499 = vmatpush2.msra.mxu0 %v233
      %500 = vmatprep.subr.mxu0 0.0
      %501 = vmatpush2.msra.mxu0 %v232
      %502 = vmatprep.subr.mxu0 0.0
      %503 = vmatpush2.msra.mxu0 %v231
      %504 = vmatprep.subr.mxu0 0.0
      %505 = vmatpush2.msra.mxu0 %v230
      %506 = vmatprep.subr.mxu0 0.0
      %507 = vmatpush2.msra.mxu0 %v229
      %508 = vmatprep.subr.mxu0 0.0
      %509 = vmatpush2.msra.mxu0 %v228
      %510 = vmatprep.subr.mxu0 0.0
      %511 = vmatpush2.msra.mxu0 %v227
      %512 = vmatprep.subr.mxu0 0.0
      %513 = vmatpush2.msra.mxu0 %v226
      %514 = vmatprep.subr.mxu0 0.0
      %515 = vmatpush2.msra.mxu0 %v225
      %516 = vmatprep.subr.mxu0 0.0
      %517 = vmatpush2.msra.mxu0 %v224
      %518 = vmatprep.subr.mxu0 0.0
      %519 = vmatpush2.msra.mxu0 %v223
      %520 = vmatprep.subr.mxu0 0.0
      %521 = vmatpush2.msra.mxu0 %v222
      %522 = vmatprep.subr.mxu0 0.0
      %523 = vmatpush2.msra.mxu0 %v221
      %524 = vmatprep.subr.mxu0 0.0
      %525 = vmatpush2.msra.mxu0 %v220
      %526 = vmatprep.subr.mxu0 0.0
      %527 = vmatpush2.msra.mxu0 %v219
      %528 = vmatprep.mubr.f32.mxu0 %v275
      %529 = vmatmul.mubr.f32.gmra.mxu0 %v274
      %v530 = vpop.f32.mrf.mxu0
      %v531 = vadd.f32 %v426, %v530
      %v532 = vpop.f32.mrf.mxu0
      %533 = vmatprep.mubr.f32.mxu0 %v282
      %534 = vmatmul.mubr.f32.gmra.mxu0 %v281
      %v535 = vpop.f32.mrf.mxu0
      %v536 = vadd.f32 %v431, %v535
      %v537 = vpop.f32.mrf.mxu0
      %538 = vmatprep.mubr.f32.mxu0 %v289
      %539 = vmatmul.mubr.f32.gmra.mxu0 %v288
      %v540 = vpop.f32.mrf.mxu0
      %v541 = vadd.f32 %v436, %v540
      %v542 = vpop.f32.mrf.mxu0
      %543 = vmatprep.mubr.f32.mxu0 %v296
      %544 = vmatmul.mubr.f32.gmra.mxu0 %v295
      %v545 = vpop.f32.mrf.mxu0
      %v546 = vadd.f32 %v441, %v545
      %v547 = vpop.f32.mrf.mxu0
      %548 = vmatprep.mubr.f32.mxu0 %v303
      %549 = vmatmul.mubr.f32.gmra.mxu0 %v302
      %v550 = vpop.f32.mrf.mxu0
      %v551 = vadd.f32 %v446, %v550
      %v552 = vpop.f32.mrf.mxu0
      %553 = vmatprep.mubr.f32.mxu0 %v310
      %554 = vmatmul.mubr.f32.gmra.mxu0 %v309
      %v555 = vpop.f32.mrf.mxu0
      %v556 = vadd.f32 %v451, %v555
      %v557 = vpop.f32.mrf.mxu0
      %558 = vmatprep.mubr.f32.mxu0 %v317
      %559 = vmatmul.mubr.f32.gmra.mxu0 %v316
      %v560 = vpop.f32.mrf.mxu0
      %v561 = vadd.f32 %v456, %v560
      %v562 = vpop.f32.mrf.mxu0
      %563 = vmatprep.mubr.f32.mxu0 %v324
      %564 = vmatmul.mubr.f32.gmra.mxu0 %v323
      %v565 = vpop.f32.mrf.mxu0
      %v566 = vadd.f32 %v461, %v565
      %v567 = vpop.f32.mrf.mxu0
      %568 = vdwg.mxu0
      %569 = vmatprep.subr.mxu0 0.0
      %570 = vmatpush1.msra.mxu0 %v250
      %571 = vmatprep.subr.mxu0 0.0
      %572 = vmatpush1.msra.mxu0 %v249
      %573 = vmatprep.subr.mxu0 0.0
      %574 = vmatpush1.msra.mxu0 %v248
      %575 = vmatprep.subr.mxu0 0.0
      %576 = vmatpush1.msra.mxu0 %v247
      %577 = vmatprep.subr.mxu0 0.0
      %578 = vmatpush1.msra.mxu0 %v246
      %579 = vmatprep.subr.mxu0 0.0
      %580 = vmatpush1.msra.mxu0 %v245
      %581 = vmatprep.subr.mxu0 0.0
      %582 = vmatpush1.msra.mxu0 %v244
      %583 = vmatprep.subr.mxu0 0.0
      %584 = vmatpush1.msra.mxu0 %v243
      %585 = vmatprep.subr.mxu0 0.0
      %586 = vmatpush1.msra.mxu0 %v242
      %587 = vmatprep.subr.mxu0 0.0
      %588 = vmatpush1.msra.mxu0 %v241
      %589 = vmatprep.subr.mxu0 0.0
      %590 = vmatpush1.msra.mxu0 %v240
      %591 = vmatprep.subr.mxu0 0.0
      %592 = vmatpush1.msra.mxu0 %v239
      %593 = vmatprep.subr.mxu0 0.0
      %594 = vmatpush1.msra.mxu0 %v238
      %595 = vmatprep.subr.mxu0 0.0
      %596 = vmatpush1.msra.mxu0 %v237
      %597 = vmatprep.subr.mxu0 0.0
      %598 = vmatpush1.msra.mxu0 %v236
      %599 = vmatprep.subr.mxu0 0.0
      %600 = vmatpush1.msra.mxu0 %v235
      %601 = vmatprep.subr.mxu0 0.0
      %602 = vmatpush2.msra.mxu0 %v266
      %603 = vmatprep.subr.mxu0 0.0
      %604 = vmatpush2.msra.mxu0 %v265
      %605 = vmatprep.subr.mxu0 0.0
      %606 = vmatpush2.msra.mxu0 %v264
      %607 = vmatprep.subr.mxu0 0.0
      %608 = vmatpush2.msra.mxu0 %v263
      %609 = vmatprep.subr.mxu0 0.0
      %610 = vmatpush2.msra.mxu0 %v262
      %611 = vmatprep.subr.mxu0 0.0
      %612 = vmatpush2.msra.mxu0 %v261
      %613 = vmatprep.subr.mxu0 0.0
      %614 = vmatpush2.msra.mxu0 %v260
      %615 = vmatprep.subr.mxu0 0.0
      %616 = vmatpush2.msra.mxu0 %v259
      %617 = vmatprep.subr.mxu0 0.0
      %618 = vmatpush2.msra.mxu0 %v258
      %619 = vmatprep.subr.mxu0 0.0
      %620 = vmatpush2.msra.mxu0 %v257
      %621 = vmatprep.subr.mxu0 0.0
      %622 = vmatpush2.msra.mxu0 %v256
      %623 = vmatprep.subr.mxu0 0.0
      %624 = vmatpush2.msra.mxu0 %v255
      %625 = vmatprep.subr.mxu0 0.0
      %626 = vmatpush2.msra.mxu0 %v254
      %627 = vmatprep.subr.mxu0 0.0
      %628 = vmatpush2.msra.mxu0 %v253
      %629 = vmatprep.subr.mxu0 0.0
      %630 = vmatpush2.msra.mxu0 %v252
      %631 = vmatprep.subr.mxu0 0.0
      %632 = vmatpush2.msra.mxu0 %v251
      %633 = vmatprep.mubr.f32.mxu0 %v277
      %634 = vmatmul.mubr.f32.gmra.mxu0 %v276
      %v635 = vpop.f32.mrf.mxu0
      %v636 = vadd.f32 %v531, %v635
      %v637 = vpop.f32.mrf.mxu0
      %638 = vmatprep.mubr.f32.mxu0 %v284
      %639 = vmatmul.mubr.f32.gmra.mxu0 %v283
      %v640 = vpop.f32.mrf.mxu0
      %v641 = vadd.f32 %v536, %v640
      %v642 = vpop.f32.mrf.mxu0
      %643 = vmatprep.mubr.f32.mxu0 %v291
      %644 = vmatmul.mubr.f32.gmra.mxu0 %v290
      %v645 = vpop.f32.mrf.mxu0
      %v646 = vadd.f32 %v541, %v645
      %v647 = vpop.f32.mrf.mxu0
      %648 = vmatprep.mubr.f32.mxu0 %v298
      %649 = vmatmul.mubr.f32.gmra.mxu0 %v297
      %v650 = vpop.f32.mrf.mxu0
      %v651 = vadd.f32 %v546, %v650
      %v652 = vpop.f32.mrf.mxu0
      %653 = vmatprep.mubr.f32.mxu0 %v305
      %654 = vmatmul.mubr.f32.gmra.mxu0 %v304
      %v655 = vpop.f32.mrf.mxu0
      %v656 = vadd.f32 %v551, %v655
      %v657 = vpop.f32.mrf.mxu0
      %658 = vmatprep.mubr.f32.mxu0 %v312
      %659 = vmatmul.mubr.f32.gmra.mxu0 %v311
      %v660 = vpop.f32.mrf.mxu0
      %v661 = vadd.f32 %v556, %v660
      %v662 = vpop.f32.mrf.mxu0
      %663 = vmatprep.mubr.f32.mxu0 %v319
      %664 = vmatmul.mubr.f32.gmra.mxu0 %v318
      %v665 = vpop.f32.mrf.mxu0
      %v666 = vadd.f32 %v561, %v665
      %v667 = vpop.f32.mrf.mxu0
      %668 = vmatprep.mubr.f32.mxu0 %v326
      %669 = vmatmul.mubr.f32.gmra.mxu0 %v325
      %v670 = vpop.f32.mrf.mxu0
      %v671 = vadd.f32 %v566, %v670
      %v672 = vpop.f32.mrf.mxu0
      %673 = vdwg.mxu0
      %674 = vmatprep.subr.mxu0 0.0
      %675 = vmatpush1.msra.mxu0 0.0
      %676 = vmatprep.subr.mxu0 0.0
      %677 = vmatpush1.msra.mxu0 0.0
      %678 = vmatprep.subr.mxu0 0.0
      %679 = vmatpush1.msra.mxu0 0.0
      %680 = vmatprep.subr.mxu0 0.0
      %681 = vmatpush1.msra.mxu0 0.0
      %682 = vmatprep.subr.mxu0 0.0
      %683 = vmatpush1.msra.mxu0 0.0
      %684 = vmatprep.subr.mxu0 0.0
      %685 = vmatpush1.msra.mxu0 0.0
      %686 = vmatprep.subr.mxu0 0.0
      %687 = vmatpush1.msra.mxu0 0.0
      %688 = vmatprep.subr.mxu0 0.0
      %689 = vmatpush1.msra.mxu0 0.0
      %690 = vmatprep.subr.mxu0 0.0
      %691 = vmatpush1.msra.mxu0 0.0
      %692 = vmatprep.subr.mxu0 0.0
      %693 = vmatpush1.msra.mxu0 0.0
      %694 = vmatprep.subr.mxu0 0.0
      %695 = vmatpush1.msra.mxu0 0.0
      %696 = vmatprep.subr.mxu0 0.0
      %697 = vmatpush1.msra.mxu0 0.0
      %698 = vmatprep.subr.mxu0 0.0
      %699 = vmatpush1.msra.mxu0 %v270
      %700 = vmatprep.subr.mxu0 0.0
      %701 = vmatpush1.msra.mxu0 %v269
      %702 = vmatprep.subr.mxu0 0.0
      %703 = vmatpush1.msra.mxu0 %v268
      %704 = vmatprep.subr.mxu0 0.0
      %705 = vmatpush1.msra.mxu0 %v267
      %706 = vmatprep.subr.mxu0 0.0
      %707 = vmatpush2.msra.mxu0 0.0
      %708 = vmatprep.subr.mxu0 0.0
      %709 = vmatpush2.msra.mxu0 0.0
      %710 = vmatprep.subr.mxu0 0.0
      %711 = vmatpush2.msra.mxu0 0.0
      %712 = vmatprep.subr.mxu0 0.0
      %713 = vmatpush2.msra.mxu0 0.0
      %714 = vmatprep.subr.mxu0 0.0
      %715 = vmatpush2.msra.mxu0 0.0
      %716 = vmatprep.subr.mxu0 0.0
      %717 = vmatpush2.msra.mxu0 0.0
      %718 = vmatprep.subr.mxu0 0.0
      %719 = vmatpush2.msra.mxu0 0.0
      %720 = vmatprep.subr.mxu0 0.0
      %721 = vmatpush2.msra.mxu0 0.0
      %722 = vmatprep.subr.mxu0 0.0
      %723 = vmatpush2.msra.mxu0 0.0
      %724 = vmatprep.subr.mxu0 0.0
      %725 = vmatpush2.msra.mxu0 0.0
      %726 = vmatprep.subr.mxu0 0.0
      %727 = vmatpush2.msra.mxu0 0.0
      %728 = vmatprep.subr.mxu0 0.0
      %729 = vmatpush2.msra.mxu0 0.0
      %730 = vmatprep.subr.mxu0 0.0
      %731 = vmatpush2.msra.mxu0 0.0
      %732 = vmatprep.subr.mxu0 0.0
      %733 = vmatpush2.msra.mxu0 0.0
      %734 = vmatprep.subr.mxu0 0.0
      %735 = vmatpush2.msra.mxu0 0.0
      %736 = vmatprep.subr.mxu0 0.0
      %737 = vmatpush2.msra.mxu0 0.0
      %738 = vmatprep.mubr.f32.mxu0 0.0
      %739 = vmatmul.mubr.f32.gmra.mxu0 %v336
      %v740 = vpop.f32.mrf.mxu0
      %v741 = vadd.f32 %v636, %v740
      %v742 = vpop.f32.mrf.mxu0
      %743 = vmatprep.mubr.f32.mxu0 0.0
      %744 = vmatmul.mubr.f32.gmra.mxu0 %v339
      %v745 = vpop.f32.mrf.mxu0
      %v746 = vadd.f32 %v641, %v745
      %v747 = vpop.f32.mrf.mxu0
      %748 = vmatprep.mubr.f32.mxu0 0.0
      %749 = vmatmul.mubr.f32.gmra.mxu0 %v342
      %v750 = vpop.f32.mrf.mxu0
      %v751 = vadd.f32 %v646, %v750
      %v752 = vpop.f32.mrf.mxu0
      %753 = vmatprep.mubr.f32.mxu0 0.0
      %754 = vmatmul.mubr.f32.gmra.mxu0 %v345
      %v755 = vpop.f32.mrf.mxu0
      %v756 = vadd.f32 %v651, %v755
      %v757 = vpop.f32.mrf.mxu0
      %758 = vmatprep.mubr.f32.mxu0 0.0
      %759 = vmatmul.mubr.f32.gmra.mxu0 %v348
      %v760 = vpop.f32.mrf.mxu0
      %v761 = vadd.f32 %v656, %v760
      %v762 = vpop.f32.mrf.mxu0
      %763 = vmatprep.mubr.f32.mxu0 0.0
      %764 = vmatmul.mubr.f32.gmra.mxu0 %v351
      %v765 = vpop.f32.mrf.mxu0
      %v766 = vadd.f32 %v661, %v765
      %v767 = vpop.f32.mrf.mxu0
      %768 = vmatprep.mubr.f32.mxu0 0.0
      %769 = vmatmul.mubr.f32.gmra.mxu0 %v354
      %v770 = vpop.f32.mrf.mxu0
      %v771 = vadd.f32 %v666, %v770
      %v772 = vpop.f32.mrf.mxu0
      %773 = vmatprep.mubr.f32.mxu0 0.0
      %774 = vmatmul.mubr.f32.gmra.mxu0 %v357
      %v775 = vpop.f32.mrf.mxu0
      %v776 = vadd.f32 %v671, %v775
      %v777 = vpop.f32.mrf.mxu0
      %778 = vdwg.mxu0
      %vm779 = vcmp.gt.f32.partialorder %v741, 0.0
      %vm780 = vcmp.gt.f32.partialorder %v746, 0.0
      %vm781 = vcmp.gt.f32.partialorder %v751, 0.0
      %vm782 = vcmp.gt.f32.partialorder %v756, 0.0
      %vm783 = vcmp.gt.f32.partialorder %v761, 0.0
      %vm784 = vcmp.gt.f32.partialorder %v766, 0.0
      %vm785 = vcmp.gt.f32.partialorder %v771, 0.0
      %vm786 = vcmp.gt.f32.partialorder %v776, 0.0
      %v787 = vmul.f32 %v741, 0.2
      %v788 = vmul.f32 %v746, 0.2
      %v789 = vmul.f32 %v751, 0.2
      %v790 = vmul.f32 %v756, 0.2
      %v791 = vmul.f32 %v761, 0.2
      %v792 = vmul.f32 %v766, 0.2
      %v793 = vmul.f32 %v771, 0.2
      %v794 = vmul.f32 %v776, 0.2
      %v795 = vsel %vm779, %v741, %v787
      %v796 = vsel %vm780, %v746, %v788
      %v797 = vsel %vm781, %v751, %v789
      %v798 = vsel %vm782, %v756, %v790
      %v799 = vsel %vm783, %v761, %v791
      %v800 = vsel %vm784, %v766, %v792
      %v801 = vsel %vm785, %v771, %v793
      %v802 = vsel %vm786, %v776, %v794
      %s803 = scalar_lea.vmem %s165, 448
      %v804 = vld [vmem:[%s803] sm:$0xff]
      %v805 = vld [vmem:[%s803 + $0x8] sm:$0xff]
      %v806 = vld [vmem:[%s803 + $0x10] sm:$0xff]
      %v807 = vld [vmem:[%s803 + $0x18] sm:$0xff]
      %v808 = vld [vmem:[%s803 + $0x20] sm:$0xff]
      %v809 = vld [vmem:[%s803 + $0x28] sm:$0xff]
      %v810 = vld [vmem:[%s803 + $0x30] sm:$0xff]
      %v811 = vld [vmem:[%s803 + $0x38] sm:$0xff]
      %v812 = vld [vmem:[%s803 + $0x40] sm:$0xff]
      %v813 = vld [vmem:[%s803 + $0x48] sm:$0xff]
      %v814 = vld [vmem:[%s803 + $0x50] sm:$0xff]
      %v815 = vld [vmem:[%s803 + $0x58] sm:$0xff]
      %v816 = vld [vmem:[%s803 + $0x60] sm:$0xff]
      %v817 = vld [vmem:[%s803 + $0x68] sm:$0xff]
      %v818 = vld [vmem:[%s803 + $0x70] sm:$0xff]
      %v819 = vld [vmem:[%s803 + $0x78] sm:$0xff]
      %v820 = vld [vmem:[%s803 + $0x80] sm:$0xff]
      %v821 = vld [vmem:[%s803 + $0x88] sm:$0xff]
      %v822 = vld [vmem:[%s803 + $0x90] sm:$0xff]
      %v823 = vld [vmem:[%s803 + $0x98] sm:$0xff]
      %v824 = vld [vmem:[%s803 + $0xa0] sm:$0xff]
      %v825 = vld [vmem:[%s803 + $0xa8] sm:$0xff]
      %v826 = vld [vmem:[%s803 + $0xb0] sm:$0xff]
      %v827 = vld [vmem:[%s803 + $0xb8] sm:$0xff]
      %v828 = vld [vmem:[%s803 + $0xc0] sm:$0xff]
      %v829 = vld [vmem:[%s803 + $0xc8] sm:$0xff]
      %v830 = vld [vmem:[%s803 + $0xd0] sm:$0xff]
      %v831 = vld [vmem:[%s803 + $0xd8] sm:$0xff]
      %v832 = vld [vmem:[%s803 + $0xe0] sm:$0xff]
      %v833 = vld [vmem:[%s803 + $0xe8] sm:$0xff]
      %v834 = vld [vmem:[%s803 + $0xf0] sm:$0xff]
      %v835 = vld [vmem:[%s803 + $0xf8] sm:$0xff]
      %v836 = vld [vmem:[%s803 + $0x100] sm:$0xff]
      %v837 = vld [vmem:[%s803 + $0x108] sm:$0xff]
      %v838 = vld [vmem:[%s803 + $0x110] sm:$0xff]
      %v839 = vld [vmem:[%s803 + $0x118] sm:$0xff]
      %v840 = vld [vmem:[%s803 + $0x120] sm:$0xff]
      %v841 = vld [vmem:[%s803 + $0x128] sm:$0xff]
      %v842 = vld [vmem:[%s803 + $0x130] sm:$0xff]
      %v843 = vld [vmem:[%s803 + $0x138] sm:$0xff]
      %v844 = vld [vmem:[%s803 + $0x140] sm:$0xff]
      %v845 = vld [vmem:[%s803 + $0x148] sm:$0xff]
      %v846 = vld [vmem:[%s803 + $0x150] sm:$0xff]
      %v847 = vld [vmem:[%s803 + $0x158] sm:$0xff]
      %v848 = vld [vmem:[%s803 + $0x160] sm:$0xff]
      %v849 = vld [vmem:[%s803 + $0x168] sm:$0xff]
      %v850 = vld [vmem:[%s803 + $0x170] sm:$0xff]
      %v851 = vld [vmem:[%s803 + $0x178] sm:$0xff]
      %v852 = vld [vmem:[%s803 + $0x180] sm:$0xff]
      %v853 = vld [vmem:[%s803 + $0x188] sm:$0xff]
      %v854 = vld [vmem:[%s803 + $0x190] sm:$0xff]
      %v855 = vld [vmem:[%s803 + $0x198] sm:$0xff]
      %v856 = vld [vmem:[%s803 + $0x1a0] sm:$0xff]
      %v857 = vld [vmem:[%s803 + $0x1a8] sm:$0xff]
      %v858 = vld [vmem:[%s803 + $0x1b0] sm:$0xff]
      %v859 = vld [vmem:[%s803 + $0x1b8] sm:$0xff]
      %v861 = vsel %vm334, %v810, 0
      %v864 = vsel %vm334, %v817, 0
      %v867 = vsel %vm334, %v824, 0
      %v870 = vsel %vm334, %v831, 0
      %v873 = vsel %vm334, %v838, 0
      %v876 = vsel %vm334, %v845, 0
      %v879 = vsel %vm334, %v852, 0
      %v882 = vsel %vm334, %v859, 0
      %884 = vmatprep.subr.mxu0 0.0
      %885 = vmatpush1.msra.mxu0 %v186
      %886 = vmatprep.subr.mxu0 0.0
      %887 = vmatpush1.msra.mxu0 %v185
      %888 = vmatprep.subr.mxu0 0.0
      %889 = vmatpush1.msra.mxu0 %v184
      %890 = vmatprep.subr.mxu0 0.0
      %891 = vmatpush1.msra.mxu0 %v183
      %892 = vmatprep.subr.mxu0 0.0
      %893 = vmatpush1.msra.mxu0 %v182
      %894 = vmatprep.subr.mxu0 0.0
      %895 = vmatpush1.msra.mxu0 %v181
      %896 = vmatprep.subr.mxu0 0.0
      %897 = vmatpush1.msra.mxu0 %v180
      %898 = vmatprep.subr.mxu0 0.0
      %899 = vmatpush1.msra.mxu0 %v179
      %900 = vmatprep.subr.mxu0 0.0
      %901 = vmatpush1.msra.mxu0 %v178
      %902 = vmatprep.subr.mxu0 0.0
      %903 = vmatpush1.msra.mxu0 %v177
      %904 = vmatprep.subr.mxu0 0.0
      %905 = vmatpush1.msra.mxu0 %v176
      %906 = vmatprep.subr.mxu0 0.0
      %907 = vmatpush1.msra.mxu0 %v175
      %908 = vmatprep.subr.mxu0 0.0
      %909 = vmatpush1.msra.mxu0 %v174
      %910 = vmatprep.subr.mxu0 0.0
      %911 = vmatpush1.msra.mxu0 %v173
      %912 = vmatprep.subr.mxu0 0.0
      %913 = vmatpush1.msra.mxu0 %v172
      %914 = vmatprep.subr.mxu0 0.0
      %915 = vmatpush1.msra.mxu0 %v171
      %916 = vmatprep.subr.mxu0 0.0
      %917 = vmatpush2.msra.mxu0 %v202
      %918 = vmatprep.subr.mxu0 0.0
      %919 = vmatpush2.msra.mxu0 %v201
      %920 = vmatprep.subr.mxu0 0.0
      %921 = vmatpush2.msra.mxu0 %v200
      %922 = vmatprep.subr.mxu0 0.0
      %923 = vmatpush2.msra.mxu0 %v199
      %924 = vmatprep.subr.mxu0 0.0
      %925 = vmatpush2.msra.mxu0 %v198
      %926 = vmatprep.subr.mxu0 0.0
      %927 = vmatpush2.msra.mxu0 %v197
      %928 = vmatprep.subr.mxu0 0.0
      %929 = vmatpush2.msra.mxu0 %v196
      %930 = vmatprep.subr.mxu0 0.0
      %931 = vmatpush2.msra.mxu0 %v195
      %932 = vmatprep.subr.mxu0 0.0
      %933 = vmatpush2.msra.mxu0 %v194
      %934 = vmatprep.subr.mxu0 0.0
      %935 = vmatpush2.msra.mxu0 %v193
      %936 = vmatprep.subr.mxu0 0.0
      %937 = vmatpush2.msra.mxu0 %v192
      %938 = vmatprep.subr.mxu0 0.0
      %939 = vmatpush2.msra.mxu0 %v191
      %940 = vmatprep.subr.mxu0 0.0
      %941 = vmatpush2.msra.mxu0 %v190
      %942 = vmatprep.subr.mxu0 0.0
      %943 = vmatpush2.msra.mxu0 %v189
      %944 = vmatprep.subr.mxu0 0.0
      %945 = vmatpush2.msra.mxu0 %v188
      %946 = vmatprep.subr.mxu0 0.0
      %947 = vmatpush2.msra.mxu0 %v187
      %948 = vmatprep.mubr.f32.mxu0 %v805
      %949 = vmatmul.mubr.f32.gmra.mxu0 %v804
      %v950 = vpop.f32.mrf.mxu0
      %v951 = vadd.f32 %v332, %v950
      %v952 = vpop.f32.mrf.mxu0
      %953 = vmatprep.mubr.f32.mxu0 %v812
      %954 = vmatmul.mubr.f32.gmra.mxu0 %v811
      %v955 = vpop.f32.mrf.mxu0
      %v956 = vadd.f32 %v332, %v955
      %v957 = vpop.f32.mrf.mxu0
      %958 = vmatprep.mubr.f32.mxu0 %v819
      %959 = vmatmul.mubr.f32.gmra.mxu0 %v818
      %v960 = vpop.f32.mrf.mxu0
      %v961 = vadd.f32 %v332, %v960
      %v962 = vpop.f32.mrf.mxu0
      %963 = vmatprep.mubr.f32.mxu0 %v826
      %964 = vmatmul.mubr.f32.gmra.mxu0 %v825
      %v965 = vpop.f32.mrf.mxu0
      %v966 = vadd.f32 %v332, %v965
      %v967 = vpop.f32.mrf.mxu0
      %968 = vmatprep.mubr.f32.mxu0 %v833
      %969 = vmatmul.mubr.f32.gmra.mxu0 %v832
      %v970 = vpop.f32.mrf.mxu0
      %v971 = vadd.f32 %v332, %v970
      %v972 = vpop.f32.mrf.mxu0
      %973 = vmatprep.mubr.f32.mxu0 %v840
      %974 = vmatmul.mubr.f32.gmra.mxu0 %v839
      %v975 = vpop.f32.mrf.mxu0
      %v976 = vadd.f32 %v332, %v975
      %v977 = vpop.f32.mrf.mxu0
      %978 = vmatprep.mubr.f32.mxu0 %v847
      %979 = vmatmul.mubr.f32.gmra.mxu0 %v846
      %v980 = vpop.f32.mrf.mxu0
      %v981 = vadd.f32 %v332, %v980
      %v982 = vpop.f32.mrf.mxu0
      %983 = vmatprep.mubr.f32.mxu0 %v854
      %984 = vmatmul.mubr.f32.gmra.mxu0 %v853
      %v985 = vpop.f32.mrf.mxu0
      %v986 = vadd.f32 %v332, %v985
      %v987 = vpop.f32.mrf.mxu0
      %988 = vdwg.mxu0
      %989 = vmatprep.subr.mxu0 0.0
      %990 = vmatpush1.msra.mxu0 %v218
      %991 = vmatprep.subr.mxu0 0.0
      %992 = vmatpush1.msra.mxu0 %v217
      %993 = vmatprep.subr.mxu0 0.0
      %994 = vmatpush1.msra.mxu0 %v216
      %995 = vmatprep.subr.mxu0 0.0
      %996 = vmatpush1.msra.mxu0 %v215
      %997 = vmatprep.subr.mxu0 0.0
      %998 = vmatpush1.msra.mxu0 %v214
      %999 = vmatprep.subr.mxu0 0.0
      %1000 = vmatpush1.msra.mxu0 %v213
      %1001 = vmatprep.subr.mxu0 0.0
      %1002 = vmatpush1.msra.mxu0 %v212
      %1003 = vmatprep.subr.mxu0 0.0
      %1004 = vmatpush1.msra.mxu0 %v211
      %1005 = vmatprep.subr.mxu0 0.0
      %1006 = vmatpush1.msra.mxu0 %v210
      %1007 = vmatprep.subr.mxu0 0.0
      %1008 = vmatpush1.msra.mxu0 %v209
      %1009 = vmatprep.subr.mxu0 0.0
      %1010 = vmatpush1.msra.mxu0 %v208
      %1011 = vmatprep.subr.mxu0 0.0
      %1012 = vmatpush1.msra.mxu0 %v207
      %1013 = vmatprep.subr.mxu0 0.0
      %1014 = vmatpush1.msra.mxu0 %v206
      %1015 = vmatprep.subr.mxu0 0.0
      %1016 = vmatpush1.msra.mxu0 %v205
      %1017 = vmatprep.subr.mxu0 0.0
      %1018 = vmatpush1.msra.mxu0 %v204
      %1019 = vmatprep.subr.mxu0 0.0
      %1020 = vmatpush1.msra.mxu0 %v203
      %1021 = vmatprep.subr.mxu0 0.0
      %1022 = vmatpush2.msra.mxu0 %v234
      %1023 = vmatprep.subr.mxu0 0.0
      %1024 = vmatpush2.msra.mxu0 %v233
      %1025 = vmatprep.subr.mxu0 0.0
      %1026 = vmatpush2.msra.mxu0 %v232
      %1027 = vmatprep.subr.mxu0 0.0
      %1028 = vmatpush2.msra.mxu0 %v231
      %1029 = vmatprep.subr.mxu0 0.0
      %1030 = vmatpush2.msra.mxu0 %v230
      %1031 = vmatprep.subr.mxu0 0.0
      %1032 = vmatpush2.msra.mxu0 %v229
      %1033 = vmatprep.subr.mxu0 0.0
      %1034 = vmatpush2.msra.mxu0 %v228
      %1035 = vmatprep.subr.mxu0 0.0
      %1036 = vmatpush2.msra.mxu0 %v227
      %1037 = vmatprep.subr.mxu0 0.0
      %1038 = vmatpush2.msra.mxu0 %v226
      %1039 = vmatprep.subr.mxu0 0.0
      %1040 = vmatpush2.msra.mxu0 %v225
      %1041 = vmatprep.subr.mxu0 0.0
      %1042 = vmatpush2.msra.mxu0 %v224
      %1043 = vmatprep.subr.mxu0 0.0
      %1044 = vmatpush2.msra.mxu0 %v223
      %1045 = vmatprep.subr.mxu0 0.0
      %1046 = vmatpush2.msra.mxu0 %v222
      %1047 = vmatprep.subr.mxu0 0.0
      %1048 = vmatpush2.msra.mxu0 %v221
      %1049 = vmatprep.subr.mxu0 0.0
      %1050 = vmatpush2.msra.mxu0 %v220
      %1051 = vmatprep.subr.mxu0 0.0
      %1052 = vmatpush2.msra.mxu0 %v219
      %1053 = vmatprep.mubr.f32.mxu0 %v807
      %1054 = vmatmul.mubr.f32.gmra.mxu0 %v806
      %v1055 = vpop.f32.mrf.mxu0
      %v1056 = vadd.f32 %v951, %v1055
      %v1057 = vpop.f32.mrf.mxu0
      %1058 = vmatprep.mubr.f32.mxu0 %v814
      %1059 = vmatmul.mubr.f32.gmra.mxu0 %v813
      %v1060 = vpop.f32.mrf.mxu0
      %v1061 = vadd.f32 %v956, %v1060
      %v1062 = vpop.f32.mrf.mxu0
      %1063 = vmatprep.mubr.f32.mxu0 %v821
      %1064 = vmatmul.mubr.f32.gmra.mxu0 %v820
      %v1065 = vpop.f32.mrf.mxu0
      %v1066 = vadd.f32 %v961, %v1065
      %v1067 = vpop.f32.mrf.mxu0
      %1068 = vmatprep.mubr.f32.mxu0 %v828
      %1069 = vmatmul.mubr.f32.gmra.mxu0 %v827
      %v1070 = vpop.f32.mrf.mxu0
      %v1071 = vadd.f32 %v966, %v1070
      %v1072 = vpop.f32.mrf.mxu0
      %1073 = vmatprep.mubr.f32.mxu0 %v835
      %1074 = vmatmul.mubr.f32.gmra.mxu0 %v834
      %v1075 = vpop.f32.mrf.mxu0
      %v1076 = vadd.f32 %v971, %v1075
      %v1077 = vpop.f32.mrf.mxu0
      %1078 = vmatprep.mubr.f32.mxu0 %v842
      %1079 = vmatmul.mubr.f32.gmra.mxu0 %v841
      %v1080 = vpop.f32.mrf.mxu0
      %v1081 = vadd.f32 %v976, %v1080
      %v1082 = vpop.f32.mrf.mxu0
      %1083 = vmatprep.mubr.f32.mxu0 %v849
      %1084 = vmatmul.mubr.f32.gmra.mxu0 %v848
      %v1085 = vpop.f32.mrf.mxu0
      %v1086 = vadd.f32 %v981, %v1085
      %v1087 = vpop.f32.mrf.mxu0
      %1088 = vmatprep.mubr.f32.mxu0 %v856
      %1089 = vmatmul.mubr.f32.gmra.mxu0 %v855
      %v1090 = vpop.f32.mrf.mxu0
      %v1091 = vadd.f32 %v986, %v1090
      %v1092 = vpop.f32.mrf.mxu0
      %1093 = vdwg.mxu0
      %1094 = vmatprep.subr.mxu0 0.0
      %1095 = vmatpush1.msra.mxu0 %v250
      %1096 = vmatprep.subr.mxu0 0.0
      %1097 = vmatpush1.msra.mxu0 %v249
      %1098 = vmatprep.subr.mxu0 0.0
      %1099 = vmatpush1.msra.mxu0 %v248
      %1100 = vmatprep.subr.mxu0 0.0
      %1101 = vmatpush1.msra.mxu0 %v247
      %1102 = vmatprep.subr.mxu0 0.0
      %1103 = vmatpush1.msra.mxu0 %v246
      %1104 = vmatprep.subr.mxu0 0.0
      %1105 = vmatpush1.msra.mxu0 %v245
      %1106 = vmatprep.subr.mxu0 0.0
      %1107 = vmatpush1.msra.mxu0 %v244
      %1108 = vmatprep.subr.mxu0 0.0
      %1109 = vmatpush1.msra.mxu0 %v243
      %1110 = vmatprep.subr.mxu0 0.0
      %1111 = vmatpush1.msra.mxu0 %v242
      %1112 = vmatprep.subr.mxu0 0.0
      %1113 = vmatpush1.msra.mxu0 %v241
      %1114 = vmatprep.subr.mxu0 0.0
      %1115 = vmatpush1.msra.mxu0 %v240
      %1116 = vmatprep.subr.mxu0 0.0
      %1117 = vmatpush1.msra.mxu0 %v239
      %1118 = vmatprep.subr.mxu0 0.0
      %1119 = vmatpush1.msra.mxu0 %v238
      %1120 = vmatprep.subr.mxu0 0.0
      %1121 = vmatpush1.msra.mxu0 %v237
      %1122 = vmatprep.subr.mxu0 0.0
      %1123 = vmatpush1.msra.mxu0 %v236
      %1124 = vmatprep.subr.mxu0 0.0
      %1125 = vmatpush1.msra.mxu0 %v235
      %1126 = vmatprep.subr.mxu0 0.0
      %1127 = vmatpush2.msra.mxu0 %v266
      %1128 = vmatprep.subr.mxu0 0.0
      %1129 = vmatpush2.msra.mxu0 %v265
      %1130 = vmatprep.subr.mxu0 0.0
      %1131 = vmatpush2.msra.mxu0 %v264
      %1132 = vmatprep.subr.mxu0 0.0
      %1133 = vmatpush2.msra.mxu0 %v263
      %1134 = vmatprep.subr.mxu0 0.0
      %1135 = vmatpush2.msra.mxu0 %v262
      %1136 = vmatprep.subr.mxu0 0.0
      %1137 = vmatpush2.msra.mxu0 %v261
      %1138 = vmatprep.subr.mxu0 0.0
      %1139 = vmatpush2.msra.mxu0 %v260
      %1140 = vmatprep.subr.mxu0 0.0
      %1141 = vmatpush2.msra.mxu0 %v259
      %1142 = vmatprep.subr.mxu0 0.0
      %1143 = vmatpush2.msra.mxu0 %v258
      %1144 = vmatprep.subr.mxu0 0.0
      %1145 = vmatpush2.msra.mxu0 %v257
      %1146 = vmatprep.subr.mxu0 0.0
      %1147 = vmatpush2.msra.mxu0 %v256
      %1148 = vmatprep.subr.mxu0 0.0
      %1149 = vmatpush2.msra.mxu0 %v255
      %1150 = vmatprep.subr.mxu0 0.0
      %1151 = vmatpush2.msra.mxu0 %v254
      %1152 = vmatprep.subr.mxu0 0.0
      %1153 = vmatpush2.msra.mxu0 %v253
      %1154 = vmatprep.subr.mxu0 0.0
      %1155 = vmatpush2.msra.mxu0 %v252
      %1156 = vmatprep.subr.mxu0 0.0
      %1157 = vmatpush2.msra.mxu0 %v251
      %1158 = vmatprep.mubr.f32.mxu0 %v809
      %1159 = vmatmul.mubr.f32.gmra.mxu0 %v808
      %v1160 = vpop.f32.mrf.mxu0
      %v1161 = vadd.f32 %v1056, %v1160
      %v1162 = vpop.f32.mrf.mxu0
      %1163 = vmatprep.mubr.f32.mxu0 %v816
      %1164 = vmatmul.mubr.f32.gmra.mxu0 %v815
      %v1165 = vpop.f32.mrf.mxu0
      %v1166 = vadd.f32 %v1061, %v1165
      %v1167 = vpop.f32.mrf.mxu0
      %1168 = vmatprep.mubr.f32.mxu0 %v823
      %1169 = vmatmul.mubr.f32.gmra.mxu0 %v822
      %v1170 = vpop.f32.mrf.mxu0
      %v1171 = vadd.f32 %v1066, %v1170
      %v1172 = vpop.f32.mrf.mxu0
      %1173 = vmatprep.mubr.f32.mxu0 %v830
      %1174 = vmatmul.mubr.f32.gmra.mxu0 %v829
      %v1175 = vpop.f32.mrf.mxu0
      %v1176 = vadd.f32 %v1071, %v1175
      %v1177 = vpop.f32.mrf.mxu0
      %1178 = vmatprep.mubr.f32.mxu0 %v837
      %1179 = vmatmul.mubr.f32.gmra.mxu0 %v836
      %v1180 = vpop.f32.mrf.mxu0
      %v1181 = vadd.f32 %v1076, %v1180
      %v1182 = vpop.f32.mrf.mxu0
      %1183 = vmatprep.mubr.f32.mxu0 %v844
      %1184 = vmatmul.mubr.f32.gmra.mxu0 %v843
      %v1185 = vpop.f32.mrf.mxu0
      %v1186 = vadd.f32 %v1081, %v1185
      %v1187 = vpop.f32.mrf.mxu0
      %1188 = vmatprep.mubr.f32.mxu0 %v851
      %1189 = vmatmul.mubr.f32.gmra.mxu0 %v850
      %v1190 = vpop.f32.mrf.mxu0
      %v1191 = vadd.f32 %v1086, %v1190
      %v1192 = vpop.f32.mrf.mxu0
      %1193 = vmatprep.mubr.f32.mxu0 %v858
      %1194 = vmatmul.mubr.f32.gmra.mxu0 %v857
      %v1195 = vpop.f32.mrf.mxu0
      %v1196 = vadd.f32 %v1091, %v1195
      %v1197 = vpop.f32.mrf.mxu0
      %1198 = vdwg.mxu0
      %1199 = vmatprep.subr.mxu0 0.0
      %1200 = vmatpush1.msra.mxu0 0.0
      %1201 = vmatprep.subr.mxu0 0.0
      %1202 = vmatpush1.msra.mxu0 0.0
      %1203 = vmatprep.subr.mxu0 0.0
      %1204 = vmatpush1.msra.mxu0 0.0
      %1205 = vmatprep.subr.mxu0 0.0
      %1206 = vmatpush1.msra.mxu0 0.0
      %1207 = vmatprep.subr.mxu0 0.0
      %1208 = vmatpush1.msra.mxu0 0.0
      %1209 = vmatprep.subr.mxu0 0.0
      %1210 = vmatpush1.msra.mxu0 0.0
      %1211 = vmatprep.subr.mxu0 0.0
      %1212 = vmatpush1.msra.mxu0 0.0
      %1213 = vmatprep.subr.mxu0 0.0
      %1214 = vmatpush1.msra.mxu0 0.0
      %1215 = vmatprep.subr.mxu0 0.0
      %1216 = vmatpush1.msra.mxu0 0.0
      %1217 = vmatprep.subr.mxu0 0.0
      %1218 = vmatpush1.msra.mxu0 0.0
      %1219 = vmatprep.subr.mxu0 0.0
      %1220 = vmatpush1.msra.mxu0 0.0
      %1221 = vmatprep.subr.mxu0 0.0
      %1222 = vmatpush1.msra.mxu0 0.0
      %1223 = vmatprep.subr.mxu0 0.0
      %1224 = vmatpush1.msra.mxu0 %v270
      %1225 = vmatprep.subr.mxu0 0.0
      %1226 = vmatpush1.msra.mxu0 %v269
      %1227 = vmatprep.subr.mxu0 0.0
      %1228 = vmatpush1.msra.mxu0 %v268
      %1229 = vmatprep.subr.mxu0 0.0
      %1230 = vmatpush1.msra.mxu0 %v267
      %1231 = vmatprep.subr.mxu0 0.0
      %1232 = vmatpush2.msra.mxu0 0.0
      %1233 = vmatprep.subr.mxu0 0.0
      %1234 = vmatpush2.msra.mxu0 0.0
      %1235 = vmatprep.subr.mxu0 0.0
      %1236 = vmatpush2.msra.mxu0 0.0
      %1237 = vmatprep.subr.mxu0 0.0
      %1238 = vmatpush2.msra.mxu0 0.0
      %1239 = vmatprep.subr.mxu0 0.0
      %1240 = vmatpush2.msra.mxu0 0.0
      %1241 = vmatprep.subr.mxu0 0.0
      %1242 = vmatpush2.msra.mxu0 0.0
      %1243 = vmatprep.subr.mxu0 0.0
      %1244 = vmatpush2.msra.mxu0 0.0
      %1245 = vmatprep.subr.mxu0 0.0
      %1246 = vmatpush2.msra.mxu0 0.0
      %1247 = vmatprep.subr.mxu0 0.0
      %1248 = vmatpush2.msra.mxu0 0.0
      %1249 = vmatprep.subr.mxu0 0.0
      %1250 = vmatpush2.msra.mxu0 0.0
      %1251 = vmatprep.subr.mxu0 0.0
      %1252 = vmatpush2.msra.mxu0 0.0
      %1253 = vmatprep.subr.mxu0 0.0
      %1254 = vmatpush2.msra.mxu0 0.0
      %1255 = vmatprep.subr.mxu0 0.0
      %1256 = vmatpush2.msra.mxu0 0.0
      %1257 = vmatprep.subr.mxu0 0.0
      %1258 = vmatpush2.msra.mxu0 0.0
      %1259 = vmatprep.subr.mxu0 0.0
      %1260 = vmatpush2.msra.mxu0 0.0
      %1261 = vmatprep.subr.mxu0 0.0
      %1262 = vmatpush2.msra.mxu0 0.0
      %1263 = vmatprep.mubr.f32.mxu0 0.0
      %1264 = vmatmul.mubr.f32.gmra.mxu0 %v861
      %v1265 = vpop.f32.mrf.mxu0
      %v1266 = vadd.f32 %v1161, %v1265
      %v1267 = vpop.f32.mrf.mxu0
      %1268 = vmatprep.mubr.f32.mxu0 0.0
      %1269 = vmatmul.mubr.f32.gmra.mxu0 %v864
      %v1270 = vpop.f32.mrf.mxu0
      %v1271 = vadd.f32 %v1166, %v1270
      %v1272 = vpop.f32.mrf.mxu0
      %1273 = vmatprep.mubr.f32.mxu0 0.0
      %1274 = vmatmul.mubr.f32.gmra.mxu0 %v867
      %v1275 = vpop.f32.mrf.mxu0
      %v1276 = vadd.f32 %v1171, %v1275
      %v1277 = vpop.f32.mrf.mxu0
      %1278 = vmatprep.mubr.f32.mxu0 0.0
      %1279 = vmatmul.mubr.f32.gmra.mxu0 %v870
      %v1280 = vpop.f32.mrf.mxu0
      %v1281 = vadd.f32 %v1176, %v1280
      %v1282 = vpop.f32.mrf.mxu0
      %1283 = vmatprep.mubr.f32.mxu0 0.0
      %1284 = vmatmul.mubr.f32.gmra.mxu0 %v873
      %v1285 = vpop.f32.mrf.mxu0
      %v1286 = vadd.f32 %v1181, %v1285
      %v1287 = vpop.f32.mrf.mxu0
      %1288 = vmatprep.mubr.f32.mxu0 0.0
      %1289 = vmatmul.mubr.f32.gmra.mxu0 %v876
      %v1290 = vpop.f32.mrf.mxu0
      %v1291 = vadd.f32 %v1186, %v1290
      %v1292 = vpop.f32.mrf.mxu0
      %1293 = vmatprep.mubr.f32.mxu0 0.0
      %1294 = vmatmul.mubr.f32.gmra.mxu0 %v879
      %v1295 = vpop.f32.mrf.mxu0
      %v1296 = vadd.f32 %v1191, %v1295
      %v1297 = vpop.f32.mrf.mxu0
      %1298 = vmatprep.mubr.f32.mxu0 0.0
      %1299 = vmatmul.mubr.f32.gmra.mxu0 %v882
      %v1300 = vpop.f32.mrf.mxu0
      %v1301 = vadd.f32 %v1196, %v1300
      %v1302 = vpop.f32.mrf.mxu0
      %1303 = vdwg.mxu0
      %vm1304 = vcmp.gt.f32.partialorder %v1266, 0.0
      %vm1305 = vcmp.gt.f32.partialorder %v1271, 0.0
      %vm1306 = vcmp.gt.f32.partialorder %v1276, 0.0
      %vm1307 = vcmp.gt.f32.partialorder %v1281, 0.0
      %vm1308 = vcmp.gt.f32.partialorder %v1286, 0.0
      %vm1309 = vcmp.gt.f32.partialorder %v1291, 0.0
      %vm1310 = vcmp.gt.f32.partialorder %v1296, 0.0
      %vm1311 = vcmp.gt.f32.partialorder %v1301, 0.0
      %v1312 = vmul.f32 %v1266, 0.2
      %v1313 = vmul.f32 %v1271, 0.2
      %v1314 = vmul.f32 %v1276, 0.2
      %v1315 = vmul.f32 %v1281, 0.2
      %v1316 = vmul.f32 %v1286, 0.2
      %v1317 = vmul.f32 %v1291, 0.2
      %v1318 = vmul.f32 %v1296, 0.2
      %v1319 = vmul.f32 %v1301, 0.2
      %v1320 = vsel %vm1304, %v1266, %v1312
      %v1321 = vsel %vm1305, %v1271, %v1313
      %v1322 = vsel %vm1306, %v1276, %v1314
      %v1323 = vsel %vm1307, %v1281, %v1315
      %v1324 = vsel %vm1308, %v1286, %v1316
      %v1325 = vsel %vm1309, %v1291, %v1317
      %v1326 = vsel %vm1310, %v1296, %v1318
      %v1327 = vsel %vm1311, %v1301, %v1319
      %v1328 = vadd.f32 %v795, %v1320
      %v1329 = vadd.f32 %v796, %v1321
      %v1330 = vadd.f32 %v797, %v1322
      %v1331 = vadd.f32 %v798, %v1323
      %v1332 = vadd.f32 %v799, %v1324
      %v1333 = vadd.f32 %v800, %v1325
      %v1334 = vadd.f32 %v801, %v1326
      %v1335 = vadd.f32 %v802, %v1327
      %s1336 = scalar_lea.vmem %s165, 896
      %v1337 = vld [vmem:[%s1336] sm:$0xff]
      %v1338 = vld [vmem:[%s1336 + $0x8] sm:$0xff]
      %v1339 = vld [vmem:[%s1336 + $0x10] sm:$0xff]
      %v1340 = vld [vmem:[%s1336 + $0x18] sm:$0xff]
      %v1341 = vld [vmem:[%s1336 + $0x20] sm:$0xff]
      %v1342 = vld [vmem:[%s1336 + $0x28] sm:$0xff]
      %v1343 = vld [vmem:[%s1336 + $0x30] sm:$0xff]
      %v1344 = vld [vmem:[%s1336 + $0x38] sm:$0xff]
      %v1345 = vld [vmem:[%s1336 + $0x40] sm:$0xff]
      %v1346 = vld [vmem:[%s1336 + $0x48] sm:$0xff]
      %v1347 = vld [vmem:[%s1336 + $0x50] sm:$0xff]
      %v1348 = vld [vmem:[%s1336 + $0x58] sm:$0xff]
      %v1349 = vld [vmem:[%s1336 + $0x60] sm:$0xff]
      %v1350 = vld [vmem:[%s1336 + $0x68] sm:$0xff]
      %v1351 = vld [vmem:[%s1336 + $0x70] sm:$0xff]
      %v1352 = vld [vmem:[%s1336 + $0x78] sm:$0xff]
      %v1353 = vld [vmem:[%s1336 + $0x80] sm:$0xff]
      %v1354 = vld [vmem:[%s1336 + $0x88] sm:$0xff]
      %v1355 = vld [vmem:[%s1336 + $0x90] sm:$0xff]
      %v1356 = vld [vmem:[%s1336 + $0x98] sm:$0xff]
      %v1357 = vld [vmem:[%s1336 + $0xa0] sm:$0xff]
      %v1358 = vld [vmem:[%s1336 + $0xa8] sm:$0xff]
      %v1359 = vld [vmem:[%s1336 + $0xb0] sm:$0xff]
      %v1360 = vld [vmem:[%s1336 + $0xb8] sm:$0xff]
      %v1361 = vld [vmem:[%s1336 + $0xc0] sm:$0xff]
      %v1362 = vld [vmem:[%s1336 + $0xc8] sm:$0xff]
      %v1363 = vld [vmem:[%s1336 + $0xd0] sm:$0xff]
      %v1364 = vld [vmem:[%s1336 + $0xd8] sm:$0xff]
      %v1365 = vld [vmem:[%s1336 + $0xe0] sm:$0xff]
      %v1366 = vld [vmem:[%s1336 + $0xe8] sm:$0xff]
      %v1367 = vld [vmem:[%s1336 + $0xf0] sm:$0xff]
      %v1368 = vld [vmem:[%s1336 + $0xf8] sm:$0xff]
      %v1369 = vld [vmem:[%s1336 + $0x100] sm:$0xff]
      %v1370 = vld [vmem:[%s1336 + $0x108] sm:$0xff]
      %v1371 = vld [vmem:[%s1336 + $0x110] sm:$0xff]
      %v1372 = vld [vmem:[%s1336 + $0x118] sm:$0xff]
      %v1373 = vld [vmem:[%s1336 + $0x120] sm:$0xff]
      %v1374 = vld [vmem:[%s1336 + $0x128] sm:$0xff]
      %v1375 = vld [vmem:[%s1336 + $0x130] sm:$0xff]
      %v1376 = vld [vmem:[%s1336 + $0x138] sm:$0xff]
      %v1377 = vld [vmem:[%s1336 + $0x140] sm:$0xff]
      %v1378 = vld [vmem:[%s1336 + $0x148] sm:$0xff]
      %v1379 = vld [vmem:[%s1336 + $0x150] sm:$0xff]
      %v1380 = vld [vmem:[%s1336 + $0x158] sm:$0xff]
      %v1381 = vld [vmem:[%s1336 + $0x160] sm:$0xff]
      %v1382 = vld [vmem:[%s1336 + $0x168] sm:$0xff]
      %v1383 = vld [vmem:[%s1336 + $0x170] sm:$0xff]
      %v1384 = vld [vmem:[%s1336 + $0x178] sm:$0xff]
      %v1385 = vld [vmem:[%s1336 + $0x180] sm:$0xff]
      %v1386 = vld [vmem:[%s1336 + $0x188] sm:$0xff]
      %v1387 = vld [vmem:[%s1336 + $0x190] sm:$0xff]
      %v1388 = vld [vmem:[%s1336 + $0x198] sm:$0xff]
      %v1389 = vld [vmem:[%s1336 + $0x1a0] sm:$0xff]
      %v1390 = vld [vmem:[%s1336 + $0x1a8] sm:$0xff]
      %v1391 = vld [vmem:[%s1336 + $0x1b0] sm:$0xff]
      %v1392 = vld [vmem:[%s1336 + $0x1b8] sm:$0xff]
      %v1394 = vsel %vm334, %v1343, 0
      %v1397 = vsel %vm334, %v1350, 0
      %v1400 = vsel %vm334, %v1357, 0
      %v1403 = vsel %vm334, %v1364, 0
      %v1406 = vsel %vm334, %v1371, 0
      %v1409 = vsel %vm334, %v1378, 0
      %v1412 = vsel %vm334, %v1385, 0
      %v1415 = vsel %vm334, %v1392, 0
      %1417 = vmatprep.subr.mxu0 0.0
      %1418 = vmatpush1.msra.mxu0 %v186
      %1419 = vmatprep.subr.mxu0 0.0
      %1420 = vmatpush1.msra.mxu0 %v185
      %1421 = vmatprep.subr.mxu0 0.0
      %1422 = vmatpush1.msra.mxu0 %v184
      %1423 = vmatprep.subr.mxu0 0.0
      %1424 = vmatpush1.msra.mxu0 %v183
      %1425 = vmatprep.subr.mxu0 0.0
      %1426 = vmatpush1.msra.mxu0 %v182
      %1427 = vmatprep.subr.mxu0 0.0
      %1428 = vmatpush1.msra.mxu0 %v181
      %1429 = vmatprep.subr.mxu0 0.0
      %1430 = vmatpush1.msra.mxu0 %v180
      %1431 = vmatprep.subr.mxu0 0.0
      %1432 = vmatpush1.msra.mxu0 %v179
      %1433 = vmatprep.subr.mxu0 0.0
      %1434 = vmatpush1.msra.mxu0 %v178
      %1435 = vmatprep.subr.mxu0 0.0
      %1436 = vmatpush1.msra.mxu0 %v177
      %1437 = vmatprep.subr.mxu0 0.0
      %1438 = vmatpush1.msra.mxu0 %v176
      %1439 = vmatprep.subr.mxu0 0.0
      %1440 = vmatpush1.msra.mxu0 %v175
      %1441 = vmatprep.subr.mxu0 0.0
      %1442 = vmatpush1.msra.mxu0 %v174
      %1443 = vmatprep.subr.mxu0 0.0
      %1444 = vmatpush1.msra.mxu0 %v173
      %1445 = vmatprep.subr.mxu0 0.0
      %1446 = vmatpush1.msra.mxu0 %v172
      %1447 = vmatprep.subr.mxu0 0.0
      %1448 = vmatpush1.msra.mxu0 %v171
      %1449 = vmatprep.subr.mxu0 0.0
      %1450 = vmatpush2.msra.mxu0 %v202
      %1451 = vmatprep.subr.mxu0 0.0
      %1452 = vmatpush2.msra.mxu0 %v201
      %1453 = vmatprep.subr.mxu0 0.0
      %1454 = vmatpush2.msra.mxu0 %v200
      %1455 = vmatprep.subr.mxu0 0.0
      %1456 = vmatpush2.msra.mxu0 %v199
      %1457 = vmatprep.subr.mxu0 0.0
      %1458 = vmatpush2.msra.mxu0 %v198
      %1459 = vmatprep.subr.mxu0 0.0
      %1460 = vmatpush2.msra.mxu0 %v197
      %1461 = vmatprep.subr.mxu0 0.0
      %1462 = vmatpush2.msra.mxu0 %v196
      %1463 = vmatprep.subr.mxu0 0.0
      %1464 = vmatpush2.msra.mxu0 %v195
      %1465 = vmatprep.subr.mxu0 0.0
      %1466 = vmatpush2.msra.mxu0 %v194
      %1467 = vmatprep.subr.mxu0 0.0
      %1468 = vmatpush2.msra.mxu0 %v193
      %1469 = vmatprep.subr.mxu0 0.0
      %1470 = vmatpush2.msra.mxu0 %v192
      %1471 = vmatprep.subr.mxu0 0.0
      %1472 = vmatpush2.msra.mxu0 %v191
      %1473 = vmatprep.subr.mxu0 0.0
      %1474 = vmatpush2.msra.mxu0 %v190
      %1475 = vmatprep.subr.mxu0 0.0
      %1476 = vmatpush2.msra.mxu0 %v189
      %1477 = vmatprep.subr.mxu0 0.0
      %1478 = vmatpush2.msra.mxu0 %v188
      %1479 = vmatprep.subr.mxu0 0.0
      %1480 = vmatpush2.msra.mxu0 %v187
      %1481 = vmatprep.mubr.f32.mxu0 %v1338
      %1482 = vmatmul.mubr.f32.gmra.mxu0 %v1337
      %v1483 = vpop.f32.mrf.mxu0
      %v1484 = vadd.f32 %v332, %v1483
      %v1485 = vpop.f32.mrf.mxu0
      %1486 = vmatprep.mubr.f32.mxu0 %v1345
      %1487 = vmatmul.mubr.f32.gmra.mxu0 %v1344
      %v1488 = vpop.f32.mrf.mxu0
      %v1489 = vadd.f32 %v332, %v1488
      %v1490 = vpop.f32.mrf.mxu0
      %1491 = vmatprep.mubr.f32.mxu0 %v1352
      %1492 = vmatmul.mubr.f32.gmra.mxu0 %v1351
      %v1493 = vpop.f32.mrf.mxu0
      %v1494 = vadd.f32 %v332, %v1493
      %v1495 = vpop.f32.mrf.mxu0
      %1496 = vmatprep.mubr.f32.mxu0 %v1359
      %1497 = vmatmul.mubr.f32.gmra.mxu0 %v1358
      %v1498 = vpop.f32.mrf.mxu0
      %v1499 = vadd.f32 %v332, %v1498
      %v1500 = vpop.f32.mrf.mxu0
      %1501 = vmatprep.mubr.f32.mxu0 %v1366
      %1502 = vmatmul.mubr.f32.gmra.mxu0 %v1365
      %v1503 = vpop.f32.mrf.mxu0
      %v1504 = vadd.f32 %v332, %v1503
      %v1505 = vpop.f32.mrf.mxu0
      %1506 = vmatprep.mubr.f32.mxu0 %v1373
      %1507 = vmatmul.mubr.f32.gmra.mxu0 %v1372
      %v1508 = vpop.f32.mrf.mxu0
      %v1509 = vadd.f32 %v332, %v1508
      %v1510 = vpop.f32.mrf.mxu0
      %1511 = vmatprep.mubr.f32.mxu0 %v1380
      %1512 = vmatmul.mubr.f32.gmra.mxu0 %v1379
      %v1513 = vpop.f32.mrf.mxu0
      %v1514 = vadd.f32 %v332, %v1513
      %v1515 = vpop.f32.mrf.mxu0
      %1516 = vmatprep.mubr.f32.mxu0 %v1387
      %1517 = vmatmul.mubr.f32.gmra.mxu0 %v1386
      %v1518 = vpop.f32.mrf.mxu0
      %v1519 = vadd.f32 %v332, %v1518
      %v1520 = vpop.f32.mrf.mxu0
      %1521 = vdwg.mxu0
      %1522 = vmatprep.subr.mxu0 0.0
      %1523 = vmatpush1.msra.mxu0 %v218
      %1524 = vmatprep.subr.mxu0 0.0
      %1525 = vmatpush1.msra.mxu0 %v217
      %1526 = vmatprep.subr.mxu0 0.0
      %1527 = vmatpush1.msra.mxu0 %v216
      %1528 = vmatprep.subr.mxu0 0.0
      %1529 = vmatpush1.msra.mxu0 %v215
      %1530 = vmatprep.subr.mxu0 0.0
      %1531 = vmatpush1.msra.mxu0 %v214
      %1532 = vmatprep.subr.mxu0 0.0
      %1533 = vmatpush1.msra.mxu0 %v213
      %1534 = vmatprep.subr.mxu0 0.0
      %1535 = vmatpush1.msra.mxu0 %v212
      %1536 = vmatprep.subr.mxu0 0.0
      %1537 = vmatpush1.msra.mxu0 %v211
      %1538 = vmatprep.subr.mxu0 0.0
      %1539 = vmatpush1.msra.mxu0 %v210
      %1540 = vmatprep.subr.mxu0 0.0
      %1541 = vmatpush1.msra.mxu0 %v209
      %1542 = vmatprep.subr.mxu0 0.0
      %1543 = vmatpush1.msra.mxu0 %v208
      %1544 = vmatprep.subr.mxu0 0.0
      %1545 = vmatpush1.msra.mxu0 %v207
      %1546 = vmatprep.subr.mxu0 0.0
      %1547 = vmatpush1.msra.mxu0 %v206
      %1548 = vmatprep.subr.mxu0 0.0
      %1549 = vmatpush1.msra.mxu0 %v205
      %1550 = vmatprep.subr.mxu0 0.0
      %1551 = vmatpush1.msra.mxu0 %v204
      %1552 = vmatprep.subr.mxu0 0.0
      %1553 = vmatpush1.msra.mxu0 %v203
      %1554 = vmatprep.subr.mxu0 0.0
      %1555 = vmatpush2.msra.mxu0 %v234
      %1556 = vmatprep.subr.mxu0 0.0
      %1557 = vmatpush2.msra.mxu0 %v233
      %1558 = vmatprep.subr.mxu0 0.0
      %1559 = vmatpush2.msra.mxu0 %v232
      %1560 = vmatprep.subr.mxu0 0.0
      %1561 = vmatpush2.msra.mxu0 %v231
      %1562 = vmatprep.subr.mxu0 0.0
      %1563 = vmatpush2.msra.mxu0 %v230
      %1564 = vmatprep.subr.mxu0 0.0
      %1565 = vmatpush2.msra.mxu0 %v229
      %1566 = vmatprep.subr.mxu0 0.0
      %1567 = vmatpush2.msra.mxu0 %v228
      %1568 = vmatprep.subr.mxu0 0.0
      %1569 = vmatpush2.msra.mxu0 %v227
      %1570 = vmatprep.subr.mxu0 0.0
      %1571 = vmatpush2.msra.mxu0 %v226
      %1572 = vmatprep.subr.mxu0 0.0
      %1573 = vmatpush2.msra.mxu0 %v225
      %1574 = vmatprep.subr.mxu0 0.0
      %1575 = vmatpush2.msra.mxu0 %v224
      %1576 = vmatprep.subr.mxu0 0.0
      %1577 = vmatpush2.msra.mxu0 %v223
      %1578 = vmatprep.subr.mxu0 0.0
      %1579 = vmatpush2.msra.mxu0 %v222
      %1580 = vmatprep.subr.mxu0 0.0
      %1581 = vmatpush2.msra.mxu0 %v221
      %1582 = vmatprep.subr.mxu0 0.0
      %1583 = vmatpush2.msra.mxu0 %v220
      %1584 = vmatprep.subr.mxu0 0.0
      %1585 = vmatpush2.msra.mxu0 %v219
      %1586 = vmatprep.mubr.f32.mxu0 %v1340
      %1587 = vmatmul.mubr.f32.gmra.mxu0 %v1339
      %v1588 = vpop.f32.mrf.mxu0
      %v1589 = vadd.f32 %v1484, %v1588
      %v1590 = vpop.f32.mrf.mxu0
      %1591 = vmatprep.mubr.f32.mxu0 %v1347
      %1592 = vmatmul.mubr.f32.gmra.mxu0 %v1346
      %v1593 = vpop.f32.mrf.mxu0
      %v1594 = vadd.f32 %v1489, %v1593
      %v1595 = vpop.f32.mrf.mxu0
      %1596 = vmatprep.mubr.f32.mxu0 %v1354
      %1597 = vmatmul.mubr.f32.gmra.mxu0 %v1353
      %v1598 = vpop.f32.mrf.mxu0
      %v1599 = vadd.f32 %v1494, %v1598
      %v1600 = vpop.f32.mrf.mxu0
      %1601 = vmatprep.mubr.f32.mxu0 %v1361
      %1602 = vmatmul.mubr.f32.gmra.mxu0 %v1360
      %v1603 = vpop.f32.mrf.mxu0
      %v1604 = vadd.f32 %v1499, %v1603
      %v1605 = vpop.f32.mrf.mxu0
      %1606 = vmatprep.mubr.f32.mxu0 %v1368
      %1607 = vmatmul.mubr.f32.gmra.mxu0 %v1367
      %v1608 = vpop.f32.mrf.mxu0
      %v1609 = vadd.f32 %v1504, %v1608
      %v1610 = vpop.f32.mrf.mxu0
      %1611 = vmatprep.mubr.f32.mxu0 %v1375
      %1612 = vmatmul.mubr.f32.gmra.mxu0 %v1374
      %v1613 = vpop.f32.mrf.mxu0
      %v1614 = vadd.f32 %v1509, %v1613
      %v1615 = vpop.f32.mrf.mxu0
      %1616 = vmatprep.mubr.f32.mxu0 %v1382
      %1617 = vmatmul.mubr.f32.gmra.mxu0 %v1381
      %v1618 = vpop.f32.mrf.mxu0
      %v1619 = vadd.f32 %v1514, %v1618
      %v1620 = vpop.f32.mrf.mxu0
      %1621 = vmatprep.mubr.f32.mxu0 %v1389
      %1622 = vmatmul.mubr.f32.gmra.mxu0 %v1388
      %v1623 = vpop.f32.mrf.mxu0
      %v1624 = vadd.f32 %v1519, %v1623
      %v1625 = vpop.f32.mrf.mxu0
      %1626 = vdwg.mxu0
      %1627 = vmatprep.subr.mxu0 0.0
      %1628 = vmatpush1.msra.mxu0 %v250
      %1629 = vmatprep.subr.mxu0 0.0
      %1630 = vmatpush1.msra.mxu0 %v249
      %1631 = vmatprep.subr.mxu0 0.0
      %1632 = vmatpush1.msra.mxu0 %v248
      %1633 = vmatprep.subr.mxu0 0.0
      %1634 = vmatpush1.msra.mxu0 %v247
      %1635 = vmatprep.subr.mxu0 0.0
      %1636 = vmatpush1.msra.mxu0 %v246
      %1637 = vmatprep.subr.mxu0 0.0
      %1638 = vmatpush1.msra.mxu0 %v245
      %1639 = vmatprep.subr.mxu0 0.0
      %1640 = vmatpush1.msra.mxu0 %v244
      %1641 = vmatprep.subr.mxu0 0.0
      %1642 = vmatpush1.msra.mxu0 %v243
      %1643 = vmatprep.subr.mxu0 0.0
      %1644 = vmatpush1.msra.mxu0 %v242
      %1645 = vmatprep.subr.mxu0 0.0
      %1646 = vmatpush1.msra.mxu0 %v241
      %1647 = vmatprep.subr.mxu0 0.0
      %1648 = vmatpush1.msra.mxu0 %v240
      %1649 = vmatprep.subr.mxu0 0.0
      %1650 = vmatpush1.msra.mxu0 %v239
      %1651 = vmatprep.subr.mxu0 0.0
      %1652 = vmatpush1.msra.mxu0 %v238
      %1653 = vmatprep.subr.mxu0 0.0
      %1654 = vmatpush1.msra.mxu0 %v237
      %1655 = vmatprep.subr.mxu0 0.0
      %1656 = vmatpush1.msra.mxu0 %v236
      %1657 = vmatprep.subr.mxu0 0.0
      %1658 = vmatpush1.msra.mxu0 %v235
      %1659 = vmatprep.subr.mxu0 0.0
      %1660 = vmatpush2.msra.mxu0 %v266
      %1661 = vmatprep.subr.mxu0 0.0
      %1662 = vmatpush2.msra.mxu0 %v265
      %1663 = vmatprep.subr.mxu0 0.0
      %1664 = vmatpush2.msra.mxu0 %v264
      %1665 = vmatprep.subr.mxu0 0.0
      %1666 = vmatpush2.msra.mxu0 %v263
      %1667 = vmatprep.subr.mxu0 0.0
      %1668 = vmatpush2.msra.mxu0 %v262
      %1669 = vmatprep.subr.mxu0 0.0
      %1670 = vmatpush2.msra.mxu0 %v261
      %1671 = vmatprep.subr.mxu0 0.0
      %1672 = vmatpush2.msra.mxu0 %v260
      %1673 = vmatprep.subr.mxu0 0.0
      %1674 = vmatpush2.msra.mxu0 %v259
      %1675 = vmatprep.subr.mxu0 0.0
      %1676 = vmatpush2.msra.mxu0 %v258
      %1677 = vmatprep.subr.mxu0 0.0
      %1678 = vmatpush2.msra.mxu0 %v257
      %1679 = vmatprep.subr.mxu0 0.0
      %1680 = vmatpush2.msra.mxu0 %v256
      %1681 = vmatprep.subr.mxu0 0.0
      %1682 = vmatpush2.msra.mxu0 %v255
      %1683 = vmatprep.subr.mxu0 0.0
      %1684 = vmatpush2.msra.mxu0 %v254
      %1685 = vmatprep.subr.mxu0 0.0
      %1686 = vmatpush2.msra.mxu0 %v253
      %1687 = vmatprep.subr.mxu0 0.0
      %1688 = vmatpush2.msra.mxu0 %v252
      %1689 = vmatprep.subr.mxu0 0.0
      %1690 = vmatpush2.msra.mxu0 %v251
      %1691 = vmatprep.mubr.f32.mxu0 %v1342
      %1692 = vmatmul.mubr.f32.gmra.mxu0 %v1341
      %v1693 = vpop.f32.mrf.mxu0
      %v1694 = vadd.f32 %v1589, %v1693
      %v1695 = vpop.f32.mrf.mxu0
      %1696 = vmatprep.mubr.f32.mxu0 %v1349
      %1697 = vmatmul.mubr.f32.gmra.mxu0 %v1348
      %v1698 = vpop.f32.mrf.mxu0
      %v1699 = vadd.f32 %v1594, %v1698
      %v1700 = vpop.f32.mrf.mxu0
      %1701 = vmatprep.mubr.f32.mxu0 %v1356
      %1702 = vmatmul.mubr.f32.gmra.mxu0 %v1355
      %v1703 = vpop.f32.mrf.mxu0
      %v1704 = vadd.f32 %v1599, %v1703
      %v1705 = vpop.f32.mrf.mxu0
      %1706 = vmatprep.mubr.f32.mxu0 %v1363
      %1707 = vmatmul.mubr.f32.gmra.mxu0 %v1362
      %v1708 = vpop.f32.mrf.mxu0
      %v1709 = vadd.f32 %v1604, %v1708
      %v1710 = vpop.f32.mrf.mxu0
      %1711 = vmatprep.mubr.f32.mxu0 %v1370
      %1712 = vmatmul.mubr.f32.gmra.mxu0 %v1369
      %v1713 = vpop.f32.mrf.mxu0
      %v1714 = vadd.f32 %v1609, %v1713
      %v1715 = vpop.f32.mrf.mxu0
      %1716 = vmatprep.mubr.f32.mxu0 %v1377
      %1717 = vmatmul.mubr.f32.gmra.mxu0 %v1376
      %v1718 = vpop.f32.mrf.mxu0
      %v1719 = vadd.f32 %v1614, %v1718
      %v1720 = vpop.f32.mrf.mxu0
      %1721 = vmatprep.mubr.f32.mxu0 %v1384
      %1722 = vmatmul.mubr.f32.gmra.mxu0 %v1383
      %v1723 = vpop.f32.mrf.mxu0
      %v1724 = vadd.f32 %v1619, %v1723
      %v1725 = vpop.f32.mrf.mxu0
      %1726 = vmatprep.mubr.f32.mxu0 %v1391
      %1727 = vmatmul.mubr.f32.gmra.mxu0 %v1390
      %v1728 = vpop.f32.mrf.mxu0
      %v1729 = vadd.f32 %v1624, %v1728
      %v1730 = vpop.f32.mrf.mxu0
      %1731 = vdwg.mxu0
      %1732 = vmatprep.subr.mxu0 0.0
      %1733 = vmatpush1.msra.mxu0 0.0
      %1734 = vmatprep.subr.mxu0 0.0
      %1735 = vmatpush1.msra.mxu0 0.0
      %1736 = vmatprep.subr.mxu0 0.0
      %1737 = vmatpush1.msra.mxu0 0.0
      %1738 = vmatprep.subr.mxu0 0.0
      %1739 = vmatpush1.msra.mxu0 0.0
      %1740 = vmatprep.subr.mxu0 0.0
      %1741 = vmatpush1.msra.mxu0 0.0
      %1742 = vmatprep.subr.mxu0 0.0
      %1743 = vmatpush1.msra.mxu0 0.0
      %1744 = vmatprep.subr.mxu0 0.0
      %1745 = vmatpush1.msra.mxu0 0.0
      %1746 = vmatprep.subr.mxu0 0.0
      %1747 = vmatpush1.msra.mxu0 0.0
      %1748 = vmatprep.subr.mxu0 0.0
      %1749 = vmatpush1.msra.mxu0 0.0
      %1750 = vmatprep.subr.mxu0 0.0
      %1751 = vmatpush1.msra.mxu0 0.0
      %1752 = vmatprep.subr.mxu0 0.0
      %1753 = vmatpush1.msra.mxu0 0.0
      %1754 = vmatprep.subr.mxu0 0.0
      %1755 = vmatpush1.msra.mxu0 0.0
      %1756 = vmatprep.subr.mxu0 0.0
      %1757 = vmatpush1.msra.mxu0 %v270
      %1758 = vmatprep.subr.mxu0 0.0
      %1759 = vmatpush1.msra.mxu0 %v269
      %1760 = vmatprep.subr.mxu0 0.0
      %1761 = vmatpush1.msra.mxu0 %v268
      %1762 = vmatprep.subr.mxu0 0.0
      %1763 = vmatpush1.msra.mxu0 %v267
      %1764 = vmatprep.subr.mxu0 0.0
      %1765 = vmatpush2.msra.mxu0 0.0
      %1766 = vmatprep.subr.mxu0 0.0
      %1767 = vmatpush2.msra.mxu0 0.0
      %1768 = vmatprep.subr.mxu0 0.0
      %1769 = vmatpush2.msra.mxu0 0.0
      %1770 = vmatprep.subr.mxu0 0.0
      %1771 = vmatpush2.msra.mxu0 0.0
      %1772 = vmatprep.subr.mxu0 0.0
      %1773 = vmatpush2.msra.mxu0 0.0
      %1774 = vmatprep.subr.mxu0 0.0
      %1775 = vmatpush2.msra.mxu0 0.0
      %1776 = vmatprep.subr.mxu0 0.0
      %1777 = vmatpush2.msra.mxu0 0.0
      %1778 = vmatprep.subr.mxu0 0.0
      %1779 = vmatpush2.msra.mxu0 0.0
      %1780 = vmatprep.subr.mxu0 0.0
      %1781 = vmatpush2.msra.mxu0 0.0
      %1782 = vmatprep.subr.mxu0 0.0
      %1783 = vmatpush2.msra.mxu0 0.0
      %1784 = vmatprep.subr.mxu0 0.0
      %1785 = vmatpush2.msra.mxu0 0.0
      %1786 = vmatprep.subr.mxu0 0.0
      %1787 = vmatpush2.msra.mxu0 0.0
      %1788 = vmatprep.subr.mxu0 0.0
      %1789 = vmatpush2.msra.mxu0 0.0
      %1790 = vmatprep.subr.mxu0 0.0
      %1791 = vmatpush2.msra.mxu0 0.0
      %1792 = vmatprep.subr.mxu0 0.0
      %1793 = vmatpush2.msra.mxu0 0.0
      %1794 = vmatprep.subr.mxu0 0.0
      %1795 = vmatpush2.msra.mxu0 0.0
      %1796 = vmatprep.mubr.f32.mxu0 0.0
      %1797 = vmatmul.mubr.f32.gmra.mxu0 %v1394
      %v1798 = vpop.f32.mrf.mxu0
      %v1799 = vadd.f32 %v1694, %v1798
      %v1800 = vpop.f32.mrf.mxu0
      %1801 = vmatprep.mubr.f32.mxu0 0.0
      %1802 = vmatmul.mubr.f32.gmra.mxu0 %v1397
      %v1803 = vpop.f32.mrf.mxu0
      %v1804 = vadd.f32 %v1699, %v1803
      %v1805 = vpop.f32.mrf.mxu0
      %1806 = vmatprep.mubr.f32.mxu0 0.0
      %1807 = vmatmul.mubr.f32.gmra.mxu0 %v1400
      %v1808 = vpop.f32.mrf.mxu0
      %v1809 = vadd.f32 %v1704, %v1808
      %v1810 = vpop.f32.mrf.mxu0
      %1811 = vmatprep.mubr.f32.mxu0 0.0
      %1812 = vmatmul.mubr.f32.gmra.mxu0 %v1403
      %v1813 = vpop.f32.mrf.mxu0
      %v1814 = vadd.f32 %v1709, %v1813
      %v1815 = vpop.f32.mrf.mxu0
      %1816 = vmatprep.mubr.f32.mxu0 0.0
      %1817 = vmatmul.mubr.f32.gmra.mxu0 %v1406
      %v1818 = vpop.f32.mrf.mxu0
      %v1819 = vadd.f32 %v1714, %v1818
      %v1820 = vpop.f32.mrf.mxu0
      %1821 = vmatprep.mubr.f32.mxu0 0.0
      %1822 = vmatmul.mubr.f32.gmra.mxu0 %v1409
      %v1823 = vpop.f32.mrf.mxu0
      %v1824 = vadd.f32 %v1719, %v1823
      %v1825 = vpop.f32.mrf.mxu0
      %1826 = vmatprep.mubr.f32.mxu0 0.0
      %1827 = vmatmul.mubr.f32.gmra.mxu0 %v1412
      %v1828 = vpop.f32.mrf.mxu0
      %v1829 = vadd.f32 %v1724, %v1828
      %v1830 = vpop.f32.mrf.mxu0
      %1831 = vmatprep.mubr.f32.mxu0 0.0
      %1832 = vmatmul.mubr.f32.gmra.mxu0 %v1415
      %v1833 = vpop.f32.mrf.mxu0
      %v1834 = vadd.f32 %v1729, %v1833
      %v1835 = vpop.f32.mrf.mxu0
      %1836 = vdwg.mxu0
      %vm1837 = vcmp.gt.f32.partialorder %v1799, 0.0
      %vm1838 = vcmp.gt.f32.partialorder %v1804, 0.0
      %vm1839 = vcmp.gt.f32.partialorder %v1809, 0.0
      %vm1840 = vcmp.gt.f32.partialorder %v1814, 0.0
      %vm1841 = vcmp.gt.f32.partialorder %v1819, 0.0
      %vm1842 = vcmp.gt.f32.partialorder %v1824, 0.0
      %vm1843 = vcmp.gt.f32.partialorder %v1829, 0.0
      %vm1844 = vcmp.gt.f32.partialorder %v1834, 0.0
      %v1845 = vmul.f32 %v1799, 0.2
      %v1846 = vmul.f32 %v1804, 0.2
      %v1847 = vmul.f32 %v1809, 0.2
      %v1848 = vmul.f32 %v1814, 0.2
      %v1849 = vmul.f32 %v1819, 0.2
      %v1850 = vmul.f32 %v1824, 0.2
      %v1851 = vmul.f32 %v1829, 0.2
      %v1852 = vmul.f32 %v1834, 0.2
      %v1853 = vsel %vm1837, %v1799, %v1845
      %v1854 = vsel %vm1838, %v1804, %v1846
      %v1855 = vsel %vm1839, %v1809, %v1847
      %v1856 = vsel %vm1840, %v1814, %v1848
      %v1857 = vsel %vm1841, %v1819, %v1849
      %v1858 = vsel %vm1842, %v1824, %v1850
      %v1859 = vsel %vm1843, %v1829, %v1851
      %v1860 = vsel %vm1844, %v1834, %v1852
      %v1861 = vadd.f32 %v1328, %v1853
      %v1862 = vadd.f32 %v1329, %v1854
      %v1863 = vadd.f32 %v1330, %v1855
      %v1864 = vadd.f32 %v1331, %v1856
      %v1865 = vadd.f32 %v1332, %v1857
      %v1866 = vadd.f32 %v1333, %v1858
      %v1867 = vadd.f32 %v1334, %v1859
      %v1868 = vadd.f32 %v1335, %v1860
      %s1869 = scalar_lea.vmem %s165, 1344
      %v1870 = vld [vmem:[%s1869] sm:$0xff]
      %v1871 = vld [vmem:[%s1869 + $0x8] sm:$0xff]
      %v1872 = vld [vmem:[%s1869 + $0x10] sm:$0xff]
      %v1873 = vld [vmem:[%s1869 + $0x18] sm:$0xff]
      %v1874 = vld [vmem:[%s1869 + $0x20] sm:$0xff]
      %v1875 = vld [vmem:[%s1869 + $0x28] sm:$0xff]
      %v1876 = vld [vmem:[%s1869 + $0x30] sm:$0xff]
      %v1877 = vld [vmem:[%s1869 + $0x38] sm:$0xff]
      %v1878 = vld [vmem:[%s1869 + $0x40] sm:$0xff]
      %v1879 = vld [vmem:[%s1869 + $0x48] sm:$0xff]
      %v1880 = vld [vmem:[%s1869 + $0x50] sm:$0xff]
      %v1881 = vld [vmem:[%s1869 + $0x58] sm:$0xff]
      %v1882 = vld [vmem:[%s1869 + $0x60] sm:$0xff]
      %v1883 = vld [vmem:[%s1869 + $0x68] sm:$0xff]
      %v1884 = vld [vmem:[%s1869 + $0x70] sm:$0xff]
      %v1885 = vld [vmem:[%s1869 + $0x78] sm:$0xff]
      %v1886 = vld [vmem:[%s1869 + $0x80] sm:$0xff]
      %v1887 = vld [vmem:[%s1869 + $0x88] sm:$0xff]
      %v1888 = vld [vmem:[%s1869 + $0x90] sm:$0xff]
      %v1889 = vld [vmem:[%s1869 + $0x98] sm:$0xff]
      %v1890 = vld [vmem:[%s1869 + $0xa0] sm:$0xff]
      %v1891 = vld [vmem:[%s1869 + $0xa8] sm:$0xff]
      %v1892 = vld [vmem:[%s1869 + $0xb0] sm:$0xff]
      %v1893 = vld [vmem:[%s1869 + $0xb8] sm:$0xff]
      %v1894 = vld [vmem:[%s1869 + $0xc0] sm:$0xff]
      %v1895 = vld [vmem:[%s1869 + $0xc8] sm:$0xff]
      %v1896 = vld [vmem:[%s1869 + $0xd0] sm:$0xff]
      %v1897 = vld [vmem:[%s1869 + $0xd8] sm:$0xff]
      %v1898 = vld [vmem:[%s1869 + $0xe0] sm:$0xff]
      %v1899 = vld [vmem:[%s1869 + $0xe8] sm:$0xff]
      %v1900 = vld [vmem:[%s1869 + $0xf0] sm:$0xff]
      %v1901 = vld [vmem:[%s1869 + $0xf8] sm:$0xff]
      %v1902 = vld [vmem:[%s1869 + $0x100] sm:$0xff]
      %v1903 = vld [vmem:[%s1869 + $0x108] sm:$0xff]
      %v1904 = vld [vmem:[%s1869 + $0x110] sm:$0xff]
      %v1905 = vld [vmem:[%s1869 + $0x118] sm:$0xff]
      %v1906 = vld [vmem:[%s1869 + $0x120] sm:$0xff]
      %v1907 = vld [vmem:[%s1869 + $0x128] sm:$0xff]
      %v1908 = vld [vmem:[%s1869 + $0x130] sm:$0xff]
      %v1909 = vld [vmem:[%s1869 + $0x138] sm:$0xff]
      %v1910 = vld [vmem:[%s1869 + $0x140] sm:$0xff]
      %v1911 = vld [vmem:[%s1869 + $0x148] sm:$0xff]
      %v1912 = vld [vmem:[%s1869 + $0x150] sm:$0xff]
      %v1913 = vld [vmem:[%s1869 + $0x158] sm:$0xff]
      %v1914 = vld [vmem:[%s1869 + $0x160] sm:$0xff]
      %v1915 = vld [vmem:[%s1869 + $0x168] sm:$0xff]
      %v1916 = vld [vmem:[%s1869 + $0x170] sm:$0xff]
      %v1917 = vld [vmem:[%s1869 + $0x178] sm:$0xff]
      %v1918 = vld [vmem:[%s1869 + $0x180] sm:$0xff]
      %v1919 = vld [vmem:[%s1869 + $0x188] sm:$0xff]
      %v1920 = vld [vmem:[%s1869 + $0x190] sm:$0xff]
      %v1921 = vld [vmem:[%s1869 + $0x198] sm:$0xff]
      %v1922 = vld [vmem:[%s1869 + $0x1a0] sm:$0xff]
      %v1923 = vld [vmem:[%s1869 + $0x1a8] sm:$0xff]
      %v1924 = vld [vmem:[%s1869 + $0x1b0] sm:$0xff]
      %v1925 = vld [vmem:[%s1869 + $0x1b8] sm:$0xff]
      %v1927 = vsel %vm334, %v1876, 0
      %v1930 = vsel %vm334, %v1883, 0
      %v1933 = vsel %vm334, %v1890, 0
      %v1936 = vsel %vm334, %v1897, 0
      %v1939 = vsel %vm334, %v1904, 0
      %v1942 = vsel %vm334, %v1911, 0
      %v1945 = vsel %vm334, %v1918, 0
      %v1948 = vsel %vm334, %v1925, 0
      %1950 = vmatprep.subr.mxu0 0.0
      %1951 = vmatpush1.msra.mxu0 %v186
      %1952 = vmatprep.subr.mxu0 0.0
      %1953 = vmatpush1.msra.mxu0 %v185
      %1954 = vmatprep.subr.mxu0 0.0
      %1955 = vmatpush1.msra.mxu0 %v184
      %1956 = vmatprep.subr.mxu0 0.0
      %1957 = vmatpush1.msra.mxu0 %v183
      %1958 = vmatprep.subr.mxu0 0.0
      %1959 = vmatpush1.msra.mxu0 %v182
      %1960 = vmatprep.subr.mxu0 0.0
      %1961 = vmatpush1.msra.mxu0 %v181
      %1962 = vmatprep.subr.mxu0 0.0
      %1963 = vmatpush1.msra.mxu0 %v180
      %1964 = vmatprep.subr.mxu0 0.0
      %1965 = vmatpush1.msra.mxu0 %v179
      %1966 = vmatprep.subr.mxu0 0.0
      %1967 = vmatpush1.msra.mxu0 %v178
      %1968 = vmatprep.subr.mxu0 0.0
      %1969 = vmatpush1.msra.mxu0 %v177
      %1970 = vmatprep.subr.mxu0 0.0
      %1971 = vmatpush1.msra.mxu0 %v176
      %1972 = vmatprep.subr.mxu0 0.0
      %1973 = vmatpush1.msra.mxu0 %v175
      %1974 = vmatprep.subr.mxu0 0.0
      %1975 = vmatpush1.msra.mxu0 %v174
      %1976 = vmatprep.subr.mxu0 0.0
      %1977 = vmatpush1.msra.mxu0 %v173
      %1978 = vmatprep.subr.mxu0 0.0
      %1979 = vmatpush1.msra.mxu0 %v172
      %1980 = vmatprep.subr.mxu0 0.0
      %1981 = vmatpush1.msra.mxu0 %v171
      %1982 = vmatprep.subr.mxu0 0.0
      %1983 = vmatpush2.msra.mxu0 %v202
      %1984 = vmatprep.subr.mxu0 0.0
      %1985 = vmatpush2.msra.mxu0 %v201
      %1986 = vmatprep.subr.mxu0 0.0
      %1987 = vmatpush2.msra.mxu0 %v200
      %1988 = vmatprep.subr.mxu0 0.0
      %1989 = vmatpush2.msra.mxu0 %v199
      %1990 = vmatprep.subr.mxu0 0.0
      %1991 = vmatpush2.msra.mxu0 %v198
      %1992 = vmatprep.subr.mxu0 0.0
      %1993 = vmatpush2.msra.mxu0 %v197
      %1994 = vmatprep.subr.mxu0 0.0
      %1995 = vmatpush2.msra.mxu0 %v196
      %1996 = vmatprep.subr.mxu0 0.0
      %1997 = vmatpush2.msra.mxu0 %v195
      %1998 = vmatprep.subr.mxu0 0.0
      %1999 = vmatpush2.msra.mxu0 %v194
      %2000 = vmatprep.subr.mxu0 0.0
      %2001 = vmatpush2.msra.mxu0 %v193
      %2002 = vmatprep.subr.mxu0 0.0
      %2003 = vmatpush2.msra.mxu0 %v192
      %2004 = vmatprep.subr.mxu0 0.0
      %2005 = vmatpush2.msra.mxu0 %v191
      %2006 = vmatprep.subr.mxu0 0.0
      %2007 = vmatpush2.msra.mxu0 %v190
      %2008 = vmatprep.subr.mxu0 0.0
      %2009 = vmatpush2.msra.mxu0 %v189
      %2010 = vmatprep.subr.mxu0 0.0
      %2011 = vmatpush2.msra.mxu0 %v188
      %2012 = vmatprep.subr.mxu0 0.0
      %2013 = vmatpush2.msra.mxu0 %v187
      %2014 = vmatprep.mubr.f32.mxu0 %v1871
      %2015 = vmatmul.mubr.f32.gmra.mxu0 %v1870
      %v2016 = vpop.f32.mrf.mxu0
      %v2017 = vadd.f32 %v332, %v2016
      %v2018 = vpop.f32.mrf.mxu0
      %2019 = vmatprep.mubr.f32.mxu0 %v1878
      %2020 = vmatmul.mubr.f32.gmra.mxu0 %v1877
      %v2021 = vpop.f32.mrf.mxu0
      %v2022 = vadd.f32 %v332, %v2021
      %v2023 = vpop.f32.mrf.mxu0
      %2024 = vmatprep.mubr.f32.mxu0 %v1885
      %2025 = vmatmul.mubr.f32.gmra.mxu0 %v1884
      %v2026 = vpop.f32.mrf.mxu0
      %v2027 = vadd.f32 %v332, %v2026
      %v2028 = vpop.f32.mrf.mxu0
      %2029 = vmatprep.mubr.f32.mxu0 %v1892
      %2030 = vmatmul.mubr.f32.gmra.mxu0 %v1891
      %v2031 = vpop.f32.mrf.mxu0
      %v2032 = vadd.f32 %v332, %v2031
      %v2033 = vpop.f32.mrf.mxu0
      %2034 = vmatprep.mubr.f32.mxu0 %v1899
      %2035 = vmatmul.mubr.f32.gmra.mxu0 %v1898
      %v2036 = vpop.f32.mrf.mxu0
      %v2037 = vadd.f32 %v332, %v2036
      %v2038 = vpop.f32.mrf.mxu0
      %2039 = vmatprep.mubr.f32.mxu0 %v1906
      %2040 = vmatmul.mubr.f32.gmra.mxu0 %v1905
      %v2041 = vpop.f32.mrf.mxu0
      %v2042 = vadd.f32 %v332, %v2041
      %v2043 = vpop.f32.mrf.mxu0
      %2044 = vmatprep.mubr.f32.mxu0 %v1913
      %2045 = vmatmul.mubr.f32.gmra.mxu0 %v1912
      %v2046 = vpop.f32.mrf.mxu0
      %v2047 = vadd.f32 %v332, %v2046
      %v2048 = vpop.f32.mrf.mxu0
      %2049 = vmatprep.mubr.f32.mxu0 %v1920
      %2050 = vmatmul.mubr.f32.gmra.mxu0 %v1919
      %v2051 = vpop.f32.mrf.mxu0
      %v2052 = vadd.f32 %v332, %v2051
      %v2053 = vpop.f32.mrf.mxu0
      %2054 = vdwg.mxu0
      %2055 = vmatprep.subr.mxu0 0.0
      %2056 = vmatpush1.msra.mxu0 %v218
      %2057 = vmatprep.subr.mxu0 0.0
      %2058 = vmatpush1.msra.mxu0 %v217
      %2059 = vmatprep.subr.mxu0 0.0
      %2060 = vmatpush1.msra.mxu0 %v216
      %2061 = vmatprep.subr.mxu0 0.0
      %2062 = vmatpush1.msra.mxu0 %v215
      %2063 = vmatprep.subr.mxu0 0.0
      %2064 = vmatpush1.msra.mxu0 %v214
      %2065 = vmatprep.subr.mxu0 0.0
      %2066 = vmatpush1.msra.mxu0 %v213
      %2067 = vmatprep.subr.mxu0 0.0
      %2068 = vmatpush1.msra.mxu0 %v212
      %2069 = vmatprep.subr.mxu0 0.0
      %2070 = vmatpush1.msra.mxu0 %v211
      %2071 = vmatprep.subr.mxu0 0.0
      %2072 = vmatpush1.msra.mxu0 %v210
      %2073 = vmatprep.subr.mxu0 0.0
      %2074 = vmatpush1.msra.mxu0 %v209
      %2075 = vmatprep.subr.mxu0 0.0
      %2076 = vmatpush1.msra.mxu0 %v208
      %2077 = vmatprep.subr.mxu0 0.0
      %2078 = vmatpush1.msra.mxu0 %v207
      %2079 = vmatprep.subr.mxu0 0.0
      %2080 = vmatpush1.msra.mxu0 %v206
      %2081 = vmatprep.subr.mxu0 0.0
      %2082 = vmatpush1.msra.mxu0 %v205
      %2083 = vmatprep.subr.mxu0 0.0
      %2084 = vmatpush1.msra.mxu0 %v204
      %2085 = vmatprep.subr.mxu0 0.0
      %2086 = vmatpush1.msra.mxu0 %v203
      %2087 = vmatprep.subr.mxu0 0.0
      %2088 = vmatpush2.msra.mxu0 %v234
      %2089 = vmatprep.subr.mxu0 0.0
      %2090 = vmatpush2.msra.mxu0 %v233
      %2091 = vmatprep.subr.mxu0 0.0
      %2092 = vmatpush2.msra.mxu0 %v232
      %2093 = vmatprep.subr.mxu0 0.0
      %2094 = vmatpush2.msra.mxu0 %v231
      %2095 = vmatprep.subr.mxu0 0.0
      %2096 = vmatpush2.msra.mxu0 %v230
      %2097 = vmatprep.subr.mxu0 0.0
      %2098 = vmatpush2.msra.mxu0 %v229
      %2099 = vmatprep.subr.mxu0 0.0
      %2100 = vmatpush2.msra.mxu0 %v228
      %2101 = vmatprep.subr.mxu0 0.0
      %2102 = vmatpush2.msra.mxu0 %v227
      %2103 = vmatprep.subr.mxu0 0.0
      %2104 = vmatpush2.msra.mxu0 %v226
      %2105 = vmatprep.subr.mxu0 0.0
      %2106 = vmatpush2.msra.mxu0 %v225
      %2107 = vmatprep.subr.mxu0 0.0
      %2108 = vmatpush2.msra.mxu0 %v224
      %2109 = vmatprep.subr.mxu0 0.0
      %2110 = vmatpush2.msra.mxu0 %v223
      %2111 = vmatprep.subr.mxu0 0.0
      %2112 = vmatpush2.msra.mxu0 %v222
      %2113 = vmatprep.subr.mxu0 0.0
      %2114 = vmatpush2.msra.mxu0 %v221
      %2115 = vmatprep.subr.mxu0 0.0
      %2116 = vmatpush2.msra.mxu0 %v220
      %2117 = vmatprep.subr.mxu0 0.0
      %2118 = vmatpush2.msra.mxu0 %v219
      %2119 = vmatprep.mubr.f32.mxu0 %v1873
      %2120 = vmatmul.mubr.f32.gmra.mxu0 %v1872
      %v2121 = vpop.f32.mrf.mxu0
      %v2122 = vadd.f32 %v2017, %v2121
      %v2123 = vpop.f32.mrf.mxu0
      %2124 = vmatprep.mubr.f32.mxu0 %v1880
      %2125 = vmatmul.mubr.f32.gmra.mxu0 %v1879
      %v2126 = vpop.f32.mrf.mxu0
      %v2127 = vadd.f32 %v2022, %v2126
      %v2128 = vpop.f32.mrf.mxu0
      %2129 = vmatprep.mubr.f32.mxu0 %v1887
      %2130 = vmatmul.mubr.f32.gmra.mxu0 %v1886
      %v2131 = vpop.f32.mrf.mxu0
      %v2132 = vadd.f32 %v2027, %v2131
      %v2133 = vpop.f32.mrf.mxu0
      %2134 = vmatprep.mubr.f32.mxu0 %v1894
      %2135 = vmatmul.mubr.f32.gmra.mxu0 %v1893
      %v2136 = vpop.f32.mrf.mxu0
      %v2137 = vadd.f32 %v2032, %v2136
      %v2138 = vpop.f32.mrf.mxu0
      %2139 = vmatprep.mubr.f32.mxu0 %v1901
      %2140 = vmatmul.mubr.f32.gmra.mxu0 %v1900
      %v2141 = vpop.f32.mrf.mxu0
      %v2142 = vadd.f32 %v2037, %v2141
      %v2143 = vpop.f32.mrf.mxu0
      %2144 = vmatprep.mubr.f32.mxu0 %v1908
      %2145 = vmatmul.mubr.f32.gmra.mxu0 %v1907
      %v2146 = vpop.f32.mrf.mxu0
      %v2147 = vadd.f32 %v2042, %v2146
      %v2148 = vpop.f32.mrf.mxu0
      %2149 = vmatprep.mubr.f32.mxu0 %v1915
      %2150 = vmatmul.mubr.f32.gmra.mxu0 %v1914
      %v2151 = vpop.f32.mrf.mxu0
      %v2152 = vadd.f32 %v2047, %v2151
      %v2153 = vpop.f32.mrf.mxu0
      %2154 = vmatprep.mubr.f32.mxu0 %v1922
      %2155 = vmatmul.mubr.f32.gmra.mxu0 %v1921
      %v2156 = vpop.f32.mrf.mxu0
      %v2157 = vadd.f32 %v2052, %v2156
      %v2158 = vpop.f32.mrf.mxu0
      %2159 = vdwg.mxu0
      %2160 = vmatprep.subr.mxu0 0.0
      %2161 = vmatpush1.msra.mxu0 %v250
      %2162 = vmatprep.subr.mxu0 0.0
      %2163 = vmatpush1.msra.mxu0 %v249
      %2164 = vmatprep.subr.mxu0 0.0
      %2165 = vmatpush1.msra.mxu0 %v248
      %2166 = vmatprep.subr.mxu0 0.0
      %2167 = vmatpush1.msra.mxu0 %v247
      %2168 = vmatprep.subr.mxu0 0.0
      %2169 = vmatpush1.msra.mxu0 %v246
      %2170 = vmatprep.subr.mxu0 0.0
      %2171 = vmatpush1.msra.mxu0 %v245
      %2172 = vmatprep.subr.mxu0 0.0
      %2173 = vmatpush1.msra.mxu0 %v244
      %2174 = vmatprep.subr.mxu0 0.0
      %2175 = vmatpush1.msra.mxu0 %v243
      %2176 = vmatprep.subr.mxu0 0.0
      %2177 = vmatpush1.msra.mxu0 %v242
      %2178 = vmatprep.subr.mxu0 0.0
      %2179 = vmatpush1.msra.mxu0 %v241
      %2180 = vmatprep.subr.mxu0 0.0
      %2181 = vmatpush1.msra.mxu0 %v240
      %2182 = vmatprep.subr.mxu0 0.0
      %2183 = vmatpush1.msra.mxu0 %v239
      %2184 = vmatprep.subr.mxu0 0.0
      %2185 = vmatpush1.msra.mxu0 %v238
      %2186 = vmatprep.subr.mxu0 0.0
      %2187 = vmatpush1.msra.mxu0 %v237
      %2188 = vmatprep.subr.mxu0 0.0
      %2189 = vmatpush1.msra.mxu0 %v236
      %2190 = vmatprep.subr.mxu0 0.0
      %2191 = vmatpush1.msra.mxu0 %v235
      %2192 = vmatprep.subr.mxu0 0.0
      %2193 = vmatpush2.msra.mxu0 %v266
      %2194 = vmatprep.subr.mxu0 0.0
      %2195 = vmatpush2.msra.mxu0 %v265
      %2196 = vmatprep.subr.mxu0 0.0
      %2197 = vmatpush2.msra.mxu0 %v264
      %2198 = vmatprep.subr.mxu0 0.0
      %2199 = vmatpush2.msra.mxu0 %v263
      %2200 = vmatprep.subr.mxu0 0.0
      %2201 = vmatpush2.msra.mxu0 %v262
      %2202 = vmatprep.subr.mxu0 0.0
      %2203 = vmatpush2.msra.mxu0 %v261
      %2204 = vmatprep.subr.mxu0 0.0
      %2205 = vmatpush2.msra.mxu0 %v260
      %2206 = vmatprep.subr.mxu0 0.0
      %2207 = vmatpush2.msra.mxu0 %v259
      %2208 = vmatprep.subr.mxu0 0.0
      %2209 = vmatpush2.msra.mxu0 %v258
      %2210 = vmatprep.subr.mxu0 0.0
      %2211 = vmatpush2.msra.mxu0 %v257
      %2212 = vmatprep.subr.mxu0 0.0
      %2213 = vmatpush2.msra.mxu0 %v256
      %2214 = vmatprep.subr.mxu0 0.0
      %2215 = vmatpush2.msra.mxu0 %v255
      %2216 = vmatprep.subr.mxu0 0.0
      %2217 = vmatpush2.msra.mxu0 %v254
      %2218 = vmatprep.subr.mxu0 0.0
      %2219 = vmatpush2.msra.mxu0 %v253
      %2220 = vmatprep.subr.mxu0 0.0
      %2221 = vmatpush2.msra.mxu0 %v252
      %2222 = vmatprep.subr.mxu0 0.0
      %2223 = vmatpush2.msra.mxu0 %v251
      %2224 = vmatprep.mubr.f32.mxu0 %v1875
      %2225 = vmatmul.mubr.f32.gmra.mxu0 %v1874
      %v2226 = vpop.f32.mrf.mxu0
      %v2227 = vadd.f32 %v2122, %v2226
      %v2228 = vpop.f32.mrf.mxu0
      %2229 = vmatprep.mubr.f32.mxu0 %v1882
      %2230 = vmatmul.mubr.f32.gmra.mxu0 %v1881
      %v2231 = vpop.f32.mrf.mxu0
      %v2232 = vadd.f32 %v2127, %v2231
      %v2233 = vpop.f32.mrf.mxu0
      %2234 = vmatprep.mubr.f32.mxu0 %v1889
      %2235 = vmatmul.mubr.f32.gmra.mxu0 %v1888
      %v2236 = vpop.f32.mrf.mxu0
      %v2237 = vadd.f32 %v2132, %v2236
      %v2238 = vpop.f32.mrf.mxu0
      %2239 = vmatprep.mubr.f32.mxu0 %v1896
      %2240 = vmatmul.mubr.f32.gmra.mxu0 %v1895
      %v2241 = vpop.f32.mrf.mxu0
      %v2242 = vadd.f32 %v2137, %v2241
      %v2243 = vpop.f32.mrf.mxu0
      %2244 = vmatprep.mubr.f32.mxu0 %v1903
      %2245 = vmatmul.mubr.f32.gmra.mxu0 %v1902
      %v2246 = vpop.f32.mrf.mxu0
      %v2247 = vadd.f32 %v2142, %v2246
      %v2248 = vpop.f32.mrf.mxu0
      %2249 = vmatprep.mubr.f32.mxu0 %v1910
      %2250 = vmatmul.mubr.f32.gmra.mxu0 %v1909
      %v2251 = vpop.f32.mrf.mxu0
      %v2252 = vadd.f32 %v2147, %v2251
      %v2253 = vpop.f32.mrf.mxu0
      %2254 = vmatprep.mubr.f32.mxu0 %v1917
      %2255 = vmatmul.mubr.f32.gmra.mxu0 %v1916
      %v2256 = vpop.f32.mrf.mxu0
      %v2257 = vadd.f32 %v2152, %v2256
      %v2258 = vpop.f32.mrf.mxu0
      %2259 = vmatprep.mubr.f32.mxu0 %v1924
      %2260 = vmatmul.mubr.f32.gmra.mxu0 %v1923
      %v2261 = vpop.f32.mrf.mxu0
      %v2262 = vadd.f32 %v2157, %v2261
      %v2263 = vpop.f32.mrf.mxu0
      %2264 = vdwg.mxu0
      %2265 = vmatprep.subr.mxu0 0.0
      %2266 = vmatpush1.msra.mxu0 0.0
      %2267 = vmatprep.subr.mxu0 0.0
      %2268 = vmatpush1.msra.mxu0 0.0
      %2269 = vmatprep.subr.mxu0 0.0
      %2270 = vmatpush1.msra.mxu0 0.0
      %2271 = vmatprep.subr.mxu0 0.0
      %2272 = vmatpush1.msra.mxu0 0.0
      %2273 = vmatprep.subr.mxu0 0.0
      %2274 = vmatpush1.msra.mxu0 0.0
      %2275 = vmatprep.subr.mxu0 0.0
      %2276 = vmatpush1.msra.mxu0 0.0
      %2277 = vmatprep.subr.mxu0 0.0
      %2278 = vmatpush1.msra.mxu0 0.0
      %2279 = vmatprep.subr.mxu0 0.0
      %2280 = vmatpush1.msra.mxu0 0.0
      %2281 = vmatprep.subr.mxu0 0.0
      %2282 = vmatpush1.msra.mxu0 0.0
      %2283 = vmatprep.subr.mxu0 0.0
      %2284 = vmatpush1.msra.mxu0 0.0
      %2285 = vmatprep.subr.mxu0 0.0
      %2286 = vmatpush1.msra.mxu0 0.0
      %2287 = vmatprep.subr.mxu0 0.0
      %2288 = vmatpush1.msra.mxu0 0.0
      %2289 = vmatprep.subr.mxu0 0.0
      %2290 = vmatpush1.msra.mxu0 %v270
      %2291 = vmatprep.subr.mxu0 0.0
      %2292 = vmatpush1.msra.mxu0 %v269
      %2293 = vmatprep.subr.mxu0 0.0
      %2294 = vmatpush1.msra.mxu0 %v268
      %2295 = vmatprep.subr.mxu0 0.0
      %2296 = vmatpush1.msra.mxu0 %v267
      %2297 = vmatprep.subr.mxu0 0.0
      %2298 = vmatpush2.msra.mxu0 0.0
      %2299 = vmatprep.subr.mxu0 0.0
      %2300 = vmatpush2.msra.mxu0 0.0
      %2301 = vmatprep.subr.mxu0 0.0
      %2302 = vmatpush2.msra.mxu0 0.0
      %2303 = vmatprep.subr.mxu0 0.0
      %2304 = vmatpush2.msra.mxu0 0.0
      %2305 = vmatprep.subr.mxu0 0.0
      %2306 = vmatpush2.msra.mxu0 0.0
      %2307 = vmatprep.subr.mxu0 0.0
      %2308 = vmatpush2.msra.mxu0 0.0
      %2309 = vmatprep.subr.mxu0 0.0
      %2310 = vmatpush2.msra.mxu0 0.0
      %2311 = vmatprep.subr.mxu0 0.0
      %2312 = vmatpush2.msra.mxu0 0.0
      %2313 = vmatprep.subr.mxu0 0.0
      %2314 = vmatpush2.msra.mxu0 0.0
      %2315 = vmatprep.subr.mxu0 0.0
      %2316 = vmatpush2.msra.mxu0 0.0
      %2317 = vmatprep.subr.mxu0 0.0
      %2318 = vmatpush2.msra.mxu0 0.0
      %2319 = vmatprep.subr.mxu0 0.0
      %2320 = vmatpush2.msra.mxu0 0.0
      %2321 = vmatprep.subr.mxu0 0.0
      %2322 = vmatpush2.msra.mxu0 0.0
      %2323 = vmatprep.subr.mxu0 0.0
      %2324 = vmatpush2.msra.mxu0 0.0
      %2325 = vmatprep.subr.mxu0 0.0
      %2326 = vmatpush2.msra.mxu0 0.0
      %2327 = vmatprep.subr.mxu0 0.0
      %2328 = vmatpush2.msra.mxu0 0.0
      %2329 = vmatprep.mubr.f32.mxu0 0.0
      %2330 = vmatmul.mubr.f32.gmra.mxu0 %v1927
      %v2331 = vpop.f32.mrf.mxu0
      %v2332 = vadd.f32 %v2227, %v2331
      %v2333 = vpop.f32.mrf.mxu0
      %2334 = vmatprep.mubr.f32.mxu0 0.0
      %2335 = vmatmul.mubr.f32.gmra.mxu0 %v1930
      %v2336 = vpop.f32.mrf.mxu0
      %v2337 = vadd.f32 %v2232, %v2336
      %v2338 = vpop.f32.mrf.mxu0
      %2339 = vmatprep.mubr.f32.mxu0 0.0
      %2340 = vmatmul.mubr.f32.gmra.mxu0 %v1933
      %v2341 = vpop.f32.mrf.mxu0
      %v2342 = vadd.f32 %v2237, %v2341
      %v2343 = vpop.f32.mrf.mxu0
      %2344 = vmatprep.mubr.f32.mxu0 0.0
      %2345 = vmatmul.mubr.f32.gmra.mxu0 %v1936
      %v2346 = vpop.f32.mrf.mxu0
      %v2347 = vadd.f32 %v2242, %v2346
      %v2348 = vpop.f32.mrf.mxu0
      %2349 = vmatprep.mubr.f32.mxu0 0.0
      %2350 = vmatmul.mubr.f32.gmra.mxu0 %v1939
      %v2351 = vpop.f32.mrf.mxu0
      %v2352 = vadd.f32 %v2247, %v2351
      %v2353 = vpop.f32.mrf.mxu0
      %2354 = vmatprep.mubr.f32.mxu0 0.0
      %2355 = vmatmul.mubr.f32.gmra.mxu0 %v1942
      %v2356 = vpop.f32.mrf.mxu0
      %v2357 = vadd.f32 %v2252, %v2356
      %v2358 = vpop.f32.mrf.mxu0
      %2359 = vmatprep.mubr.f32.mxu0 0.0
      %2360 = vmatmul.mubr.f32.gmra.mxu0 %v1945
      %v2361 = vpop.f32.mrf.mxu0
      %v2362 = vadd.f32 %v2257, %v2361
      %v2363 = vpop.f32.mrf.mxu0
      %2364 = vmatprep.mubr.f32.mxu0 0.0
      %2365 = vmatmul.mubr.f32.gmra.mxu0 %v1948
      %v2366 = vpop.f32.mrf.mxu0
      %v2367 = vadd.f32 %v2262, %v2366
      %v2368 = vpop.f32.mrf.mxu0
      %2369 = vdwg.mxu0
      %vm2370 = vcmp.gt.f32.partialorder %v2332, 0.0
      %vm2371 = vcmp.gt.f32.partialorder %v2337, 0.0
      %vm2372 = vcmp.gt.f32.partialorder %v2342, 0.0
      %vm2373 = vcmp.gt.f32.partialorder %v2347, 0.0
      %vm2374 = vcmp.gt.f32.partialorder %v2352, 0.0
      %vm2375 = vcmp.gt.f32.partialorder %v2357, 0.0
      %vm2376 = vcmp.gt.f32.partialorder %v2362, 0.0
      %vm2377 = vcmp.gt.f32.partialorder %v2367, 0.0
      %v2378 = vmul.f32 %v2332, 0.2
      %v2379 = vmul.f32 %v2337, 0.2
      %v2380 = vmul.f32 %v2342, 0.2
      %v2381 = vmul.f32 %v2347, 0.2
      %v2382 = vmul.f32 %v2352, 0.2
      %v2383 = vmul.f32 %v2357, 0.2
      %v2384 = vmul.f32 %v2362, 0.2
      %v2385 = vmul.f32 %v2367, 0.2
      %v2386 = vsel %vm2370, %v2332, %v2378
      %v2387 = vsel %vm2371, %v2337, %v2379
      %v2388 = vsel %vm2372, %v2342, %v2380
      %v2389 = vsel %vm2373, %v2347, %v2381
      %v2390 = vsel %vm2374, %v2352, %v2382
      %v2391 = vsel %vm2375, %v2357, %v2383
      %v2392 = vsel %vm2376, %v2362, %v2384
      %v2393 = vsel %vm2377, %v2367, %v2385
      %v2394 = vadd.f32 %v1861, %v2386
      %v2395 = vadd.f32 %v1862, %v2387
      %v2396 = vadd.f32 %v1863, %v2388
      %v2397 = vadd.f32 %v1864, %v2389
      %v2398 = vadd.f32 %v1865, %v2390
      %v2399 = vadd.f32 %v1866, %v2391
      %v2400 = vadd.f32 %v1867, %v2392
      %v2401 = vadd.f32 %v1868, %v2393
      %v2402 = vmul.f32 %v2394, 0.25
      %v2403 = vmul.f32 %v2395, 0.25
      %v2404 = vmul.f32 %v2396, 0.25
      %v2405 = vmul.f32 %v2397, 0.25
      %v2406 = vmul.f32 %v2398, 0.25
      %v2407 = vmul.f32 %v2399, 0.25
      %v2408 = vmul.f32 %v2400, 0.25
      %v2409 = vmul.f32 %v2401, 0.25
      %vm2410 = vcmask 523264
      %2411 = vst.msk [vmem:[%s170] sm:$0xff] %vm2410, %v2402
      %2412 = vst.msk [vmem:[%s170 + $0x8] sm:$0xff] %vm2410, %v2403
      %2413 = vst.msk [vmem:[%s170 + $0x10] sm:$0xff] %vm2410, %v2404
      %2414 = vst.msk [vmem:[%s170 + $0x18] sm:$0xff] %vm2410, %v2405
      %2415 = vst.msk [vmem:[%s170 + $0x20] sm:$0xff] %vm2410, %v2406
      %2416 = vst.msk [vmem:[%s170 + $0x28] sm:$0xff] %vm2410, %v2407
      %2417 = vst.msk [vmem:[%s170 + $0x30] sm:$0xff] %vm2410, %v2408
      %2418 = vst.msk [vmem:[%s170 + $0x38] sm:$0xff] %vm2410, %v2409
      %p2419 = scmp.lt.s32.totalorder %s14, 1
      %s2420 = scalar_select %p2419, %s14, 1
      %s2421 = smul.addr %s2420, 8
      %s2422 = smul.addr %s2421, 8
      %s2423 = scalar_lea.vmem %s3, %s2422
      // Predicated region
      $region33: #{discriminator_forward.5} parent=31 // pred_check
        %p2424 = pneg %p100
      $region34: #{discriminator_forward.5} parent=31 // pred_check_branch
        %2426 = sbr.rel (%p2424) target = $region36
      $region35: #{discriminator_forward.5} parent=31 // pred_region
        _
      $region36: #{discriminator_forward.5} parent=31 // pred_fallthru
        _
    $region32: #{discriminator_forward.5} parent=5 // pred_fallthru
      _
    %p2427 = scmp.le.s32.totalorder 2, %s9
    // Predicated region
    $region37: #{discriminator_forward.5} parent=5 // pred_check
      %p2428 = pneg %p2427
    $region38: #{discriminator_forward.5} parent=5 // pred_check_branch
      %2430 = sbr.rel (%p2428) target = $region40
    $region39: #{discriminator_forward.5} parent=5 // pred_region
      %s2431 = ssub.s32 %s9, 2
      // Predicated region
      $region41: #{discriminator_forward.5} parent=39 // pred_check
        %p2432 = pneg %p106
      $region42: #{discriminator_forward.5} parent=39 // pred_check_branch
        %2434 = sbr.rel (%p2432) target = $region44
      $region43: #{discriminator_forward.5} parent=39 // pred_region
        %p2435 = scmp.lt.s32.totalorder %s15, 1
        %s2436 = scalar_select %p2435, %s15, 1
        %s2437 = smul.addr %s2436, 8
        %s2438 = smul.addr %s2437, 8
        %s2439 = scalar_lea.vmem %s3, %s2438
      $region44: #{discriminator_forward.5} parent=39 // pred_fallthru
        _
    $region40: #{discriminator_forward.5} parent=5 // pred_fallthru
      _
  $region6: #{discriminator_forward.5} parent=0 // loop_footer
    %s13 = sadd.s32 1, %s9
  $region7: #{discriminator_forward.5} parent=0 // loop_footer_branch
    %8 = sbr.rel target = $region3
  $region8: #{discriminator_forward.5} parent=0 // loop_exit
    _

// kernel: discriminator_forward.6
$region0: #{discriminator_forward.6}
  #allocation0 [shape = 'u32[]', space=smem, size = 0x4, offset = 0x4, fixed_abs, tag = 'smem constant byte address 0x4 - core index']
  #allocation1 [shape = 'u32[144,128]{1,0:T(1,128)}', space=vmem, size = 0x12000, scoped, tag = 'internal scratch']
  %s0 = inlined_call_operand.vmem [shape: f32[2,4,4,1600], index: 0, kind: input, shape index: {}]
  %s1 = inlined_call_operand.vmem [shape: f32[1600,64], index: 1, kind: input, shape index: {}]
  %s2 = inlined_call_operand.vmem [shape: f32[1,64], index: 2, kind: input, shape index: {}]
  %s3 = inlined_call_operand.vmem [shape: f32[2,4,64], index: 3, kind: output, shape index: {}]
  %s4 = sld [smem:[#allocation0]]
  $region45: #{discriminator_forward.6} parent=0
    _
  %s6 = ssub.s32 1, %s4
  %s7 = scalar_select 0, %s6, %s4
  loop: start=0, step=1, limit=4
  $region2: #{discriminator_forward.6} parent=0 // loop_pre_header
    _
  $region3: #{discriminator_forward.6} parent=0 // loop_header
    %s9 = sphi 0, %s13
    %p10 = scmp.ge.s32.totalorder %s9, 4
    %s19 = sphi 0, %s21
    %s22 = sphi 0, %s19
    %s23 = sphi 0, %s22
    %s39 = sphi 0, %s23
    %s43 = sphi 0, %s43
    %s45 = sphi 0, %s43
    %s46 = sphi 0, %s45
    %s60 = sphi 0, %s46
    %s64 = sphi 0, %s64
    %s66 = sphi 0, %s64
    %s67 = sphi 0, %s66
    %s81 = sphi 0, %s67
    %s87 = sphi 0, %s89
    %s90 = sphi 0, %s87
    %s91 = sphi 0, %s90
    %s107 = sphi 0, %s91
  $region4: #{discriminator_forward.6} parent=0 // loop_header_branch
    %12 = sbr.rel (%p10) target = $region8
  $region5: #{discriminator_forward.6} parent=0 // loop_body
    %s14 = ssub.s32 %s9, 1
    %s15 = ssub.s32 %s9, 2
    %s16 = sadd.s32 %s9, 1
    %s17 = ssub.s32 %s9, %s16
    %p18 = scmp.eq.s32.totalorder %s17, 0
    %s20 = sadd.s32 %s19, 1
    %s21 = scalar_select %p18, %s19, %s20
    %p24 = pneg %p18
    %p25 = scmp.eq.s32.totalorder %s9, 1
    %p26 = por %p24, %p25
    %p27 = scmp.ne.s32.totalorder %s19, %s22
    %p28 = scmp.eq.s32.totalorder %s9, 0
    %p29 = por %p27, %p28
    %p30 = scmp.ne.s32.totalorder %s19, %s22
    %p31 = scmp.eq.s32.totalorder %s14, 1
    %p32 = por %p30, %p31
    %p33 = scmp.ne.s32.totalorder %s22, %s23
    %p34 = scmp.eq.s32.totalorder %s14, 0
    %p35 = por %p33, %p34
    %p36 = scmp.ne.s32.totalorder %s22, %s23
    %p37 = scmp.eq.s32.totalorder %s15, 1
    %p38 = por %p36, %p37
    %p40 = scmp.ne.s32.totalorder %s23, %s39
    %p41 = scmp.eq.s32.totalorder %s15, 0
    %p42 = por %p40, %p41
    %s44 = sadd.s32 %s43, 1
    %p47 = scmp.eq.s32.totalorder %s9, 1
    %p48 = scmp.ne.s32.totalorder %s43, %s45
    %p49 = scmp.eq.s32.totalorder %s9, 0
    %p50 = por %p48, %p49
    %p51 = scmp.ne.s32.totalorder %s43, %s45
    %p52 = scmp.eq.s32.totalorder %s14, 1
    %p53 = por %p51, %p52
    %p54 = scmp.ne.s32.totalorder %s45, %s46
    %p55 = scmp.eq.s32.totalorder %s14, 0
    %p56 = por %p54, %p55
    %p57 = scmp.ne.s32.totalorder %s45, %s46
    %p58 = scmp.eq.s32.totalorder %s15, 1
    %p59 = por %p57, %p58
    %p61 = scmp.ne.s32.totalorder %s46, %s60
    %p62 = scmp.eq.s32.totalorder %s15, 0
    %p63 = por %p61, %p62
    %s65 = sadd.s32 %s64, 1
    %p68 = scmp.eq.s32.totalorder %s9, 1
    %p69 = scmp.ne.s32.totalorder %s64, %s66
    %p70 = scmp.eq.s32.totalorder %s9, 0
    %p71 = por %p69, %p70
    %p72 = scmp.ne.s32.totalorder %s64, %s66
    %p73 = scmp.eq.s32.totalorder %s14, 1
    %p74 = por %p72, %p73
    %p75 = scmp.ne.s32.totalorder %s66, %s67
    %p76 = scmp.eq.s32.totalorder %s14, 0
    %p77 = por %p75, %p76
    %p78 = scmp.ne.s32.totalorder %s66, %s67
    %p79 = scmp.eq.s32.totalorder %s15, 1
    %p80 = por %p78, %p79
    %p82 = scmp.ne.s32.totalorder %s67, %s81
    %p83 = scmp.eq.s32.totalorder %s15, 0
    %p84 = por %p82, %p83
    %s85 = ssub.s32 %s9, %s16
    %p86 = scmp.eq.s32.totalorder %s85, 0
    %s88 = sadd.s32 %s87, 1
    %s89 = scalar_select %p86, %s87, %s88
    %p92 = pneg %p86
    %p93 = scmp.eq.s32.totalorder %s9, 1
    %p94 = por %p92, %p93
    %p95 = scmp.ne.s32.totalorder %s87, %s90
    %p96 = scmp.eq.s32.totalorder %s9, 0
    %p97 = por %p95, %p96
    %p98 = scmp.ne.s32.totalorder %s87, %s90
    %p99 = scmp.eq.s32.totalorder %s14, 1
    %p100 = por %p98, %p99
    %p101 = scmp.ne.s32.totalorder %s90, %s91
    %p102 = scmp.eq.s32.totalorder %s14, 0
    %p103 = por %p101, %p102
    %p104 = scmp.ne.s32.totalorder %s90, %s91
    %p105 = scmp.eq.s32.totalorder %s15, 1
    %p106 = por %p104, %p105
    %p108 = scmp.ne.s32.totalorder %s91, %s107
    %p109 = scmp.eq.s32.totalorder %s15, 0
    %p110 = por %p108, %p109
    %p111 = scmp.le.s32.totalorder 1, %s9
    %p112 = scmp.lt.s32.totalorder %s9, 3
    %p113 = pnand %p111, %p112
    %p114 = pneg %p113
    // Predicated region
    $region9: #{discriminator_forward.6} parent=5 // pred_check
      _
    $region10: #{discriminator_forward.6} parent=5 // pred_check_branch
      %116 = sbr.rel (%p113) target = $region12
    $region11: #{discriminator_forward.6} parent=5 // pred_region
      %s117 = ssub.s32 %s9, 1
      // Predicated region
      $region13: #{discriminator_forward.6} parent=11 // pred_check
        %p118 = pneg %p56
      $region14: #{discriminator_forward.6} parent=11 // pred_check_branch
        %120 = sbr.rel (%p118) target = $region16
      $region15: #{discriminator_forward.6} parent=11 // pred_region
        _
      $region16: #{discriminator_forward.6} parent=11 // pred_fallthru
        _
      // Predicated region
      $region17: #{discriminator_forward.6} parent=11 // pred_check
        %p121 = pneg %p77
      $region18: #{discriminator_forward.6} parent=11 // pred_check_branch
        %123 = sbr.rel (%p121) target = $region20
      $region19: #{discriminator_forward.6} parent=11 // pred_region
        _
      $region20: #{discriminator_forward.6} parent=11 // pred_fallthru
        _
    $region12: #{discriminator_forward.6} parent=5 // pred_fallthru
      _
    %p124 = scmp.lt.s32.totalorder %s9, 2
    // Predicated region
    $region21: #{discriminator_forward.6} parent=5 // pred_check
      %p125 = pneg %p124
    $region22: #{discriminator_forward.6} parent=5 // pred_check_branch
      %127 = sbr.rel (%p125) target = $region24
    $region23: #{discriminator_forward.6} parent=5 // pred_region
      // Predicated region
      $region25: #{discriminator_forward.6} parent=23 // pred_check
        %p128 = pneg %p29
      $region26: #{discriminator_forward.6} parent=23 // pred_check_branch
        %130 = sbr.rel (%p128) target = $region28
      $region27: #{discriminator_forward.6} parent=23 // pred_region
        %p131 = scmp.lt.s32.totalorder %s9, 1
        %s132 = scalar_select %p131, %s9, 1
        %s133 = smul.addr %s132, 52
        %s134 = smul.addr %s133, 4
        %s135 = scalar_lea.vmem %s0, %s134
      $region28: #{discriminator_forward.6} parent=23 // pred_fallthru
        _
    $region24: #{discriminator_forward.6} parent=5 // pred_fallthru
      _
    %p136 = scmp.le.s32.totalorder 1, %s9
    %p137 = scmp.lt.s32.totalorder %s9, 3
    %p138 = pnand %p136, %p137
    %p139 = pneg %p138
    // Predicated region
    $region29: #{discriminator_forward.6} parent=5 // pred_check
      _
    $region30: #{discriminator_forward.6} parent=5 // pred_check_branch
      %141 = sbr.rel (%p138) target = $region32
    $region31: #{discriminator_forward.6} parent=5 // pred_region
      %s142 = ssub.s32 %s9, 1
      %p143 = scmp.lt.s32.totalorder %s14, 1
      %s144 = scalar_select %p143, %s14, 1
      %s145 = smul.addr %s144, 52
      %s146 = smul.addr %s145, 4
      %s147 = scalar_lea.vmem %s0, %s146
      %p148 = pneg %p35
      %p149 = pneg %p32
      %p150 = pneg %p56
      %p151 = pneg %p53
      %p152 = pneg %p77
      %p153 = pneg %p74
      %p154 = pneg %p103
      %p155 = pneg %p100
      %p156 = scmp.lt.s32.totalorder %s14, 1
      %s157 = scalar_select %p156, %s14, 1
      %s158 = smul.addr %s157, 4
      %s159 = scalar_lea.vmem %s3, %s158
      %p160 = scmp.lt.s32.totalorder %s14, 1
      %s161 = scalar_select %p160, %s14, 1
      %s162 = smul.addr %s161, 52
      %s163 = smul.addr %s162, 4
      %s164 = scalar_lea.vmem %s0, %s163
      %p165 = scmp.lt.s32.totalorder %s14, 1
      %s166 = scalar_select %p165, %s14, 1
      %s167 = smul.addr %s166, 4
      %s168 = scalar_lea.vmem %s3, %s167
      %v169 = vld [vmem:[%s1] sm:$0xff]
      %v170 = vld [vmem:[%s1 + $0x8] sm:$0xff]
      %v171 = vld [vmem:[%s1 + $0x10] sm:$0xff]
      %v172 = vld [vmem:[%s1 + $0x18] sm:$0xff]
      %v173 = vld [vmem:[%s1 + $0x20] sm:$0xff]
      %v174 = vld [vmem:[%s1 + $0x28] sm:$0xff]
      %v175 = vld [vmem:[%s1 + $0x30] sm:$0xff]
      %v176 = vld [vmem:[%s1 + $0x38] sm:$0xff]
      %v177 = vld [vmem:[%s1 + $0x40] sm:$0xff]
      %v178 = vld [vmem:[%s1 + $0x48] sm:$0xff]
      %v179 = vld [vmem:[%s1 + $0x50] sm:$0xff]
      %v180 = vld [vmem:[%s1 + $0x58] sm:$0xff]
      %v181 = vld [vmem:[%s1 + $0x60] sm:$0xff]
      %v182 = vld [vmem:[%s1 + $0x68] sm:$0xff]
      %v183 = vld [vmem:[%s1 + $0x70] sm:$0xff]
      %v184 = vld [vmem:[%s1 + $0x78] sm:$0xff]
      %v185 = vld [vmem:[%s1 + $0x80] sm:$0xff]
      %v186 = vld [vmem:[%s1 + $0x88] sm:$0xff]
      %v187 = vld [vmem:[%s1 + $0x90] sm:$0xff]
      %v188 = vld [vmem:[%s1 + $0x98] sm:$0xff]
      %v189 = vld [vmem:[%s1 + $0xa0] sm:$0xff]
      %v190 = vld [vmem:[%s1 + $0xa8] sm:$0xff]
      %v191 = vld [vmem:[%s1 + $0xb0] sm:$0xff]
      %v192 = vld [vmem:[%s1 + $0xb8] sm:$0xff]
      %v193 = vld [vmem:[%s1 + $0xc0] sm:$0xff]
      %v194 = vld [vmem:[%s1 + $0xc8] sm:$0xff]
      %v195 = vld [vmem:[%s1 + $0xd0] sm:$0xff]
      %v196 = vld [vmem:[%s1 + $0xd8] sm:$0xff]
      %v197 = vld [vmem:[%s1 + $0xe0] sm:$0xff]
      %v198 = vld [vmem:[%s1 + $0xe8] sm:$0xff]
      %v199 = vld [vmem:[%s1 + $0xf0] sm:$0xff]
      %v200 = vld [vmem:[%s1 + $0xf8] sm:$0xff]
      %v201 = vld [vmem:[%s1 + $0x100] sm:$0xff]
      %v202 = vld [vmem:[%s1 + $0x108] sm:$0xff]
      %v203 = vld [vmem:[%s1 + $0x110] sm:$0xff]
      %v204 = vld [vmem:[%s1 + $0x118] sm:$0xff]
      %v205 = vld [vmem:[%s1 + $0x120] sm:$0xff]
      %v206 = vld [vmem:[%s1 + $0x128] sm:$0xff]
      %v207 = vld [vmem:[%s1 + $0x130] sm:$0xff]
      %v208 = vld [vmem:[%s1 + $0x138] sm:$0xff]
      %v209 = vld [vmem:[%s1 + $0x140] sm:$0xff]
      %v210 = vld [vmem:[%s1 + $0x148] sm:$0xff]
      %v211 = vld [vmem:[%s1 + $0x150] sm:$0xff]
      %v212 = vld [vmem:[%s1 + $0x158] sm:$0xff]
      %v213 = vld [vmem:[%s1 + $0x160] sm:$0xff]
      %v214 = vld [vmem:[%s1 + $0x168] sm:$0xff]
      %v215 = vld [vmem:[%s1 + $0x170] sm:$0xff]
      %v216 = vld [vmem:[%s1 + $0x178] sm:$0xff]
      %v217 = vld [vmem:[%s1 + $0x180] sm:$0xff]
      %v218 = vld [vmem:[%s1 + $0x188] sm:$0xff]
      %v219 = vld [vmem:[%s1 + $0x190] sm:$0xff]
      %v220 = vld [vmem:[%s1 + $0x198] sm:$0xff]
      %v221 = vld [vmem:[%s1 + $0x1a0] sm:$0xff]
      %v222 = vld [vmem:[%s1 + $0x1a8] sm:$0xff]
      %v223 = vld [vmem:[%s1 + $0x1b0] sm:$0xff]
      %v224 = vld [vmem:[%s1 + $0x1b8] sm:$0xff]
      %v225 = vld [vmem:[%s1 + $0x1c0] sm:$0xff]
      %v226 = vld [vmem:[%s1 + $0x1c8] sm:$0xff]
      %v227 = vld [vmem:[%s1 + $0x1d0] sm:$0xff]
      %v228 = vld [vmem:[%s1 + $0x1d8] sm:$0xff]
      %v229 = vld [vmem:[%s1 + $0x1e0] sm:$0xff]
      %v230 = vld [vmem:[%s1 + $0x1e8] sm:$0xff]
      %v231 = vld [vmem:[%s1 + $0x1f0] sm:$0xff]
      %v232 = vld [vmem:[%s1 + $0x1f8] sm:$0xff]
      %v233 = vld [vmem:[%s1 + $0x200] sm:$0xff]
      %v234 = vld [vmem:[%s1 + $0x208] sm:$0xff]
      %v235 = vld [vmem:[%s1 + $0x210] sm:$0xff]
      %v236 = vld [vmem:[%s1 + $0x218] sm:$0xff]
      %v237 = vld [vmem:[%s1 + $0x220] sm:$0xff]
      %v238 = vld [vmem:[%s1 + $0x228] sm:$0xff]
      %v239 = vld [vmem:[%s1 + $0x230] sm:$0xff]
      %v240 = vld [vmem:[%s1 + $0x238] sm:$0xff]
      %v241 = vld [vmem:[%s1 + $0x240] sm:$0xff]
      %v242 = vld [vmem:[%s1 + $0x248] sm:$0xff]
      %v243 = vld [vmem:[%s1 + $0x250] sm:$0xff]
      %v244 = vld [vmem:[%s1 + $0x258] sm:$0xff]
      %v245 = vld [vmem:[%s1 + $0x260] sm:$0xff]
      %v246 = vld [vmem:[%s1 + $0x268] sm:$0xff]
      %v247 = vld [vmem:[%s1 + $0x270] sm:$0xff]
      %v248 = vld [vmem:[%s1 + $0x278] sm:$0xff]
      %v249 = vld [vmem:[%s1 + $0x280] sm:$0xff]
      %v250 = vld [vmem:[%s1 + $0x288] sm:$0xff]
      %v251 = vld [vmem:[%s1 + $0x290] sm:$0xff]
      %v252 = vld [vmem:[%s1 + $0x298] sm:$0xff]
      %v253 = vld [vmem:[%s1 + $0x2a0] sm:$0xff]
      %v254 = vld [vmem:[%s1 + $0x2a8] sm:$0xff]
      %v255 = vld [vmem:[%s1 + $0x2b0] sm:$0xff]
      %v256 = vld [vmem:[%s1 + $0x2b8] sm:$0xff]
      %v257 = vld [vmem:[%s1 + $0x2c0] sm:$0xff]
      %v258 = vld [vmem:[%s1 + $0x2c8] sm:$0xff]
      %v259 = vld [vmem:[%s1 + $0x2d0] sm:$0xff]
      %v260 = vld [vmem:[%s1 + $0x2d8] sm:$0xff]
      %v261 = vld [vmem:[%s1 + $0x2e0] sm:$0xff]
      %v262 = vld [vmem:[%s1 + $0x2e8] sm:$0xff]
      %v263 = vld [vmem:[%s1 + $0x2f0] sm:$0xff]
      %v264 = vld [vmem:[%s1 + $0x2f8] sm:$0xff]
      %v265 = vld [vmem:[%s1 + $0x300] sm:$0xff]
      %v266 = vld [vmem:[%s1 + $0x308] sm:$0xff]
      %v267 = vld [vmem:[%s1 + $0x310] sm:$0xff]
      %v268 = vld [vmem:[%s1 + $0x318] sm:$0xff]
      %v269 = vld [vmem:[%s1 + $0x320] sm:$0xff]
      %v270 = vld [vmem:[%s1 + $0x328] sm:$0xff]
      %v271 = vld [vmem:[%s1 + $0x330] sm:$0xff]
      %v272 = vld [vmem:[%s1 + $0x338] sm:$0xff]
      %v273 = vld [vmem:[%s1 + $0x340] sm:$0xff]
      %v274 = vld [vmem:[%s1 + $0x348] sm:$0xff]
      %v275 = vld [vmem:[%s1 + $0x350] sm:$0xff]
      %v276 = vld [vmem:[%s1 + $0x358] sm:$0xff]
      %v277 = vld [vmem:[%s1 + $0x360] sm:$0xff]
      %v278 = vld [vmem:[%s1 + $0x368] sm:$0xff]
      %v279 = vld [vmem:[%s1 + $0x370] sm:$0xff]
      %v280 = vld [vmem:[%s1 + $0x378] sm:$0xff]
      %v281 = vld [vmem:[%s1 + $0x380] sm:$0xff]
      %v282 = vld [vmem:[%s1 + $0x388] sm:$0xff]
      %v283 = vld [vmem:[%s1 + $0x390] sm:$0xff]
      %v284 = vld [vmem:[%s1 + $0x398] sm:$0xff]
      %v285 = vld [vmem:[%s1 + $0x3a0] sm:$0xff]
      %v286 = vld [vmem:[%s1 + $0x3a8] sm:$0xff]
      %v287 = vld [vmem:[%s1 + $0x3b0] sm:$0xff]
      %v288 = vld [vmem:[%s1 + $0x3b8] sm:$0xff]
      %v289 = vld [vmem:[%s1 + $0x3c0] sm:$0xff]
      %v290 = vld [vmem:[%s1 + $0x3c8] sm:$0xff]
      %v291 = vld [vmem:[%s1 + $0x3d0] sm:$0xff]
      %v292 = vld [vmem:[%s1 + $0x3d8] sm:$0xff]
      %v293 = vld [vmem:[%s1 + $0x3e0] sm:$0xff]
      %v294 = vld [vmem:[%s1 + $0x3e8] sm:$0xff]
      %v295 = vld [vmem:[%s1 + $0x3f0] sm:$0xff]
      %v296 = vld [vmem:[%s1 + $0x3f8] sm:$0xff]
      %v297 = vld [vmem:[%s1 + $0x400] sm:$0xff]
      %v298 = vld [vmem:[%s1 + $0x408] sm:$0xff]
      %v299 = vld [vmem:[%s1 + $0x410] sm:$0xff]
      %v300 = vld [vmem:[%s1 + $0x418] sm:$0xff]
      %v301 = vld [vmem:[%s1 + $0x420] sm:$0xff]
      %v302 = vld [vmem:[%s1 + $0x428] sm:$0xff]
      %v303 = vld [vmem:[%s1 + $0x430] sm:$0xff]
      %v304 = vld [vmem:[%s1 + $0x438] sm:$0xff]
      %v305 = vld [vmem:[%s1 + $0x440] sm:$0xff]
      %v306 = vld [vmem:[%s1 + $0x448] sm:$0xff]
      %v307 = vld [vmem:[%s1 + $0x450] sm:$0xff]
      %v308 = vld [vmem:[%s1 + $0x458] sm:$0xff]
      %v309 = vld [vmem:[%s1 + $0x460] sm:$0xff]
      %v310 = vld [vmem:[%s1 + $0x468] sm:$0xff]
      %v311 = vld [vmem:[%s1 + $0x470] sm:$0xff]
      %v312 = vld [vmem:[%s1 + $0x478] sm:$0xff]
      %v313 = vld [vmem:[%s1 + $0x480] sm:$0xff]
      %v314 = vld [vmem:[%s1 + $0x488] sm:$0xff]
      %v315 = vld [vmem:[%s1 + $0x490] sm:$0xff]
      %v316 = vld [vmem:[%s1 + $0x498] sm:$0xff]
      %v317 = vld [vmem:[%s1 + $0x4a0] sm:$0xff]
      %v318 = vld [vmem:[%s1 + $0x4a8] sm:$0xff]
      %v319 = vld [vmem:[%s1 + $0x4b0] sm:$0xff]
      %v320 = vld [vmem:[%s1 + $0x4b8] sm:$0xff]
      %v321 = vld [vmem:[%s1 + $0x4c0] sm:$0xff]
      %v322 = vld [vmem:[%s1 + $0x4c8] sm:$0xff]
      %v323 = vld [vmem:[%s1 + $0x4d0] sm:$0xff]
      %v324 = vld [vmem:[%s1 + $0x4d8] sm:$0xff]
      %v325 = vld [vmem:[%s1 + $0x4e0] sm:$0xff]
      %v326 = vld [vmem:[%s1 + $0x4e8] sm:$0xff]
      %v327 = vld [vmem:[%s1 + $0x4f0] sm:$0xff]
      %v328 = vld [vmem:[%s1 + $0x4f8] sm:$0xff]
      %v329 = vld [vmem:[%s1 + $0x500] sm:$0xff]
      %v330 = vld [vmem:[%s1 + $0x508] sm:$0xff]
      %v331 = vld [vmem:[%s1 + $0x510] sm:$0xff]
      %v332 = vld [vmem:[%s1 + $0x518] sm:$0xff]
      %v333 = vld [vmem:[%s1 + $0x520] sm:$0xff]
      %v334 = vld [vmem:[%s1 + $0x528] sm:$0xff]
      %v335 = vld [vmem:[%s1 + $0x530] sm:$0xff]
      %v336 = vld [vmem:[%s1 + $0x538] sm:$0xff]
      %v337 = vld [vmem:[%s1 + $0x540] sm:$0xff]
      %v338 = vld [vmem:[%s1 + $0x548] sm:$0xff]
      %v339 = vld [vmem:[%s1 + $0x550] sm:$0xff]
      %v340 = vld [vmem:[%s1 + $0x558] sm:$0xff]
      %v341 = vld [vmem:[%s1 + $0x560] sm:$0xff]
      %v342 = vld [vmem:[%s1 + $0x568] sm:$0xff]
      %v343 = vld [vmem:[%s1 + $0x570] sm:$0xff]
      %v344 = vld [vmem:[%s1 + $0x578] sm:$0xff]
      %v345 = vld [vmem:[%s1 + $0x580] sm:$0xff]
      %v346 = vld [vmem:[%s1 + $0x588] sm:$0xff]
      %v347 = vld [vmem:[%s1 + $0x590] sm:$0xff]
      %v348 = vld [vmem:[%s1 + $0x598] sm:$0xff]
      %v349 = vld [vmem:[%s1 + $0x5a0] sm:$0xff]
      %v350 = vld [vmem:[%s1 + $0x5a8] sm:$0xff]
      %v351 = vld [vmem:[%s1 + $0x5b0] sm:$0xff]
      %v352 = vld [vmem:[%s1 + $0x5b8] sm:$0xff]
      %v353 = vld [vmem:[%s1 + $0x5c0] sm:$0xff]
      %v354 = vld [vmem:[%s1 + $0x5c8] sm:$0xff]
      %v355 = vld [vmem:[%s1 + $0x5d0] sm:$0xff]
      %v356 = vld [vmem:[%s1 + $0x5d8] sm:$0xff]
      %v357 = vld [vmem:[%s1 + $0x5e0] sm:$0xff]
      %v358 = vld [vmem:[%s1 + $0x5e8] sm:$0xff]
      %v359 = vld [vmem:[%s1 + $0x5f0] sm:$0xff]
      %v360 = vld [vmem:[%s1 + $0x5f8] sm:$0xff]
      %v361 = vld [vmem:[%s1 + $0x600] sm:$0xff]
      %v362 = vld [vmem:[%s1 + $0x608] sm:$0xff]
      %v363 = vld [vmem:[%s1 + $0x610] sm:$0xff]
      %v364 = vld [vmem:[%s1 + $0x618] sm:$0xff]
      %v365 = vld [vmem:[%s1 + $0x620] sm:$0xff]
      %v366 = vld [vmem:[%s1 + $0x628] sm:$0xff]
      %v367 = vld [vmem:[%s1 + $0x630] sm:$0xff]
      %v368 = vld [vmem:[%s1 + $0x638] sm:$0xff]
      %v369 = vld [vmem:[%s2] sm:$0x1]
      %v370 = vld [vmem:[%s164] sm:$0xff]
      %v371 = vld [vmem:[%s164 + $0x8] sm:$0xff]
      %v372 = vld [vmem:[%s164 + $0x10] sm:$0xff]
      %v373 = vld [vmem:[%s164 + $0x18] sm:$0xff]
      %v374 = vld [vmem:[%s164 + $0x20] sm:$0xff]
      %v375 = vld [vmem:[%s164 + $0x28] sm:$0xff]
      %v376 = vld [vmem:[%s164 + $0x30] sm:$0xf]
      %v378 = vlaneseq
      %v379 = vshrl.u32 %v378, 7
      %v380 = vsub.s32 0, %v379
      %v381 = vrot.slane %v369, %v380
      %v390 = vcombine.high %v370, %v370
      %v391 = vcombine.high %v371, %v371
      %v392 = vcombine.high %v372, %v372
      %v393 = vcombine.high %v373, %v373
      %v394 = vcombine.high %v374, %v374
      %v395 = vcombine.high %v375, %v375
      %vm402 = vcmask 523264
      %v403 = vsel %vm402, %v376, 0
      %405 = vmatprep.subr.mxu0 0.0
      %406 = vmatpush1.msra.mxu0 %v184
      %407 = vmatprep.subr.mxu0 0.0
      %408 = vmatpush1.msra.mxu0 %v183
      %409 = vmatprep.subr.mxu0 0.0
      %410 = vmatpush1.msra.mxu0 %v182
      %411 = vmatprep.subr.mxu0 0.0
      %412 = vmatpush1.msra.mxu0 %v181
      %413 = vmatprep.subr.mxu0 0.0
      %414 = vmatpush1.msra.mxu0 %v180
      %415 = vmatprep.subr.mxu0 0.0
      %416 = vmatpush1.msra.mxu0 %v179
      %417 = vmatprep.subr.mxu0 0.0
      %418 = vmatpush1.msra.mxu0 %v178
      %419 = vmatprep.subr.mxu0 0.0
      %420 = vmatpush1.msra.mxu0 %v177
      %421 = vmatprep.subr.mxu0 0.0
      %422 = vmatpush1.msra.mxu0 %v176
      %423 = vmatprep.subr.mxu0 0.0
      %424 = vmatpush1.msra.mxu0 %v175
      %425 = vmatprep.subr.mxu0 0.0
      %426 = vmatpush1.msra.mxu0 %v174
      %427 = vmatprep.subr.mxu0 0.0
      %428 = vmatpush1.msra.mxu0 %v173
      %429 = vmatprep.subr.mxu0 0.0
      %430 = vmatpush1.msra.mxu0 %v172
      %431 = vmatprep.subr.mxu0 0.0
      %432 = vmatpush1.msra.mxu0 %v171
      %433 = vmatprep.subr.mxu0 0.0
      %434 = vmatpush1.msra.mxu0 %v170
      %435 = vmatprep.subr.mxu0 0.0
      %436 = vmatpush1.msra.mxu0 %v169
      %437 = vmatprep.subr.mxu0 0.0
      %438 = vmatpush2.msra.mxu0 %v200
      %439 = vmatprep.subr.mxu0 0.0
      %440 = vmatpush2.msra.mxu0 %v199
      %441 = vmatprep.subr.mxu0 0.0
      %442 = vmatpush2.msra.mxu0 %v198
      %443 = vmatprep.subr.mxu0 0.0
      %444 = vmatpush2.msra.mxu0 %v197
      %445 = vmatprep.subr.mxu0 0.0
      %446 = vmatpush2.msra.mxu0 %v196
      %447 = vmatprep.subr.mxu0 0.0
      %448 = vmatpush2.msra.mxu0 %v195
      %449 = vmatprep.subr.mxu0 0.0
      %450 = vmatpush2.msra.mxu0 %v194
      %451 = vmatprep.subr.mxu0 0.0
      %452 = vmatpush2.msra.mxu0 %v193
      %453 = vmatprep.subr.mxu0 0.0
      %454 = vmatpush2.msra.mxu0 %v192
      %455 = vmatprep.subr.mxu0 0.0
      %456 = vmatpush2.msra.mxu0 %v191
      %457 = vmatprep.subr.mxu0 0.0
      %458 = vmatpush2.msra.mxu0 %v190
      %459 = vmatprep.subr.mxu0 0.0
      %460 = vmatpush2.msra.mxu0 %v189
      %461 = vmatprep.subr.mxu0 0.0
      %462 = vmatpush2.msra.mxu0 %v188
      %463 = vmatprep.subr.mxu0 0.0
      %464 = vmatpush2.msra.mxu0 %v187
      %465 = vmatprep.subr.mxu0 0.0
      %466 = vmatpush2.msra.mxu0 %v186
      %467 = vmatprep.subr.mxu0 0.0
      %468 = vmatpush2.msra.mxu0 %v185
      %469 = vmatprep.mubr.f32.mxu0 %v390
      %470 = vmatmul.mubr.f32.gmra.mxu0 %v370
      %v471 = vpop.f32.mrf.mxu0
      %v472 = vadd.f32 %v381, %v471
      %v473 = vpop.f32.mrf.mxu0
      %474 = vdwg.mxu0
      %475 = vmatprep.subr.mxu0 0.0
      %476 = vmatpush1.msra.mxu0 %v216
      %477 = vmatprep.subr.mxu0 0.0
      %478 = vmatpush1.msra.mxu0 %v215
      %479 = vmatprep.subr.mxu0 0.0
      %480 = vmatpush1.msra.mxu0 %v214
      %481 = vmatprep.subr.mxu0 0.0
      %482 = vmatpush1.msra.mxu0 %v213
      %483 = vmatprep.subr.mxu0 0.0
      %484 = vmatpush1.msra.mxu0 %v212
      %485 = vmatprep.subr.mxu0 0.0
      %486 = vmatpush1.msra.mxu0 %v211
      %487 = vmatprep.subr.mxu0 0.0
      %488 = vmatpush1.msra.mxu0 %v210
      %489 = vmatprep.subr.mxu0 0.0
      %490 = vmatpush1.msra.mxu0 %v209
      %491 = vmatprep.subr.mxu0 0.0
      %492 = vmatpush1.msra.mxu0 %v208
      %493 = vmatprep.subr.mxu0 0.0
      %494 = vmatpush1.msra.mxu0 %v207
      %495 = vmatprep.subr.mxu0 0.0
      %496 = vmatpush1.msra.mxu0 %v206
      %497 = vmatprep.subr.mxu0 0.0
      %498 = vmatpush1.msra.mxu0 %v205
      %499 = vmatprep.subr.mxu0 0.0
      %500 = vmatpush1.msra.mxu0 %v204
      %501 = vmatprep.subr.mxu0 0.0
      %502 = vmatpush1.msra.mxu0 %v203
      %503 = vmatprep.subr.mxu0 0.0
      %504 = vmatpush1.msra.mxu0 %v202
      %505 = vmatprep.subr.mxu0 0.0
      %506 = vmatpush1.msra.mxu0 %v201
      %507 = vmatprep.subr.mxu0 0.0
      %508 = vmatpush2.msra.mxu0 %v232
      %509 = vmatprep.subr.mxu0 0.0
      %510 = vmatpush2.msra.mxu0 %v231
      %511 = vmatprep.subr.mxu0 0.0
      %512 = vmatpush2.msra.mxu0 %v230
      %513 = vmatprep.subr.mxu0 0.0
      %514 = vmatpush2.msra.mxu0 %v229
      %515 = vmatprep.subr.mxu0 0.0
      %516 = vmatpush2.msra.mxu0 %v228
      %517 = vmatprep.subr.mxu0 0.0
      %518 = vmatpush2.msra.mxu0 %v227
      %519 = vmatprep.subr.mxu0 0.0
      %520 = vmatpush2.msra.mxu0 %v226
      %521 = vmatprep.subr.mxu0 0.0
      %522 = vmatpush2.msra.mxu0 %v225
      %523 = vmatprep.subr.mxu0 0.0
      %524 = vmatpush2.msra.mxu0 %v224
      %525 = vmatprep.subr.mxu0 0.0
      %526 = vmatpush2.msra.mxu0 %v223
      %527 = vmatprep.subr.mxu0 0.0
      %528 = vmatpush2.msra.mxu0 %v222
      %529 = vmatprep.subr.mxu0 0.0
      %530 = vmatpush2.msra.mxu0 %v221
      %531 = vmatprep.subr.mxu0 0.0
      %532 = vmatpush2.msra.mxu0 %v220
      %533 = vmatprep.subr.mxu0 0.0
      %534 = vmatpush2.msra.mxu0 %v219
      %535 = vmatprep.subr.mxu0 0.0
      %536 = vmatpush2.msra.mxu0 %v218
      %537 = vmatprep.subr.mxu0 0.0
      %538 = vmatpush2.msra.mxu0 %v217
      %539 = vmatprep.mubr.f32.mxu0 %v391
      %540 = vmatmul.mubr.f32.gmra.mxu0 %v371
      %v541 = vpop.f32.mrf.mxu0
      %v542 = vadd.f32 %v472, %v541
      %v543 = vpop.f32.mrf.mxu0
      %544 = vdwg.mxu0
      %545 = vmatprep.subr.mxu0 0.0
      %546 = vmatpush1.msra.mxu0 %v248
      %547 = vmatprep.subr.mxu0 0.0
      %548 = vmatpush1.msra.mxu0 %v247
      %549 = vmatprep.subr.mxu0 0.0
      %550 = vmatpush1.msra.mxu0 %v246
      %551 = vmatprep.subr.mxu0 0.0
      %552 = vmatpush1.msra.mxu0 %v245
      %553 = vmatprep.subr.mxu0 0.0
      %554 = vmatpush1.msra.mxu0 %v244
      %555 = vmatprep.subr.mxu0 0.0
      %556 = vmatpush1.msra.mxu0 %v243
      %557 = vmatprep.subr.mxu0 0.0
      %558 = vmatpush1.msra.mxu0 %v242
      %559 = vmatprep.subr.mxu0 0.0
      %560 = vmatpush1.msra.mxu0 %v241
      %561 = vmatprep.subr.mxu0 0.0
      %562 = vmatpush1.msra.mxu0 %v240
      %563 = vmatprep.subr.mxu0 0.0
      %564 = vmatpush1.msra.mxu0 %v239
      %565 = vmatprep.subr.mxu0 0.0
      %566 = vmatpush1.msra.mxu0 %v238
      %567 = vmatprep.subr.mxu0 0.0
      %568 = vmatpush1.msra.mxu0 %v237
      %569 = vmatprep.subr.mxu0 0.0
      %570 = vmatpush1.msra.mxu0 %v236
      %571 = vmatprep.subr.mxu0 0.0
      %572 = vmatpush1.msra.mxu0 %v235
      %573 = vmatprep.subr.mxu0 0.0
      %574 = vmatpush1.msra.mxu0 %v234
      %575 = vmatprep.subr.mxu0 0.0
      %576 = vmatpush1.msra.mxu0 %v233
      %577 = vmatprep.subr.mxu0 0.0
      %578 = vmatpush2.msra.mxu0 %v264
      %579 = vmatprep.subr.mxu0 0.0
      %580 = vmatpush2.msra.mxu0 %v263
      %581 = vmatprep.subr.mxu0 0.0
      %582 = vmatpush2.msra.mxu0 %v262
      %583 = vmatprep.subr.mxu0 0.0
      %584 = vmatpush2.msra.mxu0 %v261
      %585 = vmatprep.subr.mxu0 0.0
      %586 = vmatpush2.msra.mxu0 %v260
      %587 = vmatprep.subr.mxu0 0.0
      %588 = vmatpush2.msra.mxu0 %v259
      %589 = vmatprep.subr.mxu0 0.0
      %590 = vmatpush2.msra.mxu0 %v258
      %591 = vmatprep.subr.mxu0 0.0
      %592 = vmatpush2.msra.mxu0 %v257
      %593 = vmatprep.subr.mxu0 0.0
      %594 = vmatpush2.msra.mxu0 %v256
      %595 = vmatprep.subr.mxu0 0.0
      %596 = vmatpush2.msra.mxu0 %v255
      %597 = vmatprep.subr.mxu0 0.0
      %598 = vmatpush2.msra.mxu0 %v254
      %599 = vmatprep.subr.mxu0 0.0
      %600 = vmatpush2.msra.mxu0 %v253
      %601 = vmatprep.subr.mxu0 0.0
      %602 = vmatpush2.msra.mxu0 %v252
      %603 = vmatprep.subr.mxu0 0.0
      %604 = vmatpush2.msra.mxu0 %v251
      %605 = vmatprep.subr.mxu0 0.0
      %606 = vmatpush2.msra.mxu0 %v250
      %607 = vmatprep.subr.mxu0 0.0
      %608 = vmatpush2.msra.mxu0 %v249
      %609 = vmatprep.mubr.f32.mxu0 %v392
      %610 = vmatmul.mubr.f32.gmra.mxu0 %v372
      %v611 = vpop.f32.mrf.mxu0
      %v612 = vadd.f32 %v542, %v611
      %v613 = vpop.f32.mrf.mxu0
      %614 = vdwg.mxu0
      %615 = vmatprep.subr.mxu0 0.0
      %616 = vmatpush1.msra.mxu0 %v280
      %617 = vmatprep.subr.mxu0 0.0
      %618 = vmatpush1.msra.mxu0 %v279
      %619 = vmatprep.subr.mxu0 0.0
      %620 = vmatpush1.msra.mxu0 %v278
      %621 = vmatprep.subr.mxu0 0.0
      %622 = vmatpush1.msra.mxu0 %v277
      %623 = vmatprep.subr.mxu0 0.0
      %624 = vmatpush1.msra.mxu0 %v276
      %625 = vmatprep.subr.mxu0 0.0
      %626 = vmatpush1.msra.mxu0 %v275
      %627 = vmatprep.subr.mxu0 0.0
      %628 = vmatpush1.msra.mxu0 %v274
      %629 = vmatprep.subr.mxu0 0.0
      %630 = vmatpush1.msra.mxu0 %v273
      %631 = vmatprep.subr.mxu0 0.0
      %632 = vmatpush1.msra.mxu0 %v272
      %633 = vmatprep.subr.mxu0 0.0
      %634 = vmatpush1.msra.mxu0 %v271
      %635 = vmatprep.subr.mxu0 0.0
      %636 = vmatpush1.msra.mxu0 %v270
      %637 = vmatprep.subr.mxu0 0.0
      %638 = vmatpush1.msra.mxu0 %v269
      %639 = vmatprep.subr.mxu0 0.0
      %640 = vmatpush1.msra.mxu0 %v268
      %641 = vmatprep.subr.mxu0 0.0
      %642 = vmatpush1.msra.mxu0 %v267
      %643 = vmatprep.subr.mxu0 0.0
      %644 = vmatpush1.msra.mxu0 %v266
      %645 = vmatprep.subr.mxu0 0.0
      %646 = vmatpush1.msra.mxu0 %v265
      %647 = vmatprep.subr.mxu0 0.0
      %648 = vmatpush2.msra.mxu0 %v296
      %649 = vmatprep.subr.mxu0 0.0
      %650 = vmatpush2.msra.mxu0 %v295
      %651 = vmatprep.subr.mxu0 0.0
      %652 = vmatpush2.msra.mxu0 %v294
      %653 = vmatprep.subr.mxu0 0.0
      %654 = vmatpush2.msra.mxu0 %v293
      %655 = vmatprep.subr.mxu0 0.0
      %656 = vmatpush2.msra.mxu0 %v292
      %657 = vmatprep.subr.mxu0 0.0
      %658 = vmatpush2.msra.mxu0 %v291
      %659 = vmatprep.subr.mxu0 0.0
      %660 = vmatpush2.msra.mxu0 %v290
      %661 = vmatprep.subr.mxu0 0.0
      %662 = vmatpush2.msra.mxu0 %v289
      %663 = vmatprep.subr.mxu0 0.0
      %664 = vmatpush2.msra.mxu0 %v288
      %665 = vmatprep.subr.mxu0 0.0
      %666 = vmatpush2.msra.mxu0 %v287
      %667 = vmatprep.subr.mxu0 0.0
      %668 = vmatpush2.msra.mxu0 %v286
      %669 = vmatprep.subr.mxu0 0.0
      %670 = vmatpush2.msra.mxu0 %v285
      %671 = vmatprep.subr.mxu0 0.0
      %672 = vmatpush2.msra.mxu0 %v284
      %673 = vmatprep.subr.mxu0 0.0
      %674 = vmatpush2.msra.mxu0 %v283
      %675 = vmatprep.subr.mxu0 0.0
      %676 = vmatpush2.msra.mxu0 %v282
      %677 = vmatprep.subr.mxu0 0.0
      %678 = vmatpush2.msra.mxu0 %v281
      %679 = vmatprep.mubr.f32.mxu0 %v393
      %680 = vmatmul.mubr.f32.gmra.mxu0 %v373
      %v681 = vpop.f32.mrf.mxu0
      %v682 = vadd.f32 %v612, %v681
      %v683 = vpop.f32.mrf.mxu0
      %684 = vdwg.mxu0
      %685 = vmatprep.subr.mxu0 0.0
      %686 = vmatpush1.msra.mxu0 %v312
      %687 = vmatprep.subr.mxu0 0.0
      %688 = vmatpush1.msra.mxu0 %v311
      %689 = vmatprep.subr.mxu0 0.0
      %690 = vmatpush1.msra.mxu0 %v310
      %691 = vmatprep.subr.mxu0 0.0
      %692 = vmatpush1.msra.mxu0 %v309
      %693 = vmatprep.subr.mxu0 0.0
      %694 = vmatpush1.msra.mxu0 %v308
      %695 = vmatprep.subr.mxu0 0.0
      %696 = vmatpush1.msra.mxu0 %v307
      %697 = vmatprep.subr.mxu0 0.0
      %698 = vmatpush1.msra.mxu0 %v306
      %699 = vmatprep.subr.mxu0 0.0
      %700 = vmatpush1.msra.mxu0 %v305
      %701 = vmatprep.subr.mxu0 0.0
      %702 = vmatpush1.msra.mxu0 %v304
      %703 = vmatprep.subr.mxu0 0.0
      %704 = vmatpush1.msra.mxu0 %v303
      %705 = vmatprep.subr.mxu0 0.0
      %706 = vmatpush1.msra.mxu0 %v302
      %707 = vmatprep.subr.mxu0 0.0
      %708 = vmatpush1.msra.mxu0 %v301
      %709 = vmatprep.subr.mxu0 0.0
      %710 = vmatpush1.msra.mxu0 %v300
      %711 = vmatprep.subr.mxu0 0.0
      %712 = vmatpush1.msra.mxu0 %v299
      %713 = vmatprep.subr.mxu0 0.0
      %714 = vmatpush1.msra.mxu0 %v298
      %715 = vmatprep.subr.mxu0 0.0
      %716 = vmatpush1.msra.mxu0 %v297
      %717 = vmatprep.subr.mxu0 0.0
      %718 = vmatpush2.msra.mxu0 %v328
      %719 = vmatprep.subr.mxu0 0.0
      %720 = vmatpush2.msra.mxu0 %v327
      %721 = vmatprep.subr.mxu0 0.0
      %722 = vmatpush2.msra.mxu0 %v326
      %723 = vmatprep.subr.mxu0 0.0
      %724 = vmatpush2.msra.mxu0 %v325
      %725 = vmatprep.subr.mxu0 0.0
      %726 = vmatpush2.msra.mxu0 %v324
      %727 = vmatprep.subr.mxu0 0.0
      %728 = vmatpush2.msra.mxu0 %v323
      %729 = vmatprep.subr.mxu0 0.0
      %730 = vmatpush2.msra.mxu0 %v322
      %731 = vmatprep.subr.mxu0 0.0
      %732 = vmatpush2.msra.mxu0 %v321
      %733 = vmatprep.subr.mxu0 0.0
      %734 = vmatpush2.msra.mxu0 %v320
      %735 = vmatprep.subr.mxu0 0.0
      %736 = vmatpush2.msra.mxu0 %v319
      %737 = vmatprep.subr.mxu0 0.0
      %738 = vmatpush2.msra.mxu0 %v318
      %739 = vmatprep.subr.mxu0 0.0
      %740 = vmatpush2.msra.mxu0 %v317
      %741 = vmatprep.subr.mxu0 0.0
      %742 = vmatpush2.msra.mxu0 %v316
      %743 = vmatprep.subr.mxu0 0.0
      %744 = vmatpush2.msra.mxu0 %v315
      %745 = vmatprep.subr.mxu0 0.0
      %746 = vmatpush2.msra.mxu0 %v314
      %747 = vmatprep.subr.mxu0 0.0
      %748 = vmatpush2.msra.mxu0 %v313
      %749 = vmatprep.mubr.f32.mxu0 %v394
      %750 = vmatmul.mubr.f32.gmra.mxu0 %v374
      %v751 = vpop.f32.mrf.mxu0
      %v752 = vadd.f32 %v682, %v751
      %v753 = vpop.f32.mrf.mxu0
      %754 = vdwg.mxu0
      %755 = vmatprep.subr.mxu0 0.0
      %756 = vmatpush1.msra.mxu0 %v344
      %757 = vmatprep.subr.mxu0 0.0
      %758 = vmatpush1.msra.mxu0 %v343
      %759 = vmatprep.subr.mxu0 0.0
      %760 = vmatpush1.msra.mxu0 %v342
      %761 = vmatprep.subr.mxu0 0.0
      %762 = vmatpush1.msra.mxu0 %v341
      %763 = vmatprep.subr.mxu0 0.0
      %764 = vmatpush1.msra.mxu0 %v340
      %765 = vmatprep.subr.mxu0 0.0
      %766 = vmatpush1.msra.mxu0 %v339
      %767 = vmatprep.subr.mxu0 0.0
      %768 = vmatpush1.msra.mxu0 %v338
      %769 = vmatprep.subr.mxu0 0.0
      %770 = vmatpush1.msra.mxu0 %v337
      %771 = vmatprep.subr.mxu0 0.0
      %772 = vmatpush1.msra.mxu0 %v336
      %773 = vmatprep.subr.mxu0 0.0
      %774 = vmatpush1.msra.mxu0 %v335
      %775 = vmatprep.subr.mxu0 0.0
      %776 = vmatpush1.msra.mxu0 %v334
      %777 = vmatprep.subr.mxu0 0.0
      %778 = vmatpush1.msra.mxu0 %v333
      %779 = vmatprep.subr.mxu0 0.0
      %780 = vmatpush1.msra.mxu0 %v332
      %781 = vmatprep.subr.mxu0 0.0
      %782 = vmatpush1.msra.mxu0 %v331
      %783 = vmatprep.subr.mxu0 0.0
      %784 = vmatpush1.msra.mxu0 %v330
      %785 = vmatprep.subr.mxu0 0.0
      %786 = vmatpush1.msra.mxu0 %v329
      %787 = vmatprep.subr.mxu0 0.0
      %788 = vmatpush2.msra.mxu0 %v360
      %789 = vmatprep.subr.mxu0 0.0
      %790 = vmatpush2.msra.mxu0 %v359
      %791 = vmatprep.subr.mxu0 0.0
      %792 = vmatpush2.msra.mxu0 %v358
      %793 = vmatprep.subr.mxu0 0.0
      %794 = vmatpush2.msra.mxu0 %v357
      %795 = vmatprep.subr.mxu0 0.0
      %796 = vmatpush2.msra.mxu0 %v356
      %797 = vmatprep.subr.mxu0 0.0
      %798 = vmatpush2.msra.mxu0 %v355
      %799 = vmatprep.subr.mxu0 0.0
      %800 = vmatpush2.msra.mxu0 %v354
      %801 = vmatprep.subr.mxu0 0.0
      %802 = vmatpush2.msra.mxu0 %v353
      %803 = vmatprep.subr.mxu0 0.0
      %804 = vmatpush2.msra.mxu0 %v352
      %805 = vmatprep.subr.mxu0 0.0
      %806 = vmatpush2.msra.mxu0 %v351
      %807 = vmatprep.subr.mxu0 0.0
      %808 = vmatpush2.msra.mxu0 %v350
      %809 = vmatprep.subr.mxu0 0.0
      %810 = vmatpush2.msra.mxu0 %v349
      %811 = vmatprep.subr.mxu0 0.0
      %812 = vmatpush2.msra.mxu0 %v348
      %813 = vmatprep.subr.mxu0 0.0
      %814 = vmatpush2.msra.mxu0 %v347
      %815 = vmatprep.subr.mxu0 0.0
      %816 = vmatpush2.msra.mxu0 %v346
      %817 = vmatprep.subr.mxu0 0.0
      %818 = vmatpush2.msra.mxu0 %v345
      %819 = vmatprep.mubr.f32.mxu0 %v395
      %820 = vmatmul.mubr.f32.gmra.mxu0 %v375
      %v821 = vpop.f32.mrf.mxu0
      %v822 = vadd.f32 %v752, %v821
      %v823 = vpop.f32.mrf.mxu0
      %824 = vdwg.mxu0
      %825 = vmatprep.subr.mxu0 0.0
      %826 = vmatpush1.msra.mxu0 0.0
      %827 = vmatprep.subr.mxu0 0.0
      %828 = vmatpush1.msra.mxu0 0.0
      %829 = vmatprep.subr.mxu0 0.0
      %830 = vmatpush1.msra.mxu0 0.0
      %831 = vmatprep.subr.mxu0 0.0
      %832 = vmatpush1.msra.mxu0 0.0
      %833 = vmatprep.subr.mxu0 0.0
      %834 = vmatpush1.msra.mxu0 0.0
      %835 = vmatprep.subr.mxu0 0.0
      %836 = vmatpush1.msra.mxu0 0.0
      %837 = vmatprep.subr.mxu0 0.0
      %838 = vmatpush1.msra.mxu0 0.0
      %839 = vmatprep.subr.mxu0 0.0
      %840 = vmatpush1.msra.mxu0 0.0
      %841 = vmatprep.subr.mxu0 0.0
      %842 = vmatpush1.msra.mxu0 %v368
      %843 = vmatprep.subr.mxu0 0.0
      %844 = vmatpush1.msra.mxu0 %v367
      %845 = vmatprep.subr.mxu0 0.0
      %846 = vmatpush1.msra.mxu0 %v366
      %847 = vmatprep.subr.mxu0 0.0
      %848 = vmatpush1.msra.mxu0 %v365
      %849 = vmatprep.subr.mxu0 0.0
      %850 = vmatpush1.msra.mxu0 %v364
      %851 = vmatprep.subr.mxu0 0.0
      %852 = vmatpush1.msra.mxu0 %v363
      %853 = vmatprep.subr.mxu0 0.0
      %854 = vmatpush1.msra.mxu0 %v362
      %855 = vmatprep.subr.mxu0 0.0
      %856 = vmatpush1.msra.mxu0 %v361
      %857 = vmatprep.subr.mxu0 0.0
      %858 = vmatpush2.msra.mxu0 0.0
      %859 = vmatprep.subr.mxu0 0.0
      %860 = vmatpush2.msra.mxu0 0.0
      %861 = vmatprep.subr.mxu0 0.0
      %862 = vmatpush2.msra.mxu0 0.0
      %863 = vmatprep.subr.mxu0 0.0
      %864 = vmatpush2.msra.mxu0 0.0
      %865 = vmatprep.subr.mxu0 0.0
      %866 = vmatpush2.msra.mxu0 0.0
      %867 = vmatprep.subr.mxu0 0.0
      %868 = vmatpush2.msra.mxu0 0.0
      %869 = vmatprep.subr.mxu0 0.0
      %870 = vmatpush2.msra.mxu0 0.0
      %871 = vmatprep.subr.mxu0 0.0
      %872 = vmatpush2.msra.mxu0 0.0
      %873 = vmatprep.subr.mxu0 0.0
      %874 = vmatpush2.msra.mxu0 0.0
      %875 = vmatprep.subr.mxu0 0.0
      %876 = vmatpush2.msra.mxu0 0.0
      %877 = vmatprep.subr.mxu0 0.0
      %878 = vmatpush2.msra.mxu0 0.0
      %879 = vmatprep.subr.mxu0 0.0
      %880 = vmatpush2.msra.mxu0 0.0
      %881 = vmatprep.subr.mxu0 0.0
      %882 = vmatpush2.msra.mxu0 0.0
      %883 = vmatprep.subr.mxu0 0.0
      %884 = vmatpush2.msra.mxu0 0.0
      %885 = vmatprep.subr.mxu0 0.0
      %886 = vmatpush2.msra.mxu0 0.0
      %887 = vmatprep.subr.mxu0 0.0
      %888 = vmatpush2.msra.mxu0 0.0
      %889 = vmatprep.mubr.f32.mxu0 0.0
      %890 = vmatmul.mubr.f32.gmra.mxu0 %v403
      %v891 = vpop.f32.mrf.mxu0
      %v892 = vadd.f32 %v822, %v891
      %v893 = vpop.f32.mrf.mxu0
      %894 = vdwg.mxu0
      %vm895 = vcmp.gt.f32.partialorder %v892, 0.0
      %v896 = vmul.f32 %v892, 0.2
      %v897 = vsel %vm895, %v892, %v896
      %s898 = scalar_lea.vmem %s164, 52
      %v899 = vld [vmem:[%s898] sm:$0xff]
      %v900 = vld [vmem:[%s898 + $0x8] sm:$0xff]
      %v901 = vld [vmem:[%s898 + $0x10] sm:$0xff]
      %v902 = vld [vmem:[%s898 + $0x18] sm:$0xff]
      %v903 = vld [vmem:[%s898 + $0x20] sm:$0xff]
      %v904 = vld [vmem:[%s898 + $0x28] sm:$0xff]
      %v905 = vld [vmem:[%s898 + $0x30] sm:$0xf]
      %v913 = vcombine.high %v899, %v899
      %v914 = vcombine.high %v900, %v900
      %v915 = vcombine.high %v901, %v901
      %v916 = vcombine.high %v902, %v902
      %v917 = vcombine.high %v903, %v903
      %v918 = vcombine.high %v904, %v904
      %v925 = vsel %vm402, %v905, 0
      %927 = vmatprep.subr.mxu0 0.0
      %928 = vmatpush1.msra.mxu0 %v184
      %929 = vmatprep.subr.mxu0 0.0
      %930 = vmatpush1.msra.mxu0 %v183
      %931 = vmatprep.subr.mxu0 0.0
      %932 = vmatpush1.msra.mxu0 %v182
      %933 = vmatprep.subr.mxu0 0.0
      %934 = vmatpush1.msra.mxu0 %v181
      %935 = vmatprep.subr.mxu0 0.0
      %936 = vmatpush1.msra.mxu0 %v180
      %937 = vmatprep.subr.mxu0 0.0
      %938 = vmatpush1.msra.mxu0 %v179
      %939 = vmatprep.subr.mxu0 0.0
      %940 = vmatpush1.msra.mxu0 %v178
      %941 = vmatprep.subr.mxu0 0.0
      %942 = vmatpush1.msra.mxu0 %v177
      %943 = vmatprep.subr.mxu0 0.0
      %944 = vmatpush1.msra.mxu0 %v176
      %945 = vmatprep.subr.mxu0 0.0
      %946 = vmatpush1.msra.mxu0 %v175
      %947 = vmatprep.subr.mxu0 0.0
      %948 = vmatpush1.msra.mxu0 %v174
      %949 = vmatprep.subr.mxu0 0.0
      %950 = vmatpush1.msra.mxu0 %v173
      %951 = vmatprep.subr.mxu0 0.0
      %952 = vmatpush1.msra.mxu0 %v172
      %953 = vmatprep.subr.mxu0 0.0
      %954 = vmatpush1.msra.mxu0 %v171
      %955 = vmatprep.subr.mxu0 0.0
      %956 = vmatpush1.msra.mxu0 %v170
      %957 = vmatprep.subr.mxu0 0.0
      %958 = vmatpush1.msra.mxu0 %v169
      %959 = vmatprep.subr.mxu0 0.0
      %960 = vmatpush2.msra.mxu0 %v200
      %961 = vmatprep.subr.mxu0 0.0
      %962 = vmatpush2.msra.mxu0 %v199
      %963 = vmatprep.subr.mxu0 0.0
      %964 = vmatpush2.msra.mxu0 %v198
      %965 = vmatprep.subr.mxu0 0.0
      %966 = vmatpush2.msra.mxu0 %v197
      %967 = vmatprep.subr.mxu0 0.0
      %968 = vmatpush2.msra.mxu0 %v196
      %969 = vmatprep.subr.mxu0 0.0
      %970 = vmatpush2.msra.mxu0 %v195
      %971 = vmatprep.subr.mxu0 0.0
      %972 = vmatpush2.msra.mxu0 %v194
      %973 = vmatprep.subr.mxu0 0.0
      %974 = vmatpush2.msra.mxu0 %v193
      %975 = vmatprep.subr.mxu0 0.0
      %976 = vmatpush2.msra.mxu0 %v192
      %977 = vmatprep.subr.mxu0 0.0
      %978 = vmatpush2.msra.mxu0 %v191
      %979 = vmatprep.subr.mxu0 0.0
      %980 = vmatpush2.msra.mxu0 %v190
      %981 = vmatprep.subr.mxu0 0.0
      %982 = vmatpush2.msra.mxu0 %v189
      %983 = vmatprep.subr.mxu0 0.0
      %984 = vmatpush2.msra.mxu0 %v188
      %985 = vmatprep.subr.mxu0 0.0
      %986 = vmatpush2.msra.mxu0 %v187
      %987 = vmatprep.subr.mxu0 0.0
      %988 = vmatpush2.msra.mxu0 %v186
      %989 = vmatprep.subr.mxu0 0.0
      %990 = vmatpush2.msra.mxu0 %v185
      %991 = vmatprep.mubr.f32.mxu0 %v913
      %992 = vmatmul.mubr.f32.gmra.mxu0 %v899
      %v993 = vpop.f32.mrf.mxu0
      %v994 = vadd.f32 %v381, %v993
      %v995 = vpop.f32.mrf.mxu0
      %996 = vdwg.mxu0
      %997 = vmatprep.subr.mxu0 0.0
      %998 = vmatpush1.msra.mxu0 %v216
      %999 = vmatprep.subr.mxu0 0.0
      %1000 = vmatpush1.msra.mxu0 %v215
      %1001 = vmatprep.subr.mxu0 0.0
      %1002 = vmatpush1.msra.mxu0 %v214
      %1003 = vmatprep.subr.mxu0 0.0
      %1004 = vmatpush1.msra.mxu0 %v213
      %1005 = vmatprep.subr.mxu0 0.0
      %1006 = vmatpush1.msra.mxu0 %v212
      %1007 = vmatprep.subr.mxu0 0.0
      %1008 = vmatpush1.msra.mxu0 %v211
      %1009 = vmatprep.subr.mxu0 0.0
      %1010 = vmatpush1.msra.mxu0 %v210
      %1011 = vmatprep.subr.mxu0 0.0
      %1012 = vmatpush1.msra.mxu0 %v209
      %1013 = vmatprep.subr.mxu0 0.0
      %1014 = vmatpush1.msra.mxu0 %v208
      %1015 = vmatprep.subr.mxu0 0.0
      %1016 = vmatpush1.msra.mxu0 %v207
      %1017 = vmatprep.subr.mxu0 0.0
      %1018 = vmatpush1.msra.mxu0 %v206
      %1019 = vmatprep.subr.mxu0 0.0
      %1020 = vmatpush1.msra.mxu0 %v205
      %1021 = vmatprep.subr.mxu0 0.0
      %1022 = vmatpush1.msra.mxu0 %v204
      %1023 = vmatprep.subr.mxu0 0.0
      %1024 = vmatpush1.msra.mxu0 %v203
      %1025 = vmatprep.subr.mxu0 0.0
      %1026 = vmatpush1.msra.mxu0 %v202
      %1027 = vmatprep.subr.mxu0 0.0
      %1028 = vmatpush1.msra.mxu0 %v201
      %1029 = vmatprep.subr.mxu0 0.0
      %1030 = vmatpush2.msra.mxu0 %v232
      %1031 = vmatprep.subr.mxu0 0.0
      %1032 = vmatpush2.msra.mxu0 %v231
      %1033 = vmatprep.subr.mxu0 0.0
      %1034 = vmatpush2.msra.mxu0 %v230
      %1035 = vmatprep.subr.mxu0 0.0
      %1036 = vmatpush2.msra.mxu0 %v229
      %1037 = vmatprep.subr.mxu0 0.0
      %1038 = vmatpush2.msra.mxu0 %v228
      %1039 = vmatprep.subr.mxu0 0.0
      %1040 = vmatpush2.msra.mxu0 %v227
      %1041 = vmatprep.subr.mxu0 0.0
      %1042 = vmatpush2.msra.mxu0 %v226
      %1043 = vmatprep.subr.mxu0 0.0
      %1044 = vmatpush2.msra.mxu0 %v225
      %1045 = vmatprep.subr.mxu0 0.0
      %1046 = vmatpush2.msra.mxu0 %v224
      %1047 = vmatprep.subr.mxu0 0.0
      %1048 = vmatpush2.msra.mxu0 %v223
      %1049 = vmatprep.subr.mxu0 0.0
      %1050 = vmatpush2.msra.mxu0 %v222
      %1051 = vmatprep.subr.mxu0 0.0
      %1052 = vmatpush2.msra.mxu0 %v221
      %1053 = vmatprep.subr.mxu0 0.0
      %1054 = vmatpush2.msra.mxu0 %v220
      %1055 = vmatprep.subr.mxu0 0.0
      %1056 = vmatpush2.msra.mxu0 %v219
      %1057 = vmatprep.subr.mxu0 0.0
      %1058 = vmatpush2.msra.mxu0 %v218
      %1059 = vmatprep.subr.mxu0 0.0
      %1060 = vmatpush2.msra.mxu0 %v217
      %1061 = vmatprep.mubr.f32.mxu0 %v914
      %1062 = vmatmul.mubr.f32.gmra.mxu0 %v900
      %v1063 = vpop.f32.mrf.mxu0
      %v1064 = vadd.f32 %v994, %v1063
      %v1065 = vpop.f32.mrf.mxu0
      %1066 = vdwg.mxu0
      %1067 = vmatprep.subr.mxu0 0.0
      %1068 = vmatpush1.msra.mxu0 %v248
      %1069 = vmatprep.subr.mxu0 0.0
      %1070 = vmatpush1.msra.mxu0 %v247
      %1071 = vmatprep.subr.mxu0 0.0
      %1072 = vmatpush1.msra.mxu0 %v246
      %1073 = vmatprep.subr.mxu0 0.0
      %1074 = vmatpush1.msra.mxu0 %v245
      %1075 = vmatprep.subr.mxu0 0.0
      %1076 = vmatpush1.msra.mxu0 %v244
      %1077 = vmatprep.subr.mxu0 0.0
      %1078 = vmatpush1.msra.mxu0 %v243
      %1079 = vmatprep.subr.mxu0 0.0
      %1080 = vmatpush1.msra.mxu0 %v242
      %1081 = vmatprep.subr.mxu0 0.0
      %1082 = vmatpush1.msra.mxu0 %v241
      %1083 = vmatprep.subr.mxu0 0.0
      %1084 = vmatpush1.msra.mxu0 %v240
      %1085 = vmatprep.subr.mxu0 0.0
      %1086 = vmatpush1.msra.mxu0 %v239
      %1087 = vmatprep.subr.mxu0 0.0
      %1088 = vmatpush1.msra.mxu0 %v238
      %1089 = vmatprep.subr.mxu0 0.0
      %1090 = vmatpush1.msra.mxu0 %v237
      %1091 = vmatprep.subr.mxu0 0.0
      %1092 = vmatpush1.msra.mxu0 %v236
      %1093 = vmatprep.subr.mxu0 0.0
      %1094 = vmatpush1.msra.mxu0 %v235
      %1095 = vmatprep.subr.mxu0 0.0
      %1096 = vmatpush1.msra.mxu0 %v234
      %1097 = vmatprep.subr.mxu0 0.0
      %1098 = vmatpush1.msra.mxu0 %v233
      %1099 = vmatprep.subr.mxu0 0.0
      %1100 = vmatpush2.msra.mxu0 %v264
      %1101 = vmatprep.subr.mxu0 0.0
      %1102 = vmatpush2.msra.mxu0 %v263
      %1103 = vmatprep.subr.mxu0 0.0
      %1104 = vmatpush2.msra.mxu0 %v262
      %1105 = vmatprep.subr.mxu0 0.0
      %1106 = vmatpush2.msra.mxu0 %v261
      %1107 = vmatprep.subr.mxu0 0.0
      %1108 = vmatpush2.msra.mxu0 %v260
      %1109 = vmatprep.subr.mxu0 0.0
      %1110 = vmatpush2.msra.mxu0 %v259
      %1111 = vmatprep.subr.mxu0 0.0
      %1112 = vmatpush2.msra.mxu0 %v258
      %1113 = vmatprep.subr.mxu0 0.0
      %1114 = vmatpush2.msra.mxu0 %v257
      %1115 = vmatprep.subr.mxu0 0.0
      %1116 = vmatpush2.msra.mxu0 %v256
      %1117 = vmatprep.subr.mxu0 0.0
      %1118 = vmatpush2.msra.mxu0 %v255
      %1119 = vmatprep.subr.mxu0 0.0
      %1120 = vmatpush2.msra.mxu0 %v254
      %1121 = vmatprep.subr.mxu0 0.0
      %1122 = vmatpush2.msra.mxu0 %v253
      %1123 = vmatprep.subr.mxu0 0.0
      %1124 = vmatpush2.msra.mxu0 %v252
      %1125 = vmatprep.subr.mxu0 0.0
      %1126 = vmatpush2.msra.mxu0 %v251
      %1127 = vmatprep.subr.mxu0 0.0
      %1128 = vmatpush2.msra.mxu0 %v250
      %1129 = vmatprep.subr.mxu0 0.0
      %1130 = vmatpush2.msra.mxu0 %v249
      %1131 = vmatprep.mubr.f32.mxu0 %v915
      %1132 = vmatmul.mubr.f32.gmra.mxu0 %v901
      %v1133 = vpop.f32.mrf.mxu0
      %v1134 = vadd.f32 %v1064, %v1133
      %v1135 = vpop.f32.mrf.mxu0
      %1136 = vdwg.mxu0
      %1137 = vmatprep.subr.mxu0 0.0
      %1138 = vmatpush1.msra.mxu0 %v280
      %1139 = vmatprep.subr.mxu0 0.0
      %1140 = vmatpush1.msra.mxu0 %v279
      %1141 = vmatprep.subr.mxu0 0.0
      %1142 = vmatpush1.msra.mxu0 %v278
      %1143 = vmatprep.subr.mxu0 0.0
      %1144 = vmatpush1.msra.mxu0 %v277
      %1145 = vmatprep.subr.mxu0 0.0
      %1146 = vmatpush1.msra.mxu0 %v276
      %1147 = vmatprep.subr.mxu0 0.0
      %1148 = vmatpush1.msra.mxu0 %v275
      %1149 = vmatprep.subr.mxu0 0.0
      %1150 = vmatpush1.msra.mxu0 %v274
      %1151 = vmatprep.subr.mxu0 0.0
      %1152 = vmatpush1.msra.mxu0 %v273
      %1153 = vmatprep.subr.mxu0 0.0
      %1154 = vmatpush1.msra.mxu0 %v272
      %1155 = vmatprep.subr.mxu0 0.0
      %1156 = vmatpush1.msra.mxu0 %v271
      %1157 = vmatprep.subr.mxu0 0.0
      %1158 = vmatpush1.msra.mxu0 %v270
      %1159 = vmatprep.subr.mxu0 0.0
      %1160 = vmatpush1.msra.mxu0 %v269
      %1161 = vmatprep.subr.mxu0 0.0
      %1162 = vmatpush1.msra.mxu0 %v268
      %1163 = vmatprep.subr.mxu0 0.0
      %1164 = vmatpush1.msra.mxu0 %v267
      %1165 = vmatprep.subr.mxu0 0.0
      %1166 = vmatpush1.msra.mxu0 %v266
      %1167 = vmatprep.subr.mxu0 0.0
      %1168 = vmatpush1.msra.mxu0 %v265
      %1169 = vmatprep.subr.mxu0 0.0
      %1170 = vmatpush2.msra.mxu0 %v296
      %1171 = vmatprep.subr.mxu0 0.0
      %1172 = vmatpush2.msra.mxu0 %v295
      %1173 = vmatprep.subr.mxu0 0.0
      %1174 = vmatpush2.msra.mxu0 %v294
      %1175 = vmatprep.subr.mxu0 0.0
      %1176 = vmatpush2.msra.mxu0 %v293
      %1177 = vmatprep.subr.mxu0 0.0
      %1178 = vmatpush2.msra.mxu0 %v292
      %1179 = vmatprep.subr.mxu0 0.0
      %1180 = vmatpush2.msra.mxu0 %v291
      %1181 = vmatprep.subr.mxu0 0.0
      %1182 = vmatpush2.msra.mxu0 %v290
      %1183 = vmatprep.subr.mxu0 0.0
      %1184 = vmatpush2.msra.mxu0 %v289
      %1185 = vmatprep.subr.mxu0 0.0
      %1186 = vmatpush2.msra.mxu0 %v288
      %1187 = vmatprep.subr.mxu0 0.0
      %1188 = vmatpush2.msra.mxu0 %v287
      %1189 = vmatprep.subr.mxu0 0.0
      %1190 = vmatpush2.msra.mxu0 %v286
      %1191 = vmatprep.subr.mxu0 0.0
      %1192 = vmatpush2.msra.mxu0 %v285
      %1193 = vmatprep.subr.mxu0 0.0
      %1194 = vmatpush2.msra.mxu0 %v284
      %1195 = vmatprep.subr.mxu0 0.0
      %1196 = vmatpush2.msra.mxu0 %v283
      %1197 = vmatprep.subr.mxu0 0.0
      %1198 = vmatpush2.msra.mxu0 %v282
      %1199 = vmatprep.subr.mxu0 0.0
      %1200 = vmatpush2.msra.mxu0 %v281
      %1201 = vmatprep.mubr.f32.mxu0 %v916
      %1202 = vmatmul.mubr.f32.gmra.mxu0 %v902
      %v1203 = vpop.f32.mrf.mxu0
      %v1204 = vadd.f32 %v1134, %v1203
      %v1205 = vpop.f32.mrf.mxu0
      %1206 = vdwg.mxu0
      %1207 = vmatprep.subr.mxu0 0.0
      %1208 = vmatpush1.msra.mxu0 %v312
      %1209 = vmatprep.subr.mxu0 0.0
      %1210 = vmatpush1.msra.mxu0 %v311
      %1211 = vmatprep.subr.mxu0 0.0
      %1212 = vmatpush1.msra.mxu0 %v310
      %1213 = vmatprep.subr.mxu0 0.0
      %1214 = vmatpush1.msra.mxu0 %v309
      %1215 = vmatprep.subr.mxu0 0.0
      %1216 = vmatpush1.msra.mxu0 %v308
      %1217 = vmatprep.subr.mxu0 0.0
      %1218 = vmatpush1.msra.mxu0 %v307
      %1219 = vmatprep.subr.mxu0 0.0
      %1220 = vmatpush1.msra.mxu0 %v306
      %1221 = vmatprep.subr.mxu0 0.0
      %1222 = vmatpush1.msra.mxu0 %v305
      %1223 = vmatprep.subr.mxu0 0.0
      %1224 = vmatpush1.msra.mxu0 %v304
      %1225 = vmatprep.subr.mxu0 0.0
      %1226 = vmatpush1.msra.mxu0 %v303
      %1227 = vmatprep.subr.mxu0 0.0
      %1228 = vmatpush1.msra.mxu0 %v302
      %1229 = vmatprep.subr.mxu0 0.0
      %1230 = vmatpush1.msra.mxu0 %v301
      %1231 = vmatprep.subr.mxu0 0.0
      %1232 = vmatpush1.msra.mxu0 %v300
      %1233 = vmatprep.subr.mxu0 0.0
      %1234 = vmatpush1.msra.mxu0 %v299
      %1235 = vmatprep.subr.mxu0 0.0
      %1236 = vmatpush1.msra.mxu0 %v298
      %1237 = vmatprep.subr.mxu0 0.0
      %1238 = vmatpush1.msra.mxu0 %v297
      %1239 = vmatprep.subr.mxu0 0.0
      %1240 = vmatpush2.msra.mxu0 %v328
      %1241 = vmatprep.subr.mxu0 0.0
      %1242 = vmatpush2.msra.mxu0 %v327
      %1243 = vmatprep.subr.mxu0 0.0
      %1244 = vmatpush2.msra.mxu0 %v326
      %1245 = vmatprep.subr.mxu0 0.0
      %1246 = vmatpush2.msra.mxu0 %v325
      %1247 = vmatprep.subr.mxu0 0.0
      %1248 = vmatpush2.msra.mxu0 %v324
      %1249 = vmatprep.subr.mxu0 0.0
      %1250 = vmatpush2.msra.mxu0 %v323
      %1251 = vmatprep.subr.mxu0 0.0
      %1252 = vmatpush2.msra.mxu0 %v322
      %1253 = vmatprep.subr.mxu0 0.0
      %1254 = vmatpush2.msra.mxu0 %v321
      %1255 = vmatprep.subr.mxu0 0.0
      %1256 = vmatpush2.msra.mxu0 %v320
      %1257 = vmatprep.subr.mxu0 0.0
      %1258 = vmatpush2.msra.mxu0 %v319
      %1259 = vmatprep.subr.mxu0 0.0
      %1260 = vmatpush2.msra.mxu0 %v318
      %1261 = vmatprep.subr.mxu0 0.0
      %1262 = vmatpush2.msra.mxu0 %v317
      %1263 = vmatprep.subr.mxu0 0.0
      %1264 = vmatpush2.msra.mxu0 %v316
      %1265 = vmatprep.subr.mxu0 0.0
      %1266 = vmatpush2.msra.mxu0 %v315
      %1267 = vmatprep.subr.mxu0 0.0
      %1268 = vmatpush2.msra.mxu0 %v314
      %1269 = vmatprep.subr.mxu0 0.0
      %1270 = vmatpush2.msra.mxu0 %v313
      %1271 = vmatprep.mubr.f32.mxu0 %v917
      %1272 = vmatmul.mubr.f32.gmra.mxu0 %v903
      %v1273 = vpop.f32.mrf.mxu0
      %v1274 = vadd.f32 %v1204, %v1273
      %v1275 = vpop.f32.mrf.mxu0
      %1276 = vdwg.mxu0
      %1277 = vmatprep.subr.mxu0 0.0
      %1278 = vmatpush1.msra.mxu0 %v344
      %1279 = vmatprep.subr.mxu0 0.0
      %1280 = vmatpush1.msra.mxu0 %v343
      %1281 = vmatprep.subr.mxu0 0.0
      %1282 = vmatpush1.msra.mxu0 %v342
      %1283 = vmatprep.subr.mxu0 0.0
      %1284 = vmatpush1.msra.mxu0 %v341
      %1285 = vmatprep.subr.mxu0 0.0
      %1286 = vmatpush1.msra.mxu0 %v340
      %1287 = vmatprep.subr.mxu0 0.0
      %1288 = vmatpush1.msra.mxu0 %v339
      %1289 = vmatprep.subr.mxu0 0.0
      %1290 = vmatpush1.msra.mxu0 %v338
      %1291 = vmatprep.subr.mxu0 0.0
      %1292 = vmatpush1.msra.mxu0 %v337
      %1293 = vmatprep.subr.mxu0 0.0
      %1294 = vmatpush1.msra.mxu0 %v336
      %1295 = vmatprep.subr.mxu0 0.0
      %1296 = vmatpush1.msra.mxu0 %v335
      %1297 = vmatprep.subr.mxu0 0.0
      %1298 = vmatpush1.msra.mxu0 %v334
      %1299 = vmatprep.subr.mxu0 0.0
      %1300 = vmatpush1.msra.mxu0 %v333
      %1301 = vmatprep.subr.mxu0 0.0
      %1302 = vmatpush1.msra.mxu0 %v332
      %1303 = vmatprep.subr.mxu0 0.0
      %1304 = vmatpush1.msra.mxu0 %v331
      %1305 = vmatprep.subr.mxu0 0.0
      %1306 = vmatpush1.msra.mxu0 %v330
      %1307 = vmatprep.subr.mxu0 0.0
      %1308 = vmatpush1.msra.mxu0 %v329
      %1309 = vmatprep.subr.mxu0 0.0
      %1310 = vmatpush2.msra.mxu0 %v360
      %1311 = vmatprep.subr.mxu0 0.0
      %1312 = vmatpush2.msra.mxu0 %v359
      %1313 = vmatprep.subr.mxu0 0.0
      %1314 = vmatpush2.msra.mxu0 %v358
      %1315 = vmatprep.subr.mxu0 0.0
      %1316 = vmatpush2.msra.mxu0 %v357
      %1317 = vmatprep.subr.mxu0 0.0
      %1318 = vmatpush2.msra.mxu0 %v356
      %1319 = vmatprep.subr.mxu0 0.0
      %1320 = vmatpush2.msra.mxu0 %v355
      %1321 = vmatprep.subr.mxu0 0.0
      %1322 = vmatpush2.msra.mxu0 %v354
      %1323 = vmatprep.subr.mxu0 0.0
      %1324 = vmatpush2.msra.mxu0 %v353
      %1325 = vmatprep.subr.mxu0 0.0
      %1326 = vmatpush2.msra.mxu0 %v352
      %1327 = vmatprep.subr.mxu0 0.0
      %1328 = vmatpush2.msra.mxu0 %v351
      %1329 = vmatprep.subr.mxu0 0.0
      %1330 = vmatpush2.msra.mxu0 %v350
      %1331 = vmatprep.subr.mxu0 0.0
      %1332 = vmatpush2.msra.mxu0 %v349
      %1333 = vmatprep.subr.mxu0 0.0
      %1334 = vmatpush2.msra.mxu0 %v348
      %1335 = vmatprep.subr.mxu0 0.0
      %1336 = vmatpush2.msra.mxu0 %v347
      %1337 = vmatprep.subr.mxu0 0.0
      %1338 = vmatpush2.msra.mxu0 %v346
      %1339 = vmatprep.subr.mxu0 0.0
      %1340 = vmatpush2.msra.mxu0 %v345
      %1341 = vmatprep.mubr.f32.mxu0 %v918
      %1342 = vmatmul.mubr.f32.gmra.mxu0 %v904
      %v1343 = vpop.f32.mrf.mxu0
      %v1344 = vadd.f32 %v1274, %v1343
      %v1345 = vpop.f32.mrf.mxu0
      %1346 = vdwg.mxu0
      %1347 = vmatprep.subr.mxu0 0.0
      %1348 = vmatpush1.msra.mxu0 0.0
      %1349 = vmatprep.subr.mxu0 0.0
      %1350 = vmatpush1.msra.mxu0 0.0
      %1351 = vmatprep.subr.mxu0 0.0
      %1352 = vmatpush1.msra.mxu0 0.0
      %1353 = vmatprep.subr.mxu0 0.0
      %1354 = vmatpush1.msra.mxu0 0.0
      %1355 = vmatprep.subr.mxu0 0.0
      %1356 = vmatpush1.msra.mxu0 0.0
      %1357 = vmatprep.subr.mxu0 0.0
      %1358 = vmatpush1.msra.mxu0 0.0
      %1359 = vmatprep.subr.mxu0 0.0
      %1360 = vmatpush1.msra.mxu0 0.0
      %1361 = vmatprep.subr.mxu0 0.0
      %1362 = vmatpush1.msra.mxu0 0.0
      %1363 = vmatprep.subr.mxu0 0.0
      %1364 = vmatpush1.msra.mxu0 %v368
      %1365 = vmatprep.subr.mxu0 0.0
      %1366 = vmatpush1.msra.mxu0 %v367
      %1367 = vmatprep.subr.mxu0 0.0
      %1368 = vmatpush1.msra.mxu0 %v366
      %1369 = vmatprep.subr.mxu0 0.0
      %1370 = vmatpush1.msra.mxu0 %v365
      %1371 = vmatprep.subr.mxu0 0.0
      %1372 = vmatpush1.msra.mxu0 %v364
      %1373 = vmatprep.subr.mxu0 0.0
      %1374 = vmatpush1.msra.mxu0 %v363
      %1375 = vmatprep.subr.mxu0 0.0
      %1376 = vmatpush1.msra.mxu0 %v362
      %1377 = vmatprep.subr.mxu0 0.0
      %1378 = vmatpush1.msra.mxu0 %v361
      %1379 = vmatprep.subr.mxu0 0.0
      %1380 = vmatpush2.msra.mxu0 0.0
      %1381 = vmatprep.subr.mxu0 0.0
      %1382 = vmatpush2.msra.mxu0 0.0
      %1383 = vmatprep.subr.mxu0 0.0
      %1384 = vmatpush2.msra.mxu0 0.0
      %1385 = vmatprep.subr.mxu0 0.0
      %1386 = vmatpush2.msra.mxu0 0.0
      %1387 = vmatprep.subr.mxu0 0.0
      %1388 = vmatpush2.msra.mxu0 0.0
      %1389 = vmatprep.subr.mxu0 0.0
      %1390 = vmatpush2.msra.mxu0 0.0
      %1391 = vmatprep.subr.mxu0 0.0
      %1392 = vmatpush2.msra.mxu0 0.0
      %1393 = vmatprep.subr.mxu0 0.0
      %1394 = vmatpush2.msra.mxu0 0.0
      %1395 = vmatprep.subr.mxu0 0.0
      %1396 = vmatpush2.msra.mxu0 0.0
      %1397 = vmatprep.subr.mxu0 0.0
      %1398 = vmatpush2.msra.mxu0 0.0
      %1399 = vmatprep.subr.mxu0 0.0
      %1400 = vmatpush2.msra.mxu0 0.0
      %1401 = vmatprep.subr.mxu0 0.0
      %1402 = vmatpush2.msra.mxu0 0.0
      %1403 = vmatprep.subr.mxu0 0.0
      %1404 = vmatpush2.msra.mxu0 0.0
      %1405 = vmatprep.subr.mxu0 0.0
      %1406 = vmatpush2.msra.mxu0 0.0
      %1407 = vmatprep.subr.mxu0 0.0
      %1408 = vmatpush2.msra.mxu0 0.0
      %1409 = vmatprep.subr.mxu0 0.0
      %1410 = vmatpush2.msra.mxu0 0.0
      %1411 = vmatprep.mubr.f32.mxu0 0.0
      %1412 = vmatmul.mubr.f32.gmra.mxu0 %v925
      %v1413 = vpop.f32.mrf.mxu0
      %v1414 = vadd.f32 %v1344, %v1413
      %v1415 = vpop.f32.mrf.mxu0
      %1416 = vdwg.mxu0
      %vm1417 = vcmp.gt.f32.partialorder %v1414, 0.0
      %v1418 = vmul.f32 %v1414, 0.2
      %v1419 = vsel %vm1417, %v1414, %v1418
      %v1420 = vadd.f32 %v897, %v1419
      %s1421 = scalar_lea.vmem %s164, 104
      %v1422 = vld [vmem:[%s1421] sm:$0xff]
      %v1423 = vld [vmem:[%s1421 + $0x8] sm:$0xff]
      %v1424 = vld [vmem:[%s1421 + $0x10] sm:$0xff]
      %v1425 = vld [vmem:[%s1421 + $0x18] sm:$0xff]
      %v1426 = vld [vmem:[%s1421 + $0x20] sm:$0xff]
      %v1427 = vld [vmem:[%s1421 + $0x28] sm:$0xff]
      %v1428 = vld [vmem:[%s1421 + $0x30] sm:$0xf]
      %v1436 = vcombine.high %v1422, %v1422
      %v1437 = vcombine.high %v1423, %v1423
      %v1438 = vcombine.high %v1424, %v1424
      %v1439 = vcombine.high %v1425, %v1425
      %v1440 = vcombine.high %v1426, %v1426
      %v1441 = vcombine.high %v1427, %v1427
      %v1448 = vsel %vm402, %v1428, 0
      %1450 = vmatprep.subr.mxu0 0.0
      %1451 = vmatpush1.msra.mxu0 %v184
      %1452 = vmatprep.subr.mxu0 0.0
      %1453 = vmatpush1.msra.mxu0 %v183
      %1454 = vmatprep.subr.mxu0 0.0
      %1455 = vmatpush1.msra.mxu0 %v182
      %1456 = vmatprep.subr.mxu0 0.0
      %1457 = vmatpush1.msra.mxu0 %v181
      %1458 = vmatprep.subr.mxu0 0.0
      %1459 = vmatpush1.msra.mxu0 %v180
      %1460 = vmatprep.subr.mxu0 0.0
      %1461 = vmatpush1.msra.mxu0 %v179
      %1462 = vmatprep.subr.mxu0 0.0
      %1463 = vmatpush1.msra.mxu0 %v178
      %1464 = vmatprep.subr.mxu0 0.0
      %1465 = vmatpush1.msra.mxu0 %v177
      %1466 = vmatprep.subr.mxu0 0.0
      %1467 = vmatpush1.msra.mxu0 %v176
      %1468 = vmatprep.subr.mxu0 0.0
      %1469 = vmatpush1.msra.mxu0 %v175
      %1470 = vmatprep.subr.mxu0 0.0
      %1471 = vmatpush1.msra.mxu0 %v174
      %1472 = vmatprep.subr.mxu0 0.0
      %1473 = vmatpush1.msra.mxu0 %v173
      %1474 = vmatprep.subr.mxu0 0.0
      %1475 = vmatpush1.msra.mxu0 %v172
      %1476 = vmatprep.subr.mxu0 0.0
      %1477 = vmatpush1.msra.mxu0 %v171
      %1478 = vmatprep.subr.mxu0 0.0
      %1479 = vmatpush1.msra.mxu0 %v170
      %1480 = vmatprep.subr.mxu0 0.0
      %1481 = vmatpush1.msra.mxu0 %v169
      %1482 = vmatprep.subr.mxu0 0.0
      %1483 = vmatpush2.msra.mxu0 %v200
      %1484 = vmatprep.subr.mxu0 0.0
      %1485 = vmatpush2.msra.mxu0 %v199
      %1486 = vmatprep.subr.mxu0 0.0
      %1487 = vmatpush2.msra.mxu0 %v198
      %1488 = vmatprep.subr.mxu0 0.0
      %1489 = vmatpush2.msra.mxu0 %v197
      %1490 = vmatprep.subr.mxu0 0.0
      %1491 = vmatpush2.msra.mxu0 %v196
      %1492 = vmatprep.subr.mxu0 0.0
      %1493 = vmatpush2.msra.mxu0 %v195
      %1494 = vmatprep.subr.mxu0 0.0
      %1495 = vmatpush2.msra.mxu0 %v194
      %1496 = vmatprep.subr.mxu0 0.0
      %1497 = vmatpush2.msra.mxu0 %v193
      %1498 = vmatprep.subr.mxu0 0.0
      %1499 = vmatpush2.msra.mxu0 %v192
      %1500 = vmatprep.subr.mxu0 0.0
      %1501 = vmatpush2.msra.mxu0 %v191
      %1502 = vmatprep.subr.mxu0 0.0
      %1503 = vmatpush2.msra.mxu0 %v190
      %1504 = vmatprep.subr.mxu0 0.0
      %1505 = vmatpush2.msra.mxu0 %v189
      %1506 = vmatprep.subr.mxu0 0.0
      %1507 = vmatpush2.msra.mxu0 %v188
      %1508 = vmatprep.subr.mxu0 0.0
      %1509 = vmatpush2.msra.mxu0 %v187
      %1510 = vmatprep.subr.mxu0 0.0
      %1511 = vmatpush2.msra.mxu0 %v186
      %1512 = vmatprep.subr.mxu0 0.0
      %1513 = vmatpush2.msra.mxu0 %v185
      %1514 = vmatprep.mubr.f32.mxu0 %v1436
      %1515 = vmatmul.mubr.f32.gmra.mxu0 %v1422
      %v1516 = vpop.f32.mrf.mxu0
      %v1517 = vadd.f32 %v381, %v1516
      %v1518 = vpop.f32.mrf.mxu0
      %1519 = vdwg.mxu0
      %1520 = vmatprep.subr.mxu0 0.0
      %1521 = vmatpush1.msra.mxu0 %v216
      %1522 = vmatprep.subr.mxu0 0.0
      %1523 = vmatpush1.msra.mxu0 %v215
      %1524 = vmatprep.subr.mxu0 0.0
      %1525 = vmatpush1.msra.mxu0 %v214
      %1526 = vmatprep.subr.mxu0 0.0
      %1527 = vmatpush1.msra.mxu0 %v213
      %1528 = vmatprep.subr.mxu0 0.0
      %1529 = vmatpush1.msra.mxu0 %v212
      %1530 = vmatprep.subr.mxu0 0.0
      %1531 = vmatpush1.msra.mxu0 %v211
      %1532 = vmatprep.subr.mxu0 0.0
      %1533 = vmatpush1.msra.mxu0 %v210
      %1534 = vmatprep.subr.mxu0 0.0
      %1535 = vmatpush1.msra.mxu0 %v209
      %1536 = vmatprep.subr.mxu0 0.0
      %1537 = vmatpush1.msra.mxu0 %v208
      %1538 = vmatprep.subr.mxu0 0.0
      %1539 = vmatpush1.msra.mxu0 %v207
      %1540 = vmatprep.subr.mxu0 0.0
      %1541 = vmatpush1.msra.mxu0 %v206
      %1542 = vmatprep.subr.mxu0 0.0
      %1543 = vmatpush1.msra.mxu0 %v205
      %1544 = vmatprep.subr.mxu0 0.0
      %1545 = vmatpush1.msra.mxu0 %v204
      %1546 = vmatprep.subr.mxu0 0.0
      %1547 = vmatpush1.msra.mxu0 %v203
      %1548 = vmatprep.subr.mxu0 0.0
      %1549 = vmatpush1.msra.mxu0 %v202
      %1550 = vmatprep.subr.mxu0 0.0
      %1551 = vmatpush1.msra.mxu0 %v201
      %1552 = vmatprep.subr.mxu0 0.0
      %1553 = vmatpush2.msra.mxu0 %v232
      %1554 = vmatprep.subr.mxu0 0.0
      %1555 = vmatpush2.msra.mxu0 %v231
      %1556 = vmatprep.subr.mxu0 0.0
      %1557 = vmatpush2.msra.mxu0 %v230
      %1558 = vmatprep.subr.mxu0 0.0
      %1559 = vmatpush2.msra.mxu0 %v229
      %1560 = vmatprep.subr.mxu0 0.0
      %1561 = vmatpush2.msra.mxu0 %v228
      %1562 = vmatprep.subr.mxu0 0.0
      %1563 = vmatpush2.msra.mxu0 %v227
      %1564 = vmatprep.subr.mxu0 0.0
      %1565 = vmatpush2.msra.mxu0 %v226
      %1566 = vmatprep.subr.mxu0 0.0
      %1567 = vmatpush2.msra.mxu0 %v225
      %1568 = vmatprep.subr.mxu0 0.0
      %1569 = vmatpush2.msra.mxu0 %v224
      %1570 = vmatprep.subr.mxu0 0.0
      %1571 = vmatpush2.msra.mxu0 %v223
      %1572 = vmatprep.subr.mxu0 0.0
      %1573 = vmatpush2.msra.mxu0 %v222
      %1574 = vmatprep.subr.mxu0 0.0
      %1575 = vmatpush2.msra.mxu0 %v221
      %1576 = vmatprep.subr.mxu0 0.0
      %1577 = vmatpush2.msra.mxu0 %v220
      %1578 = vmatprep.subr.mxu0 0.0
      %1579 = vmatpush2.msra.mxu0 %v219
      %1580 = vmatprep.subr.mxu0 0.0
      %1581 = vmatpush2.msra.mxu0 %v218
      %1582 = vmatprep.subr.mxu0 0.0
      %1583 = vmatpush2.msra.mxu0 %v217
      %1584 = vmatprep.mubr.f32.mxu0 %v1437
      %1585 = vmatmul.mubr.f32.gmra.mxu0 %v1423
      %v1586 = vpop.f32.mrf.mxu0
      %v1587 = vadd.f32 %v1517, %v1586
      %v1588 = vpop.f32.mrf.mxu0
      %1589 = vdwg.mxu0
      %1590 = vmatprep.subr.mxu0 0.0
      %1591 = vmatpush1.msra.mxu0 %v248
      %1592 = vmatprep.subr.mxu0 0.0
      %1593 = vmatpush1.msra.mxu0 %v247
      %1594 = vmatprep.subr.mxu0 0.0
      %1595 = vmatpush1.msra.mxu0 %v246
      %1596 = vmatprep.subr.mxu0 0.0
      %1597 = vmatpush1.msra.mxu0 %v245
      %1598 = vmatprep.subr.mxu0 0.0
      %1599 = vmatpush1.msra.mxu0 %v244
      %1600 = vmatprep.subr.mxu0 0.0
      %1601 = vmatpush1.msra.mxu0 %v243
      %1602 = vmatprep.subr.mxu0 0.0
      %1603 = vmatpush1.msra.mxu0 %v242
      %1604 = vmatprep.subr.mxu0 0.0
      %1605 = vmatpush1.msra.mxu0 %v241
      %1606 = vmatprep.subr.mxu0 0.0
      %1607 = vmatpush1.msra.mxu0 %v240
      %1608 = vmatprep.subr.mxu0 0.0
      %1609 = vmatpush1.msra.mxu0 %v239
      %1610 = vmatprep.subr.mxu0 0.0
      %1611 = vmatpush1.msra.mxu0 %v238
      %1612 = vmatprep.subr.mxu0 0.0
      %1613 = vmatpush1.msra.mxu0 %v237
      %1614 = vmatprep.subr.mxu0 0.0
      %1615 = vmatpush1.msra.mxu0 %v236
      %1616 = vmatprep.subr.mxu0 0.0
      %1617 = vmatpush1.msra.mxu0 %v235
      %1618 = vmatprep.subr.mxu0 0.0
      %1619 = vmatpush1.msra.mxu0 %v234
      %1620 = vmatprep.subr.mxu0 0.0
      %1621 = vmatpush1.msra.mxu0 %v233
      %1622 = vmatprep.subr.mxu0 0.0
      %1623 = vmatpush2.msra.mxu0 %v264
      %1624 = vmatprep.subr.mxu0 0.0
      %1625 = vmatpush2.msra.mxu0 %v263
      %1626 = vmatprep.subr.mxu0 0.0
      %1627 = vmatpush2.msra.mxu0 %v262
      %1628 = vmatprep.subr.mxu0 0.0
      %1629 = vmatpush2.msra.mxu0 %v261
      %1630 = vmatprep.subr.mxu0 0.0
      %1631 = vmatpush2.msra.mxu0 %v260
      %1632 = vmatprep.subr.mxu0 0.0
      %1633 = vmatpush2.msra.mxu0 %v259
      %1634 = vmatprep.subr.mxu0 0.0
      %1635 = vmatpush2.msra.mxu0 %v258
      %1636 = vmatprep.subr.mxu0 0.0
      %1637 = vmatpush2.msra.mxu0 %v257
      %1638 = vmatprep.subr.mxu0 0.0
      %1639 = vmatpush2.msra.mxu0 %v256
      %1640 = vmatprep.subr.mxu0 0.0
      %1641 = vmatpush2.msra.mxu0 %v255
      %1642 = vmatprep.subr.mxu0 0.0
      %1643 = vmatpush2.msra.mxu0 %v254
      %1644 = vmatprep.subr.mxu0 0.0
      %1645 = vmatpush2.msra.mxu0 %v253
      %1646 = vmatprep.subr.mxu0 0.0
      %1647 = vmatpush2.msra.mxu0 %v252
      %1648 = vmatprep.subr.mxu0 0.0
      %1649 = vmatpush2.msra.mxu0 %v251
      %1650 = vmatprep.subr.mxu0 0.0
      %1651 = vmatpush2.msra.mxu0 %v250
      %1652 = vmatprep.subr.mxu0 0.0
      %1653 = vmatpush2.msra.mxu0 %v249
      %1654 = vmatprep.mubr.f32.mxu0 %v1438
      %1655 = vmatmul.mubr.f32.gmra.mxu0 %v1424
      %v1656 = vpop.f32.mrf.mxu0
      %v1657 = vadd.f32 %v1587, %v1656
      %v1658 = vpop.f32.mrf.mxu0
      %1659 = vdwg.mxu0
      %1660 = vmatprep.subr.mxu0 0.0
      %1661 = vmatpush1.msra.mxu0 %v280
      %1662 = vmatprep.subr.mxu0 0.0
      %1663 = vmatpush1.msra.mxu0 %v279
      %1664 = vmatprep.subr.mxu0 0.0
      %1665 = vmatpush1.msra.mxu0 %v278
      %1666 = vmatprep.subr.mxu0 0.0
      %1667 = vmatpush1.msra.mxu0 %v277
      %1668 = vmatprep.subr.mxu0 0.0
      %1669 = vmatpush1.msra.mxu0 %v276
      %1670 = vmatprep.subr.mxu0 0.0
      %1671 = vmatpush1.msra.mxu0 %v275
      %1672 = vmatprep.subr.mxu0 0.0
      %1673 = vmatpush1.msra.mxu0 %v274
      %1674 = vmatprep.subr.mxu0 0.0
      %1675 = vmatpush1.msra.mxu0 %v273
      %1676 = vmatprep.subr.mxu0 0.0
      %1677 = vmatpush1.msra.mxu0 %v272
      %1678 = vmatprep.subr.mxu0 0.0
      %1679 = vmatpush1.msra.mxu0 %v271
      %1680 = vmatprep.subr.mxu0 0.0
      %1681 = vmatpush1.msra.mxu0 %v270
      %1682 = vmatprep.subr.mxu0 0.0
      %1683 = vmatpush1.msra.mxu0 %v269
      %1684 = vmatprep.subr.mxu0 0.0
      %1685 = vmatpush1.msra.mxu0 %v268
      %1686 = vmatprep.subr.mxu0 0.0
      %1687 = vmatpush1.msra.mxu0 %v267
      %1688 = vmatprep.subr.mxu0 0.0
      %1689 = vmatpush1.msra.mxu0 %v266
      %1690 = vmatprep.subr.mxu0 0.0
      %1691 = vmatpush1.msra.mxu0 %v265
      %1692 = vmatprep.subr.mxu0 0.0
      %1693 = vmatpush2.msra.mxu0 %v296
      %1694 = vmatprep.subr.mxu0 0.0
      %1695 = vmatpush2.msra.mxu0 %v295
      %1696 = vmatprep.subr.mxu0 0.0
      %1697 = vmatpush2.msra.mxu0 %v294
      %1698 = vmatprep.subr.mxu0 0.0
      %1699 = vmatpush2.msra.mxu0 %v293
      %1700 = vmatprep.subr.mxu0 0.0
      %1701 = vmatpush2.msra.mxu0 %v292
      %1702 = vmatprep.subr.mxu0 0.0
      %1703 = vmatpush2.msra.mxu0 %v291
      %1704 = vmatprep.subr.mxu0 0.0
      %1705 = vmatpush2.msra.mxu0 %v290
      %1706 = vmatprep.subr.mxu0 0.0
      %1707 = vmatpush2.msra.mxu0 %v289
      %1708 = vmatprep.subr.mxu0 0.0
      %1709 = vmatpush2.msra.mxu0 %v288
      %1710 = vmatprep.subr.mxu0 0.0
      %1711 = vmatpush2.msra.mxu0 %v287
      %1712 = vmatprep.subr.mxu0 0.0
      %1713 = vmatpush2.msra.mxu0 %v286
      %1714 = vmatprep.subr.mxu0 0.0
      %1715 = vmatpush2.msra.mxu0 %v285
      %1716 = vmatprep.subr.mxu0 0.0
      %1717 = vmatpush2.msra.mxu0 %v284
      %1718 = vmatprep.subr.mxu0 0.0
      %1719 = vmatpush2.msra.mxu0 %v283
      %1720 = vmatprep.subr.mxu0 0.0
      %1721 = vmatpush2.msra.mxu0 %v282
      %1722 = vmatprep.subr.mxu0 0.0
      %1723 = vmatpush2.msra.mxu0 %v281
      %1724 = vmatprep.mubr.f32.mxu0 %v1439
      %1725 = vmatmul.mubr.f32.gmra.mxu0 %v1425
      %v1726 = vpop.f32.mrf.mxu0
      %v1727 = vadd.f32 %v1657, %v1726
      %v1728 = vpop.f32.mrf.mxu0
      %1729 = vdwg.mxu0
      %1730 = vmatprep.subr.mxu0 0.0
      %1731 = vmatpush1.msra.mxu0 %v312
      %1732 = vmatprep.subr.mxu0 0.0
      %1733 = vmatpush1.msra.mxu0 %v311
      %1734 = vmatprep.subr.mxu0 0.0
      %1735 = vmatpush1.msra.mxu0 %v310
      %1736 = vmatprep.subr.mxu0 0.0
      %1737 = vmatpush1.msra.mxu0 %v309
      %1738 = vmatprep.subr.mxu0 0.0
      %1739 = vmatpush1.msra.mxu0 %v308
      %1740 = vmatprep.subr.mxu0 0.0
      %1741 = vmatpush1.msra.mxu0 %v307
      %1742 = vmatprep.subr.mxu0 0.0
      %1743 = vmatpush1.msra.mxu0 %v306
      %1744 = vmatprep.subr.mxu0 0.0
      %1745 = vmatpush1.msra.mxu0 %v305
      %1746 = vmatprep.subr.mxu0 0.0
      %1747 = vmatpush1.msra.mxu0 %v304
      %1748 = vmatprep.subr.mxu0 0.0
      %1749 = vmatpush1.msra.mxu0 %v303
      %1750 = vmatprep.subr.mxu0 0.0
      %1751 = vmatpush1.msra.mxu0 %v302
      %1752 = vmatprep.subr.mxu0 0.0
      %1753 = vmatpush1.msra.mxu0 %v301
      %1754 = vmatprep.subr.mxu0 0.0
      %1755 = vmatpush1.msra.mxu0 %v300
      %1756 = vmatprep.subr.mxu0 0.0
      %1757 = vmatpush1.msra.mxu0 %v299
      %1758 = vmatprep.subr.mxu0 0.0
      %1759 = vmatpush1.msra.mxu0 %v298
      %1760 = vmatprep.subr.mxu0 0.0
      %1761 = vmatpush1.msra.mxu0 %v297
      %1762 = vmatprep.subr.mxu0 0.0
      %1763 = vmatpush2.msra.mxu0 %v328
      %1764 = vmatprep.subr.mxu0 0.0
      %1765 = vmatpush2.msra.mxu0 %v327
      %1766 = vmatprep.subr.mxu0 0.0
      %1767 = vmatpush2.msra.mxu0 %v326
      %1768 = vmatprep.subr.mxu0 0.0
      %1769 = vmatpush2.msra.mxu0 %v325
      %1770 = vmatprep.subr.mxu0 0.0
      %1771 = vmatpush2.msra.mxu0 %v324
      %1772 = vmatprep.subr.mxu0 0.0
      %1773 = vmatpush2.msra.mxu0 %v323
      %1774 = vmatprep.subr.mxu0 0.0
      %1775 = vmatpush2.msra.mxu0 %v322
      %1776 = vmatprep.subr.mxu0 0.0
      %1777 = vmatpush2.msra.mxu0 %v321
      %1778 = vmatprep.subr.mxu0 0.0
      %1779 = vmatpush2.msra.mxu0 %v320
      %1780 = vmatprep.subr.mxu0 0.0
      %1781 = vmatpush2.msra.mxu0 %v319
      %1782 = vmatprep.subr.mxu0 0.0
      %1783 = vmatpush2.msra.mxu0 %v318
      %1784 = vmatprep.subr.mxu0 0.0
      %1785 = vmatpush2.msra.mxu0 %v317
      %1786 = vmatprep.subr.mxu0 0.0
      %1787 = vmatpush2.msra.mxu0 %v316
      %1788 = vmatprep.subr.mxu0 0.0
      %1789 = vmatpush2.msra.mxu0 %v315
      %1790 = vmatprep.subr.mxu0 0.0
      %1791 = vmatpush2.msra.mxu0 %v314
      %1792 = vmatprep.subr.mxu0 0.0
      %1793 = vmatpush2.msra.mxu0 %v313
      %1794 = vmatprep.mubr.f32.mxu0 %v1440
      %1795 = vmatmul.mubr.f32.gmra.mxu0 %v1426
      %v1796 = vpop.f32.mrf.mxu0
      %v1797 = vadd.f32 %v1727, %v1796
      %v1798 = vpop.f32.mrf.mxu0
      %1799 = vdwg.mxu0
      %1800 = vmatprep.subr.mxu0 0.0
      %1801 = vmatpush1.msra.mxu0 %v344
      %1802 = vmatprep.subr.mxu0 0.0
      %1803 = vmatpush1.msra.mxu0 %v343
      %1804 = vmatprep.subr.mxu0 0.0
      %1805 = vmatpush1.msra.mxu0 %v342
      %1806 = vmatprep.subr.mxu0 0.0
      %1807 = vmatpush1.msra.mxu0 %v341
      %1808 = vmatprep.subr.mxu0 0.0
      %1809 = vmatpush1.msra.mxu0 %v340
      %1810 = vmatprep.subr.mxu0 0.0
      %1811 = vmatpush1.msra.mxu0 %v339
      %1812 = vmatprep.subr.mxu0 0.0
      %1813 = vmatpush1.msra.mxu0 %v338
      %1814 = vmatprep.subr.mxu0 0.0
      %1815 = vmatpush1.msra.mxu0 %v337
      %1816 = vmatprep.subr.mxu0 0.0
      %1817 = vmatpush1.msra.mxu0 %v336
      %1818 = vmatprep.subr.mxu0 0.0
      %1819 = vmatpush1.msra.mxu0 %v335
      %1820 = vmatprep.subr.mxu0 0.0
      %1821 = vmatpush1.msra.mxu0 %v334
      %1822 = vmatprep.subr.mxu0 0.0
      %1823 = vmatpush1.msra.mxu0 %v333
      %1824 = vmatprep.subr.mxu0 0.0
      %1825 = vmatpush1.msra.mxu0 %v332
      %1826 = vmatprep.subr.mxu0 0.0
      %1827 = vmatpush1.msra.mxu0 %v331
      %1828 = vmatprep.subr.mxu0 0.0
      %1829 = vmatpush1.msra.mxu0 %v330
      %1830 = vmatprep.subr.mxu0 0.0
      %1831 = vmatpush1.msra.mxu0 %v329
      %1832 = vmatprep.subr.mxu0 0.0
      %1833 = vmatpush2.msra.mxu0 %v360
      %1834 = vmatprep.subr.mxu0 0.0
      %1835 = vmatpush2.msra.mxu0 %v359
      %1836 = vmatprep.subr.mxu0 0.0
      %1837 = vmatpush2.msra.mxu0 %v358
      %1838 = vmatprep.subr.mxu0 0.0
      %1839 = vmatpush2.msra.mxu0 %v357
      %1840 = vmatprep.subr.mxu0 0.0
      %1841 = vmatpush2.msra.mxu0 %v356
      %1842 = vmatprep.subr.mxu0 0.0
      %1843 = vmatpush2.msra.mxu0 %v355
      %1844 = vmatprep.subr.mxu0 0.0
      %1845 = vmatpush2.msra.mxu0 %v354
      %1846 = vmatprep.subr.mxu0 0.0
      %1847 = vmatpush2.msra.mxu0 %v353
      %1848 = vmatprep.subr.mxu0 0.0
      %1849 = vmatpush2.msra.mxu0 %v352
      %1850 = vmatprep.subr.mxu0 0.0
      %1851 = vmatpush2.msra.mxu0 %v351
      %1852 = vmatprep.subr.mxu0 0.0
      %1853 = vmatpush2.msra.mxu0 %v350
      %1854 = vmatprep.subr.mxu0 0.0
      %1855 = vmatpush2.msra.mxu0 %v349
      %1856 = vmatprep.subr.mxu0 0.0
      %1857 = vmatpush2.msra.mxu0 %v348
      %1858 = vmatprep.subr.mxu0 0.0
      %1859 = vmatpush2.msra.mxu0 %v347
      %1860 = vmatprep.subr.mxu0 0.0
      %1861 = vmatpush2.msra.mxu0 %v346
      %1862 = vmatprep.subr.mxu0 0.0
      %1863 = vmatpush2.msra.mxu0 %v345
      %1864 = vmatprep.mubr.f32.mxu0 %v1441
      %1865 = vmatmul.mubr.f32.gmra.mxu0 %v1427
      %v1866 = vpop.f32.mrf.mxu0
      %v1867 = vadd.f32 %v1797, %v1866
      %v1868 = vpop.f32.mrf.mxu0
      %1869 = vdwg.mxu0
      %1870 = vmatprep.subr.mxu0 0.0
      %1871 = vmatpush1.msra.mxu0 0.0
      %1872 = vmatprep.subr.mxu0 0.0
      %1873 = vmatpush1.msra.mxu0 0.0
      %1874 = vmatprep.subr.mxu0 0.0
      %1875 = vmatpush1.msra.mxu0 0.0
      %1876 = vmatprep.subr.mxu0 0.0
      %1877 = vmatpush1.msra.mxu0 0.0
      %1878 = vmatprep.subr.mxu0 0.0
      %1879 = vmatpush1.msra.mxu0 0.0
      %1880 = vmatprep.subr.mxu0 0.0
      %1881 = vmatpush1.msra.mxu0 0.0
      %1882 = vmatprep.subr.mxu0 0.0
      %1883 = vmatpush1.msra.mxu0 0.0
      %1884 = vmatprep.subr.mxu0 0.0
      %1885 = vmatpush1.msra.mxu0 0.0
      %1886 = vmatprep.subr.mxu0 0.0
      %1887 = vmatpush1.msra.mxu0 %v368
      %1888 = vmatprep.subr.mxu0 0.0
      %1889 = vmatpush1.msra.mxu0 %v367
      %1890 = vmatprep.subr.mxu0 0.0
      %1891 = vmatpush1.msra.mxu0 %v366
      %1892 = vmatprep.subr.mxu0 0.0
      %1893 = vmatpush1.msra.mxu0 %v365
      %1894 = vmatprep.subr.mxu0 0.0
      %1895 = vmatpush1.msra.mxu0 %v364
      %1896 = vmatprep.subr.mxu0 0.0
      %1897 = vmatpush1.msra.mxu0 %v363
      %1898 = vmatprep.subr.mxu0 0.0
      %1899 = vmatpush1.msra.mxu0 %v362
      %1900 = vmatprep.subr.mxu0 0.0
      %1901 = vmatpush1.msra.mxu0 %v361
      %1902 = vmatprep.subr.mxu0 0.0
      %1903 = vmatpush2.msra.mxu0 0.0
      %1904 = vmatprep.subr.mxu0 0.0
      %1905 = vmatpush2.msra.mxu0 0.0
      %1906 = vmatprep.subr.mxu0 0.0
      %1907 = vmatpush2.msra.mxu0 0.0
      %1908 = vmatprep.subr.mxu0 0.0
      %1909 = vmatpush2.msra.mxu0 0.0
      %1910 = vmatprep.subr.mxu0 0.0
      %1911 = vmatpush2.msra.mxu0 0.0
      %1912 = vmatprep.subr.mxu0 0.0
      %1913 = vmatpush2.msra.mxu0 0.0
      %1914 = vmatprep.subr.mxu0 0.0
      %1915 = vmatpush2.msra.mxu0 0.0
      %1916 = vmatprep.subr.mxu0 0.0
      %1917 = vmatpush2.msra.mxu0 0.0
      %1918 = vmatprep.subr.mxu0 0.0
      %1919 = vmatpush2.msra.mxu0 0.0
      %1920 = vmatprep.subr.mxu0 0.0
      %1921 = vmatpush2.msra.mxu0 0.0
      %1922 = vmatprep.subr.mxu0 0.0
      %1923 = vmatpush2.msra.mxu0 0.0
      %1924 = vmatprep.subr.mxu0 0.0
      %1925 = vmatpush2.msra.mxu0 0.0
      %1926 = vmatprep.subr.mxu0 0.0
      %1927 = vmatpush2.msra.mxu0 0.0
      %1928 = vmatprep.subr.mxu0 0.0
      %1929 = vmatpush2.msra.mxu0 0.0
      %1930 = vmatprep.subr.mxu0 0.0
      %1931 = vmatpush2.msra.mxu0 0.0
      %1932 = vmatprep.subr.mxu0 0.0
      %1933 = vmatpush2.msra.mxu0 0.0
      %1934 = vmatprep.mubr.f32.mxu0 0.0
      %1935 = vmatmul.mubr.f32.gmra.mxu0 %v1448
      %v1936 = vpop.f32.mrf.mxu0
      %v1937 = vadd.f32 %v1867, %v1936
      %v1938 = vpop.f32.mrf.mxu0
      %1939 = vdwg.mxu0
      %vm1940 = vcmp.gt.f32.partialorder %v1937, 0.0
      %v1941 = vmul.f32 %v1937, 0.2
      %v1942 = vsel %vm1940, %v1937, %v1941
      %v1943 = vadd.f32 %v1420, %v1942
      %s1944 = scalar_lea.vmem %s164, 156
      %v1945 = vld [vmem:[%s1944] sm:$0xff]
      %v1946 = vld [vmem:[%s1944 + $0x8] sm:$0xff]
      %v1947 = vld [vmem:[%s1944 + $0x10] sm:$0xff]
      %v1948 = vld [vmem:[%s1944 + $0x18] sm:$0xff]
      %v1949 = vld [vmem:[%s1944 + $0x20] sm:$0xff]
      %v1950 = vld [vmem:[%s1944 + $0x28] sm:$0xff]
      %v1951 = vld [vmem:[%s1944 + $0x30] sm:$0xf]
      %v1959 = vcombine.high %v1945, %v1945
      %v1960 = vcombine.high %v1946, %v1946
      %v1961 = vcombine.high %v1947, %v1947
      %v1962 = vcombine.high %v1948, %v1948
      %v1963 = vcombine.high %v1949, %v1949
      %v1964 = vcombine.high %v1950, %v1950
      %v1971 = vsel %vm402, %v1951, 0
      %1973 = vmatprep.subr.mxu0 0.0
      %1974 = vmatpush1.msra.mxu0 %v184
      %1975 = vmatprep.subr.mxu0 0.0
      %1976 = vmatpush1.msra.mxu0 %v183
      %1977 = vmatprep.subr.mxu0 0.0
      %1978 = vmatpush1.msra.mxu0 %v182
      %1979 = vmatprep.subr.mxu0 0.0
      %1980 = vmatpush1.msra.mxu0 %v181
      %1981 = vmatprep.subr.mxu0 0.0
      %1982 = vmatpush1.msra.mxu0 %v180
      %1983 = vmatprep.subr.mxu0 0.0
      %1984 = vmatpush1.msra.mxu0 %v179
      %1985 = vmatprep.subr.mxu0 0.0
      %1986 = vmatpush1.msra.mxu0 %v178
      %1987 = vmatprep.subr.mxu0 0.0
      %1988 = vmatpush1.msra.mxu0 %v177
      %1989 = vmatprep.subr.mxu0 0.0
      %1990 = vmatpush1.msra.mxu0 %v176
      %1991 = vmatprep.subr.mxu0 0.0
      %1992 = vmatpush1.msra.mxu0 %v175
      %1993 = vmatprep.subr.mxu0 0.0
      %1994 = vmatpush1.msra.mxu0 %v174
      %1995 = vmatprep.subr.mxu0 0.0
      %1996 = vmatpush1.msra.mxu0 %v173
      %1997 = vmatprep.subr.mxu0 0.0
      %1998 = vmatpush1.msra.mxu0 %v172
      %1999 = vmatprep.subr.mxu0 0.0
      %2000 = vmatpush1.msra.mxu0 %v171
      %2001 = vmatprep.subr.mxu0 0.0
      %2002 = vmatpush1.msra.mxu0 %v170
      %2003 = vmatprep.subr.mxu0 0.0
      %2004 = vmatpush1.msra.mxu0 %v169
      %2005 = vmatprep.subr.mxu0 0.0
      %2006 = vmatpush2.msra.mxu0 %v200
      %2007 = vmatprep.subr.mxu0 0.0
      %2008 = vmatpush2.msra.mxu0 %v199
      %2009 = vmatprep.subr.mxu0 0.0
      %2010 = vmatpush2.msra.mxu0 %v198
      %2011 = vmatprep.subr.mxu0 0.0
      %2012 = vmatpush2.msra.mxu0 %v197
      %2013 = vmatprep.subr.mxu0 0.0
      %2014 = vmatpush2.msra.mxu0 %v196
      %2015 = vmatprep.subr.mxu0 0.0
      %2016 = vmatpush2.msra.mxu0 %v195
      %2017 = vmatprep.subr.mxu0 0.0
      %2018 = vmatpush2.msra.mxu0 %v194
      %2019 = vmatprep.subr.mxu0 0.0
      %2020 = vmatpush2.msra.mxu0 %v193
      %2021 = vmatprep.subr.mxu0 0.0
      %2022 = vmatpush2.msra.mxu0 %v192
      %2023 = vmatprep.subr.mxu0 0.0
      %2024 = vmatpush2.msra.mxu0 %v191
      %2025 = vmatprep.subr.mxu0 0.0
      %2026 = vmatpush2.msra.mxu0 %v190
      %2027 = vmatprep.subr.mxu0 0.0
      %2028 = vmatpush2.msra.mxu0 %v189
      %2029 = vmatprep.subr.mxu0 0.0
      %2030 = vmatpush2.msra.mxu0 %v188
      %2031 = vmatprep.subr.mxu0 0.0
      %2032 = vmatpush2.msra.mxu0 %v187
      %2033 = vmatprep.subr.mxu0 0.0
      %2034 = vmatpush2.msra.mxu0 %v186
      %2035 = vmatprep.subr.mxu0 0.0
      %2036 = vmatpush2.msra.mxu0 %v185
      %2037 = vmatprep.mubr.f32.mxu0 %v1959
      %2038 = vmatmul.mubr.f32.gmra.mxu0 %v1945
      %v2039 = vpop.f32.mrf.mxu0
      %v2040 = vadd.f32 %v381, %v2039
      %v2041 = vpop.f32.mrf.mxu0
      %2042 = vdwg.mxu0
      %2043 = vmatprep.subr.mxu0 0.0
      %2044 = vmatpush1.msra.mxu0 %v216
      %2045 = vmatprep.subr.mxu0 0.0
      %2046 = vmatpush1.msra.mxu0 %v215
      %2047 = vmatprep.subr.mxu0 0.0
      %2048 = vmatpush1.msra.mxu0 %v214
      %2049 = vmatprep.subr.mxu0 0.0
      %2050 = vmatpush1.msra.mxu0 %v213
      %2051 = vmatprep.subr.mxu0 0.0
      %2052 = vmatpush1.msra.mxu0 %v212
      %2053 = vmatprep.subr.mxu0 0.0
      %2054 = vmatpush1.msra.mxu0 %v211
      %2055 = vmatprep.subr.mxu0 0.0
      %2056 = vmatpush1.msra.mxu0 %v210
      %2057 = vmatprep.subr.mxu0 0.0
      %2058 = vmatpush1.msra.mxu0 %v209
      %2059 = vmatprep.subr.mxu0 0.0
      %2060 = vmatpush1.msra.mxu0 %v208
      %2061 = vmatprep.subr.mxu0 0.0
      %2062 = vmatpush1.msra.mxu0 %v207
      %2063 = vmatprep.subr.mxu0 0.0
      %2064 = vmatpush1.msra.mxu0 %v206
      %2065 = vmatprep.subr.mxu0 0.0
      %2066 = vmatpush1.msra.mxu0 %v205
      %2067 = vmatprep.subr.mxu0 0.0
      %2068 = vmatpush1.msra.mxu0 %v204
      %2069 = vmatprep.subr.mxu0 0.0
      %2070 = vmatpush1.msra.mxu0 %v203
      %2071 = vmatprep.subr.mxu0 0.0
      %2072 = vmatpush1.msra.mxu0 %v202
      %2073 = vmatprep.subr.mxu0 0.0
      %2074 = vmatpush1.msra.mxu0 %v201
      %2075 = vmatprep.subr.mxu0 0.0
      %2076 = vmatpush2.msra.mxu0 %v232
      %2077 = vmatprep.subr.mxu0 0.0
      %2078 = vmatpush2.msra.mxu0 %v231
      %2079 = vmatprep.subr.mxu0 0.0
      %2080 = vmatpush2.msra.mxu0 %v230
      %2081 = vmatprep.subr.mxu0 0.0
      %2082 = vmatpush2.msra.mxu0 %v229
      %2083 = vmatprep.subr.mxu0 0.0
      %2084 = vmatpush2.msra.mxu0 %v228
      %2085 = vmatprep.subr.mxu0 0.0
      %2086 = vmatpush2.msra.mxu0 %v227
      %2087 = vmatprep.subr.mxu0 0.0
      %2088 = vmatpush2.msra.mxu0 %v226
      %2089 = vmatprep.subr.mxu0 0.0
      %2090 = vmatpush2.msra.mxu0 %v225
      %2091 = vmatprep.subr.mxu0 0.0
      %2092 = vmatpush2.msra.mxu0 %v224
      %2093 = vmatprep.subr.mxu0 0.0
      %2094 = vmatpush2.msra.mxu0 %v223
      %2095 = vmatprep.subr.mxu0 0.0
      %2096 = vmatpush2.msra.mxu0 %v222
      %2097 = vmatprep.subr.mxu0 0.0
      %2098 = vmatpush2.msra.mxu0 %v221
      %2099 = vmatprep.subr.mxu0 0.0
      %2100 = vmatpush2.msra.mxu0 %v220
      %2101 = vmatprep.subr.mxu0 0.0
      %2102 = vmatpush2.msra.mxu0 %v219
      %2103 = vmatprep.subr.mxu0 0.0
      %2104 = vmatpush2.msra.mxu0 %v218
      %2105 = vmatprep.subr.mxu0 0.0
      %2106 = vmatpush2.msra.mxu0 %v217
      %2107 = vmatprep.mubr.f32.mxu0 %v1960
      %2108 = vmatmul.mubr.f32.gmra.mxu0 %v1946
      %v2109 = vpop.f32.mrf.mxu0
      %v2110 = vadd.f32 %v2040, %v2109
      %v2111 = vpop.f32.mrf.mxu0
      %2112 = vdwg.mxu0
      %2113 = vmatprep.subr.mxu0 0.0
      %2114 = vmatpush1.msra.mxu0 %v248
      %2115 = vmatprep.subr.mxu0 0.0
      %2116 = vmatpush1.msra.mxu0 %v247
      %2117 = vmatprep.subr.mxu0 0.0
      %2118 = vmatpush1.msra.mxu0 %v246
      %2119 = vmatprep.subr.mxu0 0.0
      %2120 = vmatpush1.msra.mxu0 %v245
      %2121 = vmatprep.subr.mxu0 0.0
      %2122 = vmatpush1.msra.mxu0 %v244
      %2123 = vmatprep.subr.mxu0 0.0
      %2124 = vmatpush1.msra.mxu0 %v243
      %2125 = vmatprep.subr.mxu0 0.0
      %2126 = vmatpush1.msra.mxu0 %v242
      %2127 = vmatprep.subr.mxu0 0.0
      %2128 = vmatpush1.msra.mxu0 %v241
      %2129 = vmatprep.subr.mxu0 0.0
      %2130 = vmatpush1.msra.mxu0 %v240
      %2131 = vmatprep.subr.mxu0 0.0
      %2132 = vmatpush1.msra.mxu0 %v239
      %2133 = vmatprep.subr.mxu0 0.0
      %2134 = vmatpush1.msra.mxu0 %v238
      %2135 = vmatprep.subr.mxu0 0.0
      %2136 = vmatpush1.msra.mxu0 %v237
      %2137 = vmatprep.subr.mxu0 0.0
      %2138 = vmatpush1.msra.mxu0 %v236
      %2139 = vmatprep.subr.mxu0 0.0
      %2140 = vmatpush1.msra.mxu0 %v235
      %2141 = vmatprep.subr.mxu0 0.0
      %2142 = vmatpush1.msra.mxu0 %v234
      %2143 = vmatprep.subr.mxu0 0.0
      %2144 = vmatpush1.msra.mxu0 %v233
      %2145 = vmatprep.subr.mxu0 0.0
      %2146 = vmatpush2.msra.mxu0 %v264
      %2147 = vmatprep.subr.mxu0 0.0
      %2148 = vmatpush2.msra.mxu0 %v263
      %2149 = vmatprep.subr.mxu0 0.0
      %2150 = vmatpush2.msra.mxu0 %v262
      %2151 = vmatprep.subr.mxu0 0.0
      %2152 = vmatpush2.msra.mxu0 %v261
      %2153 = vmatprep.subr.mxu0 0.0
      %2154 = vmatpush2.msra.mxu0 %v260
      %2155 = vmatprep.subr.mxu0 0.0
      %2156 = vmatpush2.msra.mxu0 %v259
      %2157 = vmatprep.subr.mxu0 0.0
      %2158 = vmatpush2.msra.mxu0 %v258
      %2159 = vmatprep.subr.mxu0 0.0
      %2160 = vmatpush2.msra.mxu0 %v257
      %2161 = vmatprep.subr.mxu0 0.0
      %2162 = vmatpush2.msra.mxu0 %v256
      %2163 = vmatprep.subr.mxu0 0.0
      %2164 = vmatpush2.msra.mxu0 %v255
      %2165 = vmatprep.subr.mxu0 0.0
      %2166 = vmatpush2.msra.mxu0 %v254
      %2167 = vmatprep.subr.mxu0 0.0
      %2168 = vmatpush2.msra.mxu0 %v253
      %2169 = vmatprep.subr.mxu0 0.0
      %2170 = vmatpush2.msra.mxu0 %v252
      %2171 = vmatprep.subr.mxu0 0.0
      %2172 = vmatpush2.msra.mxu0 %v251
      %2173 = vmatprep.subr.mxu0 0.0
      %2174 = vmatpush2.msra.mxu0 %v250
      %2175 = vmatprep.subr.mxu0 0.0
      %2176 = vmatpush2.msra.mxu0 %v249
      %2177 = vmatprep.mubr.f32.mxu0 %v1961
      %2178 = vmatmul.mubr.f32.gmra.mxu0 %v1947
      %v2179 = vpop.f32.mrf.mxu0
      %v2180 = vadd.f32 %v2110, %v2179
      %v2181 = vpop.f32.mrf.mxu0
      %2182 = vdwg.mxu0
      %2183 = vmatprep.subr.mxu0 0.0
      %2184 = vmatpush1.msra.mxu0 %v280
      %2185 = vmatprep.subr.mxu0 0.0
      %2186 = vmatpush1.msra.mxu0 %v279
      %2187 = vmatprep.subr.mxu0 0.0
      %2188 = vmatpush1.msra.mxu0 %v278
      %2189 = vmatprep.subr.mxu0 0.0
      %2190 = vmatpush1.msra.mxu0 %v277
      %2191 = vmatprep.subr.mxu0 0.0
      %2192 = vmatpush1.msra.mxu0 %v276
      %2193 = vmatprep.subr.mxu0 0.0
      %2194 = vmatpush1.msra.mxu0 %v275
      %2195 = vmatprep.subr.mxu0 0.0
      %2196 = vmatpush1.msra.mxu0 %v274
      %2197 = vmatprep.subr.mxu0 0.0
      %2198 = vmatpush1.msra.mxu0 %v273
      %2199 = vmatprep.subr.mxu0 0.0
      %2200 = vmatpush1.msra.mxu0 %v272
      %2201 = vmatprep.subr.mxu0 0.0
      %2202 = vmatpush1.msra.mxu0 %v271
      %2203 = vmatprep.subr.mxu0 0.0
      %2204 = vmatpush1.msra.mxu0 %v270
      %2205 = vmatprep.subr.mxu0 0.0
      %2206 = vmatpush1.msra.mxu0 %v269
      %2207 = vmatprep.subr.mxu0 0.0
      %2208 = vmatpush1.msra.mxu0 %v268
      %2209 = vmatprep.subr.mxu0 0.0
      %2210 = vmatpush1.msra.mxu0 %v267
      %2211 = vmatprep.subr.mxu0 0.0
      %2212 = vmatpush1.msra.mxu0 %v266
      %2213 = vmatprep.subr.mxu0 0.0
      %2214 = vmatpush1.msra.mxu0 %v265
      %2215 = vmatprep.subr.mxu0 0.0
      %2216 = vmatpush2.msra.mxu0 %v296
      %2217 = vmatprep.subr.mxu0 0.0
      %2218 = vmatpush2.msra.mxu0 %v295
      %2219 = vmatprep.subr.mxu0 0.0
      %2220 = vmatpush2.msra.mxu0 %v294
      %2221 = vmatprep.subr.mxu0 0.0
      %2222 = vmatpush2.msra.mxu0 %v293
      %2223 = vmatprep.subr.mxu0 0.0
      %2224 = vmatpush2.msra.mxu0 %v292
      %2225 = vmatprep.subr.mxu0 0.0
      %2226 = vmatpush2.msra.mxu0 %v291
      %2227 = vmatprep.subr.mxu0 0.0
      %2228 = vmatpush2.msra.mxu0 %v290
      %2229 = vmatprep.subr.mxu0 0.0
      %2230 = vmatpush2.msra.mxu0 %v289
      %2231 = vmatprep.subr.mxu0 0.0
      %2232 = vmatpush2.msra.mxu0 %v288
      %2233 = vmatprep.subr.mxu0 0.0
      %2234 = vmatpush2.msra.mxu0 %v287
      %2235 = vmatprep.subr.mxu0 0.0
      %2236 = vmatpush2.msra.mxu0 %v286
      %2237 = vmatprep.subr.mxu0 0.0
      %2238 = vmatpush2.msra.mxu0 %v285
      %2239 = vmatprep.subr.mxu0 0.0
      %2240 = vmatpush2.msra.mxu0 %v284
      %2241 = vmatprep.subr.mxu0 0.0
      %2242 = vmatpush2.msra.mxu0 %v283
      %2243 = vmatprep.subr.mxu0 0.0
      %2244 = vmatpush2.msra.mxu0 %v282
      %2245 = vmatprep.subr.mxu0 0.0
      %2246 = vmatpush2.msra.mxu0 %v281
      %2247 = vmatprep.mubr.f32.mxu0 %v1962
      %2248 = vmatmul.mubr.f32.gmra.mxu0 %v1948
      %v2249 = vpop.f32.mrf.mxu0
      %v2250 = vadd.f32 %v2180, %v2249
      %v2251 = vpop.f32.mrf.mxu0
      %2252 = vdwg.mxu0
      %2253 = vmatprep.subr.mxu0 0.0
      %2254 = vmatpush1.msra.mxu0 %v312
      %2255 = vmatprep.subr.mxu0 0.0
      %2256 = vmatpush1.msra.mxu0 %v311
      %2257 = vmatprep.subr.mxu0 0.0
      %2258 = vmatpush1.msra.mxu0 %v310
      %2259 = vmatprep.subr.mxu0 0.0
      %2260 = vmatpush1.msra.mxu0 %v309
      %2261 = vmatprep.subr.mxu0 0.0
      %2262 = vmatpush1.msra.mxu0 %v308
      %2263 = vmatprep.subr.mxu0 0.0
      %2264 = vmatpush1.msra.mxu0 %v307
      %2265 = vmatprep.subr.mxu0 0.0
      %2266 = vmatpush1.msra.mxu0 %v306
      %2267 = vmatprep.subr.mxu0 0.0
      %2268 = vmatpush1.msra.mxu0 %v305
      %2269 = vmatprep.subr.mxu0 0.0
      %2270 = vmatpush1.msra.mxu0 %v304
      %2271 = vmatprep.subr.mxu0 0.0
      %2272 = vmatpush1.msra.mxu0 %v303
      %2273 = vmatprep.subr.mxu0 0.0
      %2274 = vmatpush1.msra.mxu0 %v302
      %2275 = vmatprep.subr.mxu0 0.0
      %2276 = vmatpush1.msra.mxu0 %v301
      %2277 = vmatprep.subr.mxu0 0.0
      %2278 = vmatpush1.msra.mxu0 %v300
      %2279 = vmatprep.subr.mxu0 0.0
      %2280 = vmatpush1.msra.mxu0 %v299
      %2281 = vmatprep.subr.mxu0 0.0
      %2282 = vmatpush1.msra.mxu0 %v298
      %2283 = vmatprep.subr.mxu0 0.0
      %2284 = vmatpush1.msra.mxu0 %v297
      %2285 = vmatprep.subr.mxu0 0.0
      %2286 = vmatpush2.msra.mxu0 %v328
      %2287 = vmatprep.subr.mxu0 0.0
      %2288 = vmatpush2.msra.mxu0 %v327
      %2289 = vmatprep.subr.mxu0 0.0
      %2290 = vmatpush2.msra.mxu0 %v326
      %2291 = vmatprep.subr.mxu0 0.0
      %2292 = vmatpush2.msra.mxu0 %v325
      %2293 = vmatprep.subr.mxu0 0.0
      %2294 = vmatpush2.msra.mxu0 %v324
      %2295 = vmatprep.subr.mxu0 0.0
      %2296 = vmatpush2.msra.mxu0 %v323
      %2297 = vmatprep.subr.mxu0 0.0
      %2298 = vmatpush2.msra.mxu0 %v322
      %2299 = vmatprep.subr.mxu0 0.0
      %2300 = vmatpush2.msra.mxu0 %v321
      %2301 = vmatprep.subr.mxu0 0.0
      %2302 = vmatpush2.msra.mxu0 %v320
      %2303 = vmatprep.subr.mxu0 0.0
      %2304 = vmatpush2.msra.mxu0 %v319
      %2305 = vmatprep.subr.mxu0 0.0
      %2306 = vmatpush2.msra.mxu0 %v318
      %2307 = vmatprep.subr.mxu0 0.0
      %2308 = vmatpush2.msra.mxu0 %v317
      %2309 = vmatprep.subr.mxu0 0.0
      %2310 = vmatpush2.msra.mxu0 %v316
      %2311 = vmatprep.subr.mxu0 0.0
      %2312 = vmatpush2.msra.mxu0 %v315
      %2313 = vmatprep.subr.mxu0 0.0
      %2314 = vmatpush2.msra.mxu0 %v314
      %2315 = vmatprep.subr.mxu0 0.0
      %2316 = vmatpush2.msra.mxu0 %v313
      %2317 = vmatprep.mubr.f32.mxu0 %v1963
      %2318 = vmatmul.mubr.f32.gmra.mxu0 %v1949
      %v2319 = vpop.f32.mrf.mxu0
      %v2320 = vadd.f32 %v2250, %v2319
      %v2321 = vpop.f32.mrf.mxu0
      %2322 = vdwg.mxu0
      %2323 = vmatprep.subr.mxu0 0.0
      %2324 = vmatpush1.msra.mxu0 %v344
      %2325 = vmatprep.subr.mxu0 0.0
      %2326 = vmatpush1.msra.mxu0 %v343
      %2327 = vmatprep.subr.mxu0 0.0
      %2328 = vmatpush1.msra.mxu0 %v342
      %2329 = vmatprep.subr.mxu0 0.0
      %2330 = vmatpush1.msra.mxu0 %v341
      %2331 = vmatprep.subr.mxu0 0.0
      %2332 = vmatpush1.msra.mxu0 %v340
      %2333 = vmatprep.subr.mxu0 0.0
      %2334 = vmatpush1.msra.mxu0 %v339
      %2335 = vmatprep.subr.mxu0 0.0
      %2336 = vmatpush1.msra.mxu0 %v338
      %2337 = vmatprep.subr.mxu0 0.0
      %2338 = vmatpush1.msra.mxu0 %v337
      %2339 = vmatprep.subr.mxu0 0.0
      %2340 = vmatpush1.msra.mxu0 %v336
      %2341 = vmatprep.subr.mxu0 0.0
      %2342 = vmatpush1.msra.mxu0 %v335
      %2343 = vmatprep.subr.mxu0 0.0
      %2344 = vmatpush1.msra.mxu0 %v334
      %2345 = vmatprep.subr.mxu0 0.0
      %2346 = vmatpush1.msra.mxu0 %v333
      %2347 = vmatprep.subr.mxu0 0.0
      %2348 = vmatpush1.msra.mxu0 %v332
      %2349 = vmatprep.subr.mxu0 0.0
      %2350 = vmatpush1.msra.mxu0 %v331
      %2351 = vmatprep.subr.mxu0 0.0
      %2352 = vmatpush1.msra.mxu0 %v330
      %2353 = vmatprep.subr.mxu0 0.0
      %2354 = vmatpush1.msra.mxu0 %v329
      %2355 = vmatprep.subr.mxu0 0.0
      %2356 = vmatpush2.msra.mxu0 %v360
      %2357 = vmatprep.subr.mxu0 0.0
      %2358 = vmatpush2.msra.mxu0 %v359
      %2359 = vmatprep.subr.mxu0 0.0
      %2360 = vmatpush2.msra.mxu0 %v358
      %2361 = vmatprep.subr.mxu0 0.0
      %2362 = vmatpush2.msra.mxu0 %v357
      %2363 = vmatprep.subr.mxu0 0.0
      %2364 = vmatpush2.msra.mxu0 %v356
      %2365 = vmatprep.subr.mxu0 0.0
      %2366 = vmatpush2.msra.mxu0 %v355
      %2367 = vmatprep.subr.mxu0 0.0
      %2368 = vmatpush2.msra.mxu0 %v354
      %2369 = vmatprep.subr.mxu0 0.0
      %2370 = vmatpush2.msra.mxu0 %v353
      %2371 = vmatprep.subr.mxu0 0.0
      %2372 = vmatpush2.msra.mxu0 %v352
      %2373 = vmatprep.subr.mxu0 0.0
      %2374 = vmatpush2.msra.mxu0 %v351
      %2375 = vmatprep.subr.mxu0 0.0
      %2376 = vmatpush2.msra.mxu0 %v350
      %2377 = vmatprep.subr.mxu0 0.0
      %2378 = vmatpush2.msra.mxu0 %v349
      %2379 = vmatprep.subr.mxu0 0.0
      %2380 = vmatpush2.msra.mxu0 %v348
      %2381 = vmatprep.subr.mxu0 0.0
      %2382 = vmatpush2.msra.mxu0 %v347
      %2383 = vmatprep.subr.mxu0 0.0
      %2384 = vmatpush2.msra.mxu0 %v346
      %2385 = vmatprep.subr.mxu0 0.0
      %2386 = vmatpush2.msra.mxu0 %v345
      %2387 = vmatprep.mubr.f32.mxu0 %v1964
      %2388 = vmatmul.mubr.f32.gmra.mxu0 %v1950
      %v2389 = vpop.f32.mrf.mxu0
      %v2390 = vadd.f32 %v2320, %v2389
      %v2391 = vpop.f32.mrf.mxu0
      %2392 = vdwg.mxu0
      %2393 = vmatprep.subr.mxu0 0.0
      %2394 = vmatpush1.msra.mxu0 0.0
      %2395 = vmatprep.subr.mxu0 0.0
      %2396 = vmatpush1.msra.mxu0 0.0
      %2397 = vmatprep.subr.mxu0 0.0
      %2398 = vmatpush1.msra.mxu0 0.0
      %2399 = vmatprep.subr.mxu0 0.0
      %2400 = vmatpush1.msra.mxu0 0.0
      %2401 = vmatprep.subr.mxu0 0.0
      %2402 = vmatpush1.msra.mxu0 0.0
      %2403 = vmatprep.subr.mxu0 0.0
      %2404 = vmatpush1.msra.mxu0 0.0
      %2405 = vmatprep.subr.mxu0 0.0
      %2406 = vmatpush1.msra.mxu0 0.0
      %2407 = vmatprep.subr.mxu0 0.0
      %2408 = vmatpush1.msra.mxu0 0.0
      %2409 = vmatprep.subr.mxu0 0.0
      %2410 = vmatpush1.msra.mxu0 %v368
      %2411 = vmatprep.subr.mxu0 0.0
      %2412 = vmatpush1.msra.mxu0 %v367
      %2413 = vmatprep.subr.mxu0 0.0
      %2414 = vmatpush1.msra.mxu0 %v366
      %2415 = vmatprep.subr.mxu0 0.0
      %2416 = vmatpush1.msra.mxu0 %v365
      %2417 = vmatprep.subr.mxu0 0.0
      %2418 = vmatpush1.msra.mxu0 %v364
      %2419 = vmatprep.subr.mxu0 0.0
      %2420 = vmatpush1.msra.mxu0 %v363
      %2421 = vmatprep.subr.mxu0 0.0
      %2422 = vmatpush1.msra.mxu0 %v362
      %2423 = vmatprep.subr.mxu0 0.0
      %2424 = vmatpush1.msra.mxu0 %v361
      %2425 = vmatprep.subr.mxu0 0.0
      %2426 = vmatpush2.msra.mxu0 0.0
      %2427 = vmatprep.subr.mxu0 0.0
      %2428 = vmatpush2.msra.mxu0 0.0
      %2429 = vmatprep.subr.mxu0 0.0
      %2430 = vmatpush2.msra.mxu0 0.0
      %2431 = vmatprep.subr.mxu0 0.0
      %2432 = vmatpush2.msra.mxu0 0.0
      %2433 = vmatprep.subr.mxu0 0.0
      %2434 = vmatpush2.msra.mxu0 0.0
      %2435 = vmatprep.subr.mxu0 0.0
      %2436 = vmatpush2.msra.mxu0 0.0
      %2437 = vmatprep.subr.mxu0 0.0
      %2438 = vmatpush2.msra.mxu0 0.0
      %2439 = vmatprep.subr.mxu0 0.0
      %2440 = vmatpush2.msra.mxu0 0.0
      %2441 = vmatprep.subr.mxu0 0.0
      %2442 = vmatpush2.msra.mxu0 0.0
      %2443 = vmatprep.subr.mxu0 0.0
      %2444 = vmatpush2.msra.mxu0 0.0
      %2445 = vmatprep.subr.mxu0 0.0
      %2446 = vmatpush2.msra.mxu0 0.0
      %2447 = vmatprep.subr.mxu0 0.0
      %2448 = vmatpush2.msra.mxu0 0.0
      %2449 = vmatprep.subr.mxu0 0.0
      %2450 = vmatpush2.msra.mxu0 0.0
      %2451 = vmatprep.subr.mxu0 0.0
      %2452 = vmatpush2.msra.mxu0 0.0
      %2453 = vmatprep.subr.mxu0 0.0
      %2454 = vmatpush2.msra.mxu0 0.0
      %2455 = vmatprep.subr.mxu0 0.0
      %2456 = vmatpush2.msra.mxu0 0.0
      %2457 = vmatprep.mubr.f32.mxu0 0.0
      %2458 = vmatmul.mubr.f32.gmra.mxu0 %v1971
      %v2459 = vpop.f32.mrf.mxu0
      %v2460 = vadd.f32 %v2390, %v2459
      %v2461 = vpop.f32.mrf.mxu0
      %2462 = vdwg.mxu0
      %vm2463 = vcmp.gt.f32.partialorder %v2460, 0.0
      %v2464 = vmul.f32 %v2460, 0.2
      %v2465 = vsel %vm2463, %v2460, %v2464
      %v2466 = vadd.f32 %v1943, %v2465
      %v2467 = vmul.f32 %v2466, 0.25
      %vm2468 = vcmask 519168
      %2469 = vst.msk [vmem:[%s168] sm:$0xf] %vm2468, %v2467
      %p2470 = scmp.lt.s32.totalorder %s14, 1
      %s2471 = scalar_select %p2470, %s14, 1
      %s2472 = smul.addr %s2471, 4
      %s2473 = scalar_lea.vmem %s3, %s2472
      // Predicated region
      $region33: #{discriminator_forward.6} parent=31 // pred_check
        %p2474 = pneg %p100
      $region34: #{discriminator_forward.6} parent=31 // pred_check_branch
        %2476 = sbr.rel (%p2474) target = $region36
      $region35: #{discriminator_forward.6} parent=31 // pred_region
        _
      $region36: #{discriminator_forward.6} parent=31 // pred_fallthru
        _
    $region32: #{discriminator_forward.6} parent=5 // pred_fallthru
      _
    %p2477 = scmp.le.s32.totalorder 2, %s9
    // Predicated region
    $region37: #{discriminator_forward.6} parent=5 // pred_check
      %p2478 = pneg %p2477
    $region38: #{discriminator_forward.6} parent=5 // pred_check_branch
      %2480 = sbr.rel (%p2478) target = $region40
    $region39: #{discriminator_forward.6} parent=5 // pred_region
      %s2481 = ssub.s32 %s9, 2
      // Predicated region
      $region41: #{discriminator_forward.6} parent=39 // pred_check
        %p2482 = pneg %p106
      $region42: #{discriminator_forward.6} parent=39 // pred_check_branch
        %2484 = sbr.rel (%p2482) target = $region44
      $region43: #{discriminator_forward.6} parent=39 // pred_region
        %p2485 = scmp.lt.s32.totalorder %s15, 1
        %s2486 = scalar_select %p2485, %s15, 1
        %s2487 = smul.addr %s2486, 4
        %s2488 = scalar_lea.vmem %s3, %s2487
      $region44: #{discriminator_forward.6} parent=39 // pred_fallthru
        _
    $region40: #{discriminator_forward.6} parent=5 // pred_fallthru
      _
  $region6: #{discriminator_forward.6} parent=0 // loop_footer
    %s13 = sadd.s32 1, %s9
  $region7: #{discriminator_forward.6} parent=0 // loop_footer_branch
    %8 = sbr.rel target = $region3
  $region8: #{discriminator_forward.6} parent=0 // loop_exit
    _

// kernel: discriminator_forward.7
$region0: #{discriminator_forward.7}
  #allocation0 [shape = 'u32[]', space=smem, size = 0x4, offset = 0x4, fixed_abs, tag = 'smem constant byte address 0x4 - core index']
  #allocation1 [shape = 'u32[144,128]{1,0:T(1,128)}', space=vmem, size = 0x12000, scoped, tag = 'internal scratch']
  #allocation2 [shape = 'f32[1,1]{1,0:T(1,128)S(1)}', space=vmem, size = 0x200, scoped, tag = 'scoped memory for discriminator_forward.7']
  %s0 = inlined_call_operand.vmem [shape: f32[2,256], index: 0, kind: input, shape index: {}]
  %s1 = inlined_call_operand.vmem [shape: f32[256,512], index: 1, kind: input, shape index: {}]
  %s2 = inlined_call_operand.vmem [shape: f32[1,512], index: 2, kind: input, shape index: {}]
  %s3 = inlined_call_operand.vmem [shape: f32[512,64], index: 3, kind: input, shape index: {}]
  %s4 = inlined_call_operand.vmem [shape: f32[1,64], index: 4, kind: input, shape index: {}]
  %s5 = inlined_call_operand.vmem [shape: f32[64,1], index: 5, kind: input, shape index: {}]
  %s6 = inlined_call_operand.<no memory space> [shape: f32[1,1], index: 6, kind: input, shape index: {}]
  %s7 = inlined_call_operand.vmem [shape: f32[2,1], index: 7, kind: output, shape index: {}]
  %s8 = sld [smem:[#allocation0]]
  $region38: #{discriminator_forward.7} parent=0
    _
  %s10 = ssub.s32 1, %s8
  %s11 = scalar_select 0, %s10, %s8
  %v12 = vstv %s6
  %13 = vst [vmem:[#allocation2] sm:$0x1] %v12
  // Predicated region
  $region2: #{discriminator_forward.7} parent=0 // pred_check
    _
  $region3: #{discriminator_forward.7} parent=0 // pred_check_branch
    %15 = sbr.rel (0) target = $region5
  $region4: #{discriminator_forward.7} parent=0 // pred_region
    _
  $region5: #{discriminator_forward.7} parent=0 // pred_fallthru
    _
  // Predicated region
  $region6: #{discriminator_forward.7} parent=0 // pred_check
    _
  $region7: #{discriminator_forward.7} parent=0 // pred_check_branch
    %17 = sbr.rel (0) target = $region9
  $region8: #{discriminator_forward.7} parent=0 // pred_region
    _
  $region9: #{discriminator_forward.7} parent=0 // pred_fallthru
    _
  // Predicated region
  $region10: #{discriminator_forward.7} parent=0 // pred_check
    _
  $region11: #{discriminator_forward.7} parent=0 // pred_check_branch
    %19 = sbr.rel (0) target = $region13
  $region12: #{discriminator_forward.7} parent=0 // pred_region
    _
  $region13: #{discriminator_forward.7} parent=0 // pred_fallthru
    _
  // Predicated region
  $region14: #{discriminator_forward.7} parent=0 // pred_check
    _
  $region15: #{discriminator_forward.7} parent=0 // pred_check_branch
    %21 = sbr.rel (0) target = $region17
  $region16: #{discriminator_forward.7} parent=0 // pred_region
    _
  $region17: #{discriminator_forward.7} parent=0 // pred_fallthru
    _
  // Predicated region
  $region18: #{discriminator_forward.7} parent=0 // pred_check
    _
  $region19: #{discriminator_forward.7} parent=0 // pred_check_branch
    %23 = sbr.rel (0) target = $region21
  $region20: #{discriminator_forward.7} parent=0 // pred_region
    _
  $region21: #{discriminator_forward.7} parent=0 // pred_fallthru
    _
  // Predicated region
  $region22: #{discriminator_forward.7} parent=0 // pred_check
    _
  $region23: #{discriminator_forward.7} parent=0 // pred_check_branch
    %25 = sbr.rel (0) target = $region25
  $region24: #{discriminator_forward.7} parent=0 // pred_region
    _
  $region25: #{discriminator_forward.7} parent=0 // pred_fallthru
    _
  // Predicated region
  $region26: #{discriminator_forward.7} parent=0 // pred_check
    _
  $region27: #{discriminator_forward.7} parent=0 // pred_check_branch
    %27 = sbr.rel (0) target = $region29
  $region28: #{discriminator_forward.7} parent=0 // pred_region
    _
  $region29: #{discriminator_forward.7} parent=0 // pred_fallthru
    _
  %v28 = vld [vmem:[%s0] sm:$0xf]
  %v29 = vld [vmem:[%s1] sm:$0xff]
  %v30 = vld [vmem:[%s1 + $0x8] sm:$0xff]
  %v31 = vld [vmem:[%s1 + $0x10] sm:$0xff]
  %v32 = vld [vmem:[%s1 + $0x18] sm:$0xff]
  %v33 = vld [vmem:[%s1 + $0x20] sm:$0xff]
  %v34 = vld [vmem:[%s1 + $0x28] sm:$0xff]
  %v35 = vld [vmem:[%s1 + $0x30] sm:$0xff]
  %v36 = vld [vmem:[%s1 + $0x38] sm:$0xff]
  %v37 = vld [vmem:[%s1 + $0x40] sm:$0xff]
  %v38 = vld [vmem:[%s1 + $0x48] sm:$0xff]
  %v39 = vld [vmem:[%s1 + $0x50] sm:$0xff]
  %v40 = vld [vmem:[%s1 + $0x58] sm:$0xff]
  %v41 = vld [vmem:[%s1 + $0x60] sm:$0xff]
  %v42 = vld [vmem:[%s1 + $0x68] sm:$0xff]
  %v43 = vld [vmem:[%s1 + $0x70] sm:$0xff]
  %v44 = vld [vmem:[%s1 + $0x78] sm:$0xff]
  %v45 = vld [vmem:[%s1 + $0x80] sm:$0xff]
  %v46 = vld [vmem:[%s1 + $0x88] sm:$0xff]
  %v47 = vld [vmem:[%s1 + $0x90] sm:$0xff]
  %v48 = vld [vmem:[%s1 + $0x98] sm:$0xff]
  %v49 = vld [vmem:[%s1 + $0xa0] sm:$0xff]
  %v50 = vld [vmem:[%s1 + $0xa8] sm:$0xff]
  %v51 = vld [vmem:[%s1 + $0xb0] sm:$0xff]
  %v52 = vld [vmem:[%s1 + $0xb8] sm:$0xff]
  %v53 = vld [vmem:[%s1 + $0xc0] sm:$0xff]
  %v54 = vld [vmem:[%s1 + $0xc8] sm:$0xff]
  %v55 = vld [vmem:[%s1 + $0xd0] sm:$0xff]
  %v56 = vld [vmem:[%s1 + $0xd8] sm:$0xff]
  %v57 = vld [vmem:[%s1 + $0xe0] sm:$0xff]
  %v58 = vld [vmem:[%s1 + $0xe8] sm:$0xff]
  %v59 = vld [vmem:[%s1 + $0xf0] sm:$0xff]
  %v60 = vld [vmem:[%s1 + $0xf8] sm:$0xff]
  %v61 = vld [vmem:[%s1 + $0x100] sm:$0xff]
  %v62 = vld [vmem:[%s1 + $0x108] sm:$0xff]
  %v63 = vld [vmem:[%s1 + $0x110] sm:$0xff]
  %v64 = vld [vmem:[%s1 + $0x118] sm:$0xff]
  %v65 = vld [vmem:[%s1 + $0x120] sm:$0xff]
  %v66 = vld [vmem:[%s1 + $0x128] sm:$0xff]
  %v67 = vld [vmem:[%s1 + $0x130] sm:$0xff]
  %v68 = vld [vmem:[%s1 + $0x138] sm:$0xff]
  %v69 = vld [vmem:[%s1 + $0x140] sm:$0xff]
  %v70 = vld [vmem:[%s1 + $0x148] sm:$0xff]
  %v71 = vld [vmem:[%s1 + $0x150] sm:$0xff]
  %v72 = vld [vmem:[%s1 + $0x158] sm:$0xff]
  %v73 = vld [vmem:[%s1 + $0x160] sm:$0xff]
  %v74 = vld [vmem:[%s1 + $0x168] sm:$0xff]
  %v75 = vld [vmem:[%s1 + $0x170] sm:$0xff]
  %v76 = vld [vmem:[%s1 + $0x178] sm:$0xff]
  %v77 = vld [vmem:[%s1 + $0x180] sm:$0xff]
  %v78 = vld [vmem:[%s1 + $0x188] sm:$0xff]
  %v79 = vld [vmem:[%s1 + $0x190] sm:$0xff]
  %v80 = vld [vmem:[%s1 + $0x198] sm:$0xff]
  %v81 = vld [vmem:[%s1 + $0x1a0] sm:$0xff]
  %v82 = vld [vmem:[%s1 + $0x1a8] sm:$0xff]
  %v83 = vld [vmem:[%s1 + $0x1b0] sm:$0xff]
  %v84 = vld [vmem:[%s1 + $0x1b8] sm:$0xff]
  %v85 = vld [vmem:[%s1 + $0x1c0] sm:$0xff]
  %v86 = vld [vmem:[%s1 + $0x1c8] sm:$0xff]
  %v87 = vld [vmem:[%s1 + $0x1d0] sm:$0xff]
  %v88 = vld [vmem:[%s1 + $0x1d8] sm:$0xff]
  %v89 = vld [vmem:[%s1 + $0x1e0] sm:$0xff]
  %v90 = vld [vmem:[%s1 + $0x1e8] sm:$0xff]
  %v91 = vld [vmem:[%s1 + $0x1f0] sm:$0xff]
  %v92 = vld [vmem:[%s1 + $0x1f8] sm:$0xff]
  %v93 = vld [vmem:[%s1 + $0x200] sm:$0xff]
  %v94 = vld [vmem:[%s1 + $0x208] sm:$0xff]
  %v95 = vld [vmem:[%s1 + $0x210] sm:$0xff]
  %v96 = vld [vmem:[%s1 + $0x218] sm:$0xff]
  %v97 = vld [vmem:[%s1 + $0x220] sm:$0xff]
  %v98 = vld [vmem:[%s1 + $0x228] sm:$0xff]
  %v99 = vld [vmem:[%s1 + $0x230] sm:$0xff]
  %v100 = vld [vmem:[%s1 + $0x238] sm:$0xff]
  %v101 = vld [vmem:[%s1 + $0x240] sm:$0xff]
  %v102 = vld [vmem:[%s1 + $0x248] sm:$0xff]
  %v103 = vld [vmem:[%s1 + $0x250] sm:$0xff]
  %v104 = vld [vmem:[%s1 + $0x258] sm:$0xff]
  %v105 = vld [vmem:[%s1 + $0x260] sm:$0xff]
  %v106 = vld [vmem:[%s1 + $0x268] sm:$0xff]
  %v107 = vld [vmem:[%s1 + $0x270] sm:$0xff]
  %v108 = vld [vmem:[%s1 + $0x278] sm:$0xff]
  %v109 = vld [vmem:[%s1 + $0x280] sm:$0xff]
  %v110 = vld [vmem:[%s1 + $0x288] sm:$0xff]
  %v111 = vld [vmem:[%s1 + $0x290] sm:$0xff]
  %v112 = vld [vmem:[%s1 + $0x298] sm:$0xff]
  %v113 = vld [vmem:[%s1 + $0x2a0] sm:$0xff]
  %v114 = vld [vmem:[%s1 + $0x2a8] sm:$0xff]
  %v115 = vld [vmem:[%s1 + $0x2b0] sm:$0xff]
  %v116 = vld [vmem:[%s1 + $0x2b8] sm:$0xff]
  %v117 = vld [vmem:[%s1 + $0x2c0] sm:$0xff]
  %v118 = vld [vmem:[%s1 + $0x2c8] sm:$0xff]
  %v119 = vld [vmem:[%s1 + $0x2d0] sm:$0xff]
  %v120 = vld [vmem:[%s1 + $0x2d8] sm:$0xff]
  %v121 = vld [vmem:[%s1 + $0x2e0] sm:$0xff]
  %v122 = vld [vmem:[%s1 + $0x2e8] sm:$0xff]
  %v123 = vld [vmem:[%s1 + $0x2f0] sm:$0xff]
  %v124 = vld [vmem:[%s1 + $0x2f8] sm:$0xff]
  %v125 = vld [vmem:[%s1 + $0x300] sm:$0xff]
  %v126 = vld [vmem:[%s1 + $0x308] sm:$0xff]
  %v127 = vld [vmem:[%s1 + $0x310] sm:$0xff]
  %v128 = vld [vmem:[%s1 + $0x318] sm:$0xff]
  %v129 = vld [vmem:[%s1 + $0x320] sm:$0xff]
  %v130 = vld [vmem:[%s1 + $0x328] sm:$0xff]
  %v131 = vld [vmem:[%s1 + $0x330] sm:$0xff]
  %v132 = vld [vmem:[%s1 + $0x338] sm:$0xff]
  %v133 = vld [vmem:[%s1 + $0x340] sm:$0xff]
  %v134 = vld [vmem:[%s1 + $0x348] sm:$0xff]
  %v135 = vld [vmem:[%s1 + $0x350] sm:$0xff]
  %v136 = vld [vmem:[%s1 + $0x358] sm:$0xff]
  %v137 = vld [vmem:[%s1 + $0x360] sm:$0xff]
  %v138 = vld [vmem:[%s1 + $0x368] sm:$0xff]
  %v139 = vld [vmem:[%s1 + $0x370] sm:$0xff]
  %v140 = vld [vmem:[%s1 + $0x378] sm:$0xff]
  %v141 = vld [vmem:[%s1 + $0x380] sm:$0xff]
  %v142 = vld [vmem:[%s1 + $0x388] sm:$0xff]
  %v143 = vld [vmem:[%s1 + $0x390] sm:$0xff]
  %v144 = vld [vmem:[%s1 + $0x398] sm:$0xff]
  %v145 = vld [vmem:[%s1 + $0x3a0] sm:$0xff]
  %v146 = vld [vmem:[%s1 + $0x3a8] sm:$0xff]
  %v147 = vld [vmem:[%s1 + $0x3b0] sm:$0xff]
  %v148 = vld [vmem:[%s1 + $0x3b8] sm:$0xff]
  %v149 = vld [vmem:[%s1 + $0x3c0] sm:$0xff]
  %v150 = vld [vmem:[%s1 + $0x3c8] sm:$0xff]
  %v151 = vld [vmem:[%s1 + $0x3d0] sm:$0xff]
  %v152 = vld [vmem:[%s1 + $0x3d8] sm:$0xff]
  %v153 = vld [vmem:[%s1 + $0x3e0] sm:$0xff]
  %v154 = vld [vmem:[%s1 + $0x3e8] sm:$0xff]
  %v155 = vld [vmem:[%s1 + $0x3f0] sm:$0xff]
  %v156 = vld [vmem:[%s1 + $0x3f8] sm:$0xff]
  %v157 = vld [vmem:[%s2] sm:$0xf]
  %v159 = vlaneseq
  %v160 = vshrl.u32 %v159, 7
  %v161 = vsub.s32 0, %v160
  %v162 = vrot.slane %v157, %v161
  %v163 = vlaneseq
  %v164 = vshrl.u32 %v163, 7
  %v165 = vsub.s32 1, %v164
  %v166 = vrot.slane %v157, %v165
  %v167 = vlaneseq
  %v168 = vshrl.u32 %v167, 7
  %v169 = vsub.s32 2, %v168
  %v170 = vrot.slane %v157, %v169
  %v171 = vlaneseq
  %v172 = vshrl.u32 %v171, 7
  %v173 = vsub.s32 3, %v172
  %v174 = vrot.slane %v157, %v173
  %v181 = vunpack.c.l.s4 1983009808
  %v182 = vunpack.c.0.s8 %v181
  %v183 = vlaneseq
  %v184 = vshrl.u32 %v183, 7
  %v185 = vsub.s32 %v182, %v184
  %v186 = vrot.slane %v28, %v185
  %v187 = vcombine.high %v186, %v186
  %190 = vmatprep.subr.mxu0 %v90
  %191 = vmatpush1.msra.mxu0 %v89
  %192 = vmatprep.subr.mxu0 %v86
  %193 = vmatpush1.msra.mxu0 %v85
  %194 = vmatprep.subr.mxu0 %v82
  %195 = vmatpush1.msra.mxu0 %v81
  %196 = vmatprep.subr.mxu0 %v78
  %197 = vmatpush1.msra.mxu0 %v77
  %198 = vmatprep.subr.mxu0 %v74
  %199 = vmatpush1.msra.mxu0 %v73
  %200 = vmatprep.subr.mxu0 %v70
  %201 = vmatpush1.msra.mxu0 %v69
  %202 = vmatprep.subr.mxu0 %v66
  %203 = vmatpush1.msra.mxu0 %v65
  %204 = vmatprep.subr.mxu0 %v62
  %205 = vmatpush1.msra.mxu0 %v61
  %206 = vmatprep.subr.mxu0 %v58
  %207 = vmatpush1.msra.mxu0 %v57
  %208 = vmatprep.subr.mxu0 %v54
  %209 = vmatpush1.msra.mxu0 %v53
  %210 = vmatprep.subr.mxu0 %v50
  %211 = vmatpush1.msra.mxu0 %v49
  %212 = vmatprep.subr.mxu0 %v46
  %213 = vmatpush1.msra.mxu0 %v45
  %214 = vmatprep.subr.mxu0 %v42
  %215 = vmatpush1.msra.mxu0 %v41
  %216 = vmatprep.subr.mxu0 %v38
  %217 = vmatpush1.msra.mxu0 %v37
  %218 = vmatprep.subr.mxu0 %v34
  %219 = vmatpush1.msra.mxu0 %v33
  %220 = vmatprep.subr.mxu0 %v30
  %221 = vmatpush1.msra.mxu0 %v29
  %222 = vmatprep.subr.mxu0 %v154
  %223 = vmatpush2.msra.mxu0 %v153
  %224 = vmatprep.subr.mxu0 %v150
  %225 = vmatpush2.msra.mxu0 %v149
  %226 = vmatprep.subr.mxu0 %v146
  %227 = vmatpush2.msra.mxu0 %v145
  %228 = vmatprep.subr.mxu0 %v142
  %229 = vmatpush2.msra.mxu0 %v141
  %230 = vmatprep.subr.mxu0 %v138
  %231 = vmatpush2.msra.mxu0 %v137
  %232 = vmatprep.subr.mxu0 %v134
  %233 = vmatpush2.msra.mxu0 %v133
  %234 = vmatprep.subr.mxu0 %v130
  %235 = vmatpush2.msra.mxu0 %v129
  %236 = vmatprep.subr.mxu0 %v126
  %237 = vmatpush2.msra.mxu0 %v125
  %238 = vmatprep.subr.mxu0 %v122
  %239 = vmatpush2.msra.mxu0 %v121
  %240 = vmatprep.subr.mxu0 %v118
  %241 = vmatpush2.msra.mxu0 %v117
  %242 = vmatprep.subr.mxu0 %v114
  %243 = vmatpush2.msra.mxu0 %v113
  %244 = vmatprep.subr.mxu0 %v110
  %245 = vmatpush2.msra.mxu0 %v109
  %246 = vmatprep.subr.mxu0 %v106
  %247 = vmatpush2.msra.mxu0 %v105
  %248 = vmatprep.subr.mxu0 %v102
  %249 = vmatpush2.msra.mxu0 %v101
  %250 = vmatprep.subr.mxu0 %v98
  %251 = vmatpush2.msra.mxu0 %v97
  %252 = vmatprep.subr.mxu0 %v94
  %253 = vmatpush2.msra.mxu0 %v93
  %254 = vmatprep.mubr.f32.mxu0 %v187
  %255 = vmatmul.mubr.f32.gmra.mxu0 %v186
  %v256 = vpop.f32.mrf.mxu0
  %v257 = vadd.f32 %v162, %v256
  %v258 = vpop.f32.mrf.mxu0
  %v259 = vadd.f32 %v166, %v258
  %260 = vdwg.mxu0
  %261 = vmatprep.subr.mxu0 %v92
  %262 = vmatpush1.msra.mxu0 %v91
  %263 = vmatprep.subr.mxu0 %v88
  %264 = vmatpush1.msra.mxu0 %v87
  %265 = vmatprep.subr.mxu0 %v84
  %266 = vmatpush1.msra.mxu0 %v83
  %267 = vmatprep.subr.mxu0 %v80
  %268 = vmatpush1.msra.mxu0 %v79
  %269 = vmatprep.subr.mxu0 %v76
  %270 = vmatpush1.msra.mxu0 %v75
  %271 = vmatprep.subr.mxu0 %v72
  %272 = vmatpush1.msra.mxu0 %v71
  %273 = vmatprep.subr.mxu0 %v68
  %274 = vmatpush1.msra.mxu0 %v67
  %275 = vmatprep.subr.mxu0 %v64
  %276 = vmatpush1.msra.mxu0 %v63
  %277 = vmatprep.subr.mxu0 %v60
  %278 = vmatpush1.msra.mxu0 %v59
  %279 = vmatprep.subr.mxu0 %v56
  %280 = vmatpush1.msra.mxu0 %v55
  %281 = vmatprep.subr.mxu0 %v52
  %282 = vmatpush1.msra.mxu0 %v51
  %283 = vmatprep.subr.mxu0 %v48
  %284 = vmatpush1.msra.mxu0 %v47
  %285 = vmatprep.subr.mxu0 %v44
  %286 = vmatpush1.msra.mxu0 %v43
  %287 = vmatprep.subr.mxu0 %v40
  %288 = vmatpush1.msra.mxu0 %v39
  %289 = vmatprep.subr.mxu0 %v36
  %290 = vmatpush1.msra.mxu0 %v35
  %291 = vmatprep.subr.mxu0 %v32
  %292 = vmatpush1.msra.mxu0 %v31
  %293 = vmatprep.subr.mxu0 %v156
  %294 = vmatpush2.msra.mxu0 %v155
  %295 = vmatprep.subr.mxu0 %v152
  %296 = vmatpush2.msra.mxu0 %v151
  %297 = vmatprep.subr.mxu0 %v148
  %298 = vmatpush2.msra.mxu0 %v147
  %299 = vmatprep.subr.mxu0 %v144
  %300 = vmatpush2.msra.mxu0 %v143
  %301 = vmatprep.subr.mxu0 %v140
  %302 = vmatpush2.msra.mxu0 %v139
  %303 = vmatprep.subr.mxu0 %v136
  %304 = vmatpush2.msra.mxu0 %v135
  %305 = vmatprep.subr.mxu0 %v132
  %306 = vmatpush2.msra.mxu0 %v131
  %307 = vmatprep.subr.mxu0 %v128
  %308 = vmatpush2.msra.mxu0 %v127
  %309 = vmatprep.subr.mxu0 %v124
  %310 = vmatpush2.msra.mxu0 %v123
  %311 = vmatprep.subr.mxu0 %v120
  %312 = vmatpush2.msra.mxu0 %v119
  %313 = vmatprep.subr.mxu0 %v116
  %314 = vmatpush2.msra.mxu0 %v115
  %315 = vmatprep.subr.mxu0 %v112
  %316 = vmatpush2.msra.mxu0 %v111
  %317 = vmatprep.subr.mxu0 %v108
  %318 = vmatpush2.msra.mxu0 %v107
  %319 = vmatprep.subr.mxu0 %v104
  %320 = vmatpush2.msra.mxu0 %v103
  %321 = vmatprep.subr.mxu0 %v100
  %322 = vmatpush2.msra.mxu0 %v99
  %323 = vmatprep.subr.mxu0 %v96
  %324 = vmatpush2.msra.mxu0 %v95
  %325 = vmatprep.mubr.f32.mxu0 %v187
  %326 = vmatmul.mubr.f32.gmra.mxu0 %v186
  %v327 = vpop.f32.mrf.mxu0
  %v328 = vadd.f32 %v170, %v327
  %v329 = vpop.f32.mrf.mxu0
  %v330 = vadd.f32 %v174, %v329
  %331 = vdwg.mxu0
  %vm332 = vcmp.gt.f32.partialorder %v257, 0.0
  %vm333 = vcmp.gt.f32.partialorder %v259, 0.0
  %vm334 = vcmp.gt.f32.partialorder %v328, 0.0
  %vm335 = vcmp.gt.f32.partialorder %v330, 0.0
  %v336 = vmul.f32 %v257, 0.2
  %v337 = vmul.f32 %v259, 0.2
  %v338 = vmul.f32 %v328, 0.2
  %v339 = vmul.f32 %v330, 0.2
  %v340 = vsel %vm332, %v257, %v336
  %v341 = vsel %vm333, %v259, %v337
  %v342 = vsel %vm334, %v328, %v338
  %v343 = vsel %vm335, %v330, %v339
  %v344 = vld [vmem:[%s3] sm:$0xff]
  %v345 = vld [vmem:[%s3 + $0x8] sm:$0xff]
  %v346 = vld [vmem:[%s3 + $0x10] sm:$0xff]
  %v347 = vld [vmem:[%s3 + $0x18] sm:$0xff]
  %v348 = vld [vmem:[%s3 + $0x20] sm:$0xff]
  %v349 = vld [vmem:[%s3 + $0x28] sm:$0xff]
  %v350 = vld [vmem:[%s3 + $0x30] sm:$0xff]
  %v351 = vld [vmem:[%s3 + $0x38] sm:$0xff]
  %v352 = vld [vmem:[%s3 + $0x40] sm:$0xff]
  %v353 = vld [vmem:[%s3 + $0x48] sm:$0xff]
  %v354 = vld [vmem:[%s3 + $0x50] sm:$0xff]
  %v355 = vld [vmem:[%s3 + $0x58] sm:$0xff]
  %v356 = vld [vmem:[%s3 + $0x60] sm:$0xff]
  %v357 = vld [vmem:[%s3 + $0x68] sm:$0xff]
  %v358 = vld [vmem:[%s3 + $0x70] sm:$0xff]
  %v359 = vld [vmem:[%s3 + $0x78] sm:$0xff]
  %v360 = vld [vmem:[%s3 + $0x80] sm:$0xff]
  %v361 = vld [vmem:[%s3 + $0x88] sm:$0xff]
  %v362 = vld [vmem:[%s3 + $0x90] sm:$0xff]
  %v363 = vld [vmem:[%s3 + $0x98] sm:$0xff]
  %v364 = vld [vmem:[%s3 + $0xa0] sm:$0xff]
  %v365 = vld [vmem:[%s3 + $0xa8] sm:$0xff]
  %v366 = vld [vmem:[%s3 + $0xb0] sm:$0xff]
  %v367 = vld [vmem:[%s3 + $0xb8] sm:$0xff]
  %v368 = vld [vmem:[%s3 + $0xc0] sm:$0xff]
  %v369 = vld [vmem:[%s3 + $0xc8] sm:$0xff]
  %v370 = vld [vmem:[%s3 + $0xd0] sm:$0xff]
  %v371 = vld [vmem:[%s3 + $0xd8] sm:$0xff]
  %v372 = vld [vmem:[%s3 + $0xe0] sm:$0xff]
  %v373 = vld [vmem:[%s3 + $0xe8] sm:$0xff]
  %v374 = vld [vmem:[%s3 + $0xf0] sm:$0xff]
  %v375 = vld [vmem:[%s3 + $0xf8] sm:$0xff]
  %v376 = vld [vmem:[%s3 + $0x100] sm:$0xff]
  %v377 = vld [vmem:[%s3 + $0x108] sm:$0xff]
  %v378 = vld [vmem:[%s3 + $0x110] sm:$0xff]
  %v379 = vld [vmem:[%s3 + $0x118] sm:$0xff]
  %v380 = vld [vmem:[%s3 + $0x120] sm:$0xff]
  %v381 = vld [vmem:[%s3 + $0x128] sm:$0xff]
  %v382 = vld [vmem:[%s3 + $0x130] sm:$0xff]
  %v383 = vld [vmem:[%s3 + $0x138] sm:$0xff]
  %v384 = vld [vmem:[%s3 + $0x140] sm:$0xff]
  %v385 = vld [vmem:[%s3 + $0x148] sm:$0xff]
  %v386 = vld [vmem:[%s3 + $0x150] sm:$0xff]
  %v387 = vld [vmem:[%s3 + $0x158] sm:$0xff]
  %v388 = vld [vmem:[%s3 + $0x160] sm:$0xff]
  %v389 = vld [vmem:[%s3 + $0x168] sm:$0xff]
  %v390 = vld [vmem:[%s3 + $0x170] sm:$0xff]
  %v391 = vld [vmem:[%s3 + $0x178] sm:$0xff]
  %v392 = vld [vmem:[%s3 + $0x180] sm:$0xff]
  %v393 = vld [vmem:[%s3 + $0x188] sm:$0xff]
  %v394 = vld [vmem:[%s3 + $0x190] sm:$0xff]
  %v395 = vld [vmem:[%s3 + $0x198] sm:$0xff]
  %v396 = vld [vmem:[%s3 + $0x1a0] sm:$0xff]
  %v397 = vld [vmem:[%s3 + $0x1a8] sm:$0xff]
  %v398 = vld [vmem:[%s3 + $0x1b0] sm:$0xff]
  %v399 = vld [vmem:[%s3 + $0x1b8] sm:$0xff]
  %v400 = vld [vmem:[%s3 + $0x1c0] sm:$0xff]
  %v401 = vld [vmem:[%s3 + $0x1c8] sm:$0xff]
  %v402 = vld [vmem:[%s3 + $0x1d0] sm:$0xff]
  %v403 = vld [vmem:[%s3 + $0x1d8] sm:$0xff]
  %v404 = vld [vmem:[%s3 + $0x1e0] sm:$0xff]
  %v405 = vld [vmem:[%s3 + $0x1e8] sm:$0xff]
  %v406 = vld [vmem:[%s3 + $0x1f0] sm:$0xff]
  %v407 = vld [vmem:[%s3 + $0x1f8] sm:$0xff]
  %v408 = vld [vmem:[%s4] sm:$0x1]
  %v410 = vlaneseq
  %v411 = vshrl.u32 %v410, 7
  %v412 = vsub.s32 0, %v411
  %v413 = vrot.slane %v408, %v412
  %415 = vmatprep.subr.mxu0 0.0
  %416 = vmatpush1.msra.mxu0 %v359
  %417 = vmatprep.subr.mxu0 0.0
  %418 = vmatpush1.msra.mxu0 %v358
  %419 = vmatprep.subr.mxu0 0.0
  %420 = vmatpush1.msra.mxu0 %v357
  %421 = vmatprep.subr.mxu0 0.0
  %422 = vmatpush1.msra.mxu0 %v356
  %423 = vmatprep.subr.mxu0 0.0
  %424 = vmatpush1.msra.mxu0 %v355
  %425 = vmatprep.subr.mxu0 0.0
  %426 = vmatpush1.msra.mxu0 %v354
  %427 = vmatprep.subr.mxu0 0.0
  %428 = vmatpush1.msra.mxu0 %v353
  %429 = vmatprep.subr.mxu0 0.0
  %430 = vmatpush1.msra.mxu0 %v352
  %431 = vmatprep.subr.mxu0 0.0
  %432 = vmatpush1.msra.mxu0 %v351
  %433 = vmatprep.subr.mxu0 0.0
  %434 = vmatpush1.msra.mxu0 %v350
  %435 = vmatprep.subr.mxu0 0.0
  %436 = vmatpush1.msra.mxu0 %v349
  %437 = vmatprep.subr.mxu0 0.0
  %438 = vmatpush1.msra.mxu0 %v348
  %439 = vmatprep.subr.mxu0 0.0
  %440 = vmatpush1.msra.mxu0 %v347
  %441 = vmatprep.subr.mxu0 0.0
  %442 = vmatpush1.msra.mxu0 %v346
  %443 = vmatprep.subr.mxu0 0.0
  %444 = vmatpush1.msra.mxu0 %v345
  %445 = vmatprep.subr.mxu0 0.0
  %446 = vmatpush1.msra.mxu0 %v344
  %447 = vmatprep.subr.mxu0 0.0
  %448 = vmatpush2.msra.mxu0 %v375
  %449 = vmatprep.subr.mxu0 0.0
  %450 = vmatpush2.msra.mxu0 %v374
  %451 = vmatprep.subr.mxu0 0.0
  %452 = vmatpush2.msra.mxu0 %v373
  %453 = vmatprep.subr.mxu0 0.0
  %454 = vmatpush2.msra.mxu0 %v372
  %455 = vmatprep.subr.mxu0 0.0
  %456 = vmatpush2.msra.mxu0 %v371
  %457 = vmatprep.subr.mxu0 0.0
  %458 = vmatpush2.msra.mxu0 %v370
  %459 = vmatprep.subr.mxu0 0.0
  %460 = vmatpush2.msra.mxu0 %v369
  %461 = vmatprep.subr.mxu0 0.0
  %462 = vmatpush2.msra.mxu0 %v368
  %463 = vmatprep.subr.mxu0 0.0
  %464 = vmatpush2.msra.mxu0 %v367
  %465 = vmatprep.subr.mxu0 0.0
  %466 = vmatpush2.msra.mxu0 %v366
  %467 = vmatprep.subr.mxu0 0.0
  %468 = vmatpush2.msra.mxu0 %v365
  %469 = vmatprep.subr.mxu0 0.0
  %470 = vmatpush2.msra.mxu0 %v364
  %471 = vmatprep.subr.mxu0 0.0
  %472 = vmatpush2.msra.mxu0 %v363
  %473 = vmatprep.subr.mxu0 0.0
  %474 = vmatpush2.msra.mxu0 %v362
  %475 = vmatprep.subr.mxu0 0.0
  %476 = vmatpush2.msra.mxu0 %v361
  %477 = vmatprep.subr.mxu0 0.0
  %478 = vmatpush2.msra.mxu0 %v360
  %479 = vmatprep.mubr.f32.mxu0 %v341
  %480 = vmatmul.mubr.f32.gmra.mxu0 %v340
  %v481 = vpop.f32.mrf.mxu0
  %v482 = vadd.f32 %v413, %v481
  %v483 = vpop.f32.mrf.mxu0
  %484 = vdwg.mxu0
  %485 = vmatprep.subr.mxu0 0.0
  %486 = vmatpush1.msra.mxu0 %v391
  %487 = vmatprep.subr.mxu0 0.0
  %488 = vmatpush1.msra.mxu0 %v390
  %489 = vmatprep.subr.mxu0 0.0
  %490 = vmatpush1.msra.mxu0 %v389
  %491 = vmatprep.subr.mxu0 0.0
  %492 = vmatpush1.msra.mxu0 %v388
  %493 = vmatprep.subr.mxu0 0.0
  %494 = vmatpush1.msra.mxu0 %v387
  %495 = vmatprep.subr.mxu0 0.0
  %496 = vmatpush1.msra.mxu0 %v386
  %497 = vmatprep.subr.mxu0 0.0
  %498 = vmatpush1.msra.mxu0 %v385
  %499 = vmatprep.subr.mxu0 0.0
  %500 = vmatpush1.msra.mxu0 %v384
  %501 = vmatprep.subr.mxu0 0.0
  %502 = vmatpush1.msra.mxu0 %v383
  %503 = vmatprep.subr.mxu0 0.0
  %504 = vmatpush1.msra.mxu0 %v382
  %505 = vmatprep.subr.mxu0 0.0
  %506 = vmatpush1.msra.mxu0 %v381
  %507 = vmatprep.subr.mxu0 0.0
  %508 = vmatpush1.msra.mxu0 %v380
  %509 = vmatprep.subr.mxu0 0.0
  %510 = vmatpush1.msra.mxu0 %v379
  %511 = vmatprep.subr.mxu0 0.0
  %512 = vmatpush1.msra.mxu0 %v378
  %513 = vmatprep.subr.mxu0 0.0
  %514 = vmatpush1.msra.mxu0 %v377
  %515 = vmatprep.subr.mxu0 0.0
  %516 = vmatpush1.msra.mxu0 %v376
  %517 = vmatprep.subr.mxu0 0.0
  %518 = vmatpush2.msra.mxu0 %v407
  %519 = vmatprep.subr.mxu0 0.0
  %520 = vmatpush2.msra.mxu0 %v406
  %521 = vmatprep.subr.mxu0 0.0
  %522 = vmatpush2.msra.mxu0 %v405
  %523 = vmatprep.subr.mxu0 0.0
  %524 = vmatpush2.msra.mxu0 %v404
  %525 = vmatprep.subr.mxu0 0.0
  %526 = vmatpush2.msra.mxu0 %v403
  %527 = vmatprep.subr.mxu0 0.0
  %528 = vmatpush2.msra.mxu0 %v402
  %529 = vmatprep.subr.mxu0 0.0
  %530 = vmatpush2.msra.mxu0 %v401
  %531 = vmatprep.subr.mxu0 0.0
  %532 = vmatpush2.msra.mxu0 %v400
  %533 = vmatprep.subr.mxu0 0.0
  %534 = vmatpush2.msra.mxu0 %v399
  %535 = vmatprep.subr.mxu0 0.0
  %536 = vmatpush2.msra.mxu0 %v398
  %537 = vmatprep.subr.mxu0 0.0
  %538 = vmatpush2.msra.mxu0 %v397
  %539 = vmatprep.subr.mxu0 0.0
  %540 = vmatpush2.msra.mxu0 %v396
  %541 = vmatprep.subr.mxu0 0.0
  %542 = vmatpush2.msra.mxu0 %v395
  %543 = vmatprep.subr.mxu0 0.0
  %544 = vmatpush2.msra.mxu0 %v394
  %545 = vmatprep.subr.mxu0 0.0
  %546 = vmatpush2.msra.mxu0 %v393
  %547 = vmatprep.subr.mxu0 0.0
  %548 = vmatpush2.msra.mxu0 %v392
  %549 = vmatprep.mubr.f32.mxu0 %v343
  %550 = vmatmul.mubr.f32.gmra.mxu0 %v342
  %v551 = vpop.f32.mrf.mxu0
  %v552 = vadd.f32 %v482, %v551
  %v553 = vpop.f32.mrf.mxu0
  %554 = vdwg.mxu0
  %vm555 = vcmp.gt.f32.partialorder %v552, 0.0
  %v556 = vmul.f32 %v552, 0.2
  %v557 = vsel %vm555, %v552, %v556
  %v558 = vld [vmem:[%s5] sm:$0xff]
  %v559 = vld [vmem:[%s5 + $0x8] sm:$0xff]
  %v560 = vld [vmem:[%s5 + $0x10] sm:$0xff]
  %v561 = vld [vmem:[%s5 + $0x18] sm:$0xff]
  %v562 = vld [vmem:[%s5 + $0x20] sm:$0xff]
  %v563 = vld [vmem:[%s5 + $0x28] sm:$0xff]
  %v564 = vld [vmem:[%s5 + $0x30] sm:$0xff]
  %v565 = vld [vmem:[%s5 + $0x38] sm:$0xff]
  %v566 = vld [vmem:[#allocation2] sm:$0x1]
  %v568 = vlaneseq
  %v569 = vshrl.u32 %v568, 7
  %v570 = vsub.s32 0, %v569
  %v571 = vrot.slane %v566, %v570
  %vm573 = vcmask 523264
  %v575 = vsel %vm573, %v557, 0
  %577 = vmatprep.subr.mxu0 0.0
  %578 = vmatpush1.msra.mxu0 0.0
  %579 = vmatprep.subr.mxu0 0.0
  %580 = vmatpush1.msra.mxu0 0.0
  %581 = vmatprep.subr.mxu0 0.0
  %582 = vmatpush1.msra.mxu0 0.0
  %583 = vmatprep.subr.mxu0 0.0
  %584 = vmatpush1.msra.mxu0 0.0
  %585 = vmatprep.subr.mxu0 0.0
  %586 = vmatpush1.msra.mxu0 0.0
  %587 = vmatprep.subr.mxu0 0.0
  %588 = vmatpush1.msra.mxu0 0.0
  %589 = vmatprep.subr.mxu0 0.0
  %590 = vmatpush1.msra.mxu0 0.0
  %591 = vmatprep.subr.mxu0 0.0
  %592 = vmatpush1.msra.mxu0 0.0
  %593 = vmatprep.subr.mxu0 0.0
  %594 = vmatpush1.msra.mxu0 %v565
  %595 = vmatprep.subr.mxu0 0.0
  %596 = vmatpush1.msra.mxu0 %v564
  %597 = vmatprep.subr.mxu0 0.0
  %598 = vmatpush1.msra.mxu0 %v563
  %599 = vmatprep.subr.mxu0 0.0
  %600 = vmatpush1.msra.mxu0 %v562
  %601 = vmatprep.subr.mxu0 0.0
  %602 = vmatpush1.msra.mxu0 %v561
  %603 = vmatprep.subr.mxu0 0.0
  %604 = vmatpush1.msra.mxu0 %v560
  %605 = vmatprep.subr.mxu0 0.0
  %606 = vmatpush1.msra.mxu0 %v559
  %607 = vmatprep.subr.mxu0 0.0
  %608 = vmatpush1.msra.mxu0 %v558
  %609 = vmatprep.subr.mxu0 0.0
  %610 = vmatpush2.msra.mxu0 0.0
  %611 = vmatprep.subr.mxu0 0.0
  %612 = vmatpush2.msra.mxu0 0.0
  %613 = vmatprep.subr.mxu0 0.0
  %614 = vmatpush2.msra.mxu0 0.0
  %615 = vmatprep.subr.mxu0 0.0
  %616 = vmatpush2.msra.mxu0 0.0
  %617 = vmatprep.subr.mxu0 0.0
  %618 = vmatpush2.msra.mxu0 0.0
  %619 = vmatprep.subr.mxu0 0.0
  %620 = vmatpush2.msra.mxu0 0.0
  %621 = vmatprep.subr.mxu0 0.0
  %622 = vmatpush2.msra.mxu0 0.0
  %623 = vmatprep.subr.mxu0 0.0
  %624 = vmatpush2.msra.mxu0 0.0
  %625 = vmatprep.subr.mxu0 0.0
  %626 = vmatpush2.msra.mxu0 0.0
  %627 = vmatprep.subr.mxu0 0.0
  %628 = vmatpush2.msra.mxu0 0.0
  %629 = vmatprep.subr.mxu0 0.0
  %630 = vmatpush2.msra.mxu0 0.0
  %631 = vmatprep.subr.mxu0 0.0
  %632 = vmatpush2.msra.mxu0 0.0
  %633 = vmatprep.subr.mxu0 0.0
  %634 = vmatpush2.msra.mxu0 0.0
  %635 = vmatprep.subr.mxu0 0.0
  %636 = vmatpush2.msra.mxu0 0.0
  %637 = vmatprep.subr.mxu0 0.0
  %638 = vmatpush2.msra.mxu0 0.0
  %639 = vmatprep.subr.mxu0 0.0
  %640 = vmatpush2.msra.mxu0 0.0
  %641 = vmatprep.mubr.f32.mxu0 0.0
  %642 = vmatmul.mubr.f32.gmra.mxu0 %v575
  %v643 = vpop.f32.mrf.mxu0
  %v644 = vadd.f32 %v571, %v643
  %v645 = vpop.f32.mrf.mxu0
  %646 = vdwg.mxu0
  %vm647 = vcmask 1024
  %648 = vst.msk [vmem:[%s7] sm:$0x3] %vm647, %v644
  // Predicated region
  $region30: #{discriminator_forward.7} parent=0 // pred_check
    _
  $region31: #{discriminator_forward.7} parent=0 // pred_check_branch
    %650 = sbr.rel (0) target = $region33
  $region32: #{discriminator_forward.7} parent=0 // pred_region
    _
  $region33: #{discriminator_forward.7} parent=0 // pred_fallthru
    _
  // Predicated region
  $region34: #{discriminator_forward.7} parent=0 // pred_check
    _
  $region35: #{discriminator_forward.7} parent=0 // pred_check_branch
    %652 = sbr.rel (0) target = $region37
  $region36: #{discriminator_forward.7} parent=0 // pred_region
    _
  $region37: #{discriminator_forward.7} parent=0 // pred_fallthru
    _

</llo_original>
